<compile_context>
chip_gen: v7x
topology: tpu7x:2x2x1
jax: 0.10.0
libtpu: 0.0.40
codegen_flags: <defaults>
</compile_context>

<pallas_src>
import math

import jax
import jax.numpy as jnp
from jax.experimental import pallas as pl
from jax.experimental.pallas import tpu as pltpu

EPS = 1e-5  # PyTorch BatchNorm2d default


def _resblock_kernel(xp_ref,                       # (N, H+2, W+2, C) padded in
                     xid_ref,                      # (N*H*W, C) identity branch
                     w1_ref, b1_ref, g1_ref, bt1_ref,
                     w2_ref, b2_ref, g2_ref, bt2_ref,
                     o_ref,                        # (N*H, W*C) lane-dense out
                     pad_ref):                     # (N, H+2, W+2, C) scratch
    N, Hp, Wp, C = xp_ref.shape
    H, W = Hp - 2, Wp - 2
    M = N * H * W

    def im2col(src_ref):
        # 9 shifted taps, lane-concatenated -> (M, 9*C) patch.  The trailing
        # reshape only collapses leading dims (minor dim preserved => cheap).
        taps = [src_ref[:, dy:dy + H, dx:dx + W, :]
                for dy in range(3) for dx in range(3)]
        return jnp.concatenate(taps, axis=-1).reshape(M, 9 * C)

    def bn_scale_shift(y, g, bt):
        # Training-mode BN folded into one FMA; single-pass E[x], E[x^2].
        inv_m = 1.0 / M
        mean = jnp.sum(y, axis=0, keepdims=True) * inv_m
        mean_sq = jnp.sum(y * y, axis=0, keepdims=True) * inv_m
        var = mean_sq - mean * mean                 # biased variance
        scale = g * jax.lax.rsqrt(var + EPS)        # rsqrt -> EUP slot
        shift = bt - mean * scale
        return scale, shift

    # ---- conv1: single K=9*C MXU dot, then bn1 + relu as one fused pass ----
    y = jnp.dot(im2col(xp_ref), w1_ref[...],
                preferred_element_type=jnp.float32) + b1_ref[...]
    sc1, sh1 = bn_scale_shift(y, g1_ref[...], bt1_ref[...])
    y = jnp.maximum(y * sc1 + sh1, 0.0)

    # ---- 1-pixel zero halo for conv2: zero only the ring, write interior ---
    zrow = jnp.zeros((N, 1, Wp, C), jnp.float32)
    zcol = jnp.zeros((N, Hp, 1, C), jnp.float32)
    pad_ref[:, 0:1, :, :] = zrow
    pad_ref[:, H + 1:H + 2, :, :] = zrow
    pad_ref[:, :, 0:1, :] = zcol
    pad_ref[:, :, W + 1:W + 2, :] = zcol
    pad_ref[:, 1:H + 1, 1:W + 1, :] = y.reshape(N, H, W, C)

    # ---- conv2: single dot, bn2 folded, + identity, relu -------------------
    z = jnp.dot(im2col(pad_ref), w2_ref[...],
                preferred_element_type=jnp.float32) + b2_ref[...]
    sc2, sh2 = bn_scale_shift(z, g2_ref[...], bt2_ref[...])
    z = jnp.maximum(z * sc2 + sh2 + xid_ref[...], 0.0)

    # ---- lane-dense store: interleave W into the lane axis -> (N*H, W*C) ---
    # (W static sublane slices + one lane concat; the resulting stores are
    #  unmasked full-lane vst instead of C/128-masked stores.)
    z3 = z.reshape(N * H, W, C)
    o_ref[...] = jnp.concatenate([z3[:, x, :] for x in range(W)], axis=-1)


def residual_block(x_nchw, params):
    """params: dict with w1,b1,g1,bt1,w2,b2,g2,bt2 already in kernel layout."""
    N, C, H, W = x_nchw.shape
    x = jnp.transpose(x_nchw, (0, 2, 3, 1)).astype(jnp.float32)   # NCHW->NHWC
    xp = jnp.pad(x, ((0, 0), (1, 1), (1, 1), (0, 0)))             # spatial pad
    xid = x.reshape(N * H * W, C)                                  # identity

    vmem = pl.BlockSpec(memory_space=pltpu.MemorySpace.VMEM)
    out = pl.pallas_call(
        _resblock_kernel,
        out_shape=jax.ShapeDtypeStruct((N * H, W * C), jnp.float32),
        in_specs=[vmem] * 10,
        out_specs=vmem,
        scratch_shapes=[pltpu.VMEM((N, H + 2, W + 2, C), jnp.float32)],
        compiler_params=pltpu.CompilerParams(
            vmem_limit_bytes=32 * 1024 * 1024),
    )(xp, xid,
      params["w1"], params["b1"], params["g1"], params["bt1"],
      params["w2"], params["b2"], params["g2"], params["bt2"])

    out = out.reshape(N, H, W, C)
    return jnp.transpose(out, (0, 3, 1, 2))                       # NHWC->NCHW


def init_params(key, channels):
    """Deterministic init mimicking Conv2d/BatchNorm2d defaults (shapes only)."""
    c = channels
    ks = jax.random.split(key, 4)
    bound = 1.0 / math.sqrt(c * 9)

    def conv_params(kw, kb):
        w_oihw = jax.random.uniform(kw, (c, c, 3, 3), jnp.float32, -bound, bound)
        b = jax.random.uniform(kb, (c,), jnp.float32, -bound, bound)
        # OIHW -> (ky, kx, Cin, Cout) -> (9*Cin, Cout): matches the in-kernel
        # im2col tap order (ky-major, kx, then input channel), so each conv is
        # a single K = 9*C MXU dot.  Reshaped once here, never in-kernel.
        w_mat = jnp.transpose(w_oihw, (2, 3, 1, 0)).reshape(9 * c, c)
        return w_oihw, w_mat, b.reshape(1, c)

    w1_oihw, w1_mat, b1 = conv_params(ks[0], ks[1])
    w2_oihw, w2_mat, b2 = conv_params(ks[2], ks[3])
    ones = jnp.ones((1, c), jnp.float32)
    zeros = jnp.zeros((1, c), jnp.float32)

    kernel_params = dict(w1=w1_mat, b1=b1, g1=ones, bt1=zeros,
                         w2=w2_mat, b2=b2, g2=ones, bt2=zeros)
    raw = dict(w1=w1_oihw, b1=b1, w2=w2_oihw, b2=b2)
    return kernel_params, raw


def reference_forward(x_nchw, raw):
    """Pure-JAX reference matching the PyTorch forward (training-mode BN)."""
    x = jnp.transpose(x_nchw, (0, 2, 3, 1)).astype(jnp.float32)

    def conv(x, w_oihw, b):
        w_hwio = jnp.transpose(w_oihw, (2, 3, 1, 0))
        y = jax.lax.conv_general_dilated(
            x, w_hwio, window_strides=(1, 1), padding="SAME",
            dimension_numbers=("NHWC", "HWIO", "NHWC"))
        return y + b

    def bn(y):
        m = jnp.mean(y, axis=(0, 1, 2), keepdims=True)
        v = jnp.mean(jnp.square(y - m), axis=(0, 1, 2), keepdims=True)
        return (y - m) / jnp.sqrt(v + EPS)

    identity = x
    y = jax.nn.relu(bn(conv(x, raw["w1"], raw["b1"])))
    y = bn(conv(y, raw["w2"], raw["b2"]))
    y = jax.nn.relu(y + identity)
    return jnp.transpose(y, (0, 3, 1, 2))


if __name__ == "__main__":
    # residual add requires in_channels == out_channels; W*C = 128 lanes
    N, C, H, W = 2, 8, 16, 16
    key = jax.random.PRNGKey(0)
    kx, kp = jax.random.split(key)
    x = jax.random.normal(kx, (N, C, H, W), jnp.float32)

    kernel_params, raw_params = init_params(kp, C)

    out = jax.block_until_ready(residual_block(x, kernel_params))
    ref = jax.block_until_ready(reference_forward(x, raw_params))

    assert out.shape == (N, C, H, W)
    err = float(jnp.max(jnp.abs(out - ref)))
    assert jnp.allclose(out, ref, atol=1e-4, rtol=1e-4), err
    print("KERNEL_OK")
</pallas_src>

<mosaic_0001>
module attributes {stable_mosaic.version = 11 : i64} {
  func.func @_resblock_kernel(%arg0: memref<2x18x18x8xf32, #tpu.memory_space<vmem>>, %arg1: memref<512x8xf32, #tpu.memory_space<vmem>>, %arg2: memref<72x8xf32, #tpu.memory_space<vmem>>, %arg3: memref<1x8xf32, #tpu.memory_space<vmem>>, %arg4: memref<1x8xf32, #tpu.memory_space<vmem>>, %arg5: memref<1x8xf32, #tpu.memory_space<vmem>>, %arg6: memref<72x8xf32, #tpu.memory_space<vmem>>, %arg7: memref<1x8xf32, #tpu.memory_space<vmem>>, %arg8: memref<1x8xf32, #tpu.memory_space<vmem>>, %arg9: memref<1x8xf32, #tpu.memory_space<vmem>>, %arg10: memref<32x128xf32, #tpu.memory_space<vmem>>, %arg11: memref<2x18x18x8xf32, #tpu.memory_space<vmem>>) attributes {dimension_semantics = [], scalar_prefetch = 0 : i64, scratch_operands = 1 : i64, tpu.core_type = #tpu.core_type<tc>} {
    %c0 = arith.constant 0 : index
    %c0_0 = arith.constant 0 : index
    %c0_1 = arith.constant 0 : index
    %c0_2 = arith.constant 0 : index
    %0 = vector.load %arg0[%c0, %c0_0, %c0_1, %c0_2] : memref<2x18x18x8xf32, #tpu.memory_space<vmem>>, vector<2x16x16x8xf32>
    %c0_3 = arith.constant 0 : index
    %c0_4 = arith.constant 0 : index
    %c1 = arith.constant 1 : index
    %c0_5 = arith.constant 0 : index
    %1 = vector.load %arg0[%c0_3, %c0_4, %c1, %c0_5] : memref<2x18x18x8xf32, #tpu.memory_space<vmem>>, vector<2x16x16x8xf32>
    %c0_6 = arith.constant 0 : index
    %c0_7 = arith.constant 0 : index
    %c2 = arith.constant 2 : index
    %c0_8 = arith.constant 0 : index
    %2 = vector.load %arg0[%c0_6, %c0_7, %c2, %c0_8] : memref<2x18x18x8xf32, #tpu.memory_space<vmem>>, vector<2x16x16x8xf32>
    %c0_9 = arith.constant 0 : index
    %c1_10 = arith.constant 1 : index
    %c0_11 = arith.constant 0 : index
    %c0_12 = arith.constant 0 : index
    %3 = vector.load %arg0[%c0_9, %c1_10, %c0_11, %c0_12] : memref<2x18x18x8xf32, #tpu.memory_space<vmem>>, vector<2x16x16x8xf32>
    %c0_13 = arith.constant 0 : index
    %c1_14 = arith.constant 1 : index
    %c1_15 = arith.constant 1 : index
    %c0_16 = arith.constant 0 : index
    %4 = vector.load %arg0[%c0_13, %c1_14, %c1_15, %c0_16] : memref<2x18x18x8xf32, #tpu.memory_space<vmem>>, vector<2x16x16x8xf32>
    %c0_17 = arith.constant 0 : index
    %c1_18 = arith.constant 1 : index
    %c2_19 = arith.constant 2 : index
    %c0_20 = arith.constant 0 : index
    %5 = vector.load %arg0[%c0_17, %c1_18, %c2_19, %c0_20] : memref<2x18x18x8xf32, #tpu.memory_space<vmem>>, vector<2x16x16x8xf32>
    %c0_21 = arith.constant 0 : index
    %c2_22 = arith.constant 2 : index
    %c0_23 = arith.constant 0 : index
    %c0_24 = arith.constant 0 : index
    %6 = vector.load %arg0[%c0_21, %c2_22, %c0_23, %c0_24] : memref<2x18x18x8xf32, #tpu.memory_space<vmem>>, vector<2x16x16x8xf32>
    %c0_25 = arith.constant 0 : index
    %c2_26 = arith.constant 2 : index
    %c1_27 = arith.constant 1 : index
    %c0_28 = arith.constant 0 : index
    %7 = vector.load %arg0[%c0_25, %c2_26, %c1_27, %c0_28] : memref<2x18x18x8xf32, #tpu.memory_space<vmem>>, vector<2x16x16x8xf32>
    %c0_29 = arith.constant 0 : index
    %c2_30 = arith.constant 2 : index
    %c2_31 = arith.constant 2 : index
    %c0_32 = arith.constant 0 : index
    %8 = vector.load %arg0[%c0_29, %c2_30, %c2_31, %c0_32] : memref<2x18x18x8xf32, #tpu.memory_space<vmem>>, vector<2x16x16x8xf32>
    %9 = tpu.concatenate %0, %1, %2, %3, %4, %5, %6, %7, %8 in 3 : vector<2x16x16x8xf32>, vector<2x16x16x8xf32>, vector<2x16x16x8xf32>, vector<2x16x16x8xf32>, vector<2x16x16x8xf32>, vector<2x16x16x8xf32>, vector<2x16x16x8xf32>, vector<2x16x16x8xf32>, vector<2x16x16x8xf32> -> vector<2x16x16x72xf32>
    %10 = vector.shape_cast %9 : vector<2x16x16x72xf32> to vector<512x72xf32>
    %c0_33 = arith.constant 0 : index
    %c0_34 = arith.constant 0 : index
    %11 = vector.load %arg2[%c0_33, %c0_34] : memref<72x8xf32, #tpu.memory_space<vmem>>, vector<72x8xf32>
    %cst = arith.constant dense<0.000000e+00> : vector<512x8xf32>
    %12 = tpu.matmul %10, %11, %cst {dimension_numbers = #tpu.dot_dimension_numbers<[1], [0], [0], [1], [0, 0, 1, 1], [], []>} : vector<512x72xf32>, vector<72x8xf32>, vector<512x8xf32> -> vector<512x8xf32>
    %c0_35 = arith.constant 0 : index
    %c0_36 = arith.constant 0 : index
    %13 = vector.load %arg3[%c0_35, %c0_36] : memref<1x8xf32, #tpu.memory_space<vmem>>, vector<1x8xf32>
    %14 = vector.broadcast %13 : vector<1x8xf32> to vector<512x8xf32>
    %15 = arith.addf %12, %14 : vector<512x8xf32>
    %c0_37 = arith.constant 0 : index
    %c0_38 = arith.constant 0 : index
    %16 = vector.load %arg4[%c0_37, %c0_38] : memref<1x8xf32, #tpu.memory_space<vmem>>, vector<1x8xf32>
    %c0_39 = arith.constant 0 : index
    %c0_40 = arith.constant 0 : index
    %17 = vector.load %arg5[%c0_39, %c0_40] : memref<1x8xf32, #tpu.memory_space<vmem>>, vector<1x8xf32>
    %cst_41 = arith.constant dense<0.000000e+00> : vector<8xf32>
    %18 = vector.multi_reduction <add>, %15, %cst_41 [0] : vector<512x8xf32> to vector<8xf32>
    %19 = vector.shape_cast %18 : vector<8xf32> to vector<1x8xf32>
    %cst_42 = arith.constant 0.001953125 : f32
    %20 = vector.broadcast %cst_42 : f32 to vector<1x8xf32>
    %21 = arith.mulf %19, %20 : vector<1x8xf32>
    %22 = arith.mulf %15, %15 : vector<512x8xf32>
    %cst_43 = arith.constant dense<0.000000e+00> : vector<8xf32>
    %23 = vector.multi_reduction <add>, %22, %cst_43 [0] : vector<512x8xf32> to vector<8xf32>
    %24 = vector.shape_cast %23 : vector<8xf32> to vector<1x8xf32>
    %cst_44 = arith.constant 0.001953125 : f32
    %25 = vector.broadcast %cst_44 : f32 to vector<1x8xf32>
    %26 = arith.mulf %24, %25 : vector<1x8xf32>
    %27 = arith.mulf %21, %21 : vector<1x8xf32>
    %28 = arith.subf %26, %27 : vector<1x8xf32>
    %cst_45 = arith.constant 9.99999974E-6 : f32
    %29 = vector.broadcast %cst_45 : f32 to vector<1x8xf32>
    %30 = arith.addf %28, %29 : vector<1x8xf32>
    %31 = math.rsqrt %30 : vector<1x8xf32>
    %32 = arith.mulf %16, %31 : vector<1x8xf32>
    %33 = arith.mulf %21, %32 : vector<1x8xf32>
    %34 = arith.subf %17, %33 : vector<1x8xf32>
    %35 = vector.broadcast %32 : vector<1x8xf32> to vector<512x8xf32>
    %36 = arith.mulf %15, %35 : vector<512x8xf32>
    %37 = vector.broadcast %34 : vector<1x8xf32> to vector<512x8xf32>
    %38 = arith.addf %36, %37 : vector<512x8xf32>
    %cst_46 = arith.constant 0.000000e+00 : f32
    %39 = vector.broadcast %cst_46 : f32 to vector<512x8xf32>
    %40 = arith.maximumf %38, %39 : vector<512x8xf32>
    %cst_47 = arith.constant 0.000000e+00 : f32
    %41 = vector.broadcast %cst_47 : f32 to vector<2x1x18x8xf32>
    %cst_48 = arith.constant 0.000000e+00 : f32
    %42 = vector.broadcast %cst_48 : f32 to vector<2x18x1x8xf32>
    %c0_49 = arith.constant 0 : index
    %c0_50 = arith.constant 0 : index
    %c0_51 = arith.constant 0 : index
    %c0_52 = arith.constant 0 : index
    %43 = vector.load %arg11[%c0_49, %c0_50, %c0_51, %c0_52] : memref<2x18x18x8xf32, #tpu.memory_space<vmem>>, vector<2x1x18x8xf32>
    tpu.vector_store %arg11[%c0_49, %c0_50, %c0_51, %c0_52], %41 {strides = array<i32>} : memref<2x18x18x8xf32, #tpu.memory_space<vmem>>, vector<2x1x18x8xf32>,
    %c0_53 = arith.constant 0 : index
    %c17 = arith.constant 17 : index
    %c0_54 = arith.constant 0 : index
    %c0_55 = arith.constant 0 : index
    %44 = vector.load %arg11[%c0_53, %c17, %c0_54, %c0_55] : memref<2x18x18x8xf32, #tpu.memory_space<vmem>>, vector<2x1x18x8xf32>
    tpu.vector_store %arg11[%c0_53, %c17, %c0_54, %c0_55], %41 {strides = array<i32>} : memref<2x18x18x8xf32, #tpu.memory_space<vmem>>, vector<2x1x18x8xf32>,
    %c0_56 = arith.constant 0 : index
    %c0_57 = arith.constant 0 : index
    %c0_58 = arith.constant 0 : index
    %c0_59 = arith.constant 0 : index
    %45 = vector.load %arg11[%c0_56, %c0_57, %c0_58, %c0_59] : memref<2x18x18x8xf32, #tpu.memory_space<vmem>>, vector<2x18x1x8xf32>
    tpu.vector_store %arg11[%c0_56, %c0_57, %c0_58, %c0_59], %42 {strides = array<i32>} : memref<2x18x18x8xf32, #tpu.memory_space<vmem>>, vector<2x18x1x8xf32>,
    %c0_60 = arith.constant 0 : index
    %c0_61 = arith.constant 0 : index
    %c17_62 = arith.constant 17 : index
    %c0_63 = arith.constant 0 : index
    %46 = vector.load %arg11[%c0_60, %c0_61, %c17_62, %c0_63] : memref<2x18x18x8xf32, #tpu.memory_space<vmem>>, vector<2x18x1x8xf32>
    tpu.vector_store %arg11[%c0_60, %c0_61, %c17_62, %c0_63], %42 {strides = array<i32>} : memref<2x18x18x8xf32, #tpu.memory_space<vmem>>, vector<2x18x1x8xf32>,
    %47 = vector.shape_cast %40 : vector<512x8xf32> to vector<2x16x16x8xf32>
    %c0_64 = arith.constant 0 : index
    %c1_65 = arith.constant 1 : index
    %c1_66 = arith.constant 1 : index
    %c0_67 = arith.constant 0 : index
    %48 = vector.load %arg11[%c0_64, %c1_65, %c1_66, %c0_67] : memref<2x18x18x8xf32, #tpu.memory_space<vmem>>, vector<2x16x16x8xf32>
    tpu.vector_store %arg11[%c0_64, %c1_65, %c1_66, %c0_67], %47 {strides = array<i32>} : memref<2x18x18x8xf32, #tpu.memory_space<vmem>>, vector<2x16x16x8xf32>,
    %c0_68 = arith.constant 0 : index
    %c0_69 = arith.constant 0 : index
    %c0_70 = arith.constant 0 : index
    %c0_71 = arith.constant 0 : index
    %49 = vector.load %arg11[%c0_68, %c0_69, %c0_70, %c0_71] : memref<2x18x18x8xf32, #tpu.memory_space<vmem>>, vector<2x16x16x8xf32>
    %c0_72 = arith.constant 0 : index
    %c0_73 = arith.constant 0 : index
    %c1_74 = arith.constant 1 : index
    %c0_75 = arith.constant 0 : index
    %50 = vector.load %arg11[%c0_72, %c0_73, %c1_74, %c0_75] : memref<2x18x18x8xf32, #tpu.memory_space<vmem>>, vector<2x16x16x8xf32>
    %c0_76 = arith.constant 0 : index
    %c0_77 = arith.constant 0 : index
    %c2_78 = arith.constant 2 : index
    %c0_79 = arith.constant 0 : index
    %51 = vector.load %arg11[%c0_76, %c0_77, %c2_78, %c0_79] : memref<2x18x18x8xf32, #tpu.memory_space<vmem>>, vector<2x16x16x8xf32>
    %c0_80 = arith.constant 0 : index
    %c1_81 = arith.constant 1 : index
    %c0_82 = arith.constant 0 : index
    %c0_83 = arith.constant 0 : index
    %52 = vector.load %arg11[%c0_80, %c1_81, %c0_82, %c0_83] : memref<2x18x18x8xf32, #tpu.memory_space<vmem>>, vector<2x16x16x8xf32>
    %c0_84 = arith.constant 0 : index
    %c1_85 = arith.constant 1 : index
    %c1_86 = arith.constant 1 : index
    %c0_87 = arith.constant 0 : index
    %53 = vector.load %arg11[%c0_84, %c1_85, %c1_86, %c0_87] : memref<2x18x18x8xf32, #tpu.memory_space<vmem>>, vector<2x16x16x8xf32>
    %c0_88 = arith.constant 0 : index
    %c1_89 = arith.constant 1 : index
    %c2_90 = arith.constant 2 : index
    %c0_91 = arith.constant 0 : index
    %54 = vector.load %arg11[%c0_88, %c1_89, %c2_90, %c0_91] : memref<2x18x18x8xf32, #tpu.memory_space<vmem>>, vector<2x16x16x8xf32>
    %c0_92 = arith.constant 0 : index
    %c2_93 = arith.constant 2 : index
    %c0_94 = arith.constant 0 : index
    %c0_95 = arith.constant 0 : index
    %55 = vector.load %arg11[%c0_92, %c2_93, %c0_94, %c0_95] : memref<2x18x18x8xf32, #tpu.memory_space<vmem>>, vector<2x16x16x8xf32>
    %c0_96 = arith.constant 0 : index
    %c2_97 = arith.constant 2 : index
    %c1_98 = arith.constant 1 : index
    %c0_99 = arith.constant 0 : index
    %56 = vector.load %arg11[%c0_96, %c2_97, %c1_98, %c0_99] : memref<2x18x18x8xf32, #tpu.memory_space<vmem>>, vector<2x16x16x8xf32>
    %c0_100 = arith.constant 0 : index
    %c2_101 = arith.constant 2 : index
    %c2_102 = arith.constant 2 : index
    %c0_103 = arith.constant 0 : index
    %57 = vector.load %arg11[%c0_100, %c2_101, %c2_102, %c0_103] : memref<2x18x18x8xf32, #tpu.memory_space<vmem>>, vector<2x16x16x8xf32>
    %58 = tpu.concatenate %49, %50, %51, %52, %53, %54, %55, %56, %57 in 3 : vector<2x16x16x8xf32>, vector<2x16x16x8xf32>, vector<2x16x16x8xf32>, vector<2x16x16x8xf32>, vector<2x16x16x8xf32>, vector<2x16x16x8xf32>, vector<2x16x16x8xf32>, vector<2x16x16x8xf32>, vector<2x16x16x8xf32> -> vector<2x16x16x72xf32>
    %59 = vector.shape_cast %58 : vector<2x16x16x72xf32> to vector<512x72xf32>
    %c0_104 = arith.constant 0 : index
    %c0_105 = arith.constant 0 : index
    %60 = vector.load %arg6[%c0_104, %c0_105] : memref<72x8xf32, #tpu.memory_space<vmem>>, vector<72x8xf32>
    %cst_106 = arith.constant dense<0.000000e+00> : vector<512x8xf32>
    %61 = tpu.matmul %59, %60, %cst_106 {dimension_numbers = #tpu.dot_dimension_numbers<[1], [0], [0], [1], [0, 0, 1, 1], [], []>} : vector<512x72xf32>, vector<72x8xf32>, vector<512x8xf32> -> vector<512x8xf32>
    %c0_107 = arith.constant 0 : index
    %c0_108 = arith.constant 0 : index
    %62 = vector.load %arg7[%c0_107, %c0_108] : memref<1x8xf32, #tpu.memory_space<vmem>>, vector<1x8xf32>
    %63 = vector.broadcast %62 : vector<1x8xf32> to vector<512x8xf32>
    %64 = arith.addf %61, %63 : vector<512x8xf32>
    %c0_109 = arith.constant 0 : index
    %c0_110 = arith.constant 0 : index
    %65 = vector.load %arg8[%c0_109, %c0_110] : memref<1x8xf32, #tpu.memory_space<vmem>>, vector<1x8xf32>
    %c0_111 = arith.constant 0 : index
    %c0_112 = arith.constant 0 : index
    %66 = vector.load %arg9[%c0_111, %c0_112] : memref<1x8xf32, #tpu.memory_space<vmem>>, vector<1x8xf32>
    %cst_113 = arith.constant dense<0.000000e+00> : vector<8xf32>
    %67 = vector.multi_reduction <add>, %64, %cst_113 [0] : vector<512x8xf32> to vector<8xf32>
    %68 = vector.shape_cast %67 : vector<8xf32> to vector<1x8xf32>
    %cst_114 = arith.constant 0.001953125 : f32
    %69 = vector.broadcast %cst_114 : f32 to vector<1x8xf32>
    %70 = arith.mulf %68, %69 : vector<1x8xf32>
    %71 = arith.mulf %64, %64 : vector<512x8xf32>
    %cst_115 = arith.constant dense<0.000000e+00> : vector<8xf32>
    %72 = vector.multi_reduction <add>, %71, %cst_115 [0] : vector<512x8xf32> to vector<8xf32>
    %73 = vector.shape_cast %72 : vector<8xf32> to vector<1x8xf32>
    %cst_116 = arith.constant 0.001953125 : f32
    %74 = vector.broadcast %cst_116 : f32 to vector<1x8xf32>
    %75 = arith.mulf %73, %74 : vector<1x8xf32>
    %76 = arith.mulf %70, %70 : vector<1x8xf32>
    %77 = arith.subf %75, %76 : vector<1x8xf32>
    %cst_117 = arith.constant 9.99999974E-6 : f32
    %78 = vector.broadcast %cst_117 : f32 to vector<1x8xf32>
    %79 = arith.addf %77, %78 : vector<1x8xf32>
    %80 = math.rsqrt %79 : vector<1x8xf32>
    %81 = arith.mulf %65, %80 : vector<1x8xf32>
    %82 = arith.mulf %70, %81 : vector<1x8xf32>
    %83 = arith.subf %66, %82 : vector<1x8xf32>
    %84 = vector.broadcast %81 : vector<1x8xf32> to vector<512x8xf32>
    %85 = arith.mulf %64, %84 : vector<512x8xf32>
    %86 = vector.broadcast %83 : vector<1x8xf32> to vector<512x8xf32>
    %87 = arith.addf %85, %86 : vector<512x8xf32>
    %c0_118 = arith.constant 0 : index
    %c0_119 = arith.constant 0 : index
    %88 = vector.load %arg1[%c0_118, %c0_119] : memref<512x8xf32, #tpu.memory_space<vmem>>, vector<512x8xf32>
    %89 = arith.addf %87, %88 : vector<512x8xf32>
    %cst_120 = arith.constant 0.000000e+00 : f32
    %90 = vector.broadcast %cst_120 : f32 to vector<512x8xf32>
    %91 = arith.maximumf %89, %90 : vector<512x8xf32>
    %92 = vector.shape_cast %91 : vector<512x8xf32> to vector<32x16x8xf32>
    %93 = vector.extract_strided_slice %92 {offsets = [0, 0, 0], sizes = [32, 1, 8], strides = [1, 1, 1]} : vector<32x16x8xf32> to vector<32x1x8xf32>
    %94 = vector.shape_cast %93 : vector<32x1x8xf32> to vector<32x8xf32>
    %95 = vector.extract_strided_slice %92 {offsets = [0, 1, 0], sizes = [32, 1, 8], strides = [1, 1, 1]} : vector<32x16x8xf32> to vector<32x1x8xf32>
    %96 = vector.shape_cast %95 : vector<32x1x8xf32> to vector<32x8xf32>
    %97 = vector.extract_strided_slice %92 {offsets = [0, 2, 0], sizes = [32, 1, 8], strides = [1, 1, 1]} : vector<32x16x8xf32> to vector<32x1x8xf32>
    %98 = vector.shape_cast %97 : vector<32x1x8xf32> to vector<32x8xf32>
    %99 = vector.extract_strided_slice %92 {offsets = [0, 3, 0], sizes = [32, 1, 8], strides = [1, 1, 1]} : vector<32x16x8xf32> to vector<32x1x8xf32>
    %100 = vector.shape_cast %99 : vector<32x1x8xf32> to vector<32x8xf32>
    %101 = vector.extract_strided_slice %92 {offsets = [0, 4, 0], sizes = [32, 1, 8], strides = [1, 1, 1]} : vector<32x16x8xf32> to vector<32x1x8xf32>
    %102 = vector.shape_cast %101 : vector<32x1x8xf32> to vector<32x8xf32>
    %103 = vector.extract_strided_slice %92 {offsets = [0, 5, 0], sizes = [32, 1, 8], strides = [1, 1, 1]} : vector<32x16x8xf32> to vector<32x1x8xf32>
    %104 = vector.shape_cast %103 : vector<32x1x8xf32> to vector<32x8xf32>
    %105 = vector.extract_strided_slice %92 {offsets = [0, 6, 0], sizes = [32, 1, 8], strides = [1, 1, 1]} : vector<32x16x8xf32> to vector<32x1x8xf32>
    %106 = vector.shape_cast %105 : vector<32x1x8xf32> to vector<32x8xf32>
    %107 = vector.extract_strided_slice %92 {offsets = [0, 7, 0], sizes = [32, 1, 8], strides = [1, 1, 1]} : vector<32x16x8xf32> to vector<32x1x8xf32>
    %108 = vector.shape_cast %107 : vector<32x1x8xf32> to vector<32x8xf32>
    %109 = vector.extract_strided_slice %92 {offsets = [0, 8, 0], sizes = [32, 1, 8], strides = [1, 1, 1]} : vector<32x16x8xf32> to vector<32x1x8xf32>
    %110 = vector.shape_cast %109 : vector<32x1x8xf32> to vector<32x8xf32>
    %111 = vector.extract_strided_slice %92 {offsets = [0, 9, 0], sizes = [32, 1, 8], strides = [1, 1, 1]} : vector<32x16x8xf32> to vector<32x1x8xf32>
    %112 = vector.shape_cast %111 : vector<32x1x8xf32> to vector<32x8xf32>
    %113 = vector.extract_strided_slice %92 {offsets = [0, 10, 0], sizes = [32, 1, 8], strides = [1, 1, 1]} : vector<32x16x8xf32> to vector<32x1x8xf32>
    %114 = vector.shape_cast %113 : vector<32x1x8xf32> to vector<32x8xf32>
    %115 = vector.extract_strided_slice %92 {offsets = [0, 11, 0], sizes = [32, 1, 8], strides = [1, 1, 1]} : vector<32x16x8xf32> to vector<32x1x8xf32>
    %116 = vector.shape_cast %115 : vector<32x1x8xf32> to vector<32x8xf32>
    %117 = vector.extract_strided_slice %92 {offsets = [0, 12, 0], sizes = [32, 1, 8], strides = [1, 1, 1]} : vector<32x16x8xf32> to vector<32x1x8xf32>
    %118 = vector.shape_cast %117 : vector<32x1x8xf32> to vector<32x8xf32>
    %119 = vector.extract_strided_slice %92 {offsets = [0, 13, 0], sizes = [32, 1, 8], strides = [1, 1, 1]} : vector<32x16x8xf32> to vector<32x1x8xf32>
    %120 = vector.shape_cast %119 : vector<32x1x8xf32> to vector<32x8xf32>
    %121 = vector.extract_strided_slice %92 {offsets = [0, 14, 0], sizes = [32, 1, 8], strides = [1, 1, 1]} : vector<32x16x8xf32> to vector<32x1x8xf32>
    %122 = vector.shape_cast %121 : vector<32x1x8xf32> to vector<32x8xf32>
    %123 = vector.extract_strided_slice %92 {offsets = [0, 15, 0], sizes = [32, 1, 8], strides = [1, 1, 1]} : vector<32x16x8xf32> to vector<32x1x8xf32>
    %124 = vector.shape_cast %123 : vector<32x1x8xf32> to vector<32x8xf32>
    %125 = tpu.concatenate %94, %96, %98, %100, %102, %104, %106, %108, %110, %112, %114, %116, %118, %120, %122, %124 in 1 : vector<32x8xf32>, vector<32x8xf32>, vector<32x8xf32>, vector<32x8xf32>, vector<32x8xf32>, vector<32x8xf32>, vector<32x8xf32>, vector<32x8xf32>, vector<32x8xf32>, vector<32x8xf32>, vector<32x8xf32>, vector<32x8xf32>, vector<32x8xf32>, vector<32x8xf32>, vector<32x8xf32>, vector<32x8xf32> -> vector<32x128xf32>
    %c0_121 = arith.constant 0 : index
    %c0_122 = arith.constant 0 : index
    %126 = vector.load %arg10[%c0_121, %c0_122] : memref<32x128xf32, #tpu.memory_space<vmem>>, vector<32x128xf32>
    tpu.vector_store %arg10[%c0_121, %c0_122], %125 {strides = array<i32>} : memref<32x128xf32, #tpu.memory_space<vmem>>, vector<32x128xf32>,
    return
  }
}

</mosaic_0001>

<llo_original>
// kernel: tpu_custom_call.1
$region0: #{tpu_custom_call.1}
  #allocation0 [shape = 'u32[]', space=smem, size = 0x4, offset = 0x4, fixed_abs, tag = 'smem constant byte address 0x4 - core index']
  #allocation1 [shape = 'u32[144,128]{1,0:T(1,128)}', space=vmem, size = 0x12000, scoped, tag = 'internal scratch']
  #allocation2 [shape = 'f32[2,18,18,8]{3,2,1,0:T(8,128)}', space=vmem, size = 0x6c000, scoped, tag = 'scratch operand']
  %s0 = inlined_call_operand.vmem [shape: f32[2,18,18,8], index: 0, kind: input, shape index: {}]
  %s1 = inlined_call_operand.vmem [shape: f32[512,8], index: 1, kind: input, shape index: {}]
  %s2 = inlined_call_operand.vmem [shape: f32[72,8], index: 2, kind: input, shape index: {}]
  %s3 = inlined_call_operand.vmem [shape: f32[1,8], index: 3, kind: input, shape index: {}]
  %s4 = inlined_call_operand.vmem [shape: f32[1,8], index: 4, kind: input, shape index: {}]
  %s5 = inlined_call_operand.vmem [shape: f32[1,8], index: 5, kind: input, shape index: {}]
  %s6 = inlined_call_operand.vmem [shape: f32[72,8], index: 6, kind: input, shape index: {}]
  %s7 = inlined_call_operand.vmem [shape: f32[1,8], index: 7, kind: input, shape index: {}]
  %s8 = inlined_call_operand.vmem [shape: f32[1,8], index: 8, kind: input, shape index: {}]
  %s9 = inlined_call_operand.vmem [shape: f32[1,8], index: 9, kind: input, shape index: {}]
  %s10 = inlined_call_operand.hbm [shape: f32[32,128], index: 10, kind: output, shape index: {}]
  %s11 = sld [smem:[#allocation0]]
  $region50: #{tpu_custom_call.1} parent=0
    _
  %s13 = ssub.s32 1, %s11
  %s14 = scalar_select 0, %s13, %s11
  $region1: #{tpu_custom_call.1} parent=0
    #allocation3 [shape = 'u8[16384]{0}', space=vmem, size = 0x4000, scoped, tag = 'output window, operand 0, single buffered']
    #allocation4 [shape = 's32[1]{0}', space=sflag, size = 0x4, scoped, tag = 'scoped memory for tpu_custom_call.1']
    %15 = vsyncpa [#allocation4], 0
    // Predicated region
    $region2: #{tpu_custom_call.1} parent=1 // pred_check
      _
    $region3: #{tpu_custom_call.1} parent=1 // pred_check_branch
      %17 = sbr.rel (0) target = $region5
    $region4: #{tpu_custom_call.1} parent=1 // pred_region
      _
    $region5: #{tpu_custom_call.1} parent=1 // pred_fallthru
      _
    // Predicated region
    $region6: #{tpu_custom_call.1} parent=1 // pred_check
      _
    $region7: #{tpu_custom_call.1} parent=1 // pred_check_branch
      %19 = sbr.rel (0) target = $region9
    $region8: #{tpu_custom_call.1} parent=1 // pred_region
      _
    $region9: #{tpu_custom_call.1} parent=1 // pred_fallthru
      _
    // Predicated region
    $region10: #{tpu_custom_call.1} parent=1 // pred_check
      _
    $region11: #{tpu_custom_call.1} parent=1 // pred_check_branch
      %21 = sbr.rel (0) target = $region13
    $region12: #{tpu_custom_call.1} parent=1 // pred_region
      _
    $region13: #{tpu_custom_call.1} parent=1 // pred_fallthru
      _
    // Predicated region
    $region14: #{tpu_custom_call.1} parent=1 // pred_check
      _
    $region15: #{tpu_custom_call.1} parent=1 // pred_check_branch
      %23 = sbr.rel (0) target = $region17
    $region16: #{tpu_custom_call.1} parent=1 // pred_region
      _
    $region17: #{tpu_custom_call.1} parent=1 // pred_fallthru
      _
    // Predicated region
    $region18: #{tpu_custom_call.1} parent=1 // pred_check
      _
    $region19: #{tpu_custom_call.1} parent=1 // pred_check_branch
      %25 = sbr.rel (0) target = $region21
    $region20: #{tpu_custom_call.1} parent=1 // pred_region
      _
    $region21: #{tpu_custom_call.1} parent=1 // pred_fallthru
      _
    // Predicated region
    $region22: #{tpu_custom_call.1} parent=1 // pred_check
      _
    $region23: #{tpu_custom_call.1} parent=1 // pred_check_branch
      %27 = sbr.rel (0) target = $region25
    $region24: #{tpu_custom_call.1} parent=1 // pred_region
      _
    $region25: #{tpu_custom_call.1} parent=1 // pred_fallthru
      _
    // Predicated region
    $region26: #{tpu_custom_call.1} parent=1 // pred_check
      _
    $region27: #{tpu_custom_call.1} parent=1 // pred_check_branch
      %29 = sbr.rel (0) target = $region29
    $region28: #{tpu_custom_call.1} parent=1 // pred_region
      _
    $region29: #{tpu_custom_call.1} parent=1 // pred_fallthru
      _
    // Predicated region
    $region30: #{tpu_custom_call.1} parent=1 // pred_check
      _
    $region31: #{tpu_custom_call.1} parent=1 // pred_check_branch
      %31 = sbr.rel (0) target = $region33
    $region32: #{tpu_custom_call.1} parent=1 // pred_region
      _
    $region33: #{tpu_custom_call.1} parent=1 // pred_fallthru
      _
    // Predicated region
    $region34: #{tpu_custom_call.1} parent=1 // pred_check
      _
    $region35: #{tpu_custom_call.1} parent=1 // pred_check_branch
      %33 = sbr.rel (0) target = $region37
    $region36: #{tpu_custom_call.1} parent=1 // pred_region
      _
    $region37: #{tpu_custom_call.1} parent=1 // pred_fallthru
      _
    // Predicated region
    $region38: #{tpu_custom_call.1} parent=1 // pred_check
      _
    $region39: #{tpu_custom_call.1} parent=1 // pred_check_branch
      %35 = sbr.rel (0) target = $region41
    $region40: #{tpu_custom_call.1} parent=1 // pred_region
      _
    $region41: #{tpu_custom_call.1} parent=1 // pred_fallthru
      _
    %v36 = vld [vmem:[%s0] sm:$0xff]
    %v37 = vld [vmem:[%s0 + $0x8] sm:$0xff]
    %v38 = vld [vmem:[%s0 + $0x18] sm:$0xff]
    %v39 = vld [vmem:[%s0 + $0x20] sm:$0xff]
    %v40 = vld [vmem:[%s0 + $0x30] sm:$0xff]
    %v41 = vld [vmem:[%s0 + $0x38] sm:$0xff]
    %v42 = vld [vmem:[%s0 + $0x48] sm:$0xff]
    %v43 = vld [vmem:[%s0 + $0x50] sm:$0xff]
    %v44 = vld [vmem:[%s0 + $0x60] sm:$0xff]
    %v45 = vld [vmem:[%s0 + $0x68] sm:$0xff]
    %v46 = vld [vmem:[%s0 + $0x78] sm:$0xff]
    %v47 = vld [vmem:[%s0 + $0x80] sm:$0xff]
    %v48 = vld [vmem:[%s0 + $0x90] sm:$0xff]
    %v49 = vld [vmem:[%s0 + $0x98] sm:$0xff]
    %v50 = vld [vmem:[%s0 + $0xa8] sm:$0xff]
    %v51 = vld [vmem:[%s0 + $0xb0] sm:$0xff]
    %v52 = vld [vmem:[%s0 + $0xc0] sm:$0xff]
    %v53 = vld [vmem:[%s0 + $0xc8] sm:$0xff]
    %v54 = vld [vmem:[%s0 + $0xd8] sm:$0xff]
    %v55 = vld [vmem:[%s0 + $0xe0] sm:$0xff]
    %v56 = vld [vmem:[%s0 + $0xf0] sm:$0xff]
    %v57 = vld [vmem:[%s0 + $0xf8] sm:$0xff]
    %v58 = vld [vmem:[%s0 + $0x108] sm:$0xff]
    %v59 = vld [vmem:[%s0 + $0x110] sm:$0xff]
    %v60 = vld [vmem:[%s0 + $0x120] sm:$0xff]
    %v61 = vld [vmem:[%s0 + $0x128] sm:$0xff]
    %v62 = vld [vmem:[%s0 + $0x138] sm:$0xff]
    %v63 = vld [vmem:[%s0 + $0x140] sm:$0xff]
    %v64 = vld [vmem:[%s0 + $0x150] sm:$0xff]
    %v65 = vld [vmem:[%s0 + $0x158] sm:$0xff]
    %v66 = vld [vmem:[%s0 + $0x168] sm:$0xff]
    %v67 = vld [vmem:[%s0 + $0x170] sm:$0xff]
    %v68 = vld [vmem:[%s0 + $0x1b0] sm:$0xff]
    %v69 = vld [vmem:[%s0 + $0x1b8] sm:$0xff]
    %v70 = vld [vmem:[%s0 + $0x1c8] sm:$0xff]
    %v71 = vld [vmem:[%s0 + $0x1d0] sm:$0xff]
    %v72 = vld [vmem:[%s0 + $0x1e0] sm:$0xff]
    %v73 = vld [vmem:[%s0 + $0x1e8] sm:$0xff]
    %v74 = vld [vmem:[%s0 + $0x1f8] sm:$0xff]
    %v75 = vld [vmem:[%s0 + $0x200] sm:$0xff]
    %v76 = vld [vmem:[%s0 + $0x210] sm:$0xff]
    %v77 = vld [vmem:[%s0 + $0x218] sm:$0xff]
    %v78 = vld [vmem:[%s0 + $0x228] sm:$0xff]
    %v79 = vld [vmem:[%s0 + $0x230] sm:$0xff]
    %v80 = vld [vmem:[%s0 + $0x240] sm:$0xff]
    %v81 = vld [vmem:[%s0 + $0x248] sm:$0xff]
    %v82 = vld [vmem:[%s0 + $0x258] sm:$0xff]
    %v83 = vld [vmem:[%s0 + $0x260] sm:$0xff]
    %v84 = vld [vmem:[%s0 + $0x270] sm:$0xff]
    %v85 = vld [vmem:[%s0 + $0x278] sm:$0xff]
    %v86 = vld [vmem:[%s0 + $0x288] sm:$0xff]
    %v87 = vld [vmem:[%s0 + $0x290] sm:$0xff]
    %v88 = vld [vmem:[%s0 + $0x2a0] sm:$0xff]
    %v89 = vld [vmem:[%s0 + $0x2a8] sm:$0xff]
    %v90 = vld [vmem:[%s0 + $0x2b8] sm:$0xff]
    %v91 = vld [vmem:[%s0 + $0x2c0] sm:$0xff]
    %v92 = vld [vmem:[%s0 + $0x2d0] sm:$0xff]
    %v93 = vld [vmem:[%s0 + $0x2d8] sm:$0xff]
    %v94 = vld [vmem:[%s0 + $0x2e8] sm:$0xff]
    %v95 = vld [vmem:[%s0 + $0x2f0] sm:$0xff]
    %v96 = vld [vmem:[%s0 + $0x300] sm:$0xff]
    %v97 = vld [vmem:[%s0 + $0x308] sm:$0xff]
    %v98 = vld [vmem:[%s0 + $0x318] sm:$0xff]
    %v99 = vld [vmem:[%s0 + $0x320] sm:$0xff]
    %v100 = vld [vmem:[%s0 + $0x1] sm:$0xff]
    %v101 = vld [vmem:[%s0 + $0x9] sm:$0xff]
    %v102 = vld [vmem:[%s0 + $0x19] sm:$0xff]
    %v103 = vld [vmem:[%s0 + $0x21] sm:$0xff]
    %v104 = vld [vmem:[%s0 + $0x31] sm:$0xff]
    %v105 = vld [vmem:[%s0 + $0x39] sm:$0xff]
    %v106 = vld [vmem:[%s0 + $0x49] sm:$0xff]
    %v107 = vld [vmem:[%s0 + $0x51] sm:$0xff]
    %v108 = vld [vmem:[%s0 + $0x61] sm:$0xff]
    %v109 = vld [vmem:[%s0 + $0x69] sm:$0xff]
    %v110 = vld [vmem:[%s0 + $0x79] sm:$0xff]
    %v111 = vld [vmem:[%s0 + $0x81] sm:$0xff]
    %v112 = vld [vmem:[%s0 + $0x91] sm:$0xff]
    %v113 = vld [vmem:[%s0 + $0x99] sm:$0xff]
    %v114 = vld [vmem:[%s0 + $0xa9] sm:$0xff]
    %v115 = vld [vmem:[%s0 + $0xb1] sm:$0xff]
    %v116 = vld [vmem:[%s0 + $0xc1] sm:$0xff]
    %v117 = vld [vmem:[%s0 + $0xc9] sm:$0xff]
    %v118 = vld [vmem:[%s0 + $0xd9] sm:$0xff]
    %v119 = vld [vmem:[%s0 + $0xe1] sm:$0xff]
    %v120 = vld [vmem:[%s0 + $0xf1] sm:$0xff]
    %v121 = vld [vmem:[%s0 + $0xf9] sm:$0xff]
    %v122 = vld [vmem:[%s0 + $0x109] sm:$0xff]
    %v123 = vld [vmem:[%s0 + $0x111] sm:$0xff]
    %v124 = vld [vmem:[%s0 + $0x121] sm:$0xff]
    %v125 = vld [vmem:[%s0 + $0x129] sm:$0xff]
    %v126 = vld [vmem:[%s0 + $0x139] sm:$0xff]
    %v127 = vld [vmem:[%s0 + $0x141] sm:$0xff]
    %v128 = vld [vmem:[%s0 + $0x151] sm:$0xff]
    %v129 = vld [vmem:[%s0 + $0x159] sm:$0xff]
    %v130 = vld [vmem:[%s0 + $0x169] sm:$0xff]
    %v131 = vld [vmem:[%s0 + $0x171] sm:$0xff]
    %v132 = vld [vmem:[%s0 + $0x1b1] sm:$0xff]
    %v133 = vld [vmem:[%s0 + $0x1b9] sm:$0xff]
    %v134 = vld [vmem:[%s0 + $0x1c9] sm:$0xff]
    %v135 = vld [vmem:[%s0 + $0x1d1] sm:$0xff]
    %v136 = vld [vmem:[%s0 + $0x1e1] sm:$0xff]
    %v137 = vld [vmem:[%s0 + $0x1e9] sm:$0xff]
    %v138 = vld [vmem:[%s0 + $0x1f9] sm:$0xff]
    %v139 = vld [vmem:[%s0 + $0x201] sm:$0xff]
    %v140 = vld [vmem:[%s0 + $0x211] sm:$0xff]
    %v141 = vld [vmem:[%s0 + $0x219] sm:$0xff]
    %v142 = vld [vmem:[%s0 + $0x229] sm:$0xff]
    %v143 = vld [vmem:[%s0 + $0x231] sm:$0xff]
    %v144 = vld [vmem:[%s0 + $0x241] sm:$0xff]
    %v145 = vld [vmem:[%s0 + $0x249] sm:$0xff]
    %v146 = vld [vmem:[%s0 + $0x259] sm:$0xff]
    %v147 = vld [vmem:[%s0 + $0x261] sm:$0xff]
    %v148 = vld [vmem:[%s0 + $0x271] sm:$0xff]
    %v149 = vld [vmem:[%s0 + $0x279] sm:$0xff]
    %v150 = vld [vmem:[%s0 + $0x289] sm:$0xff]
    %v151 = vld [vmem:[%s0 + $0x291] sm:$0xff]
    %v152 = vld [vmem:[%s0 + $0x2a1] sm:$0xff]
    %v153 = vld [vmem:[%s0 + $0x2a9] sm:$0xff]
    %v154 = vld [vmem:[%s0 + $0x2b9] sm:$0xff]
    %v155 = vld [vmem:[%s0 + $0x2c1] sm:$0xff]
    %v156 = vld [vmem:[%s0 + $0x2d1] sm:$0xff]
    %v157 = vld [vmem:[%s0 + $0x2d9] sm:$0xff]
    %v158 = vld [vmem:[%s0 + $0x2e9] sm:$0xff]
    %v159 = vld [vmem:[%s0 + $0x2f1] sm:$0xff]
    %v160 = vld [vmem:[%s0 + $0x301] sm:$0xff]
    %v161 = vld [vmem:[%s0 + $0x309] sm:$0xff]
    %v162 = vld [vmem:[%s0 + $0x319] sm:$0xff]
    %v163 = vld [vmem:[%s0 + $0x321] sm:$0xff]
    %v164 = vld [vmem:[%s0 + $0x2] sm:$0xff]
    %v165 = vld [vmem:[%s0 + $0xa] sm:$0xff]
    %v166 = vld [vmem:[%s0 + $0x1a] sm:$0xff]
    %v167 = vld [vmem:[%s0 + $0x22] sm:$0xff]
    %v168 = vld [vmem:[%s0 + $0x32] sm:$0xff]
    %v169 = vld [vmem:[%s0 + $0x3a] sm:$0xff]
    %v170 = vld [vmem:[%s0 + $0x4a] sm:$0xff]
    %v171 = vld [vmem:[%s0 + $0x52] sm:$0xff]
    %v172 = vld [vmem:[%s0 + $0x62] sm:$0xff]
    %v173 = vld [vmem:[%s0 + $0x6a] sm:$0xff]
    %v174 = vld [vmem:[%s0 + $0x7a] sm:$0xff]
    %v175 = vld [vmem:[%s0 + $0x82] sm:$0xff]
    %v176 = vld [vmem:[%s0 + $0x92] sm:$0xff]
    %v177 = vld [vmem:[%s0 + $0x9a] sm:$0xff]
    %v178 = vld [vmem:[%s0 + $0xaa] sm:$0xff]
    %v179 = vld [vmem:[%s0 + $0xb2] sm:$0xff]
    %v180 = vld [vmem:[%s0 + $0xc2] sm:$0xff]
    %v181 = vld [vmem:[%s0 + $0xca] sm:$0xff]
    %v182 = vld [vmem:[%s0 + $0xda] sm:$0xff]
    %v183 = vld [vmem:[%s0 + $0xe2] sm:$0xff]
    %v184 = vld [vmem:[%s0 + $0xf2] sm:$0xff]
    %v185 = vld [vmem:[%s0 + $0xfa] sm:$0xff]
    %v186 = vld [vmem:[%s0 + $0x10a] sm:$0xff]
    %v187 = vld [vmem:[%s0 + $0x112] sm:$0xff]
    %v188 = vld [vmem:[%s0 + $0x122] sm:$0xff]
    %v189 = vld [vmem:[%s0 + $0x12a] sm:$0xff]
    %v190 = vld [vmem:[%s0 + $0x13a] sm:$0xff]
    %v191 = vld [vmem:[%s0 + $0x142] sm:$0xff]
    %v192 = vld [vmem:[%s0 + $0x152] sm:$0xff]
    %v193 = vld [vmem:[%s0 + $0x15a] sm:$0xff]
    %v194 = vld [vmem:[%s0 + $0x16a] sm:$0xff]
    %v195 = vld [vmem:[%s0 + $0x172] sm:$0xff]
    %v196 = vld [vmem:[%s0 + $0x1b2] sm:$0xff]
    %v197 = vld [vmem:[%s0 + $0x1ba] sm:$0xff]
    %v198 = vld [vmem:[%s0 + $0x1ca] sm:$0xff]
    %v199 = vld [vmem:[%s0 + $0x1d2] sm:$0xff]
    %v200 = vld [vmem:[%s0 + $0x1e2] sm:$0xff]
    %v201 = vld [vmem:[%s0 + $0x1ea] sm:$0xff]
    %v202 = vld [vmem:[%s0 + $0x1fa] sm:$0xff]
    %v203 = vld [vmem:[%s0 + $0x202] sm:$0xff]
    %v204 = vld [vmem:[%s0 + $0x212] sm:$0xff]
    %v205 = vld [vmem:[%s0 + $0x21a] sm:$0xff]
    %v206 = vld [vmem:[%s0 + $0x22a] sm:$0xff]
    %v207 = vld [vmem:[%s0 + $0x232] sm:$0xff]
    %v208 = vld [vmem:[%s0 + $0x242] sm:$0xff]
    %v209 = vld [vmem:[%s0 + $0x24a] sm:$0xff]
    %v210 = vld [vmem:[%s0 + $0x25a] sm:$0xff]
    %v211 = vld [vmem:[%s0 + $0x262] sm:$0xff]
    %v212 = vld [vmem:[%s0 + $0x272] sm:$0xff]
    %v213 = vld [vmem:[%s0 + $0x27a] sm:$0xff]
    %v214 = vld [vmem:[%s0 + $0x28a] sm:$0xff]
    %v215 = vld [vmem:[%s0 + $0x292] sm:$0xff]
    %v216 = vld [vmem:[%s0 + $0x2a2] sm:$0xff]
    %v217 = vld [vmem:[%s0 + $0x2aa] sm:$0xff]
    %v218 = vld [vmem:[%s0 + $0x2ba] sm:$0xff]
    %v219 = vld [vmem:[%s0 + $0x2c2] sm:$0xff]
    %v220 = vld [vmem:[%s0 + $0x2d2] sm:$0xff]
    %v221 = vld [vmem:[%s0 + $0x2da] sm:$0xff]
    %v222 = vld [vmem:[%s0 + $0x2ea] sm:$0xff]
    %v223 = vld [vmem:[%s0 + $0x2f2] sm:$0xff]
    %v224 = vld [vmem:[%s0 + $0x302] sm:$0xff]
    %v225 = vld [vmem:[%s0 + $0x30a] sm:$0xff]
    %v226 = vld [vmem:[%s0 + $0x31a] sm:$0xff]
    %v227 = vld [vmem:[%s0 + $0x322] sm:$0xff]
    %s228 = scalar_lea.vmem %s0, 24
    %v229 = vld [vmem:[%s228] sm:$0xff]
    %v230 = vld [vmem:[%s228 + $0x8] sm:$0xff]
    %v231 = vld [vmem:[%s228 + $0x18] sm:$0xff]
    %v232 = vld [vmem:[%s228 + $0x20] sm:$0xff]
    %v233 = vld [vmem:[%s228 + $0x30] sm:$0xff]
    %v234 = vld [vmem:[%s228 + $0x38] sm:$0xff]
    %v235 = vld [vmem:[%s228 + $0x48] sm:$0xff]
    %v236 = vld [vmem:[%s228 + $0x50] sm:$0xff]
    %v237 = vld [vmem:[%s228 + $0x60] sm:$0xff]
    %v238 = vld [vmem:[%s228 + $0x68] sm:$0xff]
    %v239 = vld [vmem:[%s228 + $0x78] sm:$0xff]
    %v240 = vld [vmem:[%s228 + $0x80] sm:$0xff]
    %v241 = vld [vmem:[%s228 + $0x90] sm:$0xff]
    %v242 = vld [vmem:[%s228 + $0x98] sm:$0xff]
    %v243 = vld [vmem:[%s228 + $0xa8] sm:$0xff]
    %v244 = vld [vmem:[%s228 + $0xb0] sm:$0xff]
    %v245 = vld [vmem:[%s228 + $0xc0] sm:$0xff]
    %v246 = vld [vmem:[%s228 + $0xc8] sm:$0xff]
    %v247 = vld [vmem:[%s228 + $0xd8] sm:$0xff]
    %v248 = vld [vmem:[%s228 + $0xe0] sm:$0xff]
    %v249 = vld [vmem:[%s228 + $0xf0] sm:$0xff]
    %v250 = vld [vmem:[%s228 + $0xf8] sm:$0xff]
    %v251 = vld [vmem:[%s228 + $0x108] sm:$0xff]
    %v252 = vld [vmem:[%s228 + $0x110] sm:$0xff]
    %v253 = vld [vmem:[%s228 + $0x120] sm:$0xff]
    %v254 = vld [vmem:[%s228 + $0x128] sm:$0xff]
    %v255 = vld [vmem:[%s228 + $0x138] sm:$0xff]
    %v256 = vld [vmem:[%s228 + $0x140] sm:$0xff]
    %v257 = vld [vmem:[%s228 + $0x150] sm:$0xff]
    %v258 = vld [vmem:[%s228 + $0x158] sm:$0xff]
    %v259 = vld [vmem:[%s228 + $0x168] sm:$0xff]
    %v260 = vld [vmem:[%s228 + $0x170] sm:$0xff]
    %v261 = vld [vmem:[%s228 + $0x1b0] sm:$0xff]
    %v262 = vld [vmem:[%s228 + $0x1b8] sm:$0xff]
    %v263 = vld [vmem:[%s228 + $0x1c8] sm:$0xff]
    %v264 = vld [vmem:[%s228 + $0x1d0] sm:$0xff]
    %v265 = vld [vmem:[%s228 + $0x1e0] sm:$0xff]
    %v266 = vld [vmem:[%s228 + $0x1e8] sm:$0xff]
    %v267 = vld [vmem:[%s228 + $0x1f8] sm:$0xff]
    %v268 = vld [vmem:[%s228 + $0x200] sm:$0xff]
    %v269 = vld [vmem:[%s228 + $0x210] sm:$0xff]
    %v270 = vld [vmem:[%s228 + $0x218] sm:$0xff]
    %v271 = vld [vmem:[%s228 + $0x228] sm:$0xff]
    %v272 = vld [vmem:[%s228 + $0x230] sm:$0xff]
    %v273 = vld [vmem:[%s228 + $0x240] sm:$0xff]
    %v274 = vld [vmem:[%s228 + $0x248] sm:$0xff]
    %v275 = vld [vmem:[%s228 + $0x258] sm:$0xff]
    %v276 = vld [vmem:[%s228 + $0x260] sm:$0xff]
    %v277 = vld [vmem:[%s228 + $0x270] sm:$0xff]
    %v278 = vld [vmem:[%s228 + $0x278] sm:$0xff]
    %v279 = vld [vmem:[%s228 + $0x288] sm:$0xff]
    %v280 = vld [vmem:[%s228 + $0x290] sm:$0xff]
    %v281 = vld [vmem:[%s228 + $0x2a0] sm:$0xff]
    %v282 = vld [vmem:[%s228 + $0x2a8] sm:$0xff]
    %v283 = vld [vmem:[%s228 + $0x2b8] sm:$0xff]
    %v284 = vld [vmem:[%s228 + $0x2c0] sm:$0xff]
    %v285 = vld [vmem:[%s228 + $0x2d0] sm:$0xff]
    %v286 = vld [vmem:[%s228 + $0x2d8] sm:$0xff]
    %v287 = vld [vmem:[%s228 + $0x2e8] sm:$0xff]
    %v288 = vld [vmem:[%s228 + $0x2f0] sm:$0xff]
    %v289 = vld [vmem:[%s228 + $0x300] sm:$0xff]
    %v290 = vld [vmem:[%s228 + $0x308] sm:$0xff]
    %v291 = vld [vmem:[%s228 + $0x318] sm:$0xff]
    %v292 = vld [vmem:[%s228 + $0x320] sm:$0xff]
    %v293 = vld [vmem:[%s228 + $0x1] sm:$0xff]
    %v294 = vld [vmem:[%s228 + $0x9] sm:$0xff]
    %v295 = vld [vmem:[%s228 + $0x19] sm:$0xff]
    %v296 = vld [vmem:[%s228 + $0x21] sm:$0xff]
    %v297 = vld [vmem:[%s228 + $0x31] sm:$0xff]
    %v298 = vld [vmem:[%s228 + $0x39] sm:$0xff]
    %v299 = vld [vmem:[%s228 + $0x49] sm:$0xff]
    %v300 = vld [vmem:[%s228 + $0x51] sm:$0xff]
    %v301 = vld [vmem:[%s228 + $0x61] sm:$0xff]
    %v302 = vld [vmem:[%s228 + $0x69] sm:$0xff]
    %v303 = vld [vmem:[%s228 + $0x79] sm:$0xff]
    %v304 = vld [vmem:[%s228 + $0x81] sm:$0xff]
    %v305 = vld [vmem:[%s228 + $0x91] sm:$0xff]
    %v306 = vld [vmem:[%s228 + $0x99] sm:$0xff]
    %v307 = vld [vmem:[%s228 + $0xa9] sm:$0xff]
    %v308 = vld [vmem:[%s228 + $0xb1] sm:$0xff]
    %v309 = vld [vmem:[%s228 + $0xc1] sm:$0xff]
    %v310 = vld [vmem:[%s228 + $0xc9] sm:$0xff]
    %v311 = vld [vmem:[%s228 + $0xd9] sm:$0xff]
    %v312 = vld [vmem:[%s228 + $0xe1] sm:$0xff]
    %v313 = vld [vmem:[%s228 + $0xf1] sm:$0xff]
    %v314 = vld [vmem:[%s228 + $0xf9] sm:$0xff]
    %v315 = vld [vmem:[%s228 + $0x109] sm:$0xff]
    %v316 = vld [vmem:[%s228 + $0x111] sm:$0xff]
    %v317 = vld [vmem:[%s228 + $0x121] sm:$0xff]
    %v318 = vld [vmem:[%s228 + $0x129] sm:$0xff]
    %v319 = vld [vmem:[%s228 + $0x139] sm:$0xff]
    %v320 = vld [vmem:[%s228 + $0x141] sm:$0xff]
    %v321 = vld [vmem:[%s228 + $0x151] sm:$0xff]
    %v322 = vld [vmem:[%s228 + $0x159] sm:$0xff]
    %v323 = vld [vmem:[%s228 + $0x169] sm:$0xff]
    %v324 = vld [vmem:[%s228 + $0x171] sm:$0xff]
    %v325 = vld [vmem:[%s228 + $0x1b1] sm:$0xff]
    %v326 = vld [vmem:[%s228 + $0x1b9] sm:$0xff]
    %v327 = vld [vmem:[%s228 + $0x1c9] sm:$0xff]
    %v328 = vld [vmem:[%s228 + $0x1d1] sm:$0xff]
    %v329 = vld [vmem:[%s228 + $0x1e1] sm:$0xff]
    %v330 = vld [vmem:[%s228 + $0x1e9] sm:$0xff]
    %v331 = vld [vmem:[%s228 + $0x1f9] sm:$0xff]
    %v332 = vld [vmem:[%s228 + $0x201] sm:$0xff]
    %v333 = vld [vmem:[%s228 + $0x211] sm:$0xff]
    %v334 = vld [vmem:[%s228 + $0x219] sm:$0xff]
    %v335 = vld [vmem:[%s228 + $0x229] sm:$0xff]
    %v336 = vld [vmem:[%s228 + $0x231] sm:$0xff]
    %v337 = vld [vmem:[%s228 + $0x241] sm:$0xff]
    %v338 = vld [vmem:[%s228 + $0x249] sm:$0xff]
    %v339 = vld [vmem:[%s228 + $0x259] sm:$0xff]
    %v340 = vld [vmem:[%s228 + $0x261] sm:$0xff]
    %v341 = vld [vmem:[%s228 + $0x271] sm:$0xff]
    %v342 = vld [vmem:[%s228 + $0x279] sm:$0xff]
    %v343 = vld [vmem:[%s228 + $0x289] sm:$0xff]
    %v344 = vld [vmem:[%s228 + $0x291] sm:$0xff]
    %v345 = vld [vmem:[%s228 + $0x2a1] sm:$0xff]
    %v346 = vld [vmem:[%s228 + $0x2a9] sm:$0xff]
    %v347 = vld [vmem:[%s228 + $0x2b9] sm:$0xff]
    %v348 = vld [vmem:[%s228 + $0x2c1] sm:$0xff]
    %v349 = vld [vmem:[%s228 + $0x2d1] sm:$0xff]
    %v350 = vld [vmem:[%s228 + $0x2d9] sm:$0xff]
    %v351 = vld [vmem:[%s228 + $0x2e9] sm:$0xff]
    %v352 = vld [vmem:[%s228 + $0x2f1] sm:$0xff]
    %v353 = vld [vmem:[%s228 + $0x301] sm:$0xff]
    %v354 = vld [vmem:[%s228 + $0x309] sm:$0xff]
    %v355 = vld [vmem:[%s228 + $0x319] sm:$0xff]
    %v356 = vld [vmem:[%s228 + $0x321] sm:$0xff]
    %v357 = vld [vmem:[%s228 + $0x2] sm:$0xff]
    %v358 = vld [vmem:[%s228 + $0xa] sm:$0xff]
    %v359 = vld [vmem:[%s228 + $0x1a] sm:$0xff]
    %v360 = vld [vmem:[%s228 + $0x22] sm:$0xff]
    %v361 = vld [vmem:[%s228 + $0x32] sm:$0xff]
    %v362 = vld [vmem:[%s228 + $0x3a] sm:$0xff]
    %v363 = vld [vmem:[%s228 + $0x4a] sm:$0xff]
    %v364 = vld [vmem:[%s228 + $0x52] sm:$0xff]
    %v365 = vld [vmem:[%s228 + $0x62] sm:$0xff]
    %v366 = vld [vmem:[%s228 + $0x6a] sm:$0xff]
    %v367 = vld [vmem:[%s228 + $0x7a] sm:$0xff]
    %v368 = vld [vmem:[%s228 + $0x82] sm:$0xff]
    %v369 = vld [vmem:[%s228 + $0x92] sm:$0xff]
    %v370 = vld [vmem:[%s228 + $0x9a] sm:$0xff]
    %v371 = vld [vmem:[%s228 + $0xaa] sm:$0xff]
    %v372 = vld [vmem:[%s228 + $0xb2] sm:$0xff]
    %v373 = vld [vmem:[%s228 + $0xc2] sm:$0xff]
    %v374 = vld [vmem:[%s228 + $0xca] sm:$0xff]
    %v375 = vld [vmem:[%s228 + $0xda] sm:$0xff]
    %v376 = vld [vmem:[%s228 + $0xe2] sm:$0xff]
    %v377 = vld [vmem:[%s228 + $0xf2] sm:$0xff]
    %v378 = vld [vmem:[%s228 + $0xfa] sm:$0xff]
    %v379 = vld [vmem:[%s228 + $0x10a] sm:$0xff]
    %v380 = vld [vmem:[%s228 + $0x112] sm:$0xff]
    %v381 = vld [vmem:[%s228 + $0x122] sm:$0xff]
    %v382 = vld [vmem:[%s228 + $0x12a] sm:$0xff]
    %v383 = vld [vmem:[%s228 + $0x13a] sm:$0xff]
    %v384 = vld [vmem:[%s228 + $0x142] sm:$0xff]
    %v385 = vld [vmem:[%s228 + $0x152] sm:$0xff]
    %v386 = vld [vmem:[%s228 + $0x15a] sm:$0xff]
    %v387 = vld [vmem:[%s228 + $0x16a] sm:$0xff]
    %v388 = vld [vmem:[%s228 + $0x172] sm:$0xff]
    %v389 = vld [vmem:[%s228 + $0x1b2] sm:$0xff]
    %v390 = vld [vmem:[%s228 + $0x1ba] sm:$0xff]
    %v391 = vld [vmem:[%s228 + $0x1ca] sm:$0xff]
    %v392 = vld [vmem:[%s228 + $0x1d2] sm:$0xff]
    %v393 = vld [vmem:[%s228 + $0x1e2] sm:$0xff]
    %v394 = vld [vmem:[%s228 + $0x1ea] sm:$0xff]
    %v395 = vld [vmem:[%s228 + $0x1fa] sm:$0xff]
    %v396 = vld [vmem:[%s228 + $0x202] sm:$0xff]
    %v397 = vld [vmem:[%s228 + $0x212] sm:$0xff]
    %v398 = vld [vmem:[%s228 + $0x21a] sm:$0xff]
    %v399 = vld [vmem:[%s228 + $0x22a] sm:$0xff]
    %v400 = vld [vmem:[%s228 + $0x232] sm:$0xff]
    %v401 = vld [vmem:[%s228 + $0x242] sm:$0xff]
    %v402 = vld [vmem:[%s228 + $0x24a] sm:$0xff]
    %v403 = vld [vmem:[%s228 + $0x25a] sm:$0xff]
    %v404 = vld [vmem:[%s228 + $0x262] sm:$0xff]
    %v405 = vld [vmem:[%s228 + $0x272] sm:$0xff]
    %v406 = vld [vmem:[%s228 + $0x27a] sm:$0xff]
    %v407 = vld [vmem:[%s228 + $0x28a] sm:$0xff]
    %v408 = vld [vmem:[%s228 + $0x292] sm:$0xff]
    %v409 = vld [vmem:[%s228 + $0x2a2] sm:$0xff]
    %v410 = vld [vmem:[%s228 + $0x2aa] sm:$0xff]
    %v411 = vld [vmem:[%s228 + $0x2ba] sm:$0xff]
    %v412 = vld [vmem:[%s228 + $0x2c2] sm:$0xff]
    %v413 = vld [vmem:[%s228 + $0x2d2] sm:$0xff]
    %v414 = vld [vmem:[%s228 + $0x2da] sm:$0xff]
    %v415 = vld [vmem:[%s228 + $0x2ea] sm:$0xff]
    %v416 = vld [vmem:[%s228 + $0x2f2] sm:$0xff]
    %v417 = vld [vmem:[%s228 + $0x302] sm:$0xff]
    %v418 = vld [vmem:[%s228 + $0x30a] sm:$0xff]
    %v419 = vld [vmem:[%s228 + $0x31a] sm:$0xff]
    %v420 = vld [vmem:[%s228 + $0x322] sm:$0xff]
    %s421 = scalar_lea.vmem %s0, 48
    %v422 = vld [vmem:[%s421] sm:$0xff]
    %v423 = vld [vmem:[%s421 + $0x8] sm:$0xff]
    %v424 = vld [vmem:[%s421 + $0x18] sm:$0xff]
    %v425 = vld [vmem:[%s421 + $0x20] sm:$0xff]
    %v426 = vld [vmem:[%s421 + $0x30] sm:$0xff]
    %v427 = vld [vmem:[%s421 + $0x38] sm:$0xff]
    %v428 = vld [vmem:[%s421 + $0x48] sm:$0xff]
    %v429 = vld [vmem:[%s421 + $0x50] sm:$0xff]
    %v430 = vld [vmem:[%s421 + $0x60] sm:$0xff]
    %v431 = vld [vmem:[%s421 + $0x68] sm:$0xff]
    %v432 = vld [vmem:[%s421 + $0x78] sm:$0xff]
    %v433 = vld [vmem:[%s421 + $0x80] sm:$0xff]
    %v434 = vld [vmem:[%s421 + $0x90] sm:$0xff]
    %v435 = vld [vmem:[%s421 + $0x98] sm:$0xff]
    %v436 = vld [vmem:[%s421 + $0xa8] sm:$0xff]
    %v437 = vld [vmem:[%s421 + $0xb0] sm:$0xff]
    %v438 = vld [vmem:[%s421 + $0xc0] sm:$0xff]
    %v439 = vld [vmem:[%s421 + $0xc8] sm:$0xff]
    %v440 = vld [vmem:[%s421 + $0xd8] sm:$0xff]
    %v441 = vld [vmem:[%s421 + $0xe0] sm:$0xff]
    %v442 = vld [vmem:[%s421 + $0xf0] sm:$0xff]
    %v443 = vld [vmem:[%s421 + $0xf8] sm:$0xff]
    %v444 = vld [vmem:[%s421 + $0x108] sm:$0xff]
    %v445 = vld [vmem:[%s421 + $0x110] sm:$0xff]
    %v446 = vld [vmem:[%s421 + $0x120] sm:$0xff]
    %v447 = vld [vmem:[%s421 + $0x128] sm:$0xff]
    %v448 = vld [vmem:[%s421 + $0x138] sm:$0xff]
    %v449 = vld [vmem:[%s421 + $0x140] sm:$0xff]
    %v450 = vld [vmem:[%s421 + $0x150] sm:$0xff]
    %v451 = vld [vmem:[%s421 + $0x158] sm:$0xff]
    %v452 = vld [vmem:[%s421 + $0x168] sm:$0xff]
    %v453 = vld [vmem:[%s421 + $0x170] sm:$0xff]
    %v454 = vld [vmem:[%s421 + $0x1b0] sm:$0xff]
    %v455 = vld [vmem:[%s421 + $0x1b8] sm:$0xff]
    %v456 = vld [vmem:[%s421 + $0x1c8] sm:$0xff]
    %v457 = vld [vmem:[%s421 + $0x1d0] sm:$0xff]
    %v458 = vld [vmem:[%s421 + $0x1e0] sm:$0xff]
    %v459 = vld [vmem:[%s421 + $0x1e8] sm:$0xff]
    %v460 = vld [vmem:[%s421 + $0x1f8] sm:$0xff]
    %v461 = vld [vmem:[%s421 + $0x200] sm:$0xff]
    %v462 = vld [vmem:[%s421 + $0x210] sm:$0xff]
    %v463 = vld [vmem:[%s421 + $0x218] sm:$0xff]
    %v464 = vld [vmem:[%s421 + $0x228] sm:$0xff]
    %v465 = vld [vmem:[%s421 + $0x230] sm:$0xff]
    %v466 = vld [vmem:[%s421 + $0x240] sm:$0xff]
    %v467 = vld [vmem:[%s421 + $0x248] sm:$0xff]
    %v468 = vld [vmem:[%s421 + $0x258] sm:$0xff]
    %v469 = vld [vmem:[%s421 + $0x260] sm:$0xff]
    %v470 = vld [vmem:[%s421 + $0x270] sm:$0xff]
    %v471 = vld [vmem:[%s421 + $0x278] sm:$0xff]
    %v472 = vld [vmem:[%s421 + $0x288] sm:$0xff]
    %v473 = vld [vmem:[%s421 + $0x290] sm:$0xff]
    %v474 = vld [vmem:[%s421 + $0x2a0] sm:$0xff]
    %v475 = vld [vmem:[%s421 + $0x2a8] sm:$0xff]
    %v476 = vld [vmem:[%s421 + $0x2b8] sm:$0xff]
    %v477 = vld [vmem:[%s421 + $0x2c0] sm:$0xff]
    %v478 = vld [vmem:[%s421 + $0x2d0] sm:$0xff]
    %v479 = vld [vmem:[%s421 + $0x2d8] sm:$0xff]
    %v480 = vld [vmem:[%s421 + $0x2e8] sm:$0xff]
    %v481 = vld [vmem:[%s421 + $0x2f0] sm:$0xff]
    %v482 = vld [vmem:[%s421 + $0x300] sm:$0xff]
    %v483 = vld [vmem:[%s421 + $0x308] sm:$0xff]
    %v484 = vld [vmem:[%s421 + $0x318] sm:$0xff]
    %v485 = vld [vmem:[%s421 + $0x320] sm:$0xff]
    %v486 = vld [vmem:[%s421 + $0x1] sm:$0xff]
    %v487 = vld [vmem:[%s421 + $0x9] sm:$0xff]
    %v488 = vld [vmem:[%s421 + $0x19] sm:$0xff]
    %v489 = vld [vmem:[%s421 + $0x21] sm:$0xff]
    %v490 = vld [vmem:[%s421 + $0x31] sm:$0xff]
    %v491 = vld [vmem:[%s421 + $0x39] sm:$0xff]
    %v492 = vld [vmem:[%s421 + $0x49] sm:$0xff]
    %v493 = vld [vmem:[%s421 + $0x51] sm:$0xff]
    %v494 = vld [vmem:[%s421 + $0x61] sm:$0xff]
    %v495 = vld [vmem:[%s421 + $0x69] sm:$0xff]
    %v496 = vld [vmem:[%s421 + $0x79] sm:$0xff]
    %v497 = vld [vmem:[%s421 + $0x81] sm:$0xff]
    %v498 = vld [vmem:[%s421 + $0x91] sm:$0xff]
    %v499 = vld [vmem:[%s421 + $0x99] sm:$0xff]
    %v500 = vld [vmem:[%s421 + $0xa9] sm:$0xff]
    %v501 = vld [vmem:[%s421 + $0xb1] sm:$0xff]
    %v502 = vld [vmem:[%s421 + $0xc1] sm:$0xff]
    %v503 = vld [vmem:[%s421 + $0xc9] sm:$0xff]
    %v504 = vld [vmem:[%s421 + $0xd9] sm:$0xff]
    %v505 = vld [vmem:[%s421 + $0xe1] sm:$0xff]
    %v506 = vld [vmem:[%s421 + $0xf1] sm:$0xff]
    %v507 = vld [vmem:[%s421 + $0xf9] sm:$0xff]
    %v508 = vld [vmem:[%s421 + $0x109] sm:$0xff]
    %v509 = vld [vmem:[%s421 + $0x111] sm:$0xff]
    %v510 = vld [vmem:[%s421 + $0x121] sm:$0xff]
    %v511 = vld [vmem:[%s421 + $0x129] sm:$0xff]
    %v512 = vld [vmem:[%s421 + $0x139] sm:$0xff]
    %v513 = vld [vmem:[%s421 + $0x141] sm:$0xff]
    %v514 = vld [vmem:[%s421 + $0x151] sm:$0xff]
    %v515 = vld [vmem:[%s421 + $0x159] sm:$0xff]
    %v516 = vld [vmem:[%s421 + $0x169] sm:$0xff]
    %v517 = vld [vmem:[%s421 + $0x171] sm:$0xff]
    %v518 = vld [vmem:[%s421 + $0x1b1] sm:$0xff]
    %v519 = vld [vmem:[%s421 + $0x1b9] sm:$0xff]
    %v520 = vld [vmem:[%s421 + $0x1c9] sm:$0xff]
    %v521 = vld [vmem:[%s421 + $0x1d1] sm:$0xff]
    %v522 = vld [vmem:[%s421 + $0x1e1] sm:$0xff]
    %v523 = vld [vmem:[%s421 + $0x1e9] sm:$0xff]
    %v524 = vld [vmem:[%s421 + $0x1f9] sm:$0xff]
    %v525 = vld [vmem:[%s421 + $0x201] sm:$0xff]
    %v526 = vld [vmem:[%s421 + $0x211] sm:$0xff]
    %v527 = vld [vmem:[%s421 + $0x219] sm:$0xff]
    %v528 = vld [vmem:[%s421 + $0x229] sm:$0xff]
    %v529 = vld [vmem:[%s421 + $0x231] sm:$0xff]
    %v530 = vld [vmem:[%s421 + $0x241] sm:$0xff]
    %v531 = vld [vmem:[%s421 + $0x249] sm:$0xff]
    %v532 = vld [vmem:[%s421 + $0x259] sm:$0xff]
    %v533 = vld [vmem:[%s421 + $0x261] sm:$0xff]
    %v534 = vld [vmem:[%s421 + $0x271] sm:$0xff]
    %v535 = vld [vmem:[%s421 + $0x279] sm:$0xff]
    %v536 = vld [vmem:[%s421 + $0x289] sm:$0xff]
    %v537 = vld [vmem:[%s421 + $0x291] sm:$0xff]
    %v538 = vld [vmem:[%s421 + $0x2a1] sm:$0xff]
    %v539 = vld [vmem:[%s421 + $0x2a9] sm:$0xff]
    %v540 = vld [vmem:[%s421 + $0x2b9] sm:$0xff]
    %v541 = vld [vmem:[%s421 + $0x2c1] sm:$0xff]
    %v542 = vld [vmem:[%s421 + $0x2d1] sm:$0xff]
    %v543 = vld [vmem:[%s421 + $0x2d9] sm:$0xff]
    %v544 = vld [vmem:[%s421 + $0x2e9] sm:$0xff]
    %v545 = vld [vmem:[%s421 + $0x2f1] sm:$0xff]
    %v546 = vld [vmem:[%s421 + $0x301] sm:$0xff]
    %v547 = vld [vmem:[%s421 + $0x309] sm:$0xff]
    %v548 = vld [vmem:[%s421 + $0x319] sm:$0xff]
    %v549 = vld [vmem:[%s421 + $0x321] sm:$0xff]
    %v550 = vld [vmem:[%s421 + $0x2] sm:$0xff]
    %v551 = vld [vmem:[%s421 + $0xa] sm:$0xff]
    %v552 = vld [vmem:[%s421 + $0x1a] sm:$0xff]
    %v553 = vld [vmem:[%s421 + $0x22] sm:$0xff]
    %v554 = vld [vmem:[%s421 + $0x32] sm:$0xff]
    %v555 = vld [vmem:[%s421 + $0x3a] sm:$0xff]
    %v556 = vld [vmem:[%s421 + $0x4a] sm:$0xff]
    %v557 = vld [vmem:[%s421 + $0x52] sm:$0xff]
    %v558 = vld [vmem:[%s421 + $0x62] sm:$0xff]
    %v559 = vld [vmem:[%s421 + $0x6a] sm:$0xff]
    %v560 = vld [vmem:[%s421 + $0x7a] sm:$0xff]
    %v561 = vld [vmem:[%s421 + $0x82] sm:$0xff]
    %v562 = vld [vmem:[%s421 + $0x92] sm:$0xff]
    %v563 = vld [vmem:[%s421 + $0x9a] sm:$0xff]
    %v564 = vld [vmem:[%s421 + $0xaa] sm:$0xff]
    %v565 = vld [vmem:[%s421 + $0xb2] sm:$0xff]
    %v566 = vld [vmem:[%s421 + $0xc2] sm:$0xff]
    %v567 = vld [vmem:[%s421 + $0xca] sm:$0xff]
    %v568 = vld [vmem:[%s421 + $0xda] sm:$0xff]
    %v569 = vld [vmem:[%s421 + $0xe2] sm:$0xff]
    %v570 = vld [vmem:[%s421 + $0xf2] sm:$0xff]
    %v571 = vld [vmem:[%s421 + $0xfa] sm:$0xff]
    %v572 = vld [vmem:[%s421 + $0x10a] sm:$0xff]
    %v573 = vld [vmem:[%s421 + $0x112] sm:$0xff]
    %v574 = vld [vmem:[%s421 + $0x122] sm:$0xff]
    %v575 = vld [vmem:[%s421 + $0x12a] sm:$0xff]
    %v576 = vld [vmem:[%s421 + $0x13a] sm:$0xff]
    %v577 = vld [vmem:[%s421 + $0x142] sm:$0xff]
    %v578 = vld [vmem:[%s421 + $0x152] sm:$0xff]
    %v579 = vld [vmem:[%s421 + $0x15a] sm:$0xff]
    %v580 = vld [vmem:[%s421 + $0x16a] sm:$0xff]
    %v581 = vld [vmem:[%s421 + $0x172] sm:$0xff]
    %v582 = vld [vmem:[%s421 + $0x1b2] sm:$0xff]
    %v583 = vld [vmem:[%s421 + $0x1ba] sm:$0xff]
    %v584 = vld [vmem:[%s421 + $0x1ca] sm:$0xff]
    %v585 = vld [vmem:[%s421 + $0x1d2] sm:$0xff]
    %v586 = vld [vmem:[%s421 + $0x1e2] sm:$0xff]
    %v587 = vld [vmem:[%s421 + $0x1ea] sm:$0xff]
    %v588 = vld [vmem:[%s421 + $0x1fa] sm:$0xff]
    %v589 = vld [vmem:[%s421 + $0x202] sm:$0xff]
    %v590 = vld [vmem:[%s421 + $0x212] sm:$0xff]
    %v591 = vld [vmem:[%s421 + $0x21a] sm:$0xff]
    %v592 = vld [vmem:[%s421 + $0x22a] sm:$0xff]
    %v593 = vld [vmem:[%s421 + $0x232] sm:$0xff]
    %v594 = vld [vmem:[%s421 + $0x242] sm:$0xff]
    %v595 = vld [vmem:[%s421 + $0x24a] sm:$0xff]
    %v596 = vld [vmem:[%s421 + $0x25a] sm:$0xff]
    %v597 = vld [vmem:[%s421 + $0x262] sm:$0xff]
    %v598 = vld [vmem:[%s421 + $0x272] sm:$0xff]
    %v599 = vld [vmem:[%s421 + $0x27a] sm:$0xff]
    %v600 = vld [vmem:[%s421 + $0x28a] sm:$0xff]
    %v601 = vld [vmem:[%s421 + $0x292] sm:$0xff]
    %v602 = vld [vmem:[%s421 + $0x2a2] sm:$0xff]
    %v603 = vld [vmem:[%s421 + $0x2aa] sm:$0xff]
    %v604 = vld [vmem:[%s421 + $0x2ba] sm:$0xff]
    %v605 = vld [vmem:[%s421 + $0x2c2] sm:$0xff]
    %v606 = vld [vmem:[%s421 + $0x2d2] sm:$0xff]
    %v607 = vld [vmem:[%s421 + $0x2da] sm:$0xff]
    %v608 = vld [vmem:[%s421 + $0x2ea] sm:$0xff]
    %v609 = vld [vmem:[%s421 + $0x2f2] sm:$0xff]
    %v610 = vld [vmem:[%s421 + $0x302] sm:$0xff]
    %v611 = vld [vmem:[%s421 + $0x30a] sm:$0xff]
    %v612 = vld [vmem:[%s421 + $0x31a] sm:$0xff]
    %v613 = vld [vmem:[%s421 + $0x322] sm:$0xff]
    %678 = vrot.lane.b32.xlu0 %v100, 8
    %v679 = vpop.permute.xlu0 %678
    %680 = vrot.lane.b32.xlu0 %v101, 8
    %v681 = vpop.permute.xlu0 %680
    %682 = vrot.lane.b32.xlu0 %v102, 8
    %v683 = vpop.permute.xlu0 %682
    %684 = vrot.lane.b32.xlu0 %v103, 8
    %v685 = vpop.permute.xlu0 %684
    %686 = vrot.lane.b32.xlu0 %v104, 8
    %v687 = vpop.permute.xlu0 %686
    %688 = vrot.lane.b32.xlu0 %v105, 8
    %v689 = vpop.permute.xlu0 %688
    %690 = vrot.lane.b32.xlu0 %v106, 8
    %v691 = vpop.permute.xlu0 %690
    %692 = vrot.lane.b32.xlu0 %v107, 8
    %v693 = vpop.permute.xlu0 %692
    %694 = vrot.lane.b32.xlu0 %v108, 8
    %v695 = vpop.permute.xlu0 %694
    %696 = vrot.lane.b32.xlu0 %v109, 8
    %v697 = vpop.permute.xlu0 %696
    %698 = vrot.lane.b32.xlu0 %v110, 8
    %v699 = vpop.permute.xlu0 %698
    %700 = vrot.lane.b32.xlu0 %v111, 8
    %v701 = vpop.permute.xlu0 %700
    %702 = vrot.lane.b32.xlu0 %v112, 8
    %v703 = vpop.permute.xlu0 %702
    %704 = vrot.lane.b32.xlu0 %v113, 8
    %v705 = vpop.permute.xlu0 %704
    %706 = vrot.lane.b32.xlu0 %v114, 8
    %v707 = vpop.permute.xlu0 %706
    %708 = vrot.lane.b32.xlu0 %v115, 8
    %v709 = vpop.permute.xlu0 %708
    %710 = vrot.lane.b32.xlu0 %v116, 8
    %v711 = vpop.permute.xlu0 %710
    %712 = vrot.lane.b32.xlu0 %v117, 8
    %v713 = vpop.permute.xlu0 %712
    %714 = vrot.lane.b32.xlu0 %v118, 8
    %v715 = vpop.permute.xlu0 %714
    %716 = vrot.lane.b32.xlu0 %v119, 8
    %v717 = vpop.permute.xlu0 %716
    %718 = vrot.lane.b32.xlu0 %v120, 8
    %v719 = vpop.permute.xlu0 %718
    %720 = vrot.lane.b32.xlu0 %v121, 8
    %v721 = vpop.permute.xlu0 %720
    %722 = vrot.lane.b32.xlu0 %v122, 8
    %v723 = vpop.permute.xlu0 %722
    %724 = vrot.lane.b32.xlu0 %v123, 8
    %v725 = vpop.permute.xlu0 %724
    %726 = vrot.lane.b32.xlu0 %v124, 8
    %v727 = vpop.permute.xlu0 %726
    %728 = vrot.lane.b32.xlu0 %v125, 8
    %v729 = vpop.permute.xlu0 %728
    %730 = vrot.lane.b32.xlu0 %v126, 8
    %v731 = vpop.permute.xlu0 %730
    %732 = vrot.lane.b32.xlu0 %v127, 8
    %v733 = vpop.permute.xlu0 %732
    %734 = vrot.lane.b32.xlu0 %v128, 8
    %v735 = vpop.permute.xlu0 %734
    %736 = vrot.lane.b32.xlu0 %v129, 8
    %v737 = vpop.permute.xlu0 %736
    %738 = vrot.lane.b32.xlu0 %v130, 8
    %v739 = vpop.permute.xlu0 %738
    %740 = vrot.lane.b32.xlu0 %v131, 8
    %v741 = vpop.permute.xlu0 %740
    %742 = vrot.lane.b32.xlu0 %v132, 8
    %v743 = vpop.permute.xlu0 %742
    %744 = vrot.lane.b32.xlu0 %v133, 8
    %v745 = vpop.permute.xlu0 %744
    %746 = vrot.lane.b32.xlu0 %v134, 8
    %v747 = vpop.permute.xlu0 %746
    %748 = vrot.lane.b32.xlu0 %v135, 8
    %v749 = vpop.permute.xlu0 %748
    %750 = vrot.lane.b32.xlu0 %v136, 8
    %v751 = vpop.permute.xlu0 %750
    %752 = vrot.lane.b32.xlu0 %v137, 8
    %v753 = vpop.permute.xlu0 %752
    %754 = vrot.lane.b32.xlu0 %v138, 8
    %v755 = vpop.permute.xlu0 %754
    %756 = vrot.lane.b32.xlu0 %v139, 8
    %v757 = vpop.permute.xlu0 %756
    %758 = vrot.lane.b32.xlu0 %v140, 8
    %v759 = vpop.permute.xlu0 %758
    %760 = vrot.lane.b32.xlu0 %v141, 8
    %v761 = vpop.permute.xlu0 %760
    %762 = vrot.lane.b32.xlu0 %v142, 8
    %v763 = vpop.permute.xlu0 %762
    %764 = vrot.lane.b32.xlu0 %v143, 8
    %v765 = vpop.permute.xlu0 %764
    %766 = vrot.lane.b32.xlu0 %v144, 8
    %v767 = vpop.permute.xlu0 %766
    %768 = vrot.lane.b32.xlu0 %v145, 8
    %v769 = vpop.permute.xlu0 %768
    %770 = vrot.lane.b32.xlu0 %v146, 8
    %v771 = vpop.permute.xlu0 %770
    %772 = vrot.lane.b32.xlu0 %v147, 8
    %v773 = vpop.permute.xlu0 %772
    %774 = vrot.lane.b32.xlu0 %v148, 8
    %v775 = vpop.permute.xlu0 %774
    %776 = vrot.lane.b32.xlu0 %v149, 8
    %v777 = vpop.permute.xlu0 %776
    %778 = vrot.lane.b32.xlu0 %v150, 8
    %v779 = vpop.permute.xlu0 %778
    %780 = vrot.lane.b32.xlu0 %v151, 8
    %v781 = vpop.permute.xlu0 %780
    %782 = vrot.lane.b32.xlu0 %v152, 8
    %v783 = vpop.permute.xlu0 %782
    %784 = vrot.lane.b32.xlu0 %v153, 8
    %v785 = vpop.permute.xlu0 %784
    %786 = vrot.lane.b32.xlu0 %v154, 8
    %v787 = vpop.permute.xlu0 %786
    %788 = vrot.lane.b32.xlu0 %v155, 8
    %v789 = vpop.permute.xlu0 %788
    %790 = vrot.lane.b32.xlu0 %v156, 8
    %v791 = vpop.permute.xlu0 %790
    %792 = vrot.lane.b32.xlu0 %v157, 8
    %v793 = vpop.permute.xlu0 %792
    %794 = vrot.lane.b32.xlu0 %v158, 8
    %v795 = vpop.permute.xlu0 %794
    %796 = vrot.lane.b32.xlu0 %v159, 8
    %v797 = vpop.permute.xlu0 %796
    %798 = vrot.lane.b32.xlu0 %v160, 8
    %v799 = vpop.permute.xlu0 %798
    %800 = vrot.lane.b32.xlu0 %v161, 8
    %v801 = vpop.permute.xlu0 %800
    %802 = vrot.lane.b32.xlu0 %v162, 8
    %v803 = vpop.permute.xlu0 %802
    %804 = vrot.lane.b32.xlu0 %v163, 8
    %v805 = vpop.permute.xlu0 %804
    %934 = vrot.lane.b32.xlu0 %v164, 16
    %v935 = vpop.permute.xlu0 %934
    %936 = vrot.lane.b32.xlu0 %v165, 16
    %v937 = vpop.permute.xlu0 %936
    %938 = vrot.lane.b32.xlu0 %v166, 16
    %v939 = vpop.permute.xlu0 %938
    %940 = vrot.lane.b32.xlu0 %v167, 16
    %v941 = vpop.permute.xlu0 %940
    %942 = vrot.lane.b32.xlu0 %v168, 16
    %v943 = vpop.permute.xlu0 %942
    %944 = vrot.lane.b32.xlu0 %v169, 16
    %v945 = vpop.permute.xlu0 %944
    %946 = vrot.lane.b32.xlu0 %v170, 16
    %v947 = vpop.permute.xlu0 %946
    %948 = vrot.lane.b32.xlu0 %v171, 16
    %v949 = vpop.permute.xlu0 %948
    %950 = vrot.lane.b32.xlu0 %v172, 16
    %v951 = vpop.permute.xlu0 %950
    %952 = vrot.lane.b32.xlu0 %v173, 16
    %v953 = vpop.permute.xlu0 %952
    %954 = vrot.lane.b32.xlu0 %v174, 16
    %v955 = vpop.permute.xlu0 %954
    %956 = vrot.lane.b32.xlu0 %v175, 16
    %v957 = vpop.permute.xlu0 %956
    %958 = vrot.lane.b32.xlu0 %v176, 16
    %v959 = vpop.permute.xlu0 %958
    %960 = vrot.lane.b32.xlu0 %v177, 16
    %v961 = vpop.permute.xlu0 %960
    %962 = vrot.lane.b32.xlu0 %v178, 16
    %v963 = vpop.permute.xlu0 %962
    %964 = vrot.lane.b32.xlu0 %v179, 16
    %v965 = vpop.permute.xlu0 %964
    %966 = vrot.lane.b32.xlu0 %v180, 16
    %v967 = vpop.permute.xlu0 %966
    %968 = vrot.lane.b32.xlu0 %v181, 16
    %v969 = vpop.permute.xlu0 %968
    %970 = vrot.lane.b32.xlu0 %v182, 16
    %v971 = vpop.permute.xlu0 %970
    %972 = vrot.lane.b32.xlu0 %v183, 16
    %v973 = vpop.permute.xlu0 %972
    %974 = vrot.lane.b32.xlu0 %v184, 16
    %v975 = vpop.permute.xlu0 %974
    %976 = vrot.lane.b32.xlu0 %v185, 16
    %v977 = vpop.permute.xlu0 %976
    %978 = vrot.lane.b32.xlu0 %v186, 16
    %v979 = vpop.permute.xlu0 %978
    %980 = vrot.lane.b32.xlu0 %v187, 16
    %v981 = vpop.permute.xlu0 %980
    %982 = vrot.lane.b32.xlu0 %v188, 16
    %v983 = vpop.permute.xlu0 %982
    %984 = vrot.lane.b32.xlu0 %v189, 16
    %v985 = vpop.permute.xlu0 %984
    %986 = vrot.lane.b32.xlu0 %v190, 16
    %v987 = vpop.permute.xlu0 %986
    %988 = vrot.lane.b32.xlu0 %v191, 16
    %v989 = vpop.permute.xlu0 %988
    %990 = vrot.lane.b32.xlu0 %v192, 16
    %v991 = vpop.permute.xlu0 %990
    %992 = vrot.lane.b32.xlu0 %v193, 16
    %v993 = vpop.permute.xlu0 %992
    %994 = vrot.lane.b32.xlu0 %v194, 16
    %v995 = vpop.permute.xlu0 %994
    %996 = vrot.lane.b32.xlu0 %v195, 16
    %v997 = vpop.permute.xlu0 %996
    %998 = vrot.lane.b32.xlu0 %v196, 16
    %v999 = vpop.permute.xlu0 %998
    %1000 = vrot.lane.b32.xlu0 %v197, 16
    %v1001 = vpop.permute.xlu0 %1000
    %1002 = vrot.lane.b32.xlu0 %v198, 16
    %v1003 = vpop.permute.xlu0 %1002
    %1004 = vrot.lane.b32.xlu0 %v199, 16
    %v1005 = vpop.permute.xlu0 %1004
    %1006 = vrot.lane.b32.xlu0 %v200, 16
    %v1007 = vpop.permute.xlu0 %1006
    %1008 = vrot.lane.b32.xlu0 %v201, 16
    %v1009 = vpop.permute.xlu0 %1008
    %1010 = vrot.lane.b32.xlu0 %v202, 16
    %v1011 = vpop.permute.xlu0 %1010
    %1012 = vrot.lane.b32.xlu0 %v203, 16
    %v1013 = vpop.permute.xlu0 %1012
    %1014 = vrot.lane.b32.xlu0 %v204, 16
    %v1015 = vpop.permute.xlu0 %1014
    %1016 = vrot.lane.b32.xlu0 %v205, 16
    %v1017 = vpop.permute.xlu0 %1016
    %1018 = vrot.lane.b32.xlu0 %v206, 16
    %v1019 = vpop.permute.xlu0 %1018
    %1020 = vrot.lane.b32.xlu0 %v207, 16
    %v1021 = vpop.permute.xlu0 %1020
    %1022 = vrot.lane.b32.xlu0 %v208, 16
    %v1023 = vpop.permute.xlu0 %1022
    %1024 = vrot.lane.b32.xlu0 %v209, 16
    %v1025 = vpop.permute.xlu0 %1024
    %1026 = vrot.lane.b32.xlu0 %v210, 16
    %v1027 = vpop.permute.xlu0 %1026
    %1028 = vrot.lane.b32.xlu0 %v211, 16
    %v1029 = vpop.permute.xlu0 %1028
    %1030 = vrot.lane.b32.xlu0 %v212, 16
    %v1031 = vpop.permute.xlu0 %1030
    %1032 = vrot.lane.b32.xlu0 %v213, 16
    %v1033 = vpop.permute.xlu0 %1032
    %1034 = vrot.lane.b32.xlu0 %v214, 16
    %v1035 = vpop.permute.xlu0 %1034
    %1036 = vrot.lane.b32.xlu0 %v215, 16
    %v1037 = vpop.permute.xlu0 %1036
    %1038 = vrot.lane.b32.xlu0 %v216, 16
    %v1039 = vpop.permute.xlu0 %1038
    %1040 = vrot.lane.b32.xlu0 %v217, 16
    %v1041 = vpop.permute.xlu0 %1040
    %1042 = vrot.lane.b32.xlu0 %v218, 16
    %v1043 = vpop.permute.xlu0 %1042
    %1044 = vrot.lane.b32.xlu0 %v219, 16
    %v1045 = vpop.permute.xlu0 %1044
    %1046 = vrot.lane.b32.xlu0 %v220, 16
    %v1047 = vpop.permute.xlu0 %1046
    %1048 = vrot.lane.b32.xlu0 %v221, 16
    %v1049 = vpop.permute.xlu0 %1048
    %1050 = vrot.lane.b32.xlu0 %v222, 16
    %v1051 = vpop.permute.xlu0 %1050
    %1052 = vrot.lane.b32.xlu0 %v223, 16
    %v1053 = vpop.permute.xlu0 %1052
    %1054 = vrot.lane.b32.xlu0 %v224, 16
    %v1055 = vpop.permute.xlu0 %1054
    %1056 = vrot.lane.b32.xlu0 %v225, 16
    %v1057 = vpop.permute.xlu0 %1056
    %1058 = vrot.lane.b32.xlu0 %v226, 16
    %v1059 = vpop.permute.xlu0 %1058
    %1060 = vrot.lane.b32.xlu0 %v227, 16
    %v1061 = vpop.permute.xlu0 %1060
    %1190 = vrot.lane.b32.xlu0 %v229, 24
    %v1191 = vpop.permute.xlu0 %1190
    %1192 = vrot.lane.b32.xlu0 %v230, 24
    %v1193 = vpop.permute.xlu0 %1192
    %1194 = vrot.lane.b32.xlu0 %v231, 24
    %v1195 = vpop.permute.xlu0 %1194
    %1196 = vrot.lane.b32.xlu0 %v232, 24
    %v1197 = vpop.permute.xlu0 %1196
    %1198 = vrot.lane.b32.xlu0 %v233, 24
    %v1199 = vpop.permute.xlu0 %1198
    %1200 = vrot.lane.b32.xlu0 %v234, 24
    %v1201 = vpop.permute.xlu0 %1200
    %1202 = vrot.lane.b32.xlu0 %v235, 24
    %v1203 = vpop.permute.xlu0 %1202
    %1204 = vrot.lane.b32.xlu0 %v236, 24
    %v1205 = vpop.permute.xlu0 %1204
    %1206 = vrot.lane.b32.xlu0 %v237, 24
    %v1207 = vpop.permute.xlu0 %1206
    %1208 = vrot.lane.b32.xlu0 %v238, 24
    %v1209 = vpop.permute.xlu0 %1208
    %1210 = vrot.lane.b32.xlu0 %v239, 24
    %v1211 = vpop.permute.xlu0 %1210
    %1212 = vrot.lane.b32.xlu0 %v240, 24
    %v1213 = vpop.permute.xlu0 %1212
    %1214 = vrot.lane.b32.xlu0 %v241, 24
    %v1215 = vpop.permute.xlu0 %1214
    %1216 = vrot.lane.b32.xlu0 %v242, 24
    %v1217 = vpop.permute.xlu0 %1216
    %1218 = vrot.lane.b32.xlu0 %v243, 24
    %v1219 = vpop.permute.xlu0 %1218
    %1220 = vrot.lane.b32.xlu0 %v244, 24
    %v1221 = vpop.permute.xlu0 %1220
    %1222 = vrot.lane.b32.xlu0 %v245, 24
    %v1223 = vpop.permute.xlu0 %1222
    %1224 = vrot.lane.b32.xlu0 %v246, 24
    %v1225 = vpop.permute.xlu0 %1224
    %1226 = vrot.lane.b32.xlu0 %v247, 24
    %v1227 = vpop.permute.xlu0 %1226
    %1228 = vrot.lane.b32.xlu0 %v248, 24
    %v1229 = vpop.permute.xlu0 %1228
    %1230 = vrot.lane.b32.xlu0 %v249, 24
    %v1231 = vpop.permute.xlu0 %1230
    %1232 = vrot.lane.b32.xlu0 %v250, 24
    %v1233 = vpop.permute.xlu0 %1232
    %1234 = vrot.lane.b32.xlu0 %v251, 24
    %v1235 = vpop.permute.xlu0 %1234
    %1236 = vrot.lane.b32.xlu0 %v252, 24
    %v1237 = vpop.permute.xlu0 %1236
    %1238 = vrot.lane.b32.xlu0 %v253, 24
    %v1239 = vpop.permute.xlu0 %1238
    %1240 = vrot.lane.b32.xlu0 %v254, 24
    %v1241 = vpop.permute.xlu0 %1240
    %1242 = vrot.lane.b32.xlu0 %v255, 24
    %v1243 = vpop.permute.xlu0 %1242
    %1244 = vrot.lane.b32.xlu0 %v256, 24
    %v1245 = vpop.permute.xlu0 %1244
    %1246 = vrot.lane.b32.xlu0 %v257, 24
    %v1247 = vpop.permute.xlu0 %1246
    %1248 = vrot.lane.b32.xlu0 %v258, 24
    %v1249 = vpop.permute.xlu0 %1248
    %1250 = vrot.lane.b32.xlu0 %v259, 24
    %v1251 = vpop.permute.xlu0 %1250
    %1252 = vrot.lane.b32.xlu0 %v260, 24
    %v1253 = vpop.permute.xlu0 %1252
    %1254 = vrot.lane.b32.xlu0 %v261, 24
    %v1255 = vpop.permute.xlu0 %1254
    %1256 = vrot.lane.b32.xlu0 %v262, 24
    %v1257 = vpop.permute.xlu0 %1256
    %1258 = vrot.lane.b32.xlu0 %v263, 24
    %v1259 = vpop.permute.xlu0 %1258
    %1260 = vrot.lane.b32.xlu0 %v264, 24
    %v1261 = vpop.permute.xlu0 %1260
    %1262 = vrot.lane.b32.xlu0 %v265, 24
    %v1263 = vpop.permute.xlu0 %1262
    %1264 = vrot.lane.b32.xlu0 %v266, 24
    %v1265 = vpop.permute.xlu0 %1264
    %1266 = vrot.lane.b32.xlu0 %v267, 24
    %v1267 = vpop.permute.xlu0 %1266
    %1268 = vrot.lane.b32.xlu0 %v268, 24
    %v1269 = vpop.permute.xlu0 %1268
    %1270 = vrot.lane.b32.xlu0 %v269, 24
    %v1271 = vpop.permute.xlu0 %1270
    %1272 = vrot.lane.b32.xlu0 %v270, 24
    %v1273 = vpop.permute.xlu0 %1272
    %1274 = vrot.lane.b32.xlu0 %v271, 24
    %v1275 = vpop.permute.xlu0 %1274
    %1276 = vrot.lane.b32.xlu0 %v272, 24
    %v1277 = vpop.permute.xlu0 %1276
    %1278 = vrot.lane.b32.xlu0 %v273, 24
    %v1279 = vpop.permute.xlu0 %1278
    %1280 = vrot.lane.b32.xlu0 %v274, 24
    %v1281 = vpop.permute.xlu0 %1280
    %1282 = vrot.lane.b32.xlu0 %v275, 24
    %v1283 = vpop.permute.xlu0 %1282
    %1284 = vrot.lane.b32.xlu0 %v276, 24
    %v1285 = vpop.permute.xlu0 %1284
    %1286 = vrot.lane.b32.xlu0 %v277, 24
    %v1287 = vpop.permute.xlu0 %1286
    %1288 = vrot.lane.b32.xlu0 %v278, 24
    %v1289 = vpop.permute.xlu0 %1288
    %1290 = vrot.lane.b32.xlu0 %v279, 24
    %v1291 = vpop.permute.xlu0 %1290
    %1292 = vrot.lane.b32.xlu0 %v280, 24
    %v1293 = vpop.permute.xlu0 %1292
    %1294 = vrot.lane.b32.xlu0 %v281, 24
    %v1295 = vpop.permute.xlu0 %1294
    %1296 = vrot.lane.b32.xlu0 %v282, 24
    %v1297 = vpop.permute.xlu0 %1296
    %1298 = vrot.lane.b32.xlu0 %v283, 24
    %v1299 = vpop.permute.xlu0 %1298
    %1300 = vrot.lane.b32.xlu0 %v284, 24
    %v1301 = vpop.permute.xlu0 %1300
    %1302 = vrot.lane.b32.xlu0 %v285, 24
    %v1303 = vpop.permute.xlu0 %1302
    %1304 = vrot.lane.b32.xlu0 %v286, 24
    %v1305 = vpop.permute.xlu0 %1304
    %1306 = vrot.lane.b32.xlu0 %v287, 24
    %v1307 = vpop.permute.xlu0 %1306
    %1308 = vrot.lane.b32.xlu0 %v288, 24
    %v1309 = vpop.permute.xlu0 %1308
    %1310 = vrot.lane.b32.xlu0 %v289, 24
    %v1311 = vpop.permute.xlu0 %1310
    %1312 = vrot.lane.b32.xlu0 %v290, 24
    %v1313 = vpop.permute.xlu0 %1312
    %1314 = vrot.lane.b32.xlu0 %v291, 24
    %v1315 = vpop.permute.xlu0 %1314
    %1316 = vrot.lane.b32.xlu0 %v292, 24
    %v1317 = vpop.permute.xlu0 %1316
    %1446 = vrot.lane.b32.xlu0 %v293, 32
    %v1447 = vpop.permute.xlu0 %1446
    %1448 = vrot.lane.b32.xlu0 %v294, 32
    %v1449 = vpop.permute.xlu0 %1448
    %1450 = vrot.lane.b32.xlu0 %v295, 32
    %v1451 = vpop.permute.xlu0 %1450
    %1452 = vrot.lane.b32.xlu0 %v296, 32
    %v1453 = vpop.permute.xlu0 %1452
    %1454 = vrot.lane.b32.xlu0 %v297, 32
    %v1455 = vpop.permute.xlu0 %1454
    %1456 = vrot.lane.b32.xlu0 %v298, 32
    %v1457 = vpop.permute.xlu0 %1456
    %1458 = vrot.lane.b32.xlu0 %v299, 32
    %v1459 = vpop.permute.xlu0 %1458
    %1460 = vrot.lane.b32.xlu0 %v300, 32
    %v1461 = vpop.permute.xlu0 %1460
    %1462 = vrot.lane.b32.xlu0 %v301, 32
    %v1463 = vpop.permute.xlu0 %1462
    %1464 = vrot.lane.b32.xlu0 %v302, 32
    %v1465 = vpop.permute.xlu0 %1464
    %1466 = vrot.lane.b32.xlu0 %v303, 32
    %v1467 = vpop.permute.xlu0 %1466
    %1468 = vrot.lane.b32.xlu0 %v304, 32
    %v1469 = vpop.permute.xlu0 %1468
    %1470 = vrot.lane.b32.xlu0 %v305, 32
    %v1471 = vpop.permute.xlu0 %1470
    %1472 = vrot.lane.b32.xlu0 %v306, 32
    %v1473 = vpop.permute.xlu0 %1472
    %1474 = vrot.lane.b32.xlu0 %v307, 32
    %v1475 = vpop.permute.xlu0 %1474
    %1476 = vrot.lane.b32.xlu0 %v308, 32
    %v1477 = vpop.permute.xlu0 %1476
    %1478 = vrot.lane.b32.xlu0 %v309, 32
    %v1479 = vpop.permute.xlu0 %1478
    %1480 = vrot.lane.b32.xlu0 %v310, 32
    %v1481 = vpop.permute.xlu0 %1480
    %1482 = vrot.lane.b32.xlu0 %v311, 32
    %v1483 = vpop.permute.xlu0 %1482
    %1484 = vrot.lane.b32.xlu0 %v312, 32
    %v1485 = vpop.permute.xlu0 %1484
    %1486 = vrot.lane.b32.xlu0 %v313, 32
    %v1487 = vpop.permute.xlu0 %1486
    %1488 = vrot.lane.b32.xlu0 %v314, 32
    %v1489 = vpop.permute.xlu0 %1488
    %1490 = vrot.lane.b32.xlu0 %v315, 32
    %v1491 = vpop.permute.xlu0 %1490
    %1492 = vrot.lane.b32.xlu0 %v316, 32
    %v1493 = vpop.permute.xlu0 %1492
    %1494 = vrot.lane.b32.xlu0 %v317, 32
    %v1495 = vpop.permute.xlu0 %1494
    %1496 = vrot.lane.b32.xlu0 %v318, 32
    %v1497 = vpop.permute.xlu0 %1496
    %1498 = vrot.lane.b32.xlu0 %v319, 32
    %v1499 = vpop.permute.xlu0 %1498
    %1500 = vrot.lane.b32.xlu0 %v320, 32
    %v1501 = vpop.permute.xlu0 %1500
    %1502 = vrot.lane.b32.xlu0 %v321, 32
    %v1503 = vpop.permute.xlu0 %1502
    %1504 = vrot.lane.b32.xlu0 %v322, 32
    %v1505 = vpop.permute.xlu0 %1504
    %1506 = vrot.lane.b32.xlu0 %v323, 32
    %v1507 = vpop.permute.xlu0 %1506
    %1508 = vrot.lane.b32.xlu0 %v324, 32
    %v1509 = vpop.permute.xlu0 %1508
    %1510 = vrot.lane.b32.xlu0 %v325, 32
    %v1511 = vpop.permute.xlu0 %1510
    %1512 = vrot.lane.b32.xlu0 %v326, 32
    %v1513 = vpop.permute.xlu0 %1512
    %1514 = vrot.lane.b32.xlu0 %v327, 32
    %v1515 = vpop.permute.xlu0 %1514
    %1516 = vrot.lane.b32.xlu0 %v328, 32
    %v1517 = vpop.permute.xlu0 %1516
    %1518 = vrot.lane.b32.xlu0 %v329, 32
    %v1519 = vpop.permute.xlu0 %1518
    %1520 = vrot.lane.b32.xlu0 %v330, 32
    %v1521 = vpop.permute.xlu0 %1520
    %1522 = vrot.lane.b32.xlu0 %v331, 32
    %v1523 = vpop.permute.xlu0 %1522
    %1524 = vrot.lane.b32.xlu0 %v332, 32
    %v1525 = vpop.permute.xlu0 %1524
    %1526 = vrot.lane.b32.xlu0 %v333, 32
    %v1527 = vpop.permute.xlu0 %1526
    %1528 = vrot.lane.b32.xlu0 %v334, 32
    %v1529 = vpop.permute.xlu0 %1528
    %1530 = vrot.lane.b32.xlu0 %v335, 32
    %v1531 = vpop.permute.xlu0 %1530
    %1532 = vrot.lane.b32.xlu0 %v336, 32
    %v1533 = vpop.permute.xlu0 %1532
    %1534 = vrot.lane.b32.xlu0 %v337, 32
    %v1535 = vpop.permute.xlu0 %1534
    %1536 = vrot.lane.b32.xlu0 %v338, 32
    %v1537 = vpop.permute.xlu0 %1536
    %1538 = vrot.lane.b32.xlu0 %v339, 32
    %v1539 = vpop.permute.xlu0 %1538
    %1540 = vrot.lane.b32.xlu0 %v340, 32
    %v1541 = vpop.permute.xlu0 %1540
    %1542 = vrot.lane.b32.xlu0 %v341, 32
    %v1543 = vpop.permute.xlu0 %1542
    %1544 = vrot.lane.b32.xlu0 %v342, 32
    %v1545 = vpop.permute.xlu0 %1544
    %1546 = vrot.lane.b32.xlu0 %v343, 32
    %v1547 = vpop.permute.xlu0 %1546
    %1548 = vrot.lane.b32.xlu0 %v344, 32
    %v1549 = vpop.permute.xlu0 %1548
    %1550 = vrot.lane.b32.xlu0 %v345, 32
    %v1551 = vpop.permute.xlu0 %1550
    %1552 = vrot.lane.b32.xlu0 %v346, 32
    %v1553 = vpop.permute.xlu0 %1552
    %1554 = vrot.lane.b32.xlu0 %v347, 32
    %v1555 = vpop.permute.xlu0 %1554
    %1556 = vrot.lane.b32.xlu0 %v348, 32
    %v1557 = vpop.permute.xlu0 %1556
    %1558 = vrot.lane.b32.xlu0 %v349, 32
    %v1559 = vpop.permute.xlu0 %1558
    %1560 = vrot.lane.b32.xlu0 %v350, 32
    %v1561 = vpop.permute.xlu0 %1560
    %1562 = vrot.lane.b32.xlu0 %v351, 32
    %v1563 = vpop.permute.xlu0 %1562
    %1564 = vrot.lane.b32.xlu0 %v352, 32
    %v1565 = vpop.permute.xlu0 %1564
    %1566 = vrot.lane.b32.xlu0 %v353, 32
    %v1567 = vpop.permute.xlu0 %1566
    %1568 = vrot.lane.b32.xlu0 %v354, 32
    %v1569 = vpop.permute.xlu0 %1568
    %1570 = vrot.lane.b32.xlu0 %v355, 32
    %v1571 = vpop.permute.xlu0 %1570
    %1572 = vrot.lane.b32.xlu0 %v356, 32
    %v1573 = vpop.permute.xlu0 %1572
    %1702 = vrot.lane.b32.xlu0 %v357, 40
    %v1703 = vpop.permute.xlu0 %1702
    %1704 = vrot.lane.b32.xlu0 %v358, 40
    %v1705 = vpop.permute.xlu0 %1704
    %1706 = vrot.lane.b32.xlu0 %v359, 40
    %v1707 = vpop.permute.xlu0 %1706
    %1708 = vrot.lane.b32.xlu0 %v360, 40
    %v1709 = vpop.permute.xlu0 %1708
    %1710 = vrot.lane.b32.xlu0 %v361, 40
    %v1711 = vpop.permute.xlu0 %1710
    %1712 = vrot.lane.b32.xlu0 %v362, 40
    %v1713 = vpop.permute.xlu0 %1712
    %1714 = vrot.lane.b32.xlu0 %v363, 40
    %v1715 = vpop.permute.xlu0 %1714
    %1716 = vrot.lane.b32.xlu0 %v364, 40
    %v1717 = vpop.permute.xlu0 %1716
    %1718 = vrot.lane.b32.xlu0 %v365, 40
    %v1719 = vpop.permute.xlu0 %1718
    %1720 = vrot.lane.b32.xlu0 %v366, 40
    %v1721 = vpop.permute.xlu0 %1720
    %1722 = vrot.lane.b32.xlu0 %v367, 40
    %v1723 = vpop.permute.xlu0 %1722
    %1724 = vrot.lane.b32.xlu0 %v368, 40
    %v1725 = vpop.permute.xlu0 %1724
    %1726 = vrot.lane.b32.xlu0 %v369, 40
    %v1727 = vpop.permute.xlu0 %1726
    %1728 = vrot.lane.b32.xlu0 %v370, 40
    %v1729 = vpop.permute.xlu0 %1728
    %1730 = vrot.lane.b32.xlu0 %v371, 40
    %v1731 = vpop.permute.xlu0 %1730
    %1732 = vrot.lane.b32.xlu0 %v372, 40
    %v1733 = vpop.permute.xlu0 %1732
    %1734 = vrot.lane.b32.xlu0 %v373, 40
    %v1735 = vpop.permute.xlu0 %1734
    %1736 = vrot.lane.b32.xlu0 %v374, 40
    %v1737 = vpop.permute.xlu0 %1736
    %1738 = vrot.lane.b32.xlu0 %v375, 40
    %v1739 = vpop.permute.xlu0 %1738
    %1740 = vrot.lane.b32.xlu0 %v376, 40
    %v1741 = vpop.permute.xlu0 %1740
    %1742 = vrot.lane.b32.xlu0 %v377, 40
    %v1743 = vpop.permute.xlu0 %1742
    %1744 = vrot.lane.b32.xlu0 %v378, 40
    %v1745 = vpop.permute.xlu0 %1744
    %1746 = vrot.lane.b32.xlu0 %v379, 40
    %v1747 = vpop.permute.xlu0 %1746
    %1748 = vrot.lane.b32.xlu0 %v380, 40
    %v1749 = vpop.permute.xlu0 %1748
    %1750 = vrot.lane.b32.xlu0 %v381, 40
    %v1751 = vpop.permute.xlu0 %1750
    %1752 = vrot.lane.b32.xlu0 %v382, 40
    %v1753 = vpop.permute.xlu0 %1752
    %1754 = vrot.lane.b32.xlu0 %v383, 40
    %v1755 = vpop.permute.xlu0 %1754
    %1756 = vrot.lane.b32.xlu0 %v384, 40
    %v1757 = vpop.permute.xlu0 %1756
    %1758 = vrot.lane.b32.xlu0 %v385, 40
    %v1759 = vpop.permute.xlu0 %1758
    %1760 = vrot.lane.b32.xlu0 %v386, 40
    %v1761 = vpop.permute.xlu0 %1760
    %1762 = vrot.lane.b32.xlu0 %v387, 40
    %v1763 = vpop.permute.xlu0 %1762
    %1764 = vrot.lane.b32.xlu0 %v388, 40
    %v1765 = vpop.permute.xlu0 %1764
    %1766 = vrot.lane.b32.xlu0 %v389, 40
    %v1767 = vpop.permute.xlu0 %1766
    %1768 = vrot.lane.b32.xlu0 %v390, 40
    %v1769 = vpop.permute.xlu0 %1768
    %1770 = vrot.lane.b32.xlu0 %v391, 40
    %v1771 = vpop.permute.xlu0 %1770
    %1772 = vrot.lane.b32.xlu0 %v392, 40
    %v1773 = vpop.permute.xlu0 %1772
    %1774 = vrot.lane.b32.xlu0 %v393, 40
    %v1775 = vpop.permute.xlu0 %1774
    %1776 = vrot.lane.b32.xlu0 %v394, 40
    %v1777 = vpop.permute.xlu0 %1776
    %1778 = vrot.lane.b32.xlu0 %v395, 40
    %v1779 = vpop.permute.xlu0 %1778
    %1780 = vrot.lane.b32.xlu0 %v396, 40
    %v1781 = vpop.permute.xlu0 %1780
    %1782 = vrot.lane.b32.xlu0 %v397, 40
    %v1783 = vpop.permute.xlu0 %1782
    %1784 = vrot.lane.b32.xlu0 %v398, 40
    %v1785 = vpop.permute.xlu0 %1784
    %1786 = vrot.lane.b32.xlu0 %v399, 40
    %v1787 = vpop.permute.xlu0 %1786
    %1788 = vrot.lane.b32.xlu0 %v400, 40
    %v1789 = vpop.permute.xlu0 %1788
    %1790 = vrot.lane.b32.xlu0 %v401, 40
    %v1791 = vpop.permute.xlu0 %1790
    %1792 = vrot.lane.b32.xlu0 %v402, 40
    %v1793 = vpop.permute.xlu0 %1792
    %1794 = vrot.lane.b32.xlu0 %v403, 40
    %v1795 = vpop.permute.xlu0 %1794
    %1796 = vrot.lane.b32.xlu0 %v404, 40
    %v1797 = vpop.permute.xlu0 %1796
    %1798 = vrot.lane.b32.xlu0 %v405, 40
    %v1799 = vpop.permute.xlu0 %1798
    %1800 = vrot.lane.b32.xlu0 %v406, 40
    %v1801 = vpop.permute.xlu0 %1800
    %1802 = vrot.lane.b32.xlu0 %v407, 40
    %v1803 = vpop.permute.xlu0 %1802
    %1804 = vrot.lane.b32.xlu0 %v408, 40
    %v1805 = vpop.permute.xlu0 %1804
    %1806 = vrot.lane.b32.xlu0 %v409, 40
    %v1807 = vpop.permute.xlu0 %1806
    %1808 = vrot.lane.b32.xlu0 %v410, 40
    %v1809 = vpop.permute.xlu0 %1808
    %1810 = vrot.lane.b32.xlu0 %v411, 40
    %v1811 = vpop.permute.xlu0 %1810
    %1812 = vrot.lane.b32.xlu0 %v412, 40
    %v1813 = vpop.permute.xlu0 %1812
    %1814 = vrot.lane.b32.xlu0 %v413, 40
    %v1815 = vpop.permute.xlu0 %1814
    %1816 = vrot.lane.b32.xlu0 %v414, 40
    %v1817 = vpop.permute.xlu0 %1816
    %1818 = vrot.lane.b32.xlu0 %v415, 40
    %v1819 = vpop.permute.xlu0 %1818
    %1820 = vrot.lane.b32.xlu0 %v416, 40
    %v1821 = vpop.permute.xlu0 %1820
    %1822 = vrot.lane.b32.xlu0 %v417, 40
    %v1823 = vpop.permute.xlu0 %1822
    %1824 = vrot.lane.b32.xlu0 %v418, 40
    %v1825 = vpop.permute.xlu0 %1824
    %1826 = vrot.lane.b32.xlu0 %v419, 40
    %v1827 = vpop.permute.xlu0 %1826
    %1828 = vrot.lane.b32.xlu0 %v420, 40
    %v1829 = vpop.permute.xlu0 %1828
    %1958 = vrot.lane.b32.xlu0 %v422, 48
    %v1959 = vpop.permute.xlu0 %1958
    %1960 = vrot.lane.b32.xlu0 %v423, 48
    %v1961 = vpop.permute.xlu0 %1960
    %1962 = vrot.lane.b32.xlu0 %v424, 48
    %v1963 = vpop.permute.xlu0 %1962
    %1964 = vrot.lane.b32.xlu0 %v425, 48
    %v1965 = vpop.permute.xlu0 %1964
    %1966 = vrot.lane.b32.xlu0 %v426, 48
    %v1967 = vpop.permute.xlu0 %1966
    %1968 = vrot.lane.b32.xlu0 %v427, 48
    %v1969 = vpop.permute.xlu0 %1968
    %1970 = vrot.lane.b32.xlu0 %v428, 48
    %v1971 = vpop.permute.xlu0 %1970
    %1972 = vrot.lane.b32.xlu0 %v429, 48
    %v1973 = vpop.permute.xlu0 %1972
    %1974 = vrot.lane.b32.xlu0 %v430, 48
    %v1975 = vpop.permute.xlu0 %1974
    %1976 = vrot.lane.b32.xlu0 %v431, 48
    %v1977 = vpop.permute.xlu0 %1976
    %1978 = vrot.lane.b32.xlu0 %v432, 48
    %v1979 = vpop.permute.xlu0 %1978
    %1980 = vrot.lane.b32.xlu0 %v433, 48
    %v1981 = vpop.permute.xlu0 %1980
    %1982 = vrot.lane.b32.xlu0 %v434, 48
    %v1983 = vpop.permute.xlu0 %1982
    %1984 = vrot.lane.b32.xlu0 %v435, 48
    %v1985 = vpop.permute.xlu0 %1984
    %1986 = vrot.lane.b32.xlu0 %v436, 48
    %v1987 = vpop.permute.xlu0 %1986
    %1988 = vrot.lane.b32.xlu0 %v437, 48
    %v1989 = vpop.permute.xlu0 %1988
    %1990 = vrot.lane.b32.xlu0 %v438, 48
    %v1991 = vpop.permute.xlu0 %1990
    %1992 = vrot.lane.b32.xlu0 %v439, 48
    %v1993 = vpop.permute.xlu0 %1992
    %1994 = vrot.lane.b32.xlu0 %v440, 48
    %v1995 = vpop.permute.xlu0 %1994
    %1996 = vrot.lane.b32.xlu0 %v441, 48
    %v1997 = vpop.permute.xlu0 %1996
    %1998 = vrot.lane.b32.xlu0 %v442, 48
    %v1999 = vpop.permute.xlu0 %1998
    %2000 = vrot.lane.b32.xlu0 %v443, 48
    %v2001 = vpop.permute.xlu0 %2000
    %2002 = vrot.lane.b32.xlu0 %v444, 48
    %v2003 = vpop.permute.xlu0 %2002
    %2004 = vrot.lane.b32.xlu0 %v445, 48
    %v2005 = vpop.permute.xlu0 %2004
    %2006 = vrot.lane.b32.xlu0 %v446, 48
    %v2007 = vpop.permute.xlu0 %2006
    %2008 = vrot.lane.b32.xlu0 %v447, 48
    %v2009 = vpop.permute.xlu0 %2008
    %2010 = vrot.lane.b32.xlu0 %v448, 48
    %v2011 = vpop.permute.xlu0 %2010
    %2012 = vrot.lane.b32.xlu0 %v449, 48
    %v2013 = vpop.permute.xlu0 %2012
    %2014 = vrot.lane.b32.xlu0 %v450, 48
    %v2015 = vpop.permute.xlu0 %2014
    %2016 = vrot.lane.b32.xlu0 %v451, 48
    %v2017 = vpop.permute.xlu0 %2016
    %2018 = vrot.lane.b32.xlu0 %v452, 48
    %v2019 = vpop.permute.xlu0 %2018
    %2020 = vrot.lane.b32.xlu0 %v453, 48
    %v2021 = vpop.permute.xlu0 %2020
    %2022 = vrot.lane.b32.xlu0 %v454, 48
    %v2023 = vpop.permute.xlu0 %2022
    %2024 = vrot.lane.b32.xlu0 %v455, 48
    %v2025 = vpop.permute.xlu0 %2024
    %2026 = vrot.lane.b32.xlu0 %v456, 48
    %v2027 = vpop.permute.xlu0 %2026
    %2028 = vrot.lane.b32.xlu0 %v457, 48
    %v2029 = vpop.permute.xlu0 %2028
    %2030 = vrot.lane.b32.xlu0 %v458, 48
    %v2031 = vpop.permute.xlu0 %2030
    %2032 = vrot.lane.b32.xlu0 %v459, 48
    %v2033 = vpop.permute.xlu0 %2032
    %2034 = vrot.lane.b32.xlu0 %v460, 48
    %v2035 = vpop.permute.xlu0 %2034
    %2036 = vrot.lane.b32.xlu0 %v461, 48
    %v2037 = vpop.permute.xlu0 %2036
    %2038 = vrot.lane.b32.xlu0 %v462, 48
    %v2039 = vpop.permute.xlu0 %2038
    %2040 = vrot.lane.b32.xlu0 %v463, 48
    %v2041 = vpop.permute.xlu0 %2040
    %2042 = vrot.lane.b32.xlu0 %v464, 48
    %v2043 = vpop.permute.xlu0 %2042
    %2044 = vrot.lane.b32.xlu0 %v465, 48
    %v2045 = vpop.permute.xlu0 %2044
    %2046 = vrot.lane.b32.xlu0 %v466, 48
    %v2047 = vpop.permute.xlu0 %2046
    %2048 = vrot.lane.b32.xlu0 %v467, 48
    %v2049 = vpop.permute.xlu0 %2048
    %2050 = vrot.lane.b32.xlu0 %v468, 48
    %v2051 = vpop.permute.xlu0 %2050
    %2052 = vrot.lane.b32.xlu0 %v469, 48
    %v2053 = vpop.permute.xlu0 %2052
    %2054 = vrot.lane.b32.xlu0 %v470, 48
    %v2055 = vpop.permute.xlu0 %2054
    %2056 = vrot.lane.b32.xlu0 %v471, 48
    %v2057 = vpop.permute.xlu0 %2056
    %2058 = vrot.lane.b32.xlu0 %v472, 48
    %v2059 = vpop.permute.xlu0 %2058
    %2060 = vrot.lane.b32.xlu0 %v473, 48
    %v2061 = vpop.permute.xlu0 %2060
    %2062 = vrot.lane.b32.xlu0 %v474, 48
    %v2063 = vpop.permute.xlu0 %2062
    %2064 = vrot.lane.b32.xlu0 %v475, 48
    %v2065 = vpop.permute.xlu0 %2064
    %2066 = vrot.lane.b32.xlu0 %v476, 48
    %v2067 = vpop.permute.xlu0 %2066
    %2068 = vrot.lane.b32.xlu0 %v477, 48
    %v2069 = vpop.permute.xlu0 %2068
    %2070 = vrot.lane.b32.xlu0 %v478, 48
    %v2071 = vpop.permute.xlu0 %2070
    %2072 = vrot.lane.b32.xlu0 %v479, 48
    %v2073 = vpop.permute.xlu0 %2072
    %2074 = vrot.lane.b32.xlu0 %v480, 48
    %v2075 = vpop.permute.xlu0 %2074
    %2076 = vrot.lane.b32.xlu0 %v481, 48
    %v2077 = vpop.permute.xlu0 %2076
    %2078 = vrot.lane.b32.xlu0 %v482, 48
    %v2079 = vpop.permute.xlu0 %2078
    %2080 = vrot.lane.b32.xlu0 %v483, 48
    %v2081 = vpop.permute.xlu0 %2080
    %2082 = vrot.lane.b32.xlu0 %v484, 48
    %v2083 = vpop.permute.xlu0 %2082
    %2084 = vrot.lane.b32.xlu0 %v485, 48
    %v2085 = vpop.permute.xlu0 %2084
    %2214 = vrot.lane.b32.xlu0 %v486, 56
    %v2215 = vpop.permute.xlu0 %2214
    %2216 = vrot.lane.b32.xlu0 %v487, 56
    %v2217 = vpop.permute.xlu0 %2216
    %2218 = vrot.lane.b32.xlu0 %v488, 56
    %v2219 = vpop.permute.xlu0 %2218
    %2220 = vrot.lane.b32.xlu0 %v489, 56
    %v2221 = vpop.permute.xlu0 %2220
    %2222 = vrot.lane.b32.xlu0 %v490, 56
    %v2223 = vpop.permute.xlu0 %2222
    %2224 = vrot.lane.b32.xlu0 %v491, 56
    %v2225 = vpop.permute.xlu0 %2224
    %2226 = vrot.lane.b32.xlu0 %v492, 56
    %v2227 = vpop.permute.xlu0 %2226
    %2228 = vrot.lane.b32.xlu0 %v493, 56
    %v2229 = vpop.permute.xlu0 %2228
    %2230 = vrot.lane.b32.xlu0 %v494, 56
    %v2231 = vpop.permute.xlu0 %2230
    %2232 = vrot.lane.b32.xlu0 %v495, 56
    %v2233 = vpop.permute.xlu0 %2232
    %2234 = vrot.lane.b32.xlu0 %v496, 56
    %v2235 = vpop.permute.xlu0 %2234
    %2236 = vrot.lane.b32.xlu0 %v497, 56
    %v2237 = vpop.permute.xlu0 %2236
    %2238 = vrot.lane.b32.xlu0 %v498, 56
    %v2239 = vpop.permute.xlu0 %2238
    %2240 = vrot.lane.b32.xlu0 %v499, 56
    %v2241 = vpop.permute.xlu0 %2240
    %2242 = vrot.lane.b32.xlu0 %v500, 56
    %v2243 = vpop.permute.xlu0 %2242
    %2244 = vrot.lane.b32.xlu0 %v501, 56
    %v2245 = vpop.permute.xlu0 %2244
    %2246 = vrot.lane.b32.xlu0 %v502, 56
    %v2247 = vpop.permute.xlu0 %2246
    %2248 = vrot.lane.b32.xlu0 %v503, 56
    %v2249 = vpop.permute.xlu0 %2248
    %2250 = vrot.lane.b32.xlu0 %v504, 56
    %v2251 = vpop.permute.xlu0 %2250
    %2252 = vrot.lane.b32.xlu0 %v505, 56
    %v2253 = vpop.permute.xlu0 %2252
    %2254 = vrot.lane.b32.xlu0 %v506, 56
    %v2255 = vpop.permute.xlu0 %2254
    %2256 = vrot.lane.b32.xlu0 %v507, 56
    %v2257 = vpop.permute.xlu0 %2256
    %2258 = vrot.lane.b32.xlu0 %v508, 56
    %v2259 = vpop.permute.xlu0 %2258
    %2260 = vrot.lane.b32.xlu0 %v509, 56
    %v2261 = vpop.permute.xlu0 %2260
    %2262 = vrot.lane.b32.xlu0 %v510, 56
    %v2263 = vpop.permute.xlu0 %2262
    %2264 = vrot.lane.b32.xlu0 %v511, 56
    %v2265 = vpop.permute.xlu0 %2264
    %2266 = vrot.lane.b32.xlu0 %v512, 56
    %v2267 = vpop.permute.xlu0 %2266
    %2268 = vrot.lane.b32.xlu0 %v513, 56
    %v2269 = vpop.permute.xlu0 %2268
    %2270 = vrot.lane.b32.xlu0 %v514, 56
    %v2271 = vpop.permute.xlu0 %2270
    %2272 = vrot.lane.b32.xlu0 %v515, 56
    %v2273 = vpop.permute.xlu0 %2272
    %2274 = vrot.lane.b32.xlu0 %v516, 56
    %v2275 = vpop.permute.xlu0 %2274
    %2276 = vrot.lane.b32.xlu0 %v517, 56
    %v2277 = vpop.permute.xlu0 %2276
    %2278 = vrot.lane.b32.xlu0 %v518, 56
    %v2279 = vpop.permute.xlu0 %2278
    %2280 = vrot.lane.b32.xlu0 %v519, 56
    %v2281 = vpop.permute.xlu0 %2280
    %2282 = vrot.lane.b32.xlu0 %v520, 56
    %v2283 = vpop.permute.xlu0 %2282
    %2284 = vrot.lane.b32.xlu0 %v521, 56
    %v2285 = vpop.permute.xlu0 %2284
    %2286 = vrot.lane.b32.xlu0 %v522, 56
    %v2287 = vpop.permute.xlu0 %2286
    %2288 = vrot.lane.b32.xlu0 %v523, 56
    %v2289 = vpop.permute.xlu0 %2288
    %2290 = vrot.lane.b32.xlu0 %v524, 56
    %v2291 = vpop.permute.xlu0 %2290
    %2292 = vrot.lane.b32.xlu0 %v525, 56
    %v2293 = vpop.permute.xlu0 %2292
    %2294 = vrot.lane.b32.xlu0 %v526, 56
    %v2295 = vpop.permute.xlu0 %2294
    %2296 = vrot.lane.b32.xlu0 %v527, 56
    %v2297 = vpop.permute.xlu0 %2296
    %2298 = vrot.lane.b32.xlu0 %v528, 56
    %v2299 = vpop.permute.xlu0 %2298
    %2300 = vrot.lane.b32.xlu0 %v529, 56
    %v2301 = vpop.permute.xlu0 %2300
    %2302 = vrot.lane.b32.xlu0 %v530, 56
    %v2303 = vpop.permute.xlu0 %2302
    %2304 = vrot.lane.b32.xlu0 %v531, 56
    %v2305 = vpop.permute.xlu0 %2304
    %2306 = vrot.lane.b32.xlu0 %v532, 56
    %v2307 = vpop.permute.xlu0 %2306
    %2308 = vrot.lane.b32.xlu0 %v533, 56
    %v2309 = vpop.permute.xlu0 %2308
    %2310 = vrot.lane.b32.xlu0 %v534, 56
    %v2311 = vpop.permute.xlu0 %2310
    %2312 = vrot.lane.b32.xlu0 %v535, 56
    %v2313 = vpop.permute.xlu0 %2312
    %2314 = vrot.lane.b32.xlu0 %v536, 56
    %v2315 = vpop.permute.xlu0 %2314
    %2316 = vrot.lane.b32.xlu0 %v537, 56
    %v2317 = vpop.permute.xlu0 %2316
    %2318 = vrot.lane.b32.xlu0 %v538, 56
    %v2319 = vpop.permute.xlu0 %2318
    %2320 = vrot.lane.b32.xlu0 %v539, 56
    %v2321 = vpop.permute.xlu0 %2320
    %2322 = vrot.lane.b32.xlu0 %v540, 56
    %v2323 = vpop.permute.xlu0 %2322
    %2324 = vrot.lane.b32.xlu0 %v541, 56
    %v2325 = vpop.permute.xlu0 %2324
    %2326 = vrot.lane.b32.xlu0 %v542, 56
    %v2327 = vpop.permute.xlu0 %2326
    %2328 = vrot.lane.b32.xlu0 %v543, 56
    %v2329 = vpop.permute.xlu0 %2328
    %2330 = vrot.lane.b32.xlu0 %v544, 56
    %v2331 = vpop.permute.xlu0 %2330
    %2332 = vrot.lane.b32.xlu0 %v545, 56
    %v2333 = vpop.permute.xlu0 %2332
    %2334 = vrot.lane.b32.xlu0 %v546, 56
    %v2335 = vpop.permute.xlu0 %2334
    %2336 = vrot.lane.b32.xlu0 %v547, 56
    %v2337 = vpop.permute.xlu0 %2336
    %2338 = vrot.lane.b32.xlu0 %v548, 56
    %v2339 = vpop.permute.xlu0 %2338
    %2340 = vrot.lane.b32.xlu0 %v549, 56
    %v2341 = vpop.permute.xlu0 %2340
    %2470 = vrot.lane.b32.xlu0 %v550, 64
    %v2471 = vpop.permute.xlu0 %2470
    %2472 = vrot.lane.b32.xlu0 %v551, 64
    %v2473 = vpop.permute.xlu0 %2472
    %2474 = vrot.lane.b32.xlu0 %v552, 64
    %v2475 = vpop.permute.xlu0 %2474
    %2476 = vrot.lane.b32.xlu0 %v553, 64
    %v2477 = vpop.permute.xlu0 %2476
    %2478 = vrot.lane.b32.xlu0 %v554, 64
    %v2479 = vpop.permute.xlu0 %2478
    %2480 = vrot.lane.b32.xlu0 %v555, 64
    %v2481 = vpop.permute.xlu0 %2480
    %2482 = vrot.lane.b32.xlu0 %v556, 64
    %v2483 = vpop.permute.xlu0 %2482
    %2484 = vrot.lane.b32.xlu0 %v557, 64
    %v2485 = vpop.permute.xlu0 %2484
    %2486 = vrot.lane.b32.xlu0 %v558, 64
    %v2487 = vpop.permute.xlu0 %2486
    %2488 = vrot.lane.b32.xlu0 %v559, 64
    %v2489 = vpop.permute.xlu0 %2488
    %2490 = vrot.lane.b32.xlu0 %v560, 64
    %v2491 = vpop.permute.xlu0 %2490
    %2492 = vrot.lane.b32.xlu0 %v561, 64
    %v2493 = vpop.permute.xlu0 %2492
    %2494 = vrot.lane.b32.xlu0 %v562, 64
    %v2495 = vpop.permute.xlu0 %2494
    %2496 = vrot.lane.b32.xlu0 %v563, 64
    %v2497 = vpop.permute.xlu0 %2496
    %2498 = vrot.lane.b32.xlu0 %v564, 64
    %v2499 = vpop.permute.xlu0 %2498
    %2500 = vrot.lane.b32.xlu0 %v565, 64
    %v2501 = vpop.permute.xlu0 %2500
    %2502 = vrot.lane.b32.xlu0 %v566, 64
    %v2503 = vpop.permute.xlu0 %2502
    %2504 = vrot.lane.b32.xlu0 %v567, 64
    %v2505 = vpop.permute.xlu0 %2504
    %2506 = vrot.lane.b32.xlu0 %v568, 64
    %v2507 = vpop.permute.xlu0 %2506
    %2508 = vrot.lane.b32.xlu0 %v569, 64
    %v2509 = vpop.permute.xlu0 %2508
    %2510 = vrot.lane.b32.xlu0 %v570, 64
    %v2511 = vpop.permute.xlu0 %2510
    %2512 = vrot.lane.b32.xlu0 %v571, 64
    %v2513 = vpop.permute.xlu0 %2512
    %2514 = vrot.lane.b32.xlu0 %v572, 64
    %v2515 = vpop.permute.xlu0 %2514
    %2516 = vrot.lane.b32.xlu0 %v573, 64
    %v2517 = vpop.permute.xlu0 %2516
    %2518 = vrot.lane.b32.xlu0 %v574, 64
    %v2519 = vpop.permute.xlu0 %2518
    %2520 = vrot.lane.b32.xlu0 %v575, 64
    %v2521 = vpop.permute.xlu0 %2520
    %2522 = vrot.lane.b32.xlu0 %v576, 64
    %v2523 = vpop.permute.xlu0 %2522
    %2524 = vrot.lane.b32.xlu0 %v577, 64
    %v2525 = vpop.permute.xlu0 %2524
    %2526 = vrot.lane.b32.xlu0 %v578, 64
    %v2527 = vpop.permute.xlu0 %2526
    %2528 = vrot.lane.b32.xlu0 %v579, 64
    %v2529 = vpop.permute.xlu0 %2528
    %2530 = vrot.lane.b32.xlu0 %v580, 64
    %v2531 = vpop.permute.xlu0 %2530
    %2532 = vrot.lane.b32.xlu0 %v581, 64
    %v2533 = vpop.permute.xlu0 %2532
    %2534 = vrot.lane.b32.xlu0 %v582, 64
    %v2535 = vpop.permute.xlu0 %2534
    %2536 = vrot.lane.b32.xlu0 %v583, 64
    %v2537 = vpop.permute.xlu0 %2536
    %2538 = vrot.lane.b32.xlu0 %v584, 64
    %v2539 = vpop.permute.xlu0 %2538
    %2540 = vrot.lane.b32.xlu0 %v585, 64
    %v2541 = vpop.permute.xlu0 %2540
    %2542 = vrot.lane.b32.xlu0 %v586, 64
    %v2543 = vpop.permute.xlu0 %2542
    %2544 = vrot.lane.b32.xlu0 %v587, 64
    %v2545 = vpop.permute.xlu0 %2544
    %2546 = vrot.lane.b32.xlu0 %v588, 64
    %v2547 = vpop.permute.xlu0 %2546
    %2548 = vrot.lane.b32.xlu0 %v589, 64
    %v2549 = vpop.permute.xlu0 %2548
    %2550 = vrot.lane.b32.xlu0 %v590, 64
    %v2551 = vpop.permute.xlu0 %2550
    %2552 = vrot.lane.b32.xlu0 %v591, 64
    %v2553 = vpop.permute.xlu0 %2552
    %2554 = vrot.lane.b32.xlu0 %v592, 64
    %v2555 = vpop.permute.xlu0 %2554
    %2556 = vrot.lane.b32.xlu0 %v593, 64
    %v2557 = vpop.permute.xlu0 %2556
    %2558 = vrot.lane.b32.xlu0 %v594, 64
    %v2559 = vpop.permute.xlu0 %2558
    %2560 = vrot.lane.b32.xlu0 %v595, 64
    %v2561 = vpop.permute.xlu0 %2560
    %2562 = vrot.lane.b32.xlu0 %v596, 64
    %v2563 = vpop.permute.xlu0 %2562
    %2564 = vrot.lane.b32.xlu0 %v597, 64
    %v2565 = vpop.permute.xlu0 %2564
    %2566 = vrot.lane.b32.xlu0 %v598, 64
    %v2567 = vpop.permute.xlu0 %2566
    %2568 = vrot.lane.b32.xlu0 %v599, 64
    %v2569 = vpop.permute.xlu0 %2568
    %2570 = vrot.lane.b32.xlu0 %v600, 64
    %v2571 = vpop.permute.xlu0 %2570
    %2572 = vrot.lane.b32.xlu0 %v601, 64
    %v2573 = vpop.permute.xlu0 %2572
    %2574 = vrot.lane.b32.xlu0 %v602, 64
    %v2575 = vpop.permute.xlu0 %2574
    %2576 = vrot.lane.b32.xlu0 %v603, 64
    %v2577 = vpop.permute.xlu0 %2576
    %2578 = vrot.lane.b32.xlu0 %v604, 64
    %v2579 = vpop.permute.xlu0 %2578
    %2580 = vrot.lane.b32.xlu0 %v605, 64
    %v2581 = vpop.permute.xlu0 %2580
    %2582 = vrot.lane.b32.xlu0 %v606, 64
    %v2583 = vpop.permute.xlu0 %2582
    %2584 = vrot.lane.b32.xlu0 %v607, 64
    %v2585 = vpop.permute.xlu0 %2584
    %2586 = vrot.lane.b32.xlu0 %v608, 64
    %v2587 = vpop.permute.xlu0 %2586
    %2588 = vrot.lane.b32.xlu0 %v609, 64
    %v2589 = vpop.permute.xlu0 %2588
    %2590 = vrot.lane.b32.xlu0 %v610, 64
    %v2591 = vpop.permute.xlu0 %2590
    %2592 = vrot.lane.b32.xlu0 %v611, 64
    %v2593 = vpop.permute.xlu0 %2592
    %2594 = vrot.lane.b32.xlu0 %v612, 64
    %v2595 = vpop.permute.xlu0 %2594
    %2596 = vrot.lane.b32.xlu0 %v613, 64
    %v2597 = vpop.permute.xlu0 %2596
    %vm2662 = vcmask 64512
    %v2663 = vsel %vm2662, %v36, %v679
    %v2664 = vsel %vm2662, %v37, %v681
    %v2665 = vsel %vm2662, %v38, %v683
    %v2666 = vsel %vm2662, %v39, %v685
    %v2667 = vsel %vm2662, %v40, %v687
    %v2668 = vsel %vm2662, %v41, %v689
    %v2669 = vsel %vm2662, %v42, %v691
    %v2670 = vsel %vm2662, %v43, %v693
    %v2671 = vsel %vm2662, %v44, %v695
    %v2672 = vsel %vm2662, %v45, %v697
    %v2673 = vsel %vm2662, %v46, %v699
    %v2674 = vsel %vm2662, %v47, %v701
    %v2675 = vsel %vm2662, %v48, %v703
    %v2676 = vsel %vm2662, %v49, %v705
    %v2677 = vsel %vm2662, %v50, %v707
    %v2678 = vsel %vm2662, %v51, %v709
    %v2679 = vsel %vm2662, %v52, %v711
    %v2680 = vsel %vm2662, %v53, %v713
    %v2681 = vsel %vm2662, %v54, %v715
    %v2682 = vsel %vm2662, %v55, %v717
    %v2683 = vsel %vm2662, %v56, %v719
    %v2684 = vsel %vm2662, %v57, %v721
    %v2685 = vsel %vm2662, %v58, %v723
    %v2686 = vsel %vm2662, %v59, %v725
    %v2687 = vsel %vm2662, %v60, %v727
    %v2688 = vsel %vm2662, %v61, %v729
    %v2689 = vsel %vm2662, %v62, %v731
    %v2690 = vsel %vm2662, %v63, %v733
    %v2691 = vsel %vm2662, %v64, %v735
    %v2692 = vsel %vm2662, %v65, %v737
    %v2693 = vsel %vm2662, %v66, %v739
    %v2694 = vsel %vm2662, %v67, %v741
    %v2695 = vsel %vm2662, %v68, %v743
    %v2696 = vsel %vm2662, %v69, %v745
    %v2697 = vsel %vm2662, %v70, %v747
    %v2698 = vsel %vm2662, %v71, %v749
    %v2699 = vsel %vm2662, %v72, %v751
    %v2700 = vsel %vm2662, %v73, %v753
    %v2701 = vsel %vm2662, %v74, %v755
    %v2702 = vsel %vm2662, %v75, %v757
    %v2703 = vsel %vm2662, %v76, %v759
    %v2704 = vsel %vm2662, %v77, %v761
    %v2705 = vsel %vm2662, %v78, %v763
    %v2706 = vsel %vm2662, %v79, %v765
    %v2707 = vsel %vm2662, %v80, %v767
    %v2708 = vsel %vm2662, %v81, %v769
    %v2709 = vsel %vm2662, %v82, %v771
    %v2710 = vsel %vm2662, %v83, %v773
    %v2711 = vsel %vm2662, %v84, %v775
    %v2712 = vsel %vm2662, %v85, %v777
    %v2713 = vsel %vm2662, %v86, %v779
    %v2714 = vsel %vm2662, %v87, %v781
    %v2715 = vsel %vm2662, %v88, %v783
    %v2716 = vsel %vm2662, %v89, %v785
    %v2717 = vsel %vm2662, %v90, %v787
    %v2718 = vsel %vm2662, %v91, %v789
    %v2719 = vsel %vm2662, %v92, %v791
    %v2720 = vsel %vm2662, %v93, %v793
    %v2721 = vsel %vm2662, %v94, %v795
    %v2722 = vsel %vm2662, %v95, %v797
    %v2723 = vsel %vm2662, %v96, %v799
    %v2724 = vsel %vm2662, %v97, %v801
    %v2725 = vsel %vm2662, %v98, %v803
    %v2726 = vsel %vm2662, %v99, %v805
    %vm2727 = vcmask 130048
    %v2728 = vsel %vm2727, %v2663, %v935
    %v2729 = vsel %vm2727, %v2664, %v937
    %v2730 = vsel %vm2727, %v2665, %v939
    %v2731 = vsel %vm2727, %v2666, %v941
    %v2732 = vsel %vm2727, %v2667, %v943
    %v2733 = vsel %vm2727, %v2668, %v945
    %v2734 = vsel %vm2727, %v2669, %v947
    %v2735 = vsel %vm2727, %v2670, %v949
    %v2736 = vsel %vm2727, %v2671, %v951
    %v2737 = vsel %vm2727, %v2672, %v953
    %v2738 = vsel %vm2727, %v2673, %v955
    %v2739 = vsel %vm2727, %v2674, %v957
    %v2740 = vsel %vm2727, %v2675, %v959
    %v2741 = vsel %vm2727, %v2676, %v961
    %v2742 = vsel %vm2727, %v2677, %v963
    %v2743 = vsel %vm2727, %v2678, %v965
    %v2744 = vsel %vm2727, %v2679, %v967
    %v2745 = vsel %vm2727, %v2680, %v969
    %v2746 = vsel %vm2727, %v2681, %v971
    %v2747 = vsel %vm2727, %v2682, %v973
    %v2748 = vsel %vm2727, %v2683, %v975
    %v2749 = vsel %vm2727, %v2684, %v977
    %v2750 = vsel %vm2727, %v2685, %v979
    %v2751 = vsel %vm2727, %v2686, %v981
    %v2752 = vsel %vm2727, %v2687, %v983
    %v2753 = vsel %vm2727, %v2688, %v985
    %v2754 = vsel %vm2727, %v2689, %v987
    %v2755 = vsel %vm2727, %v2690, %v989
    %v2756 = vsel %vm2727, %v2691, %v991
    %v2757 = vsel %vm2727, %v2692, %v993
    %v2758 = vsel %vm2727, %v2693, %v995
    %v2759 = vsel %vm2727, %v2694, %v997
    %v2760 = vsel %vm2727, %v2695, %v999
    %v2761 = vsel %vm2727, %v2696, %v1001
    %v2762 = vsel %vm2727, %v2697, %v1003
    %v2763 = vsel %vm2727, %v2698, %v1005
    %v2764 = vsel %vm2727, %v2699, %v1007
    %v2765 = vsel %vm2727, %v2700, %v1009
    %v2766 = vsel %vm2727, %v2701, %v1011
    %v2767 = vsel %vm2727, %v2702, %v1013
    %v2768 = vsel %vm2727, %v2703, %v1015
    %v2769 = vsel %vm2727, %v2704, %v1017
    %v2770 = vsel %vm2727, %v2705, %v1019
    %v2771 = vsel %vm2727, %v2706, %v1021
    %v2772 = vsel %vm2727, %v2707, %v1023
    %v2773 = vsel %vm2727, %v2708, %v1025
    %v2774 = vsel %vm2727, %v2709, %v1027
    %v2775 = vsel %vm2727, %v2710, %v1029
    %v2776 = vsel %vm2727, %v2711, %v1031
    %v2777 = vsel %vm2727, %v2712, %v1033
    %v2778 = vsel %vm2727, %v2713, %v1035
    %v2779 = vsel %vm2727, %v2714, %v1037
    %v2780 = vsel %vm2727, %v2715, %v1039
    %v2781 = vsel %vm2727, %v2716, %v1041
    %v2782 = vsel %vm2727, %v2717, %v1043
    %v2783 = vsel %vm2727, %v2718, %v1045
    %v2784 = vsel %vm2727, %v2719, %v1047
    %v2785 = vsel %vm2727, %v2720, %v1049
    %v2786 = vsel %vm2727, %v2721, %v1051
    %v2787 = vsel %vm2727, %v2722, %v1053
    %v2788 = vsel %vm2727, %v2723, %v1055
    %v2789 = vsel %vm2727, %v2724, %v1057
    %v2790 = vsel %vm2727, %v2725, %v1059
    %v2791 = vsel %vm2727, %v2726, %v1061
    %vm2792 = vcmask 195584
    %v2793 = vsel %vm2792, %v2728, %v1191
    %v2794 = vsel %vm2792, %v2729, %v1193
    %v2795 = vsel %vm2792, %v2730, %v1195
    %v2796 = vsel %vm2792, %v2731, %v1197
    %v2797 = vsel %vm2792, %v2732, %v1199
    %v2798 = vsel %vm2792, %v2733, %v1201
    %v2799 = vsel %vm2792, %v2734, %v1203
    %v2800 = vsel %vm2792, %v2735, %v1205
    %v2801 = vsel %vm2792, %v2736, %v1207
    %v2802 = vsel %vm2792, %v2737, %v1209
    %v2803 = vsel %vm2792, %v2738, %v1211
    %v2804 = vsel %vm2792, %v2739, %v1213
    %v2805 = vsel %vm2792, %v2740, %v1215
    %v2806 = vsel %vm2792, %v2741, %v1217
    %v2807 = vsel %vm2792, %v2742, %v1219
    %v2808 = vsel %vm2792, %v2743, %v1221
    %v2809 = vsel %vm2792, %v2744, %v1223
    %v2810 = vsel %vm2792, %v2745, %v1225
    %v2811 = vsel %vm2792, %v2746, %v1227
    %v2812 = vsel %vm2792, %v2747, %v1229
    %v2813 = vsel %vm2792, %v2748, %v1231
    %v2814 = vsel %vm2792, %v2749, %v1233
    %v2815 = vsel %vm2792, %v2750, %v1235
    %v2816 = vsel %vm2792, %v2751, %v1237
    %v2817 = vsel %vm2792, %v2752, %v1239
    %v2818 = vsel %vm2792, %v2753, %v1241
    %v2819 = vsel %vm2792, %v2754, %v1243
    %v2820 = vsel %vm2792, %v2755, %v1245
    %v2821 = vsel %vm2792, %v2756, %v1247
    %v2822 = vsel %vm2792, %v2757, %v1249
    %v2823 = vsel %vm2792, %v2758, %v1251
    %v2824 = vsel %vm2792, %v2759, %v1253
    %v2825 = vsel %vm2792, %v2760, %v1255
    %v2826 = vsel %vm2792, %v2761, %v1257
    %v2827 = vsel %vm2792, %v2762, %v1259
    %v2828 = vsel %vm2792, %v2763, %v1261
    %v2829 = vsel %vm2792, %v2764, %v1263
    %v2830 = vsel %vm2792, %v2765, %v1265
    %v2831 = vsel %vm2792, %v2766, %v1267
    %v2832 = vsel %vm2792, %v2767, %v1269
    %v2833 = vsel %vm2792, %v2768, %v1271
    %v2834 = vsel %vm2792, %v2769, %v1273
    %v2835 = vsel %vm2792, %v2770, %v1275
    %v2836 = vsel %vm2792, %v2771, %v1277
    %v2837 = vsel %vm2792, %v2772, %v1279
    %v2838 = vsel %vm2792, %v2773, %v1281
    %v2839 = vsel %vm2792, %v2774, %v1283
    %v2840 = vsel %vm2792, %v2775, %v1285
    %v2841 = vsel %vm2792, %v2776, %v1287
    %v2842 = vsel %vm2792, %v2777, %v1289
    %v2843 = vsel %vm2792, %v2778, %v1291
    %v2844 = vsel %vm2792, %v2779, %v1293
    %v2845 = vsel %vm2792, %v2780, %v1295
    %v2846 = vsel %vm2792, %v2781, %v1297
    %v2847 = vsel %vm2792, %v2782, %v1299
    %v2848 = vsel %vm2792, %v2783, %v1301
    %v2849 = vsel %vm2792, %v2784, %v1303
    %v2850 = vsel %vm2792, %v2785, %v1305
    %v2851 = vsel %vm2792, %v2786, %v1307
    %v2852 = vsel %vm2792, %v2787, %v1309
    %v2853 = vsel %vm2792, %v2788, %v1311
    %v2854 = vsel %vm2792, %v2789, %v1313
    %v2855 = vsel %vm2792, %v2790, %v1315
    %v2856 = vsel %vm2792, %v2791, %v1317
    %vm2857 = vcmask 261120
    %v2858 = vsel %vm2857, %v2793, %v1447
    %v2859 = vsel %vm2857, %v2794, %v1449
    %v2860 = vsel %vm2857, %v2795, %v1451
    %v2861 = vsel %vm2857, %v2796, %v1453
    %v2862 = vsel %vm2857, %v2797, %v1455
    %v2863 = vsel %vm2857, %v2798, %v1457
    %v2864 = vsel %vm2857, %v2799, %v1459
    %v2865 = vsel %vm2857, %v2800, %v1461
    %v2866 = vsel %vm2857, %v2801, %v1463
    %v2867 = vsel %vm2857, %v2802, %v1465
    %v2868 = vsel %vm2857, %v2803, %v1467
    %v2869 = vsel %vm2857, %v2804, %v1469
    %v2870 = vsel %vm2857, %v2805, %v1471
    %v2871 = vsel %vm2857, %v2806, %v1473
    %v2872 = vsel %vm2857, %v2807, %v1475
    %v2873 = vsel %vm2857, %v2808, %v1477
    %v2874 = vsel %vm2857, %v2809, %v1479
    %v2875 = vsel %vm2857, %v2810, %v1481
    %v2876 = vsel %vm2857, %v2811, %v1483
    %v2877 = vsel %vm2857, %v2812, %v1485
    %v2878 = vsel %vm2857, %v2813, %v1487
    %v2879 = vsel %vm2857, %v2814, %v1489
    %v2880 = vsel %vm2857, %v2815, %v1491
    %v2881 = vsel %vm2857, %v2816, %v1493
    %v2882 = vsel %vm2857, %v2817, %v1495
    %v2883 = vsel %vm2857, %v2818, %v1497
    %v2884 = vsel %vm2857, %v2819, %v1499
    %v2885 = vsel %vm2857, %v2820, %v1501
    %v2886 = vsel %vm2857, %v2821, %v1503
    %v2887 = vsel %vm2857, %v2822, %v1505
    %v2888 = vsel %vm2857, %v2823, %v1507
    %v2889 = vsel %vm2857, %v2824, %v1509
    %v2890 = vsel %vm2857, %v2825, %v1511
    %v2891 = vsel %vm2857, %v2826, %v1513
    %v2892 = vsel %vm2857, %v2827, %v1515
    %v2893 = vsel %vm2857, %v2828, %v1517
    %v2894 = vsel %vm2857, %v2829, %v1519
    %v2895 = vsel %vm2857, %v2830, %v1521
    %v2896 = vsel %vm2857, %v2831, %v1523
    %v2897 = vsel %vm2857, %v2832, %v1525
    %v2898 = vsel %vm2857, %v2833, %v1527
    %v2899 = vsel %vm2857, %v2834, %v1529
    %v2900 = vsel %vm2857, %v2835, %v1531
    %v2901 = vsel %vm2857, %v2836, %v1533
    %v2902 = vsel %vm2857, %v2837, %v1535
    %v2903 = vsel %vm2857, %v2838, %v1537
    %v2904 = vsel %vm2857, %v2839, %v1539
    %v2905 = vsel %vm2857, %v2840, %v1541
    %v2906 = vsel %vm2857, %v2841, %v1543
    %v2907 = vsel %vm2857, %v2842, %v1545
    %v2908 = vsel %vm2857, %v2843, %v1547
    %v2909 = vsel %vm2857, %v2844, %v1549
    %v2910 = vsel %vm2857, %v2845, %v1551
    %v2911 = vsel %vm2857, %v2846, %v1553
    %v2912 = vsel %vm2857, %v2847, %v1555
    %v2913 = vsel %vm2857, %v2848, %v1557
    %v2914 = vsel %vm2857, %v2849, %v1559
    %v2915 = vsel %vm2857, %v2850, %v1561
    %v2916 = vsel %vm2857, %v2851, %v1563
    %v2917 = vsel %vm2857, %v2852, %v1565
    %v2918 = vsel %vm2857, %v2853, %v1567
    %v2919 = vsel %vm2857, %v2854, %v1569
    %v2920 = vsel %vm2857, %v2855, %v1571
    %v2921 = vsel %vm2857, %v2856, %v1573
    %vm2922 = vcmask 326656
    %v2923 = vsel %vm2922, %v2858, %v1703
    %v2924 = vsel %vm2922, %v2859, %v1705
    %v2925 = vsel %vm2922, %v2860, %v1707
    %v2926 = vsel %vm2922, %v2861, %v1709
    %v2927 = vsel %vm2922, %v2862, %v1711
    %v2928 = vsel %vm2922, %v2863, %v1713
    %v2929 = vsel %vm2922, %v2864, %v1715
    %v2930 = vsel %vm2922, %v2865, %v1717
    %v2931 = vsel %vm2922, %v2866, %v1719
    %v2932 = vsel %vm2922, %v2867, %v1721
    %v2933 = vsel %vm2922, %v2868, %v1723
    %v2934 = vsel %vm2922, %v2869, %v1725
    %v2935 = vsel %vm2922, %v2870, %v1727
    %v2936 = vsel %vm2922, %v2871, %v1729
    %v2937 = vsel %vm2922, %v2872, %v1731
    %v2938 = vsel %vm2922, %v2873, %v1733
    %v2939 = vsel %vm2922, %v2874, %v1735
    %v2940 = vsel %vm2922, %v2875, %v1737
    %v2941 = vsel %vm2922, %v2876, %v1739
    %v2942 = vsel %vm2922, %v2877, %v1741
    %v2943 = vsel %vm2922, %v2878, %v1743
    %v2944 = vsel %vm2922, %v2879, %v1745
    %v2945 = vsel %vm2922, %v2880, %v1747
    %v2946 = vsel %vm2922, %v2881, %v1749
    %v2947 = vsel %vm2922, %v2882, %v1751
    %v2948 = vsel %vm2922, %v2883, %v1753
    %v2949 = vsel %vm2922, %v2884, %v1755
    %v2950 = vsel %vm2922, %v2885, %v1757
    %v2951 = vsel %vm2922, %v2886, %v1759
    %v2952 = vsel %vm2922, %v2887, %v1761
    %v2953 = vsel %vm2922, %v2888, %v1763
    %v2954 = vsel %vm2922, %v2889, %v1765
    %v2955 = vsel %vm2922, %v2890, %v1767
    %v2956 = vsel %vm2922, %v2891, %v1769
    %v2957 = vsel %vm2922, %v2892, %v1771
    %v2958 = vsel %vm2922, %v2893, %v1773
    %v2959 = vsel %vm2922, %v2894, %v1775
    %v2960 = vsel %vm2922, %v2895, %v1777
    %v2961 = vsel %vm2922, %v2896, %v1779
    %v2962 = vsel %vm2922, %v2897, %v1781
    %v2963 = vsel %vm2922, %v2898, %v1783
    %v2964 = vsel %vm2922, %v2899, %v1785
    %v2965 = vsel %vm2922, %v2900, %v1787
    %v2966 = vsel %vm2922, %v2901, %v1789
    %v2967 = vsel %vm2922, %v2902, %v1791
    %v2968 = vsel %vm2922, %v2903, %v1793
    %v2969 = vsel %vm2922, %v2904, %v1795
    %v2970 = vsel %vm2922, %v2905, %v1797
    %v2971 = vsel %vm2922, %v2906, %v1799
    %v2972 = vsel %vm2922, %v2907, %v1801
    %v2973 = vsel %vm2922, %v2908, %v1803
    %v2974 = vsel %vm2922, %v2909, %v1805
    %v2975 = vsel %vm2922, %v2910, %v1807
    %v2976 = vsel %vm2922, %v2911, %v1809
    %v2977 = vsel %vm2922, %v2912, %v1811
    %v2978 = vsel %vm2922, %v2913, %v1813
    %v2979 = vsel %vm2922, %v2914, %v1815
    %v2980 = vsel %vm2922, %v2915, %v1817
    %v2981 = vsel %vm2922, %v2916, %v1819
    %v2982 = vsel %vm2922, %v2917, %v1821
    %v2983 = vsel %vm2922, %v2918, %v1823
    %v2984 = vsel %vm2922, %v2919, %v1825
    %v2985 = vsel %vm2922, %v2920, %v1827
    %v2986 = vsel %vm2922, %v2921, %v1829
    %vm2987 = vcmask 392192
    %v2988 = vsel %vm2987, %v2923, %v1959
    %v2989 = vsel %vm2987, %v2924, %v1961
    %v2990 = vsel %vm2987, %v2925, %v1963
    %v2991 = vsel %vm2987, %v2926, %v1965
    %v2992 = vsel %vm2987, %v2927, %v1967
    %v2993 = vsel %vm2987, %v2928, %v1969
    %v2994 = vsel %vm2987, %v2929, %v1971
    %v2995 = vsel %vm2987, %v2930, %v1973
    %v2996 = vsel %vm2987, %v2931, %v1975
    %v2997 = vsel %vm2987, %v2932, %v1977
    %v2998 = vsel %vm2987, %v2933, %v1979
    %v2999 = vsel %vm2987, %v2934, %v1981
    %v3000 = vsel %vm2987, %v2935, %v1983
    %v3001 = vsel %vm2987, %v2936, %v1985
    %v3002 = vsel %vm2987, %v2937, %v1987
    %v3003 = vsel %vm2987, %v2938, %v1989
    %v3004 = vsel %vm2987, %v2939, %v1991
    %v3005 = vsel %vm2987, %v2940, %v1993
    %v3006 = vsel %vm2987, %v2941, %v1995
    %v3007 = vsel %vm2987, %v2942, %v1997
    %v3008 = vsel %vm2987, %v2943, %v1999
    %v3009 = vsel %vm2987, %v2944, %v2001
    %v3010 = vsel %vm2987, %v2945, %v2003
    %v3011 = vsel %vm2987, %v2946, %v2005
    %v3012 = vsel %vm2987, %v2947, %v2007
    %v3013 = vsel %vm2987, %v2948, %v2009
    %v3014 = vsel %vm2987, %v2949, %v2011
    %v3015 = vsel %vm2987, %v2950, %v2013
    %v3016 = vsel %vm2987, %v2951, %v2015
    %v3017 = vsel %vm2987, %v2952, %v2017
    %v3018 = vsel %vm2987, %v2953, %v2019
    %v3019 = vsel %vm2987, %v2954, %v2021
    %v3020 = vsel %vm2987, %v2955, %v2023
    %v3021 = vsel %vm2987, %v2956, %v2025
    %v3022 = vsel %vm2987, %v2957, %v2027
    %v3023 = vsel %vm2987, %v2958, %v2029
    %v3024 = vsel %vm2987, %v2959, %v2031
    %v3025 = vsel %vm2987, %v2960, %v2033
    %v3026 = vsel %vm2987, %v2961, %v2035
    %v3027 = vsel %vm2987, %v2962, %v2037
    %v3028 = vsel %vm2987, %v2963, %v2039
    %v3029 = vsel %vm2987, %v2964, %v2041
    %v3030 = vsel %vm2987, %v2965, %v2043
    %v3031 = vsel %vm2987, %v2966, %v2045
    %v3032 = vsel %vm2987, %v2967, %v2047
    %v3033 = vsel %vm2987, %v2968, %v2049
    %v3034 = vsel %vm2987, %v2969, %v2051
    %v3035 = vsel %vm2987, %v2970, %v2053
    %v3036 = vsel %vm2987, %v2971, %v2055
    %v3037 = vsel %vm2987, %v2972, %v2057
    %v3038 = vsel %vm2987, %v2973, %v2059
    %v3039 = vsel %vm2987, %v2974, %v2061
    %v3040 = vsel %vm2987, %v2975, %v2063
    %v3041 = vsel %vm2987, %v2976, %v2065
    %v3042 = vsel %vm2987, %v2977, %v2067
    %v3043 = vsel %vm2987, %v2978, %v2069
    %v3044 = vsel %vm2987, %v2979, %v2071
    %v3045 = vsel %vm2987, %v2980, %v2073
    %v3046 = vsel %vm2987, %v2981, %v2075
    %v3047 = vsel %vm2987, %v2982, %v2077
    %v3048 = vsel %vm2987, %v2983, %v2079
    %v3049 = vsel %vm2987, %v2984, %v2081
    %v3050 = vsel %vm2987, %v2985, %v2083
    %v3051 = vsel %vm2987, %v2986, %v2085
    %vm3052 = vcmask 457728
    %v3053 = vsel %vm3052, %v2988, %v2215
    %v3054 = vsel %vm3052, %v2989, %v2217
    %v3055 = vsel %vm3052, %v2990, %v2219
    %v3056 = vsel %vm3052, %v2991, %v2221
    %v3057 = vsel %vm3052, %v2992, %v2223
    %v3058 = vsel %vm3052, %v2993, %v2225
    %v3059 = vsel %vm3052, %v2994, %v2227
    %v3060 = vsel %vm3052, %v2995, %v2229
    %v3061 = vsel %vm3052, %v2996, %v2231
    %v3062 = vsel %vm3052, %v2997, %v2233
    %v3063 = vsel %vm3052, %v2998, %v2235
    %v3064 = vsel %vm3052, %v2999, %v2237
    %v3065 = vsel %vm3052, %v3000, %v2239
    %v3066 = vsel %vm3052, %v3001, %v2241
    %v3067 = vsel %vm3052, %v3002, %v2243
    %v3068 = vsel %vm3052, %v3003, %v2245
    %v3069 = vsel %vm3052, %v3004, %v2247
    %v3070 = vsel %vm3052, %v3005, %v2249
    %v3071 = vsel %vm3052, %v3006, %v2251
    %v3072 = vsel %vm3052, %v3007, %v2253
    %v3073 = vsel %vm3052, %v3008, %v2255
    %v3074 = vsel %vm3052, %v3009, %v2257
    %v3075 = vsel %vm3052, %v3010, %v2259
    %v3076 = vsel %vm3052, %v3011, %v2261
    %v3077 = vsel %vm3052, %v3012, %v2263
    %v3078 = vsel %vm3052, %v3013, %v2265
    %v3079 = vsel %vm3052, %v3014, %v2267
    %v3080 = vsel %vm3052, %v3015, %v2269
    %v3081 = vsel %vm3052, %v3016, %v2271
    %v3082 = vsel %vm3052, %v3017, %v2273
    %v3083 = vsel %vm3052, %v3018, %v2275
    %v3084 = vsel %vm3052, %v3019, %v2277
    %v3085 = vsel %vm3052, %v3020, %v2279
    %v3086 = vsel %vm3052, %v3021, %v2281
    %v3087 = vsel %vm3052, %v3022, %v2283
    %v3088 = vsel %vm3052, %v3023, %v2285
    %v3089 = vsel %vm3052, %v3024, %v2287
    %v3090 = vsel %vm3052, %v3025, %v2289
    %v3091 = vsel %vm3052, %v3026, %v2291
    %v3092 = vsel %vm3052, %v3027, %v2293
    %v3093 = vsel %vm3052, %v3028, %v2295
    %v3094 = vsel %vm3052, %v3029, %v2297
    %v3095 = vsel %vm3052, %v3030, %v2299
    %v3096 = vsel %vm3052, %v3031, %v2301
    %v3097 = vsel %vm3052, %v3032, %v2303
    %v3098 = vsel %vm3052, %v3033, %v2305
    %v3099 = vsel %vm3052, %v3034, %v2307
    %v3100 = vsel %vm3052, %v3035, %v2309
    %v3101 = vsel %vm3052, %v3036, %v2311
    %v3102 = vsel %vm3052, %v3037, %v2313
    %v3103 = vsel %vm3052, %v3038, %v2315
    %v3104 = vsel %vm3052, %v3039, %v2317
    %v3105 = vsel %vm3052, %v3040, %v2319
    %v3106 = vsel %vm3052, %v3041, %v2321
    %v3107 = vsel %vm3052, %v3042, %v2323
    %v3108 = vsel %vm3052, %v3043, %v2325
    %v3109 = vsel %vm3052, %v3044, %v2327
    %v3110 = vsel %vm3052, %v3045, %v2329
    %v3111 = vsel %vm3052, %v3046, %v2331
    %v3112 = vsel %vm3052, %v3047, %v2333
    %v3113 = vsel %vm3052, %v3048, %v2335
    %v3114 = vsel %vm3052, %v3049, %v2337
    %v3115 = vsel %vm3052, %v3050, %v2339
    %v3116 = vsel %vm3052, %v3051, %v2341
    %vm3117 = vcmask 523264
    %v3118 = vsel %vm3117, %v3053, %v2471
    %v3119 = vsel %vm3117, %v3054, %v2473
    %v3120 = vsel %vm3117, %v3055, %v2475
    %v3121 = vsel %vm3117, %v3056, %v2477
    %v3122 = vsel %vm3117, %v3057, %v2479
    %v3123 = vsel %vm3117, %v3058, %v2481
    %v3124 = vsel %vm3117, %v3059, %v2483
    %v3125 = vsel %vm3117, %v3060, %v2485
    %v3126 = vsel %vm3117, %v3061, %v2487
    %v3127 = vsel %vm3117, %v3062, %v2489
    %v3128 = vsel %vm3117, %v3063, %v2491
    %v3129 = vsel %vm3117, %v3064, %v2493
    %v3130 = vsel %vm3117, %v3065, %v2495
    %v3131 = vsel %vm3117, %v3066, %v2497
    %v3132 = vsel %vm3117, %v3067, %v2499
    %v3133 = vsel %vm3117, %v3068, %v2501
    %v3134 = vsel %vm3117, %v3069, %v2503
    %v3135 = vsel %vm3117, %v3070, %v2505
    %v3136 = vsel %vm3117, %v3071, %v2507
    %v3137 = vsel %vm3117, %v3072, %v2509
    %v3138 = vsel %vm3117, %v3073, %v2511
    %v3139 = vsel %vm3117, %v3074, %v2513
    %v3140 = vsel %vm3117, %v3075, %v2515
    %v3141 = vsel %vm3117, %v3076, %v2517
    %v3142 = vsel %vm3117, %v3077, %v2519
    %v3143 = vsel %vm3117, %v3078, %v2521
    %v3144 = vsel %vm3117, %v3079, %v2523
    %v3145 = vsel %vm3117, %v3080, %v2525
    %v3146 = vsel %vm3117, %v3081, %v2527
    %v3147 = vsel %vm3117, %v3082, %v2529
    %v3148 = vsel %vm3117, %v3083, %v2531
    %v3149 = vsel %vm3117, %v3084, %v2533
    %v3150 = vsel %vm3117, %v3085, %v2535
    %v3151 = vsel %vm3117, %v3086, %v2537
    %v3152 = vsel %vm3117, %v3087, %v2539
    %v3153 = vsel %vm3117, %v3088, %v2541
    %v3154 = vsel %vm3117, %v3089, %v2543
    %v3155 = vsel %vm3117, %v3090, %v2545
    %v3156 = vsel %vm3117, %v3091, %v2547
    %v3157 = vsel %vm3117, %v3092, %v2549
    %v3158 = vsel %vm3117, %v3093, %v2551
    %v3159 = vsel %vm3117, %v3094, %v2553
    %v3160 = vsel %vm3117, %v3095, %v2555
    %v3161 = vsel %vm3117, %v3096, %v2557
    %v3162 = vsel %vm3117, %v3097, %v2559
    %v3163 = vsel %vm3117, %v3098, %v2561
    %v3164 = vsel %vm3117, %v3099, %v2563
    %v3165 = vsel %vm3117, %v3100, %v2565
    %v3166 = vsel %vm3117, %v3101, %v2567
    %v3167 = vsel %vm3117, %v3102, %v2569
    %v3168 = vsel %vm3117, %v3103, %v2571
    %v3169 = vsel %vm3117, %v3104, %v2573
    %v3170 = vsel %vm3117, %v3105, %v2575
    %v3171 = vsel %vm3117, %v3106, %v2577
    %v3172 = vsel %vm3117, %v3107, %v2579
    %v3173 = vsel %vm3117, %v3108, %v2581
    %v3174 = vsel %vm3117, %v3109, %v2583
    %v3175 = vsel %vm3117, %v3110, %v2585
    %v3176 = vsel %vm3117, %v3111, %v2587
    %v3177 = vsel %vm3117, %v3112, %v2589
    %v3178 = vsel %vm3117, %v3113, %v2591
    %v3179 = vsel %vm3117, %v3114, %v2593
    %v3180 = vsel %vm3117, %v3115, %v2595
    %v3181 = vsel %vm3117, %v3116, %v2597
    %v3182 = vld [vmem:[%s2] sm:$0xff]
    %v3183 = vld [vmem:[%s2 + $0x8] sm:$0xff]
    %v3184 = vld [vmem:[%s2 + $0x10] sm:$0xff]
    %v3185 = vld [vmem:[%s2 + $0x18] sm:$0xff]
    %v3186 = vld [vmem:[%s2 + $0x20] sm:$0xff]
    %v3187 = vld [vmem:[%s2 + $0x28] sm:$0xff]
    %v3188 = vld [vmem:[%s2 + $0x30] sm:$0xff]
    %v3189 = vld [vmem:[%s2 + $0x38] sm:$0xff]
    %v3190 = vld [vmem:[%s2 + $0x40] sm:$0xff]
    %v3191 = vld [vmem:[%s3] sm:$0x1]
    %v3193 = vlaneseq
    %v3194 = vshrl.u32 %v3193, 7
    %v3195 = vsub.s32 0, %v3194
    %v3196 = vrot.slane %v3191, %v3195
    %vm3198 = vcmask 588800
    %v3200 = vsel %vm3198, %v3118, 0
    %v3203 = vsel %vm3198, %v3119, 0
    %v3206 = vsel %vm3198, %v3120, 0
    %v3209 = vsel %vm3198, %v3121, 0
    %v3212 = vsel %vm3198, %v3122, 0
    %v3215 = vsel %vm3198, %v3123, 0
    %v3218 = vsel %vm3198, %v3124, 0
    %v3221 = vsel %vm3198, %v3125, 0
    %v3224 = vsel %vm3198, %v3126, 0
    %v3227 = vsel %vm3198, %v3127, 0
    %v3230 = vsel %vm3198, %v3128, 0
    %v3233 = vsel %vm3198, %v3129, 0
    %v3236 = vsel %vm3198, %v3130, 0
    %v3239 = vsel %vm3198, %v3131, 0
    %v3242 = vsel %vm3198, %v3132, 0
    %v3245 = vsel %vm3198, %v3133, 0
    %v3248 = vsel %vm3198, %v3134, 0
    %v3251 = vsel %vm3198, %v3135, 0
    %v3254 = vsel %vm3198, %v3136, 0
    %v3257 = vsel %vm3198, %v3137, 0
    %v3260 = vsel %vm3198, %v3138, 0
    %v3263 = vsel %vm3198, %v3139, 0
    %v3266 = vsel %vm3198, %v3140, 0
    %v3269 = vsel %vm3198, %v3141, 0
    %v3272 = vsel %vm3198, %v3142, 0
    %v3275 = vsel %vm3198, %v3143, 0
    %v3278 = vsel %vm3198, %v3144, 0
    %v3281 = vsel %vm3198, %v3145, 0
    %v3284 = vsel %vm3198, %v3146, 0
    %v3287 = vsel %vm3198, %v3147, 0
    %v3290 = vsel %vm3198, %v3148, 0
    %v3293 = vsel %vm3198, %v3149, 0
    %v3296 = vsel %vm3198, %v3150, 0
    %v3299 = vsel %vm3198, %v3151, 0
    %v3302 = vsel %vm3198, %v3152, 0
    %v3305 = vsel %vm3198, %v3153, 0
    %v3308 = vsel %vm3198, %v3154, 0
    %v3311 = vsel %vm3198, %v3155, 0
    %v3314 = vsel %vm3198, %v3156, 0
    %v3317 = vsel %vm3198, %v3157, 0
    %v3320 = vsel %vm3198, %v3158, 0
    %v3323 = vsel %vm3198, %v3159, 0
    %v3326 = vsel %vm3198, %v3160, 0
    %v3329 = vsel %vm3198, %v3161, 0
    %v3332 = vsel %vm3198, %v3162, 0
    %v3335 = vsel %vm3198, %v3163, 0
    %v3338 = vsel %vm3198, %v3164, 0
    %v3341 = vsel %vm3198, %v3165, 0
    %v3344 = vsel %vm3198, %v3166, 0
    %v3347 = vsel %vm3198, %v3167, 0
    %v3350 = vsel %vm3198, %v3168, 0
    %v3353 = vsel %vm3198, %v3169, 0
    %v3356 = vsel %vm3198, %v3170, 0
    %v3359 = vsel %vm3198, %v3171, 0
    %v3362 = vsel %vm3198, %v3172, 0
    %v3365 = vsel %vm3198, %v3173, 0
    %v3368 = vsel %vm3198, %v3174, 0
    %v3371 = vsel %vm3198, %v3175, 0
    %v3374 = vsel %vm3198, %v3176, 0
    %v3377 = vsel %vm3198, %v3177, 0
    %v3380 = vsel %vm3198, %v3178, 0
    %v3383 = vsel %vm3198, %v3179, 0
    %v3386 = vsel %vm3198, %v3180, 0
    %v3389 = vsel %vm3198, %v3181, 0
    %3391 = vmatprep.subr.mxu0 0.0
    %3392 = vmatpush1.msra.mxu0 %v3182
    %3393 = vmatprep.subr.mxu0 0.0
    %3394 = vmatpush1.msra.mxu0 %v3183
    %3395 = vmatprep.subr.mxu0 0.0
    %3396 = vmatpush1.msra.mxu0 %v3184
    %3397 = vmatprep.subr.mxu0 0.0
    %3398 = vmatpush1.msra.mxu0 %v3185
    %3399 = vmatprep.subr.mxu0 0.0
    %3400 = vmatpush1.msra.mxu0 %v3186
    %3401 = vmatprep.subr.mxu0 0.0
    %3402 = vmatpush1.msra.mxu0 %v3187
    %3403 = vmatprep.subr.mxu0 0.0
    %3404 = vmatpush1.msra.mxu0 %v3188
    %3405 = vmatprep.subr.mxu0 0.0
    %3406 = vmatpush1.msra.mxu0 %v3189
    %3407 = vmatprep.subr.mxu0 0.0
    %3408 = vmatpush1.msra.mxu0 %v3190
    %3409 = vmatprep.subr.mxu0 0.0
    %3410 = vmatpush1.msra.mxu0 0.0
    %3411 = vmatprep.subr.mxu0 0.0
    %3412 = vmatpush1.msra.mxu0 0.0
    %3413 = vmatprep.subr.mxu0 0.0
    %3414 = vmatpush1.msra.mxu0 0.0
    %3415 = vmatprep.subr.mxu0 0.0
    %3416 = vmatpush1.msra.mxu0 0.0
    %3417 = vmatprep.subr.mxu0 0.0
    %3418 = vmatpush1.msra.mxu0 0.0
    %3419 = vmatprep.subr.mxu0 0.0
    %3420 = vmatpush1.msra.mxu0 0.0
    %3421 = vmatprep.subr.mxu0 0.0
    %3422 = vmatpush1.msra.mxu0 0.0
    %3423 = vmatprep.subr.mxu0 0.0
    %3424 = vmatpush1.msra.mxu0 0.0
    %3425 = vmatprep.subr.mxu0 0.0
    %3426 = vmatpush1.msra.mxu0 0.0
    %3427 = vmatprep.subr.mxu0 0.0
    %3428 = vmatpush1.msra.mxu0 0.0
    %3429 = vmatprep.subr.mxu0 0.0
    %3430 = vmatpush1.msra.mxu0 0.0
    %3431 = vmatprep.subr.mxu0 0.0
    %3432 = vmatpush1.msra.mxu0 0.0
    %3433 = vmatprep.subr.mxu0 0.0
    %3434 = vmatpush1.msra.mxu0 0.0
    %3435 = vmatprep.subr.mxu0 0.0
    %3436 = vmatpush1.msra.mxu0 0.0
    %3437 = vmatprep.subr.mxu0 0.0
    %3438 = vmatpush1.msra.mxu0 0.0
    %3439 = vmatprep.subr.mxu0 0.0
    %3440 = vmatpush1.msra.mxu0 0.0
    %3441 = vmatprep.subr.mxu0 0.0
    %3442 = vmatpush1.msra.mxu0 0.0
    %3443 = vmatprep.subr.mxu0 0.0
    %3444 = vmatpush1.msra.mxu0 0.0
    %3445 = vmatprep.subr.mxu0 0.0
    %3446 = vmatpush1.msra.mxu0 0.0
    %3447 = vmatprep.subr.mxu0 0.0
    %3448 = vmatpush1.msra.mxu0 0.0
    %3449 = vmatprep.subr.mxu0 0.0
    %3450 = vmatpush1.msra.mxu0 0.0
    %3451 = vmatprep.subr.mxu0 0.0
    %3452 = vmatpush1.msra.mxu0 0.0
    %3453 = vmatprep.subr.mxu0 0.0
    %3454 = vmatpush1.msra.mxu0 0.0
    %3455 = vmatprep.mubr.f32.mxu0 0.0
    %3456 = vmatmul.mubr.f32.gmra.mrb[0].mxu0 %v3200
    %v3457 = vpop.f32.mrb[0].mxu0
    %v3458 = vadd.f32 %v3196, %v3457
    %v3459 = vpop.f32.mrb[0].mxu0
    %3460 = vmatprep.mubr.f32.mxu0 0.0
    %3461 = vmatmul.mubr.f32.gmra.mrb[0].mxu0 %v3203
    %v3462 = vpop.f32.mrb[0].mxu0
    %v3463 = vadd.f32 %v3196, %v3462
    %v3464 = vpop.f32.mrb[0].mxu0
    %3465 = vmatprep.mubr.f32.mxu0 0.0
    %3466 = vmatmul.mubr.f32.gmra.mrb[0].mxu0 %v3206
    %v3467 = vpop.f32.mrb[0].mxu0
    %v3468 = vadd.f32 %v3196, %v3467
    %v3469 = vpop.f32.mrb[0].mxu0
    %3470 = vmatprep.mubr.f32.mxu0 0.0
    %3471 = vmatmul.mubr.f32.gmra.mrb[0].mxu0 %v3209
    %v3472 = vpop.f32.mrb[0].mxu0
    %v3473 = vadd.f32 %v3196, %v3472
    %v3474 = vpop.f32.mrb[0].mxu0
    %3475 = vmatprep.mubr.f32.mxu0 0.0
    %3476 = vmatmul.mubr.f32.gmra.mrb[0].mxu0 %v3212
    %v3477 = vpop.f32.mrb[0].mxu0
    %v3478 = vadd.f32 %v3196, %v3477
    %v3479 = vpop.f32.mrb[0].mxu0
    %3480 = vmatprep.mubr.f32.mxu0 0.0
    %3481 = vmatmul.mubr.f32.gmra.mrb[0].mxu0 %v3215
    %v3482 = vpop.f32.mrb[0].mxu0
    %v3483 = vadd.f32 %v3196, %v3482
    %v3484 = vpop.f32.mrb[0].mxu0
    %3485 = vmatprep.mubr.f32.mxu0 0.0
    %3486 = vmatmul.mubr.f32.gmra.mrb[0].mxu0 %v3218
    %v3487 = vpop.f32.mrb[0].mxu0
    %v3488 = vadd.f32 %v3196, %v3487
    %v3489 = vpop.f32.mrb[0].mxu0
    %3490 = vmatprep.mubr.f32.mxu0 0.0
    %3491 = vmatmul.mubr.f32.gmra.mrb[0].mxu0 %v3221
    %v3492 = vpop.f32.mrb[0].mxu0
    %v3493 = vadd.f32 %v3196, %v3492
    %v3494 = vpop.f32.mrb[0].mxu0
    %3495 = vmatprep.mubr.f32.mxu0 0.0
    %3496 = vmatmul.mubr.f32.gmra.mrb[0].mxu0 %v3224
    %v3497 = vpop.f32.mrb[0].mxu0
    %v3498 = vadd.f32 %v3196, %v3497
    %v3499 = vpop.f32.mrb[0].mxu0
    %3500 = vmatprep.mubr.f32.mxu0 0.0
    %3501 = vmatmul.mubr.f32.gmra.mrb[0].mxu0 %v3227
    %v3502 = vpop.f32.mrb[0].mxu0
    %v3503 = vadd.f32 %v3196, %v3502
    %v3504 = vpop.f32.mrb[0].mxu0
    %3505 = vmatprep.mubr.f32.mxu0 0.0
    %3506 = vmatmul.mubr.f32.gmra.mrb[0].mxu0 %v3230
    %v3507 = vpop.f32.mrb[0].mxu0
    %v3508 = vadd.f32 %v3196, %v3507
    %v3509 = vpop.f32.mrb[0].mxu0
    %3510 = vmatprep.mubr.f32.mxu0 0.0
    %3511 = vmatmul.mubr.f32.gmra.mrb[0].mxu0 %v3233
    %v3512 = vpop.f32.mrb[0].mxu0
    %v3513 = vadd.f32 %v3196, %v3512
    %v3514 = vpop.f32.mrb[0].mxu0
    %3515 = vmatprep.mubr.f32.mxu0 0.0
    %3516 = vmatmul.mubr.f32.gmra.mrb[0].mxu0 %v3236
    %v3517 = vpop.f32.mrb[0].mxu0
    %v3518 = vadd.f32 %v3196, %v3517
    %v3519 = vpop.f32.mrb[0].mxu0
    %3520 = vmatprep.mubr.f32.mxu0 0.0
    %3521 = vmatmul.mubr.f32.gmra.mrb[0].mxu0 %v3239
    %v3522 = vpop.f32.mrb[0].mxu0
    %v3523 = vadd.f32 %v3196, %v3522
    %v3524 = vpop.f32.mrb[0].mxu0
    %3525 = vmatprep.mubr.f32.mxu0 0.0
    %3526 = vmatmul.mubr.f32.gmra.mrb[0].mxu0 %v3242
    %v3527 = vpop.f32.mrb[0].mxu0
    %v3528 = vadd.f32 %v3196, %v3527
    %v3529 = vpop.f32.mrb[0].mxu0
    %3530 = vmatprep.mubr.f32.mxu0 0.0
    %3531 = vmatmul.mubr.f32.gmra.mrb[0].mxu0 %v3245
    %v3532 = vpop.f32.mrb[0].mxu0
    %v3533 = vadd.f32 %v3196, %v3532
    %v3534 = vpop.f32.mrb[0].mxu0
    %3535 = vmatprep.mubr.f32.mxu0 0.0
    %3536 = vmatmul.mubr.f32.gmra.mrb[0].mxu0 %v3248
    %v3537 = vpop.f32.mrb[0].mxu0
    %v3538 = vadd.f32 %v3196, %v3537
    %v3539 = vpop.f32.mrb[0].mxu0
    %3540 = vmatprep.mubr.f32.mxu0 0.0
    %3541 = vmatmul.mubr.f32.gmra.mrb[0].mxu0 %v3251
    %v3542 = vpop.f32.mrb[0].mxu0
    %v3543 = vadd.f32 %v3196, %v3542
    %v3544 = vpop.f32.mrb[0].mxu0
    %3545 = vmatprep.mubr.f32.mxu0 0.0
    %3546 = vmatmul.mubr.f32.gmra.mrb[0].mxu0 %v3254
    %v3547 = vpop.f32.mrb[0].mxu0
    %v3548 = vadd.f32 %v3196, %v3547
    %v3549 = vpop.f32.mrb[0].mxu0
    %3550 = vmatprep.mubr.f32.mxu0 0.0
    %3551 = vmatmul.mubr.f32.gmra.mrb[0].mxu0 %v3257
    %v3552 = vpop.f32.mrb[0].mxu0
    %v3553 = vadd.f32 %v3196, %v3552
    %v3554 = vpop.f32.mrb[0].mxu0
    %3555 = vmatprep.mubr.f32.mxu0 0.0
    %3556 = vmatmul.mubr.f32.gmra.mrb[0].mxu0 %v3260
    %v3557 = vpop.f32.mrb[0].mxu0
    %v3558 = vadd.f32 %v3196, %v3557
    %v3559 = vpop.f32.mrb[0].mxu0
    %3560 = vmatprep.mubr.f32.mxu0 0.0
    %3561 = vmatmul.mubr.f32.gmra.mrb[0].mxu0 %v3263
    %v3562 = vpop.f32.mrb[0].mxu0
    %v3563 = vadd.f32 %v3196, %v3562
    %v3564 = vpop.f32.mrb[0].mxu0
    %3565 = vmatprep.mubr.f32.mxu0 0.0
    %3566 = vmatmul.mubr.f32.gmra.mrb[0].mxu0 %v3266
    %v3567 = vpop.f32.mrb[0].mxu0
    %v3568 = vadd.f32 %v3196, %v3567
    %v3569 = vpop.f32.mrb[0].mxu0
    %3570 = vmatprep.mubr.f32.mxu0 0.0
    %3571 = vmatmul.mubr.f32.gmra.mrb[0].mxu0 %v3269
    %v3572 = vpop.f32.mrb[0].mxu0
    %v3573 = vadd.f32 %v3196, %v3572
    %v3574 = vpop.f32.mrb[0].mxu0
    %3575 = vmatprep.mubr.f32.mxu0 0.0
    %3576 = vmatmul.mubr.f32.gmra.mrb[0].mxu0 %v3272
    %v3577 = vpop.f32.mrb[0].mxu0
    %v3578 = vadd.f32 %v3196, %v3577
    %v3579 = vpop.f32.mrb[0].mxu0
    %3580 = vmatprep.mubr.f32.mxu0 0.0
    %3581 = vmatmul.mubr.f32.gmra.mrb[0].mxu0 %v3275
    %v3582 = vpop.f32.mrb[0].mxu0
    %v3583 = vadd.f32 %v3196, %v3582
    %v3584 = vpop.f32.mrb[0].mxu0
    %3585 = vmatprep.mubr.f32.mxu0 0.0
    %3586 = vmatmul.mubr.f32.gmra.mrb[0].mxu0 %v3278
    %v3587 = vpop.f32.mrb[0].mxu0
    %v3588 = vadd.f32 %v3196, %v3587
    %v3589 = vpop.f32.mrb[0].mxu0
    %3590 = vmatprep.mubr.f32.mxu0 0.0
    %3591 = vmatmul.mubr.f32.gmra.mrb[0].mxu0 %v3281
    %v3592 = vpop.f32.mrb[0].mxu0
    %v3593 = vadd.f32 %v3196, %v3592
    %v3594 = vpop.f32.mrb[0].mxu0
    %3595 = vmatprep.mubr.f32.mxu0 0.0
    %3596 = vmatmul.mubr.f32.gmra.mrb[0].mxu0 %v3284
    %v3597 = vpop.f32.mrb[0].mxu0
    %v3598 = vadd.f32 %v3196, %v3597
    %v3599 = vpop.f32.mrb[0].mxu0
    %3600 = vmatprep.mubr.f32.mxu0 0.0
    %3601 = vmatmul.mubr.f32.gmra.mrb[0].mxu0 %v3287
    %v3602 = vpop.f32.mrb[0].mxu0
    %v3603 = vadd.f32 %v3196, %v3602
    %v3604 = vpop.f32.mrb[0].mxu0
    %3605 = vmatprep.mubr.f32.mxu0 0.0
    %3606 = vmatmul.mubr.f32.gmra.mrb[0].mxu0 %v3290
    %v3607 = vpop.f32.mrb[0].mxu0
    %v3608 = vadd.f32 %v3196, %v3607
    %v3609 = vpop.f32.mrb[0].mxu0
    %3610 = vmatprep.mubr.f32.mxu0 0.0
    %3611 = vmatmul.mubr.f32.gmra.mrb[0].mxu0 %v3293
    %v3612 = vpop.f32.mrb[0].mxu0
    %v3613 = vadd.f32 %v3196, %v3612
    %v3614 = vpop.f32.mrb[0].mxu0
    %3615 = vmatprep.mubr.f32.mxu0 0.0
    %3616 = vmatmul.mubr.f32.gmra.mrb[0].mxu0 %v3296
    %v3617 = vpop.f32.mrb[0].mxu0
    %v3618 = vadd.f32 %v3196, %v3617
    %v3619 = vpop.f32.mrb[0].mxu0
    %3620 = vmatprep.mubr.f32.mxu0 0.0
    %3621 = vmatmul.mubr.f32.gmra.mrb[0].mxu0 %v3299
    %v3622 = vpop.f32.mrb[0].mxu0
    %v3623 = vadd.f32 %v3196, %v3622
    %v3624 = vpop.f32.mrb[0].mxu0
    %3625 = vmatprep.mubr.f32.mxu0 0.0
    %3626 = vmatmul.mubr.f32.gmra.mrb[0].mxu0 %v3302
    %v3627 = vpop.f32.mrb[0].mxu0
    %v3628 = vadd.f32 %v3196, %v3627
    %v3629 = vpop.f32.mrb[0].mxu0
    %3630 = vmatprep.mubr.f32.mxu0 0.0
    %3631 = vmatmul.mubr.f32.gmra.mrb[0].mxu0 %v3305
    %v3632 = vpop.f32.mrb[0].mxu0
    %v3633 = vadd.f32 %v3196, %v3632
    %v3634 = vpop.f32.mrb[0].mxu0
    %3635 = vmatprep.mubr.f32.mxu0 0.0
    %3636 = vmatmul.mubr.f32.gmra.mrb[0].mxu0 %v3308
    %v3637 = vpop.f32.mrb[0].mxu0
    %v3638 = vadd.f32 %v3196, %v3637
    %v3639 = vpop.f32.mrb[0].mxu0
    %3640 = vmatprep.mubr.f32.mxu0 0.0
    %3641 = vmatmul.mubr.f32.gmra.mrb[0].mxu0 %v3311
    %v3642 = vpop.f32.mrb[0].mxu0
    %v3643 = vadd.f32 %v3196, %v3642
    %v3644 = vpop.f32.mrb[0].mxu0
    %3645 = vmatprep.mubr.f32.mxu0 0.0
    %3646 = vmatmul.mubr.f32.gmra.mrb[0].mxu0 %v3314
    %v3647 = vpop.f32.mrb[0].mxu0
    %v3648 = vadd.f32 %v3196, %v3647
    %v3649 = vpop.f32.mrb[0].mxu0
    %3650 = vmatprep.mubr.f32.mxu0 0.0
    %3651 = vmatmul.mubr.f32.gmra.mrb[0].mxu0 %v3317
    %v3652 = vpop.f32.mrb[0].mxu0
    %v3653 = vadd.f32 %v3196, %v3652
    %v3654 = vpop.f32.mrb[0].mxu0
    %3655 = vmatprep.mubr.f32.mxu0 0.0
    %3656 = vmatmul.mubr.f32.gmra.mrb[0].mxu0 %v3320
    %v3657 = vpop.f32.mrb[0].mxu0
    %v3658 = vadd.f32 %v3196, %v3657
    %v3659 = vpop.f32.mrb[0].mxu0
    %3660 = vmatprep.mubr.f32.mxu0 0.0
    %3661 = vmatmul.mubr.f32.gmra.mrb[0].mxu0 %v3323
    %v3662 = vpop.f32.mrb[0].mxu0
    %v3663 = vadd.f32 %v3196, %v3662
    %v3664 = vpop.f32.mrb[0].mxu0
    %3665 = vmatprep.mubr.f32.mxu0 0.0
    %3666 = vmatmul.mubr.f32.gmra.mrb[0].mxu0 %v3326
    %v3667 = vpop.f32.mrb[0].mxu0
    %v3668 = vadd.f32 %v3196, %v3667
    %v3669 = vpop.f32.mrb[0].mxu0
    %3670 = vmatprep.mubr.f32.mxu0 0.0
    %3671 = vmatmul.mubr.f32.gmra.mrb[0].mxu0 %v3329
    %v3672 = vpop.f32.mrb[0].mxu0
    %v3673 = vadd.f32 %v3196, %v3672
    %v3674 = vpop.f32.mrb[0].mxu0
    %3675 = vmatprep.mubr.f32.mxu0 0.0
    %3676 = vmatmul.mubr.f32.gmra.mrb[0].mxu0 %v3332
    %v3677 = vpop.f32.mrb[0].mxu0
    %v3678 = vadd.f32 %v3196, %v3677
    %v3679 = vpop.f32.mrb[0].mxu0
    %3680 = vmatprep.mubr.f32.mxu0 0.0
    %3681 = vmatmul.mubr.f32.gmra.mrb[0].mxu0 %v3335
    %v3682 = vpop.f32.mrb[0].mxu0
    %v3683 = vadd.f32 %v3196, %v3682
    %v3684 = vpop.f32.mrb[0].mxu0
    %3685 = vmatprep.mubr.f32.mxu0 0.0
    %3686 = vmatmul.mubr.f32.gmra.mrb[0].mxu0 %v3338
    %v3687 = vpop.f32.mrb[0].mxu0
    %v3688 = vadd.f32 %v3196, %v3687
    %v3689 = vpop.f32.mrb[0].mxu0
    %3690 = vmatprep.mubr.f32.mxu0 0.0
    %3691 = vmatmul.mubr.f32.gmra.mrb[0].mxu0 %v3341
    %v3692 = vpop.f32.mrb[0].mxu0
    %v3693 = vadd.f32 %v3196, %v3692
    %v3694 = vpop.f32.mrb[0].mxu0
    %3695 = vmatprep.mubr.f32.mxu0 0.0
    %3696 = vmatmul.mubr.f32.gmra.mrb[0].mxu0 %v3344
    %v3697 = vpop.f32.mrb[0].mxu0
    %v3698 = vadd.f32 %v3196, %v3697
    %v3699 = vpop.f32.mrb[0].mxu0
    %3700 = vmatprep.mubr.f32.mxu0 0.0
    %3701 = vmatmul.mubr.f32.gmra.mrb[0].mxu0 %v3347
    %v3702 = vpop.f32.mrb[0].mxu0
    %v3703 = vadd.f32 %v3196, %v3702
    %v3704 = vpop.f32.mrb[0].mxu0
    %3705 = vmatprep.mubr.f32.mxu0 0.0
    %3706 = vmatmul.mubr.f32.gmra.mrb[0].mxu0 %v3350
    %v3707 = vpop.f32.mrb[0].mxu0
    %v3708 = vadd.f32 %v3196, %v3707
    %v3709 = vpop.f32.mrb[0].mxu0
    %3710 = vmatprep.mubr.f32.mxu0 0.0
    %3711 = vmatmul.mubr.f32.gmra.mrb[0].mxu0 %v3353
    %v3712 = vpop.f32.mrb[0].mxu0
    %v3713 = vadd.f32 %v3196, %v3712
    %v3714 = vpop.f32.mrb[0].mxu0
    %3715 = vmatprep.mubr.f32.mxu0 0.0
    %3716 = vmatmul.mubr.f32.gmra.mrb[0].mxu0 %v3356
    %v3717 = vpop.f32.mrb[0].mxu0
    %v3718 = vadd.f32 %v3196, %v3717
    %v3719 = vpop.f32.mrb[0].mxu0
    %3720 = vmatprep.mubr.f32.mxu0 0.0
    %3721 = vmatmul.mubr.f32.gmra.mrb[0].mxu0 %v3359
    %v3722 = vpop.f32.mrb[0].mxu0
    %v3723 = vadd.f32 %v3196, %v3722
    %v3724 = vpop.f32.mrb[0].mxu0
    %3725 = vmatprep.mubr.f32.mxu0 0.0
    %3726 = vmatmul.mubr.f32.gmra.mrb[0].mxu0 %v3362
    %v3727 = vpop.f32.mrb[0].mxu0
    %v3728 = vadd.f32 %v3196, %v3727
    %v3729 = vpop.f32.mrb[0].mxu0
    %3730 = vmatprep.mubr.f32.mxu0 0.0
    %3731 = vmatmul.mubr.f32.gmra.mrb[0].mxu0 %v3365
    %v3732 = vpop.f32.mrb[0].mxu0
    %v3733 = vadd.f32 %v3196, %v3732
    %v3734 = vpop.f32.mrb[0].mxu0
    %3735 = vmatprep.mubr.f32.mxu0 0.0
    %3736 = vmatmul.mubr.f32.gmra.mrb[0].mxu0 %v3368
    %v3737 = vpop.f32.mrb[0].mxu0
    %v3738 = vadd.f32 %v3196, %v3737
    %v3739 = vpop.f32.mrb[0].mxu0
    %3740 = vmatprep.mubr.f32.mxu0 0.0
    %3741 = vmatmul.mubr.f32.gmra.mrb[0].mxu0 %v3371
    %v3742 = vpop.f32.mrb[0].mxu0
    %v3743 = vadd.f32 %v3196, %v3742
    %v3744 = vpop.f32.mrb[0].mxu0
    %3745 = vmatprep.mubr.f32.mxu0 0.0
    %3746 = vmatmul.mubr.f32.gmra.mrb[0].mxu0 %v3374
    %v3747 = vpop.f32.mrb[0].mxu0
    %v3748 = vadd.f32 %v3196, %v3747
    %v3749 = vpop.f32.mrb[0].mxu0
    %3750 = vmatprep.mubr.f32.mxu0 0.0
    %3751 = vmatmul.mubr.f32.gmra.mrb[0].mxu0 %v3377
    %v3752 = vpop.f32.mrb[0].mxu0
    %v3753 = vadd.f32 %v3196, %v3752
    %v3754 = vpop.f32.mrb[0].mxu0
    %3755 = vmatprep.mubr.f32.mxu0 0.0
    %3756 = vmatmul.mubr.f32.gmra.mrb[0].mxu0 %v3380
    %v3757 = vpop.f32.mrb[0].mxu0
    %v3758 = vadd.f32 %v3196, %v3757
    %v3759 = vpop.f32.mrb[0].mxu0
    %3760 = vmatprep.mubr.f32.mxu0 0.0
    %3761 = vmatmul.mubr.f32.gmra.mrb[0].mxu0 %v3383
    %v3762 = vpop.f32.mrb[0].mxu0
    %v3763 = vadd.f32 %v3196, %v3762
    %v3764 = vpop.f32.mrb[0].mxu0
    %3765 = vmatprep.mubr.f32.mxu0 0.0
    %3766 = vmatmul.mubr.f32.gmra.mrb[0].mxu0 %v3386
    %v3767 = vpop.f32.mrb[0].mxu0
    %v3768 = vadd.f32 %v3196, %v3767
    %v3769 = vpop.f32.mrb[0].mxu0
    %3770 = vmatprep.mubr.f32.mxu0 0.0
    %3771 = vmatmul.mubr.f32.gmra.mrb[0].mxu0 %v3389
    %v3772 = vpop.f32.mrb[0].mxu0
    %v3773 = vadd.f32 %v3196, %v3772
    %v3774 = vpop.f32.mrb[0].mxu0
    %3775 = vdwg.mxu0
    %v3776 = vld [vmem:[%s4] sm:$0x1]
    %v3777 = vld [vmem:[%s5] sm:$0x1]
    %v3778 = vsel %vm2662, %v3458, 0.0
    %v3779 = vsel %vm2662, %v3463, 0.0
    %v3780 = vadd.f32 %v3778, %v3779
    %v3781 = vsel %vm2662, %v3468, 0.0
    %v3782 = vadd.f32 %v3780, %v3781
    %v3783 = vsel %vm2662, %v3473, 0.0
    %v3784 = vadd.f32 %v3782, %v3783
    %v3785 = vsel %vm2662, %v3478, 0.0
    %v3786 = vadd.f32 %v3784, %v3785
    %v3787 = vsel %vm2662, %v3483, 0.0
    %v3788 = vadd.f32 %v3786, %v3787
    %v3789 = vsel %vm2662, %v3488, 0.0
    %v3790 = vadd.f32 %v3788, %v3789
    %v3791 = vsel %vm2662, %v3493, 0.0
    %v3792 = vadd.f32 %v3790, %v3791
    %v3793 = vsel %vm2662, %v3498, 0.0
    %v3794 = vadd.f32 %v3792, %v3793
    %v3795 = vsel %vm2662, %v3503, 0.0
    %v3796 = vadd.f32 %v3794, %v3795
    %v3797 = vsel %vm2662, %v3508, 0.0
    %v3798 = vadd.f32 %v3796, %v3797
    %v3799 = vsel %vm2662, %v3513, 0.0
    %v3800 = vadd.f32 %v3798, %v3799
    %v3801 = vsel %vm2662, %v3518, 0.0
    %v3802 = vadd.f32 %v3800, %v3801
    %v3803 = vsel %vm2662, %v3523, 0.0
    %v3804 = vadd.f32 %v3802, %v3803
    %v3805 = vsel %vm2662, %v3528, 0.0
    %v3806 = vadd.f32 %v3804, %v3805
    %v3807 = vsel %vm2662, %v3533, 0.0
    %v3808 = vadd.f32 %v3806, %v3807
    %v3809 = vsel %vm2662, %v3538, 0.0
    %v3810 = vadd.f32 %v3808, %v3809
    %v3811 = vsel %vm2662, %v3543, 0.0
    %v3812 = vadd.f32 %v3810, %v3811
    %v3813 = vsel %vm2662, %v3548, 0.0
    %v3814 = vadd.f32 %v3812, %v3813
    %v3815 = vsel %vm2662, %v3553, 0.0
    %v3816 = vadd.f32 %v3814, %v3815
    %v3817 = vsel %vm2662, %v3558, 0.0
    %v3818 = vadd.f32 %v3816, %v3817
    %v3819 = vsel %vm2662, %v3563, 0.0
    %v3820 = vadd.f32 %v3818, %v3819
    %v3821 = vsel %vm2662, %v3568, 0.0
    %v3822 = vadd.f32 %v3820, %v3821
    %v3823 = vsel %vm2662, %v3573, 0.0
    %v3824 = vadd.f32 %v3822, %v3823
    %v3825 = vsel %vm2662, %v3578, 0.0
    %v3826 = vadd.f32 %v3824, %v3825
    %v3827 = vsel %vm2662, %v3583, 0.0
    %v3828 = vadd.f32 %v3826, %v3827
    %v3829 = vsel %vm2662, %v3588, 0.0
    %v3830 = vadd.f32 %v3828, %v3829
    %v3831 = vsel %vm2662, %v3593, 0.0
    %v3832 = vadd.f32 %v3830, %v3831
    %v3833 = vsel %vm2662, %v3598, 0.0
    %v3834 = vadd.f32 %v3832, %v3833
    %v3835 = vsel %vm2662, %v3603, 0.0
    %v3836 = vadd.f32 %v3834, %v3835
    %v3837 = vsel %vm2662, %v3608, 0.0
    %v3838 = vadd.f32 %v3836, %v3837
    %v3839 = vsel %vm2662, %v3613, 0.0
    %v3840 = vadd.f32 %v3838, %v3839
    %v3841 = vsel %vm2662, %v3618, 0.0
    %v3842 = vadd.f32 %v3840, %v3841
    %v3843 = vsel %vm2662, %v3623, 0.0
    %v3844 = vadd.f32 %v3842, %v3843
    %v3845 = vsel %vm2662, %v3628, 0.0
    %v3846 = vadd.f32 %v3844, %v3845
    %v3847 = vsel %vm2662, %v3633, 0.0
    %v3848 = vadd.f32 %v3846, %v3847
    %v3849 = vsel %vm2662, %v3638, 0.0
    %v3850 = vadd.f32 %v3848, %v3849
    %v3851 = vsel %vm2662, %v3643, 0.0
    %v3852 = vadd.f32 %v3850, %v3851
    %v3853 = vsel %vm2662, %v3648, 0.0
    %v3854 = vadd.f32 %v3852, %v3853
    %v3855 = vsel %vm2662, %v3653, 0.0
    %v3856 = vadd.f32 %v3854, %v3855
    %v3857 = vsel %vm2662, %v3658, 0.0
    %v3858 = vadd.f32 %v3856, %v3857
    %v3859 = vsel %vm2662, %v3663, 0.0
    %v3860 = vadd.f32 %v3858, %v3859
    %v3861 = vsel %vm2662, %v3668, 0.0
    %v3862 = vadd.f32 %v3860, %v3861
    %v3863 = vsel %vm2662, %v3673, 0.0
    %v3864 = vadd.f32 %v3862, %v3863
    %v3865 = vsel %vm2662, %v3678, 0.0
    %v3866 = vadd.f32 %v3864, %v3865
    %v3867 = vsel %vm2662, %v3683, 0.0
    %v3868 = vadd.f32 %v3866, %v3867
    %v3869 = vsel %vm2662, %v3688, 0.0
    %v3870 = vadd.f32 %v3868, %v3869
    %v3871 = vsel %vm2662, %v3693, 0.0
    %v3872 = vadd.f32 %v3870, %v3871
    %v3873 = vsel %vm2662, %v3698, 0.0
    %v3874 = vadd.f32 %v3872, %v3873
    %v3875 = vsel %vm2662, %v3703, 0.0
    %v3876 = vadd.f32 %v3874, %v3875
    %v3877 = vsel %vm2662, %v3708, 0.0
    %v3878 = vadd.f32 %v3876, %v3877
    %v3879 = vsel %vm2662, %v3713, 0.0
    %v3880 = vadd.f32 %v3878, %v3879
    %v3881 = vsel %vm2662, %v3718, 0.0
    %v3882 = vadd.f32 %v3880, %v3881
    %v3883 = vsel %vm2662, %v3723, 0.0
    %v3884 = vadd.f32 %v3882, %v3883
    %v3885 = vsel %vm2662, %v3728, 0.0
    %v3886 = vadd.f32 %v3884, %v3885
    %v3887 = vsel %vm2662, %v3733, 0.0
    %v3888 = vadd.f32 %v3886, %v3887
    %v3889 = vsel %vm2662, %v3738, 0.0
    %v3890 = vadd.f32 %v3888, %v3889
    %v3891 = vsel %vm2662, %v3743, 0.0
    %v3892 = vadd.f32 %v3890, %v3891
    %v3893 = vsel %vm2662, %v3748, 0.0
    %v3894 = vadd.f32 %v3892, %v3893
    %v3895 = vsel %vm2662, %v3753, 0.0
    %v3896 = vadd.f32 %v3894, %v3895
    %v3897 = vsel %vm2662, %v3758, 0.0
    %v3898 = vadd.f32 %v3896, %v3897
    %v3899 = vsel %vm2662, %v3763, 0.0
    %v3900 = vadd.f32 %v3898, %v3899
    %v3901 = vsel %vm2662, %v3768, 0.0
    %v3902 = vadd.f32 %v3900, %v3901
    %v3903 = vsel %vm2662, %v3773, 0.0
    %v3904 = vadd.f32 %v3902, %v3903
    %v3905 = vrot.slane %v3904, 4
    %v3906 = vadd.f32 %v3904, %v3905
    %v3907 = vrot.slane %v3906, 2
    %v3908 = vadd.f32 %v3906, %v3907
    %v3909 = vrot.slane %v3908, 1
    %v3910 = vadd.f32 %v3908, %v3909
    %v3911 = vmul.f32 %v3910, 0.001953125
    %v3912 = vmul.f32 %v3458, %v3458
    %v3913 = vmul.f32 %v3463, %v3463
    %v3914 = vmul.f32 %v3468, %v3468
    %v3915 = vmul.f32 %v3473, %v3473
    %v3916 = vmul.f32 %v3478, %v3478
    %v3917 = vmul.f32 %v3483, %v3483
    %v3918 = vmul.f32 %v3488, %v3488
    %v3919 = vmul.f32 %v3493, %v3493
    %v3920 = vmul.f32 %v3498, %v3498
    %v3921 = vmul.f32 %v3503, %v3503
    %v3922 = vmul.f32 %v3508, %v3508
    %v3923 = vmul.f32 %v3513, %v3513
    %v3924 = vmul.f32 %v3518, %v3518
    %v3925 = vmul.f32 %v3523, %v3523
    %v3926 = vmul.f32 %v3528, %v3528
    %v3927 = vmul.f32 %v3533, %v3533
    %v3928 = vmul.f32 %v3538, %v3538
    %v3929 = vmul.f32 %v3543, %v3543
    %v3930 = vmul.f32 %v3548, %v3548
    %v3931 = vmul.f32 %v3553, %v3553
    %v3932 = vmul.f32 %v3558, %v3558
    %v3933 = vmul.f32 %v3563, %v3563
    %v3934 = vmul.f32 %v3568, %v3568
    %v3935 = vmul.f32 %v3573, %v3573
    %v3936 = vmul.f32 %v3578, %v3578
    %v3937 = vmul.f32 %v3583, %v3583
    %v3938 = vmul.f32 %v3588, %v3588
    %v3939 = vmul.f32 %v3593, %v3593
    %v3940 = vmul.f32 %v3598, %v3598
    %v3941 = vmul.f32 %v3603, %v3603
    %v3942 = vmul.f32 %v3608, %v3608
    %v3943 = vmul.f32 %v3613, %v3613
    %v3944 = vmul.f32 %v3618, %v3618
    %v3945 = vmul.f32 %v3623, %v3623
    %v3946 = vmul.f32 %v3628, %v3628
    %v3947 = vmul.f32 %v3633, %v3633
    %v3948 = vmul.f32 %v3638, %v3638
    %v3949 = vmul.f32 %v3643, %v3643
    %v3950 = vmul.f32 %v3648, %v3648
    %v3951 = vmul.f32 %v3653, %v3653
    %v3952 = vmul.f32 %v3658, %v3658
    %v3953 = vmul.f32 %v3663, %v3663
    %v3954 = vmul.f32 %v3668, %v3668
    %v3955 = vmul.f32 %v3673, %v3673
    %v3956 = vmul.f32 %v3678, %v3678
    %v3957 = vmul.f32 %v3683, %v3683
    %v3958 = vmul.f32 %v3688, %v3688
    %v3959 = vmul.f32 %v3693, %v3693
    %v3960 = vmul.f32 %v3698, %v3698
    %v3961 = vmul.f32 %v3703, %v3703
    %v3962 = vmul.f32 %v3708, %v3708
    %v3963 = vmul.f32 %v3713, %v3713
    %v3964 = vmul.f32 %v3718, %v3718
    %v3965 = vmul.f32 %v3723, %v3723
    %v3966 = vmul.f32 %v3728, %v3728
    %v3967 = vmul.f32 %v3733, %v3733
    %v3968 = vmul.f32 %v3738, %v3738
    %v3969 = vmul.f32 %v3743, %v3743
    %v3970 = vmul.f32 %v3748, %v3748
    %v3971 = vmul.f32 %v3753, %v3753
    %v3972 = vmul.f32 %v3758, %v3758
    %v3973 = vmul.f32 %v3763, %v3763
    %v3974 = vmul.f32 %v3768, %v3768
    %v3975 = vmul.f32 %v3773, %v3773
    %v3976 = vsel %vm2662, %v3912, 0.0
    %v3977 = vsel %vm2662, %v3913, 0.0
    %v3978 = vadd.f32 %v3976, %v3977
    %v3979 = vsel %vm2662, %v3914, 0.0
    %v3980 = vadd.f32 %v3978, %v3979
    %v3981 = vsel %vm2662, %v3915, 0.0
    %v3982 = vadd.f32 %v3980, %v3981
    %v3983 = vsel %vm2662, %v3916, 0.0
    %v3984 = vadd.f32 %v3982, %v3983
    %v3985 = vsel %vm2662, %v3917, 0.0
    %v3986 = vadd.f32 %v3984, %v3985
    %v3987 = vsel %vm2662, %v3918, 0.0
    %v3988 = vadd.f32 %v3986, %v3987
    %v3989 = vsel %vm2662, %v3919, 0.0
    %v3990 = vadd.f32 %v3988, %v3989
    %v3991 = vsel %vm2662, %v3920, 0.0
    %v3992 = vadd.f32 %v3990, %v3991
    %v3993 = vsel %vm2662, %v3921, 0.0
    %v3994 = vadd.f32 %v3992, %v3993
    %v3995 = vsel %vm2662, %v3922, 0.0
    %v3996 = vadd.f32 %v3994, %v3995
    %v3997 = vsel %vm2662, %v3923, 0.0
    %v3998 = vadd.f32 %v3996, %v3997
    %v3999 = vsel %vm2662, %v3924, 0.0
    %v4000 = vadd.f32 %v3998, %v3999
    %v4001 = vsel %vm2662, %v3925, 0.0
    %v4002 = vadd.f32 %v4000, %v4001
    %v4003 = vsel %vm2662, %v3926, 0.0
    %v4004 = vadd.f32 %v4002, %v4003
    %v4005 = vsel %vm2662, %v3927, 0.0
    %v4006 = vadd.f32 %v4004, %v4005
    %v4007 = vsel %vm2662, %v3928, 0.0
    %v4008 = vadd.f32 %v4006, %v4007
    %v4009 = vsel %vm2662, %v3929, 0.0
    %v4010 = vadd.f32 %v4008, %v4009
    %v4011 = vsel %vm2662, %v3930, 0.0
    %v4012 = vadd.f32 %v4010, %v4011
    %v4013 = vsel %vm2662, %v3931, 0.0
    %v4014 = vadd.f32 %v4012, %v4013
    %v4015 = vsel %vm2662, %v3932, 0.0
    %v4016 = vadd.f32 %v4014, %v4015
    %v4017 = vsel %vm2662, %v3933, 0.0
    %v4018 = vadd.f32 %v4016, %v4017
    %v4019 = vsel %vm2662, %v3934, 0.0
    %v4020 = vadd.f32 %v4018, %v4019
    %v4021 = vsel %vm2662, %v3935, 0.0
    %v4022 = vadd.f32 %v4020, %v4021
    %v4023 = vsel %vm2662, %v3936, 0.0
    %v4024 = vadd.f32 %v4022, %v4023
    %v4025 = vsel %vm2662, %v3937, 0.0
    %v4026 = vadd.f32 %v4024, %v4025
    %v4027 = vsel %vm2662, %v3938, 0.0
    %v4028 = vadd.f32 %v4026, %v4027
    %v4029 = vsel %vm2662, %v3939, 0.0
    %v4030 = vadd.f32 %v4028, %v4029
    %v4031 = vsel %vm2662, %v3940, 0.0
    %v4032 = vadd.f32 %v4030, %v4031
    %v4033 = vsel %vm2662, %v3941, 0.0
    %v4034 = vadd.f32 %v4032, %v4033
    %v4035 = vsel %vm2662, %v3942, 0.0
    %v4036 = vadd.f32 %v4034, %v4035
    %v4037 = vsel %vm2662, %v3943, 0.0
    %v4038 = vadd.f32 %v4036, %v4037
    %v4039 = vsel %vm2662, %v3944, 0.0
    %v4040 = vadd.f32 %v4038, %v4039
    %v4041 = vsel %vm2662, %v3945, 0.0
    %v4042 = vadd.f32 %v4040, %v4041
    %v4043 = vsel %vm2662, %v3946, 0.0
    %v4044 = vadd.f32 %v4042, %v4043
    %v4045 = vsel %vm2662, %v3947, 0.0
    %v4046 = vadd.f32 %v4044, %v4045
    %v4047 = vsel %vm2662, %v3948, 0.0
    %v4048 = vadd.f32 %v4046, %v4047
    %v4049 = vsel %vm2662, %v3949, 0.0
    %v4050 = vadd.f32 %v4048, %v4049
    %v4051 = vsel %vm2662, %v3950, 0.0
    %v4052 = vadd.f32 %v4050, %v4051
    %v4053 = vsel %vm2662, %v3951, 0.0
    %v4054 = vadd.f32 %v4052, %v4053
    %v4055 = vsel %vm2662, %v3952, 0.0
    %v4056 = vadd.f32 %v4054, %v4055
    %v4057 = vsel %vm2662, %v3953, 0.0
    %v4058 = vadd.f32 %v4056, %v4057
    %v4059 = vsel %vm2662, %v3954, 0.0
    %v4060 = vadd.f32 %v4058, %v4059
    %v4061 = vsel %vm2662, %v3955, 0.0
    %v4062 = vadd.f32 %v4060, %v4061
    %v4063 = vsel %vm2662, %v3956, 0.0
    %v4064 = vadd.f32 %v4062, %v4063
    %v4065 = vsel %vm2662, %v3957, 0.0
    %v4066 = vadd.f32 %v4064, %v4065
    %v4067 = vsel %vm2662, %v3958, 0.0
    %v4068 = vadd.f32 %v4066, %v4067
    %v4069 = vsel %vm2662, %v3959, 0.0
    %v4070 = vadd.f32 %v4068, %v4069
    %v4071 = vsel %vm2662, %v3960, 0.0
    %v4072 = vadd.f32 %v4070, %v4071
    %v4073 = vsel %vm2662, %v3961, 0.0
    %v4074 = vadd.f32 %v4072, %v4073
    %v4075 = vsel %vm2662, %v3962, 0.0
    %v4076 = vadd.f32 %v4074, %v4075
    %v4077 = vsel %vm2662, %v3963, 0.0
    %v4078 = vadd.f32 %v4076, %v4077
    %v4079 = vsel %vm2662, %v3964, 0.0
    %v4080 = vadd.f32 %v4078, %v4079
    %v4081 = vsel %vm2662, %v3965, 0.0
    %v4082 = vadd.f32 %v4080, %v4081
    %v4083 = vsel %vm2662, %v3966, 0.0
    %v4084 = vadd.f32 %v4082, %v4083
    %v4085 = vsel %vm2662, %v3967, 0.0
    %v4086 = vadd.f32 %v4084, %v4085
    %v4087 = vsel %vm2662, %v3968, 0.0
    %v4088 = vadd.f32 %v4086, %v4087
    %v4089 = vsel %vm2662, %v3969, 0.0
    %v4090 = vadd.f32 %v4088, %v4089
    %v4091 = vsel %vm2662, %v3970, 0.0
    %v4092 = vadd.f32 %v4090, %v4091
    %v4093 = vsel %vm2662, %v3971, 0.0
    %v4094 = vadd.f32 %v4092, %v4093
    %v4095 = vsel %vm2662, %v3972, 0.0
    %v4096 = vadd.f32 %v4094, %v4095
    %v4097 = vsel %vm2662, %v3973, 0.0
    %v4098 = vadd.f32 %v4096, %v4097
    %v4099 = vsel %vm2662, %v3974, 0.0
    %v4100 = vadd.f32 %v4098, %v4099
    %v4101 = vsel %vm2662, %v3975, 0.0
    %v4102 = vadd.f32 %v4100, %v4101
    %v4103 = vrot.slane %v4102, 4
    %v4104 = vadd.f32 %v4102, %v4103
    %v4105 = vrot.slane %v4104, 2
    %v4106 = vadd.f32 %v4104, %v4105
    %v4107 = vrot.slane %v4106, 1
    %v4108 = vadd.f32 %v4106, %v4107
    %v4109 = vmul.f32 %v4108, 0.001953125
    %v4110 = vmul.f32 %v3911, %v3911
    %v4111 = vsub.f32 %v4109, %v4110
    %v4112 = vadd.f32 %v4111, 1e-05
    %v4113 = vrsqrt.pop %v4112
    %v4114 = vmul.f32 %v3776, %v4113
    %v4115 = vmul.f32 %v3911, %v4114
    %v4116 = vsub.f32 %v3777, %v4115
    %v4118 = vlaneseq
    %v4119 = vshrl.u32 %v4118, 7
    %v4120 = vsub.s32 0, %v4119
    %v4121 = vrot.slane %v4114, %v4120
    %v4123 = vmul.f32 %v3458, %v4121
    %v4124 = vmul.f32 %v3463, %v4121
    %v4125 = vmul.f32 %v3468, %v4121
    %v4126 = vmul.f32 %v3473, %v4121
    %v4127 = vmul.f32 %v3478, %v4121
    %v4128 = vmul.f32 %v3483, %v4121
    %v4129 = vmul.f32 %v3488, %v4121
    %v4130 = vmul.f32 %v3493, %v4121
    %v4131 = vmul.f32 %v3498, %v4121
    %v4132 = vmul.f32 %v3503, %v4121
    %v4133 = vmul.f32 %v3508, %v4121
    %v4134 = vmul.f32 %v3513, %v4121
    %v4135 = vmul.f32 %v3518, %v4121
    %v4136 = vmul.f32 %v3523, %v4121
    %v4137 = vmul.f32 %v3528, %v4121
    %v4138 = vmul.f32 %v3533, %v4121
    %v4139 = vmul.f32 %v3538, %v4121
    %v4140 = vmul.f32 %v3543, %v4121
    %v4141 = vmul.f32 %v3548, %v4121
    %v4142 = vmul.f32 %v3553, %v4121
    %v4143 = vmul.f32 %v3558, %v4121
    %v4144 = vmul.f32 %v3563, %v4121
    %v4145 = vmul.f32 %v3568, %v4121
    %v4146 = vmul.f32 %v3573, %v4121
    %v4147 = vmul.f32 %v3578, %v4121
    %v4148 = vmul.f32 %v3583, %v4121
    %v4149 = vmul.f32 %v3588, %v4121
    %v4150 = vmul.f32 %v3593, %v4121
    %v4151 = vmul.f32 %v3598, %v4121
    %v4152 = vmul.f32 %v3603, %v4121
    %v4153 = vmul.f32 %v3608, %v4121
    %v4154 = vmul.f32 %v3613, %v4121
    %v4155 = vmul.f32 %v3618, %v4121
    %v4156 = vmul.f32 %v3623, %v4121
    %v4157 = vmul.f32 %v3628, %v4121
    %v4158 = vmul.f32 %v3633, %v4121
    %v4159 = vmul.f32 %v3638, %v4121
    %v4160 = vmul.f32 %v3643, %v4121
    %v4161 = vmul.f32 %v3648, %v4121
    %v4162 = vmul.f32 %v3653, %v4121
    %v4163 = vmul.f32 %v3658, %v4121
    %v4164 = vmul.f32 %v3663, %v4121
    %v4165 = vmul.f32 %v3668, %v4121
    %v4166 = vmul.f32 %v3673, %v4121
    %v4167 = vmul.f32 %v3678, %v4121
    %v4168 = vmul.f32 %v3683, %v4121
    %v4169 = vmul.f32 %v3688, %v4121
    %v4170 = vmul.f32 %v3693, %v4121
    %v4171 = vmul.f32 %v3698, %v4121
    %v4172 = vmul.f32 %v3703, %v4121
    %v4173 = vmul.f32 %v3708, %v4121
    %v4174 = vmul.f32 %v3713, %v4121
    %v4175 = vmul.f32 %v3718, %v4121
    %v4176 = vmul.f32 %v3723, %v4121
    %v4177 = vmul.f32 %v3728, %v4121
    %v4178 = vmul.f32 %v3733, %v4121
    %v4179 = vmul.f32 %v3738, %v4121
    %v4180 = vmul.f32 %v3743, %v4121
    %v4181 = vmul.f32 %v3748, %v4121
    %v4182 = vmul.f32 %v3753, %v4121
    %v4183 = vmul.f32 %v3758, %v4121
    %v4184 = vmul.f32 %v3763, %v4121
    %v4185 = vmul.f32 %v3768, %v4121
    %v4186 = vmul.f32 %v3773, %v4121
    %v4188 = vlaneseq
    %v4189 = vshrl.u32 %v4188, 7
    %v4190 = vsub.s32 0, %v4189
    %v4191 = vrot.slane %v4116, %v4190
    %v4193 = vadd.f32 %v4123, %v4191
    %v4194 = vadd.f32 %v4124, %v4191
    %v4195 = vadd.f32 %v4125, %v4191
    %v4196 = vadd.f32 %v4126, %v4191
    %v4197 = vadd.f32 %v4127, %v4191
    %v4198 = vadd.f32 %v4128, %v4191
    %v4199 = vadd.f32 %v4129, %v4191
    %v4200 = vadd.f32 %v4130, %v4191
    %v4201 = vadd.f32 %v4131, %v4191
    %v4202 = vadd.f32 %v4132, %v4191
    %v4203 = vadd.f32 %v4133, %v4191
    %v4204 = vadd.f32 %v4134, %v4191
    %v4205 = vadd.f32 %v4135, %v4191
    %v4206 = vadd.f32 %v4136, %v4191
    %v4207 = vadd.f32 %v4137, %v4191
    %v4208 = vadd.f32 %v4138, %v4191
    %v4209 = vadd.f32 %v4139, %v4191
    %v4210 = vadd.f32 %v4140, %v4191
    %v4211 = vadd.f32 %v4141, %v4191
    %v4212 = vadd.f32 %v4142, %v4191
    %v4213 = vadd.f32 %v4143, %v4191
    %v4214 = vadd.f32 %v4144, %v4191
    %v4215 = vadd.f32 %v4145, %v4191
    %v4216 = vadd.f32 %v4146, %v4191
    %v4217 = vadd.f32 %v4147, %v4191
    %v4218 = vadd.f32 %v4148, %v4191
    %v4219 = vadd.f32 %v4149, %v4191
    %v4220 = vadd.f32 %v4150, %v4191
    %v4221 = vadd.f32 %v4151, %v4191
    %v4222 = vadd.f32 %v4152, %v4191
    %v4223 = vadd.f32 %v4153, %v4191
    %v4224 = vadd.f32 %v4154, %v4191
    %v4225 = vadd.f32 %v4155, %v4191
    %v4226 = vadd.f32 %v4156, %v4191
    %v4227 = vadd.f32 %v4157, %v4191
    %v4228 = vadd.f32 %v4158, %v4191
    %v4229 = vadd.f32 %v4159, %v4191
    %v4230 = vadd.f32 %v4160, %v4191
    %v4231 = vadd.f32 %v4161, %v4191
    %v4232 = vadd.f32 %v4162, %v4191
    %v4233 = vadd.f32 %v4163, %v4191
    %v4234 = vadd.f32 %v4164, %v4191
    %v4235 = vadd.f32 %v4165, %v4191
    %v4236 = vadd.f32 %v4166, %v4191
    %v4237 = vadd.f32 %v4167, %v4191
    %v4238 = vadd.f32 %v4168, %v4191
    %v4239 = vadd.f32 %v4169, %v4191
    %v4240 = vadd.f32 %v4170, %v4191
    %v4241 = vadd.f32 %v4171, %v4191
    %v4242 = vadd.f32 %v4172, %v4191
    %v4243 = vadd.f32 %v4173, %v4191
    %v4244 = vadd.f32 %v4174, %v4191
    %v4245 = vadd.f32 %v4175, %v4191
    %v4246 = vadd.f32 %v4176, %v4191
    %v4247 = vadd.f32 %v4177, %v4191
    %v4248 = vadd.f32 %v4178, %v4191
    %v4249 = vadd.f32 %v4179, %v4191
    %v4250 = vadd.f32 %v4180, %v4191
    %v4251 = vadd.f32 %v4181, %v4191
    %v4252 = vadd.f32 %v4182, %v4191
    %v4253 = vadd.f32 %v4183, %v4191
    %v4254 = vadd.f32 %v4184, %v4191
    %v4255 = vadd.f32 %v4185, %v4191
    %v4256 = vadd.f32 %v4186, %v4191
    %v4257 = vmax.f32 %v4193, 0.0
    %v4258 = vmax.f32 %v4194, 0.0
    %v4259 = vmax.f32 %v4195, 0.0
    %v4260 = vmax.f32 %v4196, 0.0
    %v4261 = vmax.f32 %v4197, 0.0
    %v4262 = vmax.f32 %v4198, 0.0
    %v4263 = vmax.f32 %v4199, 0.0
    %v4264 = vmax.f32 %v4200, 0.0
    %v4265 = vmax.f32 %v4201, 0.0
    %v4266 = vmax.f32 %v4202, 0.0
    %v4267 = vmax.f32 %v4203, 0.0
    %v4268 = vmax.f32 %v4204, 0.0
    %v4269 = vmax.f32 %v4205, 0.0
    %v4270 = vmax.f32 %v4206, 0.0
    %v4271 = vmax.f32 %v4207, 0.0
    %v4272 = vmax.f32 %v4208, 0.0
    %v4273 = vmax.f32 %v4209, 0.0
    %v4274 = vmax.f32 %v4210, 0.0
    %v4275 = vmax.f32 %v4211, 0.0
    %v4276 = vmax.f32 %v4212, 0.0
    %v4277 = vmax.f32 %v4213, 0.0
    %v4278 = vmax.f32 %v4214, 0.0
    %v4279 = vmax.f32 %v4215, 0.0
    %v4280 = vmax.f32 %v4216, 0.0
    %v4281 = vmax.f32 %v4217, 0.0
    %v4282 = vmax.f32 %v4218, 0.0
    %v4283 = vmax.f32 %v4219, 0.0
    %v4284 = vmax.f32 %v4220, 0.0
    %v4285 = vmax.f32 %v4221, 0.0
    %v4286 = vmax.f32 %v4222, 0.0
    %v4287 = vmax.f32 %v4223, 0.0
    %v4288 = vmax.f32 %v4224, 0.0
    %v4289 = vmax.f32 %v4225, 0.0
    %v4290 = vmax.f32 %v4226, 0.0
    %v4291 = vmax.f32 %v4227, 0.0
    %v4292 = vmax.f32 %v4228, 0.0
    %v4293 = vmax.f32 %v4229, 0.0
    %v4294 = vmax.f32 %v4230, 0.0
    %v4295 = vmax.f32 %v4231, 0.0
    %v4296 = vmax.f32 %v4232, 0.0
    %v4297 = vmax.f32 %v4233, 0.0
    %v4298 = vmax.f32 %v4234, 0.0
    %v4299 = vmax.f32 %v4235, 0.0
    %v4300 = vmax.f32 %v4236, 0.0
    %v4301 = vmax.f32 %v4237, 0.0
    %v4302 = vmax.f32 %v4238, 0.0
    %v4303 = vmax.f32 %v4239, 0.0
    %v4304 = vmax.f32 %v4240, 0.0
    %v4305 = vmax.f32 %v4241, 0.0
    %v4306 = vmax.f32 %v4242, 0.0
    %v4307 = vmax.f32 %v4243, 0.0
    %v4308 = vmax.f32 %v4244, 0.0
    %v4309 = vmax.f32 %v4245, 0.0
    %v4310 = vmax.f32 %v4246, 0.0
    %v4311 = vmax.f32 %v4247, 0.0
    %v4312 = vmax.f32 %v4248, 0.0
    %v4313 = vmax.f32 %v4249, 0.0
    %v4314 = vmax.f32 %v4250, 0.0
    %v4315 = vmax.f32 %v4251, 0.0
    %v4316 = vmax.f32 %v4252, 0.0
    %v4317 = vmax.f32 %v4253, 0.0
    %v4318 = vmax.f32 %v4254, 0.0
    %v4319 = vmax.f32 %v4255, 0.0
    %v4320 = vmax.f32 %v4256, 0.0
    %4321 = vst.msk [vmem:[#allocation2] sm:$0xff] %vm2662, 0.0
    %4322 = vst.msk [vmem:[#allocation2 + $0x8] sm:$0xff] %vm2662, 0.0
    %vm4323 = vcmask 58368
    %4324 = vst.msk [vmem:[#allocation2 + $0x10] sm:$0x3] %vm4323, 0.0
    %4325 = vst.msk [vmem:[#allocation2 + $0x1b0] sm:$0xff] %vm2662, 0.0
    %4326 = vst.msk [vmem:[#allocation2 + $0x1b8] sm:$0xff] %vm2662, 0.0
    %4327 = vst.msk [vmem:[#allocation2 + $0x1c0] sm:$0x3] %vm4323, 0.0
    %s4328 = scalar_lea.vmem [#allocation2], 408
    %4329 = vst.msk [vmem:[%s4328] sm:$0xff] %vm2662, 0.0
    %4330 = vst.msk [vmem:[%s4328 + $0x8] sm:$0xff] %vm2662, 0.0
    %4331 = vst.msk [vmem:[%s4328 + $0x10] sm:$0x3] %vm4323, 0.0
    %4332 = vst.msk [vmem:[%s4328 + $0x1b0] sm:$0xff] %vm2662, 0.0
    %4333 = vst.msk [vmem:[%s4328 + $0x1b8] sm:$0xff] %vm2662, 0.0
    %4334 = vst.msk [vmem:[%s4328 + $0x1c0] sm:$0x3] %vm4323, 0.0
    %vm4335 = vcmask 57344
    %4336 = vst.msk [vmem:[#allocation2] sm:$0x1] %vm4335, 0.0
    %4337 = vst.msk [vmem:[#allocation2 + $0x18] sm:$0x1] %vm4335, 0.0
    %4338 = vst.msk [vmem:[#allocation2 + $0x30] sm:$0x1] %vm4335, 0.0
    %4339 = vst.msk [vmem:[#allocation2 + $0x48] sm:$0x1] %vm4335, 0.0
    %4340 = vst.msk [vmem:[#allocation2 + $0x60] sm:$0x1] %vm4335, 0.0
    %4341 = vst.msk [vmem:[#allocation2 + $0x78] sm:$0x1] %vm4335, 0.0
    %4342 = vst.msk [vmem:[#allocation2 + $0x90] sm:$0x1] %vm4335, 0.0
    %4343 = vst.msk [vmem:[#allocation2 + $0xa8] sm:$0x1] %vm4335, 0.0
    %4344 = vst.msk [vmem:[#allocation2 + $0xc0] sm:$0x1] %vm4335, 0.0
    %4345 = vst.msk [vmem:[#allocation2 + $0xd8] sm:$0x1] %vm4335, 0.0
    %4346 = vst.msk [vmem:[#allocation2 + $0xf0] sm:$0x1] %vm4335, 0.0
    %4347 = vst.msk [vmem:[#allocation2 + $0x108] sm:$0x1] %vm4335, 0.0
    %4348 = vst.msk [vmem:[#allocation2 + $0x120] sm:$0x1] %vm4335, 0.0
    %4349 = vst.msk [vmem:[#allocation2 + $0x138] sm:$0x1] %vm4335, 0.0
    %4350 = vst.msk [vmem:[#allocation2 + $0x150] sm:$0x1] %vm4335, 0.0
    %4351 = vst.msk [vmem:[#allocation2 + $0x168] sm:$0x1] %vm4335, 0.0
    %4352 = vst.msk [vmem:[#allocation2 + $0x180] sm:$0x1] %vm4335, 0.0
    %4353 = vst.msk [vmem:[#allocation2 + $0x198] sm:$0x1] %vm4335, 0.0
    %4354 = vst.msk [vmem:[#allocation2 + $0x1b0] sm:$0x1] %vm4335, 0.0
    %4355 = vst.msk [vmem:[#allocation2 + $0x1c8] sm:$0x1] %vm4335, 0.0
    %4356 = vst.msk [vmem:[#allocation2 + $0x1e0] sm:$0x1] %vm4335, 0.0
    %4357 = vst.msk [vmem:[#allocation2 + $0x1f8] sm:$0x1] %vm4335, 0.0
    %4358 = vst.msk [vmem:[#allocation2 + $0x210] sm:$0x1] %vm4335, 0.0
    %4359 = vst.msk [vmem:[#allocation2 + $0x228] sm:$0x1] %vm4335, 0.0
    %4360 = vst.msk [vmem:[#allocation2 + $0x240] sm:$0x1] %vm4335, 0.0
    %4361 = vst.msk [vmem:[#allocation2 + $0x258] sm:$0x1] %vm4335, 0.0
    %4362 = vst.msk [vmem:[#allocation2 + $0x270] sm:$0x1] %vm4335, 0.0
    %4363 = vst.msk [vmem:[#allocation2 + $0x288] sm:$0x1] %vm4335, 0.0
    %4364 = vst.msk [vmem:[#allocation2 + $0x2a0] sm:$0x1] %vm4335, 0.0
    %4365 = vst.msk [vmem:[#allocation2 + $0x2b8] sm:$0x1] %vm4335, 0.0
    %4366 = vst.msk [vmem:[#allocation2 + $0x2d0] sm:$0x1] %vm4335, 0.0
    %4367 = vst.msk [vmem:[#allocation2 + $0x2e8] sm:$0x1] %vm4335, 0.0
    %4368 = vst.msk [vmem:[#allocation2 + $0x300] sm:$0x1] %vm4335, 0.0
    %4369 = vst.msk [vmem:[#allocation2 + $0x318] sm:$0x1] %vm4335, 0.0
    %4370 = vst.msk [vmem:[#allocation2 + $0x330] sm:$0x1] %vm4335, 0.0
    %4371 = vst.msk [vmem:[#allocation2 + $0x348] sm:$0x1] %vm4335, 0.0
    %4372 = vst.msk [vmem:[#allocation2 + $0x11] sm:$0x1] %vm4335, 0.0
    %4373 = vst.msk [vmem:[#allocation2 + $0x29] sm:$0x1] %vm4335, 0.0
    %4374 = vst.msk [vmem:[#allocation2 + $0x41] sm:$0x1] %vm4335, 0.0
    %4375 = vst.msk [vmem:[#allocation2 + $0x59] sm:$0x1] %vm4335, 0.0
    %4376 = vst.msk [vmem:[#allocation2 + $0x71] sm:$0x1] %vm4335, 0.0
    %4377 = vst.msk [vmem:[#allocation2 + $0x89] sm:$0x1] %vm4335, 0.0
    %4378 = vst.msk [vmem:[#allocation2 + $0xa1] sm:$0x1] %vm4335, 0.0
    %4379 = vst.msk [vmem:[#allocation2 + $0xb9] sm:$0x1] %vm4335, 0.0
    %4380 = vst.msk [vmem:[#allocation2 + $0xd1] sm:$0x1] %vm4335, 0.0
    %4381 = vst.msk [vmem:[#allocation2 + $0xe9] sm:$0x1] %vm4335, 0.0
    %4382 = vst.msk [vmem:[#allocation2 + $0x101] sm:$0x1] %vm4335, 0.0
    %4383 = vst.msk [vmem:[#allocation2 + $0x119] sm:$0x1] %vm4335, 0.0
    %4384 = vst.msk [vmem:[#allocation2 + $0x131] sm:$0x1] %vm4335, 0.0
    %4385 = vst.msk [vmem:[#allocation2 + $0x149] sm:$0x1] %vm4335, 0.0
    %4386 = vst.msk [vmem:[#allocation2 + $0x161] sm:$0x1] %vm4335, 0.0
    %4387 = vst.msk [vmem:[#allocation2 + $0x179] sm:$0x1] %vm4335, 0.0
    %4388 = vst.msk [vmem:[#allocation2 + $0x191] sm:$0x1] %vm4335, 0.0
    %4389 = vst.msk [vmem:[#allocation2 + $0x1a9] sm:$0x1] %vm4335, 0.0
    %4390 = vst.msk [vmem:[#allocation2 + $0x1c1] sm:$0x1] %vm4335, 0.0
    %4391 = vst.msk [vmem:[#allocation2 + $0x1d9] sm:$0x1] %vm4335, 0.0
    %4392 = vst.msk [vmem:[#allocation2 + $0x1f1] sm:$0x1] %vm4335, 0.0
    %4393 = vst.msk [vmem:[#allocation2 + $0x209] sm:$0x1] %vm4335, 0.0
    %4394 = vst.msk [vmem:[#allocation2 + $0x221] sm:$0x1] %vm4335, 0.0
    %4395 = vst.msk [vmem:[#allocation2 + $0x239] sm:$0x1] %vm4335, 0.0
    %4396 = vst.msk [vmem:[#allocation2 + $0x251] sm:$0x1] %vm4335, 0.0
    %4397 = vst.msk [vmem:[#allocation2 + $0x269] sm:$0x1] %vm4335, 0.0
    %4398 = vst.msk [vmem:[#allocation2 + $0x281] sm:$0x1] %vm4335, 0.0
    %4399 = vst.msk [vmem:[#allocation2 + $0x299] sm:$0x1] %vm4335, 0.0
    %4400 = vst.msk [vmem:[#allocation2 + $0x2b1] sm:$0x1] %vm4335, 0.0
    %4401 = vst.msk [vmem:[#allocation2 + $0x2c9] sm:$0x1] %vm4335, 0.0
    %4402 = vst.msk [vmem:[#allocation2 + $0x2e1] sm:$0x1] %vm4335, 0.0
    %4403 = vst.msk [vmem:[#allocation2 + $0x2f9] sm:$0x1] %vm4335, 0.0
    %4404 = vst.msk [vmem:[#allocation2 + $0x311] sm:$0x1] %vm4335, 0.0
    %4405 = vst.msk [vmem:[#allocation2 + $0x329] sm:$0x1] %vm4335, 0.0
    %4406 = vst.msk [vmem:[#allocation2 + $0x341] sm:$0x1] %vm4335, 0.0
    %4407 = vst.msk [vmem:[#allocation2 + $0x359] sm:$0x1] %vm4335, 0.0
    %s4408 = scalar_lea.vmem [#allocation2], 24
    %4409 = vst.msk [vmem:[%s4408 + $0x1] sm:$0xff] %vm2662, %v4257
    %4410 = vst.msk [vmem:[%s4408 + $0x9] sm:$0xff] %vm2662, %v4258
    %4411 = vst.msk [vmem:[%s4408 + $0x19] sm:$0xff] %vm2662, %v4259
    %4412 = vst.msk [vmem:[%s4408 + $0x21] sm:$0xff] %vm2662, %v4260
    %4413 = vst.msk [vmem:[%s4408 + $0x31] sm:$0xff] %vm2662, %v4261
    %4414 = vst.msk [vmem:[%s4408 + $0x39] sm:$0xff] %vm2662, %v4262
    %4415 = vst.msk [vmem:[%s4408 + $0x49] sm:$0xff] %vm2662, %v4263
    %4416 = vst.msk [vmem:[%s4408 + $0x51] sm:$0xff] %vm2662, %v4264
    %4417 = vst.msk [vmem:[%s4408 + $0x61] sm:$0xff] %vm2662, %v4265
    %4418 = vst.msk [vmem:[%s4408 + $0x69] sm:$0xff] %vm2662, %v4266
    %4419 = vst.msk [vmem:[%s4408 + $0x79] sm:$0xff] %vm2662, %v4267
    %4420 = vst.msk [vmem:[%s4408 + $0x81] sm:$0xff] %vm2662, %v4268
    %4421 = vst.msk [vmem:[%s4408 + $0x91] sm:$0xff] %vm2662, %v4269
    %4422 = vst.msk [vmem:[%s4408 + $0x99] sm:$0xff] %vm2662, %v4270
    %4423 = vst.msk [vmem:[%s4408 + $0xa9] sm:$0xff] %vm2662, %v4271
    %4424 = vst.msk [vmem:[%s4408 + $0xb1] sm:$0xff] %vm2662, %v4272
    %4425 = vst.msk [vmem:[%s4408 + $0xc1] sm:$0xff] %vm2662, %v4273
    %4426 = vst.msk [vmem:[%s4408 + $0xc9] sm:$0xff] %vm2662, %v4274
    %4427 = vst.msk [vmem:[%s4408 + $0xd9] sm:$0xff] %vm2662, %v4275
    %4428 = vst.msk [vmem:[%s4408 + $0xe1] sm:$0xff] %vm2662, %v4276
    %4429 = vst.msk [vmem:[%s4408 + $0xf1] sm:$0xff] %vm2662, %v4277
    %4430 = vst.msk [vmem:[%s4408 + $0xf9] sm:$0xff] %vm2662, %v4278
    %4431 = vst.msk [vmem:[%s4408 + $0x109] sm:$0xff] %vm2662, %v4279
    %4432 = vst.msk [vmem:[%s4408 + $0x111] sm:$0xff] %vm2662, %v4280
    %4433 = vst.msk [vmem:[%s4408 + $0x121] sm:$0xff] %vm2662, %v4281
    %4434 = vst.msk [vmem:[%s4408 + $0x129] sm:$0xff] %vm2662, %v4282
    %4435 = vst.msk [vmem:[%s4408 + $0x139] sm:$0xff] %vm2662, %v4283
    %4436 = vst.msk [vmem:[%s4408 + $0x141] sm:$0xff] %vm2662, %v4284
    %4437 = vst.msk [vmem:[%s4408 + $0x151] sm:$0xff] %vm2662, %v4285
    %4438 = vst.msk [vmem:[%s4408 + $0x159] sm:$0xff] %vm2662, %v4286
    %4439 = vst.msk [vmem:[%s4408 + $0x169] sm:$0xff] %vm2662, %v4287
    %4440 = vst.msk [vmem:[%s4408 + $0x171] sm:$0xff] %vm2662, %v4288
    %4441 = vst.msk [vmem:[%s4408 + $0x1b1] sm:$0xff] %vm2662, %v4289
    %4442 = vst.msk [vmem:[%s4408 + $0x1b9] sm:$0xff] %vm2662, %v4290
    %4443 = vst.msk [vmem:[%s4408 + $0x1c9] sm:$0xff] %vm2662, %v4291
    %4444 = vst.msk [vmem:[%s4408 + $0x1d1] sm:$0xff] %vm2662, %v4292
    %4445 = vst.msk [vmem:[%s4408 + $0x1e1] sm:$0xff] %vm2662, %v4293
    %4446 = vst.msk [vmem:[%s4408 + $0x1e9] sm:$0xff] %vm2662, %v4294
    %4447 = vst.msk [vmem:[%s4408 + $0x1f9] sm:$0xff] %vm2662, %v4295
    %4448 = vst.msk [vmem:[%s4408 + $0x201] sm:$0xff] %vm2662, %v4296
    %4449 = vst.msk [vmem:[%s4408 + $0x211] sm:$0xff] %vm2662, %v4297
    %4450 = vst.msk [vmem:[%s4408 + $0x219] sm:$0xff] %vm2662, %v4298
    %4451 = vst.msk [vmem:[%s4408 + $0x229] sm:$0xff] %vm2662, %v4299
    %4452 = vst.msk [vmem:[%s4408 + $0x231] sm:$0xff] %vm2662, %v4300
    %4453 = vst.msk [vmem:[%s4408 + $0x241] sm:$0xff] %vm2662, %v4301
    %4454 = vst.msk [vmem:[%s4408 + $0x249] sm:$0xff] %vm2662, %v4302
    %4455 = vst.msk [vmem:[%s4408 + $0x259] sm:$0xff] %vm2662, %v4303
    %4456 = vst.msk [vmem:[%s4408 + $0x261] sm:$0xff] %vm2662, %v4304
    %4457 = vst.msk [vmem:[%s4408 + $0x271] sm:$0xff] %vm2662, %v4305
    %4458 = vst.msk [vmem:[%s4408 + $0x279] sm:$0xff] %vm2662, %v4306
    %4459 = vst.msk [vmem:[%s4408 + $0x289] sm:$0xff] %vm2662, %v4307
    %4460 = vst.msk [vmem:[%s4408 + $0x291] sm:$0xff] %vm2662, %v4308
    %4461 = vst.msk [vmem:[%s4408 + $0x2a1] sm:$0xff] %vm2662, %v4309
    %4462 = vst.msk [vmem:[%s4408 + $0x2a9] sm:$0xff] %vm2662, %v4310
    %4463 = vst.msk [vmem:[%s4408 + $0x2b9] sm:$0xff] %vm2662, %v4311
    %4464 = vst.msk [vmem:[%s4408 + $0x2c1] sm:$0xff] %vm2662, %v4312
    %4465 = vst.msk [vmem:[%s4408 + $0x2d1] sm:$0xff] %vm2662, %v4313
    %4466 = vst.msk [vmem:[%s4408 + $0x2d9] sm:$0xff] %vm2662, %v4314
    %4467 = vst.msk [vmem:[%s4408 + $0x2e9] sm:$0xff] %vm2662, %v4315
    %4468 = vst.msk [vmem:[%s4408 + $0x2f1] sm:$0xff] %vm2662, %v4316
    %4469 = vst.msk [vmem:[%s4408 + $0x301] sm:$0xff] %vm2662, %v4317
    %4470 = vst.msk [vmem:[%s4408 + $0x309] sm:$0xff] %vm2662, %v4318
    %4471 = vst.msk [vmem:[%s4408 + $0x319] sm:$0xff] %vm2662, %v4319
    %4472 = vst.msk [vmem:[%s4408 + $0x321] sm:$0xff] %vm2662, %v4320
    %v4473 = vld [vmem:[#allocation2] sm:$0xff]
    %v4474 = vld [vmem:[#allocation2 + $0x8] sm:$0xff]
    %v4475 = vld [vmem:[#allocation2 + $0x18] sm:$0xff]
    %v4476 = vld [vmem:[#allocation2 + $0x20] sm:$0xff]
    %v4477 = vld [vmem:[#allocation2 + $0x30] sm:$0xff]
    %v4478 = vld [vmem:[#allocation2 + $0x38] sm:$0xff]
    %v4479 = vld [vmem:[#allocation2 + $0x48] sm:$0xff]
    %v4480 = vld [vmem:[#allocation2 + $0x50] sm:$0xff]
    %v4481 = vld [vmem:[#allocation2 + $0x60] sm:$0xff]
    %v4482 = vld [vmem:[#allocation2 + $0x68] sm:$0xff]
    %v4483 = vld [vmem:[#allocation2 + $0x78] sm:$0xff]
    %v4484 = vld [vmem:[#allocation2 + $0x80] sm:$0xff]
    %v4485 = vld [vmem:[#allocation2 + $0x90] sm:$0xff]
    %v4486 = vld [vmem:[#allocation2 + $0x98] sm:$0xff]
    %v4487 = vld [vmem:[#allocation2 + $0xa8] sm:$0xff]
    %v4488 = vld [vmem:[#allocation2 + $0xb0] sm:$0xff]
    %v4489 = vld [vmem:[#allocation2 + $0xc0] sm:$0xff]
    %v4490 = vld [vmem:[#allocation2 + $0xc8] sm:$0xff]
    %v4491 = vld [vmem:[#allocation2 + $0xd8] sm:$0xff]
    %v4492 = vld [vmem:[#allocation2 + $0xe0] sm:$0xff]
    %v4493 = vld [vmem:[#allocation2 + $0xf0] sm:$0xff]
    %v4494 = vld [vmem:[#allocation2 + $0xf8] sm:$0xff]
    %v4495 = vld [vmem:[#allocation2 + $0x108] sm:$0xff]
    %v4496 = vld [vmem:[#allocation2 + $0x110] sm:$0xff]
    %v4497 = vld [vmem:[#allocation2 + $0x120] sm:$0xff]
    %v4498 = vld [vmem:[#allocation2 + $0x128] sm:$0xff]
    %v4499 = vld [vmem:[#allocation2 + $0x138] sm:$0xff]
    %v4500 = vld [vmem:[#allocation2 + $0x140] sm:$0xff]
    %v4501 = vld [vmem:[#allocation2 + $0x150] sm:$0xff]
    %v4502 = vld [vmem:[#allocation2 + $0x158] sm:$0xff]
    %v4503 = vld [vmem:[#allocation2 + $0x168] sm:$0xff]
    %v4504 = vld [vmem:[#allocation2 + $0x170] sm:$0xff]
    %v4505 = vld [vmem:[#allocation2 + $0x1b0] sm:$0xff]
    %v4506 = vld [vmem:[#allocation2 + $0x1b8] sm:$0xff]
    %v4507 = vld [vmem:[#allocation2 + $0x1c8] sm:$0xff]
    %v4508 = vld [vmem:[#allocation2 + $0x1d0] sm:$0xff]
    %v4509 = vld [vmem:[#allocation2 + $0x1e0] sm:$0xff]
    %v4510 = vld [vmem:[#allocation2 + $0x1e8] sm:$0xff]
    %v4511 = vld [vmem:[#allocation2 + $0x1f8] sm:$0xff]
    %v4512 = vld [vmem:[#allocation2 + $0x200] sm:$0xff]
    %v4513 = vld [vmem:[#allocation2 + $0x210] sm:$0xff]
    %v4514 = vld [vmem:[#allocation2 + $0x218] sm:$0xff]
    %v4515 = vld [vmem:[#allocation2 + $0x228] sm:$0xff]
    %v4516 = vld [vmem:[#allocation2 + $0x230] sm:$0xff]
    %v4517 = vld [vmem:[#allocation2 + $0x240] sm:$0xff]
    %v4518 = vld [vmem:[#allocation2 + $0x248] sm:$0xff]
    %v4519 = vld [vmem:[#allocation2 + $0x258] sm:$0xff]
    %v4520 = vld [vmem:[#allocation2 + $0x260] sm:$0xff]
    %v4521 = vld [vmem:[#allocation2 + $0x270] sm:$0xff]
    %v4522 = vld [vmem:[#allocation2 + $0x278] sm:$0xff]
    %v4523 = vld [vmem:[#allocation2 + $0x288] sm:$0xff]
    %v4524 = vld [vmem:[#allocation2 + $0x290] sm:$0xff]
    %v4525 = vld [vmem:[#allocation2 + $0x2a0] sm:$0xff]
    %v4526 = vld [vmem:[#allocation2 + $0x2a8] sm:$0xff]
    %v4527 = vld [vmem:[#allocation2 + $0x2b8] sm:$0xff]
    %v4528 = vld [vmem:[#allocation2 + $0x2c0] sm:$0xff]
    %v4529 = vld [vmem:[#allocation2 + $0x2d0] sm:$0xff]
    %v4530 = vld [vmem:[#allocation2 + $0x2d8] sm:$0xff]
    %v4531 = vld [vmem:[#allocation2 + $0x2e8] sm:$0xff]
    %v4532 = vld [vmem:[#allocation2 + $0x2f0] sm:$0xff]
    %v4533 = vld [vmem:[#allocation2 + $0x300] sm:$0xff]
    %v4534 = vld [vmem:[#allocation2 + $0x308] sm:$0xff]
    %v4535 = vld [vmem:[#allocation2 + $0x318] sm:$0xff]
    %v4536 = vld [vmem:[#allocation2 + $0x320] sm:$0xff]
    %v4537 = vld [vmem:[#allocation2 + $0x1] sm:$0xff]
    %v4538 = vld [vmem:[#allocation2 + $0x9] sm:$0xff]
    %v4539 = vld [vmem:[#allocation2 + $0x19] sm:$0xff]
    %v4540 = vld [vmem:[#allocation2 + $0x21] sm:$0xff]
    %v4541 = vld [vmem:[#allocation2 + $0x31] sm:$0xff]
    %v4542 = vld [vmem:[#allocation2 + $0x39] sm:$0xff]
    %v4543 = vld [vmem:[#allocation2 + $0x49] sm:$0xff]
    %v4544 = vld [vmem:[#allocation2 + $0x51] sm:$0xff]
    %v4545 = vld [vmem:[#allocation2 + $0x61] sm:$0xff]
    %v4546 = vld [vmem:[#allocation2 + $0x69] sm:$0xff]
    %v4547 = vld [vmem:[#allocation2 + $0x79] sm:$0xff]
    %v4548 = vld [vmem:[#allocation2 + $0x81] sm:$0xff]
    %v4549 = vld [vmem:[#allocation2 + $0x91] sm:$0xff]
    %v4550 = vld [vmem:[#allocation2 + $0x99] sm:$0xff]
    %v4551 = vld [vmem:[#allocation2 + $0xa9] sm:$0xff]
    %v4552 = vld [vmem:[#allocation2 + $0xb1] sm:$0xff]
    %v4553 = vld [vmem:[#allocation2 + $0xc1] sm:$0xff]
    %v4554 = vld [vmem:[#allocation2 + $0xc9] sm:$0xff]
    %v4555 = vld [vmem:[#allocation2 + $0xd9] sm:$0xff]
    %v4556 = vld [vmem:[#allocation2 + $0xe1] sm:$0xff]
    %v4557 = vld [vmem:[#allocation2 + $0xf1] sm:$0xff]
    %v4558 = vld [vmem:[#allocation2 + $0xf9] sm:$0xff]
    %v4559 = vld [vmem:[#allocation2 + $0x109] sm:$0xff]
    %v4560 = vld [vmem:[#allocation2 + $0x111] sm:$0xff]
    %v4561 = vld [vmem:[#allocation2 + $0x121] sm:$0xff]
    %v4562 = vld [vmem:[#allocation2 + $0x129] sm:$0xff]
    %v4563 = vld [vmem:[#allocation2 + $0x139] sm:$0xff]
    %v4564 = vld [vmem:[#allocation2 + $0x141] sm:$0xff]
    %v4565 = vld [vmem:[#allocation2 + $0x151] sm:$0xff]
    %v4566 = vld [vmem:[#allocation2 + $0x159] sm:$0xff]
    %v4567 = vld [vmem:[#allocation2 + $0x169] sm:$0xff]
    %v4568 = vld [vmem:[#allocation2 + $0x171] sm:$0xff]
    %v4569 = vld [vmem:[#allocation2 + $0x1b1] sm:$0xff]
    %v4570 = vld [vmem:[#allocation2 + $0x1b9] sm:$0xff]
    %v4571 = vld [vmem:[#allocation2 + $0x1c9] sm:$0xff]
    %v4572 = vld [vmem:[#allocation2 + $0x1d1] sm:$0xff]
    %v4573 = vld [vmem:[#allocation2 + $0x1e1] sm:$0xff]
    %v4574 = vld [vmem:[#allocation2 + $0x1e9] sm:$0xff]
    %v4575 = vld [vmem:[#allocation2 + $0x1f9] sm:$0xff]
    %v4576 = vld [vmem:[#allocation2 + $0x201] sm:$0xff]
    %v4577 = vld [vmem:[#allocation2 + $0x211] sm:$0xff]
    %v4578 = vld [vmem:[#allocation2 + $0x219] sm:$0xff]
    %v4579 = vld [vmem:[#allocation2 + $0x229] sm:$0xff]
    %v4580 = vld [vmem:[#allocation2 + $0x231] sm:$0xff]
    %v4581 = vld [vmem:[#allocation2 + $0x241] sm:$0xff]
    %v4582 = vld [vmem:[#allocation2 + $0x249] sm:$0xff]
    %v4583 = vld [vmem:[#allocation2 + $0x259] sm:$0xff]
    %v4584 = vld [vmem:[#allocation2 + $0x261] sm:$0xff]
    %v4585 = vld [vmem:[#allocation2 + $0x271] sm:$0xff]
    %v4586 = vld [vmem:[#allocation2 + $0x279] sm:$0xff]
    %v4587 = vld [vmem:[#allocation2 + $0x289] sm:$0xff]
    %v4588 = vld [vmem:[#allocation2 + $0x291] sm:$0xff]
    %v4589 = vld [vmem:[#allocation2 + $0x2a1] sm:$0xff]
    %v4590 = vld [vmem:[#allocation2 + $0x2a9] sm:$0xff]
    %v4591 = vld [vmem:[#allocation2 + $0x2b9] sm:$0xff]
    %v4592 = vld [vmem:[#allocation2 + $0x2c1] sm:$0xff]
    %v4593 = vld [vmem:[#allocation2 + $0x2d1] sm:$0xff]
    %v4594 = vld [vmem:[#allocation2 + $0x2d9] sm:$0xff]
    %v4595 = vld [vmem:[#allocation2 + $0x2e9] sm:$0xff]
    %v4596 = vld [vmem:[#allocation2 + $0x2f1] sm:$0xff]
    %v4597 = vld [vmem:[#allocation2 + $0x301] sm:$0xff]
    %v4598 = vld [vmem:[#allocation2 + $0x309] sm:$0xff]
    %v4599 = vld [vmem:[#allocation2 + $0x319] sm:$0xff]
    %v4600 = vld [vmem:[#allocation2 + $0x321] sm:$0xff]
    %v4601 = vld [vmem:[#allocation2 + $0x2] sm:$0xff]
    %v4602 = vld [vmem:[#allocation2 + $0xa] sm:$0xff]
    %v4603 = vld [vmem:[#allocation2 + $0x1a] sm:$0xff]
    %v4604 = vld [vmem:[#allocation2 + $0x22] sm:$0xff]
    %v4605 = vld [vmem:[#allocation2 + $0x32] sm:$0xff]
    %v4606 = vld [vmem:[#allocation2 + $0x3a] sm:$0xff]
    %v4607 = vld [vmem:[#allocation2 + $0x4a] sm:$0xff]
    %v4608 = vld [vmem:[#allocation2 + $0x52] sm:$0xff]
    %v4609 = vld [vmem:[#allocation2 + $0x62] sm:$0xff]
    %v4610 = vld [vmem:[#allocation2 + $0x6a] sm:$0xff]
    %v4611 = vld [vmem:[#allocation2 + $0x7a] sm:$0xff]
    %v4612 = vld [vmem:[#allocation2 + $0x82] sm:$0xff]
    %v4613 = vld [vmem:[#allocation2 + $0x92] sm:$0xff]
    %v4614 = vld [vmem:[#allocation2 + $0x9a] sm:$0xff]
    %v4615 = vld [vmem:[#allocation2 + $0xaa] sm:$0xff]
    %v4616 = vld [vmem:[#allocation2 + $0xb2] sm:$0xff]
    %v4617 = vld [vmem:[#allocation2 + $0xc2] sm:$0xff]
    %v4618 = vld [vmem:[#allocation2 + $0xca] sm:$0xff]
    %v4619 = vld [vmem:[#allocation2 + $0xda] sm:$0xff]
    %v4620 = vld [vmem:[#allocation2 + $0xe2] sm:$0xff]
    %v4621 = vld [vmem:[#allocation2 + $0xf2] sm:$0xff]
    %v4622 = vld [vmem:[#allocation2 + $0xfa] sm:$0xff]
    %v4623 = vld [vmem:[#allocation2 + $0x10a] sm:$0xff]
    %v4624 = vld [vmem:[#allocation2 + $0x112] sm:$0xff]
    %v4625 = vld [vmem:[#allocation2 + $0x122] sm:$0xff]
    %v4626 = vld [vmem:[#allocation2 + $0x12a] sm:$0xff]
    %v4627 = vld [vmem:[#allocation2 + $0x13a] sm:$0xff]
    %v4628 = vld [vmem:[#allocation2 + $0x142] sm:$0xff]
    %v4629 = vld [vmem:[#allocation2 + $0x152] sm:$0xff]
    %v4630 = vld [vmem:[#allocation2 + $0x15a] sm:$0xff]
    %v4631 = vld [vmem:[#allocation2 + $0x16a] sm:$0xff]
    %v4632 = vld [vmem:[#allocation2 + $0x172] sm:$0xff]
    %v4633 = vld [vmem:[#allocation2 + $0x1b2] sm:$0xff]
    %v4634 = vld [vmem:[#allocation2 + $0x1ba] sm:$0xff]
    %v4635 = vld [vmem:[#allocation2 + $0x1ca] sm:$0xff]
    %v4636 = vld [vmem:[#allocation2 + $0x1d2] sm:$0xff]
    %v4637 = vld [vmem:[#allocation2 + $0x1e2] sm:$0xff]
    %v4638 = vld [vmem:[#allocation2 + $0x1ea] sm:$0xff]
    %v4639 = vld [vmem:[#allocation2 + $0x1fa] sm:$0xff]
    %v4640 = vld [vmem:[#allocation2 + $0x202] sm:$0xff]
    %v4641 = vld [vmem:[#allocation2 + $0x212] sm:$0xff]
    %v4642 = vld [vmem:[#allocation2 + $0x21a] sm:$0xff]
    %v4643 = vld [vmem:[#allocation2 + $0x22a] sm:$0xff]
    %v4644 = vld [vmem:[#allocation2 + $0x232] sm:$0xff]
    %v4645 = vld [vmem:[#allocation2 + $0x242] sm:$0xff]
    %v4646 = vld [vmem:[#allocation2 + $0x24a] sm:$0xff]
    %v4647 = vld [vmem:[#allocation2 + $0x25a] sm:$0xff]
    %v4648 = vld [vmem:[#allocation2 + $0x262] sm:$0xff]
    %v4649 = vld [vmem:[#allocation2 + $0x272] sm:$0xff]
    %v4650 = vld [vmem:[#allocation2 + $0x27a] sm:$0xff]
    %v4651 = vld [vmem:[#allocation2 + $0x28a] sm:$0xff]
    %v4652 = vld [vmem:[#allocation2 + $0x292] sm:$0xff]
    %v4653 = vld [vmem:[#allocation2 + $0x2a2] sm:$0xff]
    %v4654 = vld [vmem:[#allocation2 + $0x2aa] sm:$0xff]
    %v4655 = vld [vmem:[#allocation2 + $0x2ba] sm:$0xff]
    %v4656 = vld [vmem:[#allocation2 + $0x2c2] sm:$0xff]
    %v4657 = vld [vmem:[#allocation2 + $0x2d2] sm:$0xff]
    %v4658 = vld [vmem:[#allocation2 + $0x2da] sm:$0xff]
    %v4659 = vld [vmem:[#allocation2 + $0x2ea] sm:$0xff]
    %v4660 = vld [vmem:[#allocation2 + $0x2f2] sm:$0xff]
    %v4661 = vld [vmem:[#allocation2 + $0x302] sm:$0xff]
    %v4662 = vld [vmem:[#allocation2 + $0x30a] sm:$0xff]
    %v4663 = vld [vmem:[#allocation2 + $0x31a] sm:$0xff]
    %v4664 = vld [vmem:[#allocation2 + $0x322] sm:$0xff]
    %v4665 = vld [vmem:[%s4408] sm:$0xff]
    %v4666 = vld [vmem:[%s4408 + $0x8] sm:$0xff]
    %v4667 = vld [vmem:[%s4408 + $0x18] sm:$0xff]
    %v4668 = vld [vmem:[%s4408 + $0x20] sm:$0xff]
    %v4669 = vld [vmem:[%s4408 + $0x30] sm:$0xff]
    %v4670 = vld [vmem:[%s4408 + $0x38] sm:$0xff]
    %v4671 = vld [vmem:[%s4408 + $0x48] sm:$0xff]
    %v4672 = vld [vmem:[%s4408 + $0x50] sm:$0xff]
    %v4673 = vld [vmem:[%s4408 + $0x60] sm:$0xff]
    %v4674 = vld [vmem:[%s4408 + $0x68] sm:$0xff]
    %v4675 = vld [vmem:[%s4408 + $0x78] sm:$0xff]
    %v4676 = vld [vmem:[%s4408 + $0x80] sm:$0xff]
    %v4677 = vld [vmem:[%s4408 + $0x90] sm:$0xff]
    %v4678 = vld [vmem:[%s4408 + $0x98] sm:$0xff]
    %v4679 = vld [vmem:[%s4408 + $0xa8] sm:$0xff]
    %v4680 = vld [vmem:[%s4408 + $0xb0] sm:$0xff]
    %v4681 = vld [vmem:[%s4408 + $0xc0] sm:$0xff]
    %v4682 = vld [vmem:[%s4408 + $0xc8] sm:$0xff]
    %v4683 = vld [vmem:[%s4408 + $0xd8] sm:$0xff]
    %v4684 = vld [vmem:[%s4408 + $0xe0] sm:$0xff]
    %v4685 = vld [vmem:[%s4408 + $0xf0] sm:$0xff]
    %v4686 = vld [vmem:[%s4408 + $0xf8] sm:$0xff]
    %v4687 = vld [vmem:[%s4408 + $0x108] sm:$0xff]
    %v4688 = vld [vmem:[%s4408 + $0x110] sm:$0xff]
    %v4689 = vld [vmem:[%s4408 + $0x120] sm:$0xff]
    %v4690 = vld [vmem:[%s4408 + $0x128] sm:$0xff]
    %v4691 = vld [vmem:[%s4408 + $0x138] sm:$0xff]
    %v4692 = vld [vmem:[%s4408 + $0x140] sm:$0xff]
    %v4693 = vld [vmem:[%s4408 + $0x150] sm:$0xff]
    %v4694 = vld [vmem:[%s4408 + $0x158] sm:$0xff]
    %v4695 = vld [vmem:[%s4408 + $0x168] sm:$0xff]
    %v4696 = vld [vmem:[%s4408 + $0x170] sm:$0xff]
    %v4697 = vld [vmem:[%s4408 + $0x1b0] sm:$0xff]
    %v4698 = vld [vmem:[%s4408 + $0x1b8] sm:$0xff]
    %v4699 = vld [vmem:[%s4408 + $0x1c8] sm:$0xff]
    %v4700 = vld [vmem:[%s4408 + $0x1d0] sm:$0xff]
    %v4701 = vld [vmem:[%s4408 + $0x1e0] sm:$0xff]
    %v4702 = vld [vmem:[%s4408 + $0x1e8] sm:$0xff]
    %v4703 = vld [vmem:[%s4408 + $0x1f8] sm:$0xff]
    %v4704 = vld [vmem:[%s4408 + $0x200] sm:$0xff]
    %v4705 = vld [vmem:[%s4408 + $0x210] sm:$0xff]
    %v4706 = vld [vmem:[%s4408 + $0x218] sm:$0xff]
    %v4707 = vld [vmem:[%s4408 + $0x228] sm:$0xff]
    %v4708 = vld [vmem:[%s4408 + $0x230] sm:$0xff]
    %v4709 = vld [vmem:[%s4408 + $0x240] sm:$0xff]
    %v4710 = vld [vmem:[%s4408 + $0x248] sm:$0xff]
    %v4711 = vld [vmem:[%s4408 + $0x258] sm:$0xff]
    %v4712 = vld [vmem:[%s4408 + $0x260] sm:$0xff]
    %v4713 = vld [vmem:[%s4408 + $0x270] sm:$0xff]
    %v4714 = vld [vmem:[%s4408 + $0x278] sm:$0xff]
    %v4715 = vld [vmem:[%s4408 + $0x288] sm:$0xff]
    %v4716 = vld [vmem:[%s4408 + $0x290] sm:$0xff]
    %v4717 = vld [vmem:[%s4408 + $0x2a0] sm:$0xff]
    %v4718 = vld [vmem:[%s4408 + $0x2a8] sm:$0xff]
    %v4719 = vld [vmem:[%s4408 + $0x2b8] sm:$0xff]
    %v4720 = vld [vmem:[%s4408 + $0x2c0] sm:$0xff]
    %v4721 = vld [vmem:[%s4408 + $0x2d0] sm:$0xff]
    %v4722 = vld [vmem:[%s4408 + $0x2d8] sm:$0xff]
    %v4723 = vld [vmem:[%s4408 + $0x2e8] sm:$0xff]
    %v4724 = vld [vmem:[%s4408 + $0x2f0] sm:$0xff]
    %v4725 = vld [vmem:[%s4408 + $0x300] sm:$0xff]
    %v4726 = vld [vmem:[%s4408 + $0x308] sm:$0xff]
    %v4727 = vld [vmem:[%s4408 + $0x318] sm:$0xff]
    %v4728 = vld [vmem:[%s4408 + $0x320] sm:$0xff]
    %v4729 = vld [vmem:[%s4408 + $0x1] sm:$0xff]
    %v4730 = vld [vmem:[%s4408 + $0x9] sm:$0xff]
    %v4731 = vld [vmem:[%s4408 + $0x19] sm:$0xff]
    %v4732 = vld [vmem:[%s4408 + $0x21] sm:$0xff]
    %v4733 = vld [vmem:[%s4408 + $0x31] sm:$0xff]
    %v4734 = vld [vmem:[%s4408 + $0x39] sm:$0xff]
    %v4735 = vld [vmem:[%s4408 + $0x49] sm:$0xff]
    %v4736 = vld [vmem:[%s4408 + $0x51] sm:$0xff]
    %v4737 = vld [vmem:[%s4408 + $0x61] sm:$0xff]
    %v4738 = vld [vmem:[%s4408 + $0x69] sm:$0xff]
    %v4739 = vld [vmem:[%s4408 + $0x79] sm:$0xff]
    %v4740 = vld [vmem:[%s4408 + $0x81] sm:$0xff]
    %v4741 = vld [vmem:[%s4408 + $0x91] sm:$0xff]
    %v4742 = vld [vmem:[%s4408 + $0x99] sm:$0xff]
    %v4743 = vld [vmem:[%s4408 + $0xa9] sm:$0xff]
    %v4744 = vld [vmem:[%s4408 + $0xb1] sm:$0xff]
    %v4745 = vld [vmem:[%s4408 + $0xc1] sm:$0xff]
    %v4746 = vld [vmem:[%s4408 + $0xc9] sm:$0xff]
    %v4747 = vld [vmem:[%s4408 + $0xd9] sm:$0xff]
    %v4748 = vld [vmem:[%s4408 + $0xe1] sm:$0xff]
    %v4749 = vld [vmem:[%s4408 + $0xf1] sm:$0xff]
    %v4750 = vld [vmem:[%s4408 + $0xf9] sm:$0xff]
    %v4751 = vld [vmem:[%s4408 + $0x109] sm:$0xff]
    %v4752 = vld [vmem:[%s4408 + $0x111] sm:$0xff]
    %v4753 = vld [vmem:[%s4408 + $0x121] sm:$0xff]
    %v4754 = vld [vmem:[%s4408 + $0x129] sm:$0xff]
    %v4755 = vld [vmem:[%s4408 + $0x139] sm:$0xff]
    %v4756 = vld [vmem:[%s4408 + $0x141] sm:$0xff]
    %v4757 = vld [vmem:[%s4408 + $0x151] sm:$0xff]
    %v4758 = vld [vmem:[%s4408 + $0x159] sm:$0xff]
    %v4759 = vld [vmem:[%s4408 + $0x169] sm:$0xff]
    %v4760 = vld [vmem:[%s4408 + $0x171] sm:$0xff]
    %v4761 = vld [vmem:[%s4408 + $0x1b1] sm:$0xff]
    %v4762 = vld [vmem:[%s4408 + $0x1b9] sm:$0xff]
    %v4763 = vld [vmem:[%s4408 + $0x1c9] sm:$0xff]
    %v4764 = vld [vmem:[%s4408 + $0x1d1] sm:$0xff]
    %v4765 = vld [vmem:[%s4408 + $0x1e1] sm:$0xff]
    %v4766 = vld [vmem:[%s4408 + $0x1e9] sm:$0xff]
    %v4767 = vld [vmem:[%s4408 + $0x1f9] sm:$0xff]
    %v4768 = vld [vmem:[%s4408 + $0x201] sm:$0xff]
    %v4769 = vld [vmem:[%s4408 + $0x211] sm:$0xff]
    %v4770 = vld [vmem:[%s4408 + $0x219] sm:$0xff]
    %v4771 = vld [vmem:[%s4408 + $0x229] sm:$0xff]
    %v4772 = vld [vmem:[%s4408 + $0x231] sm:$0xff]
    %v4773 = vld [vmem:[%s4408 + $0x241] sm:$0xff]
    %v4774 = vld [vmem:[%s4408 + $0x249] sm:$0xff]
    %v4775 = vld [vmem:[%s4408 + $0x259] sm:$0xff]
    %v4776 = vld [vmem:[%s4408 + $0x261] sm:$0xff]
    %v4777 = vld [vmem:[%s4408 + $0x271] sm:$0xff]
    %v4778 = vld [vmem:[%s4408 + $0x279] sm:$0xff]
    %v4779 = vld [vmem:[%s4408 + $0x289] sm:$0xff]
    %v4780 = vld [vmem:[%s4408 + $0x291] sm:$0xff]
    %v4781 = vld [vmem:[%s4408 + $0x2a1] sm:$0xff]
    %v4782 = vld [vmem:[%s4408 + $0x2a9] sm:$0xff]
    %v4783 = vld [vmem:[%s4408 + $0x2b9] sm:$0xff]
    %v4784 = vld [vmem:[%s4408 + $0x2c1] sm:$0xff]
    %v4785 = vld [vmem:[%s4408 + $0x2d1] sm:$0xff]
    %v4786 = vld [vmem:[%s4408 + $0x2d9] sm:$0xff]
    %v4787 = vld [vmem:[%s4408 + $0x2e9] sm:$0xff]
    %v4788 = vld [vmem:[%s4408 + $0x2f1] sm:$0xff]
    %v4789 = vld [vmem:[%s4408 + $0x301] sm:$0xff]
    %v4790 = vld [vmem:[%s4408 + $0x309] sm:$0xff]
    %v4791 = vld [vmem:[%s4408 + $0x319] sm:$0xff]
    %v4792 = vld [vmem:[%s4408 + $0x321] sm:$0xff]
    %v4793 = vld [vmem:[%s4408 + $0x2] sm:$0xff]
    %v4794 = vld [vmem:[%s4408 + $0xa] sm:$0xff]
    %v4795 = vld [vmem:[%s4408 + $0x1a] sm:$0xff]
    %v4796 = vld [vmem:[%s4408 + $0x22] sm:$0xff]
    %v4797 = vld [vmem:[%s4408 + $0x32] sm:$0xff]
    %v4798 = vld [vmem:[%s4408 + $0x3a] sm:$0xff]
    %v4799 = vld [vmem:[%s4408 + $0x4a] sm:$0xff]
    %v4800 = vld [vmem:[%s4408 + $0x52] sm:$0xff]
    %v4801 = vld [vmem:[%s4408 + $0x62] sm:$0xff]
    %v4802 = vld [vmem:[%s4408 + $0x6a] sm:$0xff]
    %v4803 = vld [vmem:[%s4408 + $0x7a] sm:$0xff]
    %v4804 = vld [vmem:[%s4408 + $0x82] sm:$0xff]
    %v4805 = vld [vmem:[%s4408 + $0x92] sm:$0xff]
    %v4806 = vld [vmem:[%s4408 + $0x9a] sm:$0xff]
    %v4807 = vld [vmem:[%s4408 + $0xaa] sm:$0xff]
    %v4808 = vld [vmem:[%s4408 + $0xb2] sm:$0xff]
    %v4809 = vld [vmem:[%s4408 + $0xc2] sm:$0xff]
    %v4810 = vld [vmem:[%s4408 + $0xca] sm:$0xff]
    %v4811 = vld [vmem:[%s4408 + $0xda] sm:$0xff]
    %v4812 = vld [vmem:[%s4408 + $0xe2] sm:$0xff]
    %v4813 = vld [vmem:[%s4408 + $0xf2] sm:$0xff]
    %v4814 = vld [vmem:[%s4408 + $0xfa] sm:$0xff]
    %v4815 = vld [vmem:[%s4408 + $0x10a] sm:$0xff]
    %v4816 = vld [vmem:[%s4408 + $0x112] sm:$0xff]
    %v4817 = vld [vmem:[%s4408 + $0x122] sm:$0xff]
    %v4818 = vld [vmem:[%s4408 + $0x12a] sm:$0xff]
    %v4819 = vld [vmem:[%s4408 + $0x13a] sm:$0xff]
    %v4820 = vld [vmem:[%s4408 + $0x142] sm:$0xff]
    %v4821 = vld [vmem:[%s4408 + $0x152] sm:$0xff]
    %v4822 = vld [vmem:[%s4408 + $0x15a] sm:$0xff]
    %v4823 = vld [vmem:[%s4408 + $0x16a] sm:$0xff]
    %v4824 = vld [vmem:[%s4408 + $0x172] sm:$0xff]
    %v4825 = vld [vmem:[%s4408 + $0x1b2] sm:$0xff]
    %v4826 = vld [vmem:[%s4408 + $0x1ba] sm:$0xff]
    %v4827 = vld [vmem:[%s4408 + $0x1ca] sm:$0xff]
    %v4828 = vld [vmem:[%s4408 + $0x1d2] sm:$0xff]
    %v4829 = vld [vmem:[%s4408 + $0x1e2] sm:$0xff]
    %v4830 = vld [vmem:[%s4408 + $0x1ea] sm:$0xff]
    %v4831 = vld [vmem:[%s4408 + $0x1fa] sm:$0xff]
    %v4832 = vld [vmem:[%s4408 + $0x202] sm:$0xff]
    %v4833 = vld [vmem:[%s4408 + $0x212] sm:$0xff]
    %v4834 = vld [vmem:[%s4408 + $0x21a] sm:$0xff]
    %v4835 = vld [vmem:[%s4408 + $0x22a] sm:$0xff]
    %v4836 = vld [vmem:[%s4408 + $0x232] sm:$0xff]
    %v4837 = vld [vmem:[%s4408 + $0x242] sm:$0xff]
    %v4838 = vld [vmem:[%s4408 + $0x24a] sm:$0xff]
    %v4839 = vld [vmem:[%s4408 + $0x25a] sm:$0xff]
    %v4840 = vld [vmem:[%s4408 + $0x262] sm:$0xff]
    %v4841 = vld [vmem:[%s4408 + $0x272] sm:$0xff]
    %v4842 = vld [vmem:[%s4408 + $0x27a] sm:$0xff]
    %v4843 = vld [vmem:[%s4408 + $0x28a] sm:$0xff]
    %v4844 = vld [vmem:[%s4408 + $0x292] sm:$0xff]
    %v4845 = vld [vmem:[%s4408 + $0x2a2] sm:$0xff]
    %v4846 = vld [vmem:[%s4408 + $0x2aa] sm:$0xff]
    %v4847 = vld [vmem:[%s4408 + $0x2ba] sm:$0xff]
    %v4848 = vld [vmem:[%s4408 + $0x2c2] sm:$0xff]
    %v4849 = vld [vmem:[%s4408 + $0x2d2] sm:$0xff]
    %v4850 = vld [vmem:[%s4408 + $0x2da] sm:$0xff]
    %v4851 = vld [vmem:[%s4408 + $0x2ea] sm:$0xff]
    %v4852 = vld [vmem:[%s4408 + $0x2f2] sm:$0xff]
    %v4853 = vld [vmem:[%s4408 + $0x302] sm:$0xff]
    %v4854 = vld [vmem:[%s4408 + $0x30a] sm:$0xff]
    %v4855 = vld [vmem:[%s4408 + $0x31a] sm:$0xff]
    %v4856 = vld [vmem:[%s4408 + $0x322] sm:$0xff]
    %s4857 = scalar_lea.vmem [#allocation2], 48
    %v4858 = vld [vmem:[%s4857] sm:$0xff]
    %v4859 = vld [vmem:[%s4857 + $0x8] sm:$0xff]
    %v4860 = vld [vmem:[%s4857 + $0x18] sm:$0xff]
    %v4861 = vld [vmem:[%s4857 + $0x20] sm:$0xff]
    %v4862 = vld [vmem:[%s4857 + $0x30] sm:$0xff]
    %v4863 = vld [vmem:[%s4857 + $0x38] sm:$0xff]
    %v4864 = vld [vmem:[%s4857 + $0x48] sm:$0xff]
    %v4865 = vld [vmem:[%s4857 + $0x50] sm:$0xff]
    %v4866 = vld [vmem:[%s4857 + $0x60] sm:$0xff]
    %v4867 = vld [vmem:[%s4857 + $0x68] sm:$0xff]
    %v4868 = vld [vmem:[%s4857 + $0x78] sm:$0xff]
    %v4869 = vld [vmem:[%s4857 + $0x80] sm:$0xff]
    %v4870 = vld [vmem:[%s4857 + $0x90] sm:$0xff]
    %v4871 = vld [vmem:[%s4857 + $0x98] sm:$0xff]
    %v4872 = vld [vmem:[%s4857 + $0xa8] sm:$0xff]
    %v4873 = vld [vmem:[%s4857 + $0xb0] sm:$0xff]
    %v4874 = vld [vmem:[%s4857 + $0xc0] sm:$0xff]
    %v4875 = vld [vmem:[%s4857 + $0xc8] sm:$0xff]
    %v4876 = vld [vmem:[%s4857 + $0xd8] sm:$0xff]
    %v4877 = vld [vmem:[%s4857 + $0xe0] sm:$0xff]
    %v4878 = vld [vmem:[%s4857 + $0xf0] sm:$0xff]
    %v4879 = vld [vmem:[%s4857 + $0xf8] sm:$0xff]
    %v4880 = vld [vmem:[%s4857 + $0x108] sm:$0xff]
    %v4881 = vld [vmem:[%s4857 + $0x110] sm:$0xff]
    %v4882 = vld [vmem:[%s4857 + $0x120] sm:$0xff]
    %v4883 = vld [vmem:[%s4857 + $0x128] sm:$0xff]
    %v4884 = vld [vmem:[%s4857 + $0x138] sm:$0xff]
    %v4885 = vld [vmem:[%s4857 + $0x140] sm:$0xff]
    %v4886 = vld [vmem:[%s4857 + $0x150] sm:$0xff]
    %v4887 = vld [vmem:[%s4857 + $0x158] sm:$0xff]
    %v4888 = vld [vmem:[%s4857 + $0x168] sm:$0xff]
    %v4889 = vld [vmem:[%s4857 + $0x170] sm:$0xff]
    %v4890 = vld [vmem:[%s4857 + $0x1b0] sm:$0xff]
    %v4891 = vld [vmem:[%s4857 + $0x1b8] sm:$0xff]
    %v4892 = vld [vmem:[%s4857 + $0x1c8] sm:$0xff]
    %v4893 = vld [vmem:[%s4857 + $0x1d0] sm:$0xff]
    %v4894 = vld [vmem:[%s4857 + $0x1e0] sm:$0xff]
    %v4895 = vld [vmem:[%s4857 + $0x1e8] sm:$0xff]
    %v4896 = vld [vmem:[%s4857 + $0x1f8] sm:$0xff]
    %v4897 = vld [vmem:[%s4857 + $0x200] sm:$0xff]
    %v4898 = vld [vmem:[%s4857 + $0x210] sm:$0xff]
    %v4899 = vld [vmem:[%s4857 + $0x218] sm:$0xff]
    %v4900 = vld [vmem:[%s4857 + $0x228] sm:$0xff]
    %v4901 = vld [vmem:[%s4857 + $0x230] sm:$0xff]
    %v4902 = vld [vmem:[%s4857 + $0x240] sm:$0xff]
    %v4903 = vld [vmem:[%s4857 + $0x248] sm:$0xff]
    %v4904 = vld [vmem:[%s4857 + $0x258] sm:$0xff]
    %v4905 = vld [vmem:[%s4857 + $0x260] sm:$0xff]
    %v4906 = vld [vmem:[%s4857 + $0x270] sm:$0xff]
    %v4907 = vld [vmem:[%s4857 + $0x278] sm:$0xff]
    %v4908 = vld [vmem:[%s4857 + $0x288] sm:$0xff]
    %v4909 = vld [vmem:[%s4857 + $0x290] sm:$0xff]
    %v4910 = vld [vmem:[%s4857 + $0x2a0] sm:$0xff]
    %v4911 = vld [vmem:[%s4857 + $0x2a8] sm:$0xff]
    %v4912 = vld [vmem:[%s4857 + $0x2b8] sm:$0xff]
    %v4913 = vld [vmem:[%s4857 + $0x2c0] sm:$0xff]
    %v4914 = vld [vmem:[%s4857 + $0x2d0] sm:$0xff]
    %v4915 = vld [vmem:[%s4857 + $0x2d8] sm:$0xff]
    %v4916 = vld [vmem:[%s4857 + $0x2e8] sm:$0xff]
    %v4917 = vld [vmem:[%s4857 + $0x2f0] sm:$0xff]
    %v4918 = vld [vmem:[%s4857 + $0x300] sm:$0xff]
    %v4919 = vld [vmem:[%s4857 + $0x308] sm:$0xff]
    %v4920 = vld [vmem:[%s4857 + $0x318] sm:$0xff]
    %v4921 = vld [vmem:[%s4857 + $0x320] sm:$0xff]
    %v4922 = vld [vmem:[%s4857 + $0x1] sm:$0xff]
    %v4923 = vld [vmem:[%s4857 + $0x9] sm:$0xff]
    %v4924 = vld [vmem:[%s4857 + $0x19] sm:$0xff]
    %v4925 = vld [vmem:[%s4857 + $0x21] sm:$0xff]
    %v4926 = vld [vmem:[%s4857 + $0x31] sm:$0xff]
    %v4927 = vld [vmem:[%s4857 + $0x39] sm:$0xff]
    %v4928 = vld [vmem:[%s4857 + $0x49] sm:$0xff]
    %v4929 = vld [vmem:[%s4857 + $0x51] sm:$0xff]
    %v4930 = vld [vmem:[%s4857 + $0x61] sm:$0xff]
    %v4931 = vld [vmem:[%s4857 + $0x69] sm:$0xff]
    %v4932 = vld [vmem:[%s4857 + $0x79] sm:$0xff]
    %v4933 = vld [vmem:[%s4857 + $0x81] sm:$0xff]
    %v4934 = vld [vmem:[%s4857 + $0x91] sm:$0xff]
    %v4935 = vld [vmem:[%s4857 + $0x99] sm:$0xff]
    %v4936 = vld [vmem:[%s4857 + $0xa9] sm:$0xff]
    %v4937 = vld [vmem:[%s4857 + $0xb1] sm:$0xff]
    %v4938 = vld [vmem:[%s4857 + $0xc1] sm:$0xff]
    %v4939 = vld [vmem:[%s4857 + $0xc9] sm:$0xff]
    %v4940 = vld [vmem:[%s4857 + $0xd9] sm:$0xff]
    %v4941 = vld [vmem:[%s4857 + $0xe1] sm:$0xff]
    %v4942 = vld [vmem:[%s4857 + $0xf1] sm:$0xff]
    %v4943 = vld [vmem:[%s4857 + $0xf9] sm:$0xff]
    %v4944 = vld [vmem:[%s4857 + $0x109] sm:$0xff]
    %v4945 = vld [vmem:[%s4857 + $0x111] sm:$0xff]
    %v4946 = vld [vmem:[%s4857 + $0x121] sm:$0xff]
    %v4947 = vld [vmem:[%s4857 + $0x129] sm:$0xff]
    %v4948 = vld [vmem:[%s4857 + $0x139] sm:$0xff]
    %v4949 = vld [vmem:[%s4857 + $0x141] sm:$0xff]
    %v4950 = vld [vmem:[%s4857 + $0x151] sm:$0xff]
    %v4951 = vld [vmem:[%s4857 + $0x159] sm:$0xff]
    %v4952 = vld [vmem:[%s4857 + $0x169] sm:$0xff]
    %v4953 = vld [vmem:[%s4857 + $0x171] sm:$0xff]
    %v4954 = vld [vmem:[%s4857 + $0x1b1] sm:$0xff]
    %v4955 = vld [vmem:[%s4857 + $0x1b9] sm:$0xff]
    %v4956 = vld [vmem:[%s4857 + $0x1c9] sm:$0xff]
    %v4957 = vld [vmem:[%s4857 + $0x1d1] sm:$0xff]
    %v4958 = vld [vmem:[%s4857 + $0x1e1] sm:$0xff]
    %v4959 = vld [vmem:[%s4857 + $0x1e9] sm:$0xff]
    %v4960 = vld [vmem:[%s4857 + $0x1f9] sm:$0xff]
    %v4961 = vld [vmem:[%s4857 + $0x201] sm:$0xff]
    %v4962 = vld [vmem:[%s4857 + $0x211] sm:$0xff]
    %v4963 = vld [vmem:[%s4857 + $0x219] sm:$0xff]
    %v4964 = vld [vmem:[%s4857 + $0x229] sm:$0xff]
    %v4965 = vld [vmem:[%s4857 + $0x231] sm:$0xff]
    %v4966 = vld [vmem:[%s4857 + $0x241] sm:$0xff]
    %v4967 = vld [vmem:[%s4857 + $0x249] sm:$0xff]
    %v4968 = vld [vmem:[%s4857 + $0x259] sm:$0xff]
    %v4969 = vld [vmem:[%s4857 + $0x261] sm:$0xff]
    %v4970 = vld [vmem:[%s4857 + $0x271] sm:$0xff]
    %v4971 = vld [vmem:[%s4857 + $0x279] sm:$0xff]
    %v4972 = vld [vmem:[%s4857 + $0x289] sm:$0xff]
    %v4973 = vld [vmem:[%s4857 + $0x291] sm:$0xff]
    %v4974 = vld [vmem:[%s4857 + $0x2a1] sm:$0xff]
    %v4975 = vld [vmem:[%s4857 + $0x2a9] sm:$0xff]
    %v4976 = vld [vmem:[%s4857 + $0x2b9] sm:$0xff]
    %v4977 = vld [vmem:[%s4857 + $0x2c1] sm:$0xff]
    %v4978 = vld [vmem:[%s4857 + $0x2d1] sm:$0xff]
    %v4979 = vld [vmem:[%s4857 + $0x2d9] sm:$0xff]
    %v4980 = vld [vmem:[%s4857 + $0x2e9] sm:$0xff]
    %v4981 = vld [vmem:[%s4857 + $0x2f1] sm:$0xff]
    %v4982 = vld [vmem:[%s4857 + $0x301] sm:$0xff]
    %v4983 = vld [vmem:[%s4857 + $0x309] sm:$0xff]
    %v4984 = vld [vmem:[%s4857 + $0x319] sm:$0xff]
    %v4985 = vld [vmem:[%s4857 + $0x321] sm:$0xff]
    %v4986 = vld [vmem:[%s4857 + $0x2] sm:$0xff]
    %v4987 = vld [vmem:[%s4857 + $0xa] sm:$0xff]
    %v4988 = vld [vmem:[%s4857 + $0x1a] sm:$0xff]
    %v4989 = vld [vmem:[%s4857 + $0x22] sm:$0xff]
    %v4990 = vld [vmem:[%s4857 + $0x32] sm:$0xff]
    %v4991 = vld [vmem:[%s4857 + $0x3a] sm:$0xff]
    %v4992 = vld [vmem:[%s4857 + $0x4a] sm:$0xff]
    %v4993 = vld [vmem:[%s4857 + $0x52] sm:$0xff]
    %v4994 = vld [vmem:[%s4857 + $0x62] sm:$0xff]
    %v4995 = vld [vmem:[%s4857 + $0x6a] sm:$0xff]
    %v4996 = vld [vmem:[%s4857 + $0x7a] sm:$0xff]
    %v4997 = vld [vmem:[%s4857 + $0x82] sm:$0xff]
    %v4998 = vld [vmem:[%s4857 + $0x92] sm:$0xff]
    %v4999 = vld [vmem:[%s4857 + $0x9a] sm:$0xff]
    %v5000 = vld [vmem:[%s4857 + $0xaa] sm:$0xff]
    %v5001 = vld [vmem:[%s4857 + $0xb2] sm:$0xff]
    %v5002 = vld [vmem:[%s4857 + $0xc2] sm:$0xff]
    %v5003 = vld [vmem:[%s4857 + $0xca] sm:$0xff]
    %v5004 = vld [vmem:[%s4857 + $0xda] sm:$0xff]
    %v5005 = vld [vmem:[%s4857 + $0xe2] sm:$0xff]
    %v5006 = vld [vmem:[%s4857 + $0xf2] sm:$0xff]
    %v5007 = vld [vmem:[%s4857 + $0xfa] sm:$0xff]
    %v5008 = vld [vmem:[%s4857 + $0x10a] sm:$0xff]
    %v5009 = vld [vmem:[%s4857 + $0x112] sm:$0xff]
    %v5010 = vld [vmem:[%s4857 + $0x122] sm:$0xff]
    %v5011 = vld [vmem:[%s4857 + $0x12a] sm:$0xff]
    %v5012 = vld [vmem:[%s4857 + $0x13a] sm:$0xff]
    %v5013 = vld [vmem:[%s4857 + $0x142] sm:$0xff]
    %v5014 = vld [vmem:[%s4857 + $0x152] sm:$0xff]
    %v5015 = vld [vmem:[%s4857 + $0x15a] sm:$0xff]
    %v5016 = vld [vmem:[%s4857 + $0x16a] sm:$0xff]
    %v5017 = vld [vmem:[%s4857 + $0x172] sm:$0xff]
    %v5018 = vld [vmem:[%s4857 + $0x1b2] sm:$0xff]
    %v5019 = vld [vmem:[%s4857 + $0x1ba] sm:$0xff]
    %v5020 = vld [vmem:[%s4857 + $0x1ca] sm:$0xff]
    %v5021 = vld [vmem:[%s4857 + $0x1d2] sm:$0xff]
    %v5022 = vld [vmem:[%s4857 + $0x1e2] sm:$0xff]
    %v5023 = vld [vmem:[%s4857 + $0x1ea] sm:$0xff]
    %v5024 = vld [vmem:[%s4857 + $0x1fa] sm:$0xff]
    %v5025 = vld [vmem:[%s4857 + $0x202] sm:$0xff]
    %v5026 = vld [vmem:[%s4857 + $0x212] sm:$0xff]
    %v5027 = vld [vmem:[%s4857 + $0x21a] sm:$0xff]
    %v5028 = vld [vmem:[%s4857 + $0x22a] sm:$0xff]
    %v5029 = vld [vmem:[%s4857 + $0x232] sm:$0xff]
    %v5030 = vld [vmem:[%s4857 + $0x242] sm:$0xff]
    %v5031 = vld [vmem:[%s4857 + $0x24a] sm:$0xff]
    %v5032 = vld [vmem:[%s4857 + $0x25a] sm:$0xff]
    %v5033 = vld [vmem:[%s4857 + $0x262] sm:$0xff]
    %v5034 = vld [vmem:[%s4857 + $0x272] sm:$0xff]
    %v5035 = vld [vmem:[%s4857 + $0x27a] sm:$0xff]
    %v5036 = vld [vmem:[%s4857 + $0x28a] sm:$0xff]
    %v5037 = vld [vmem:[%s4857 + $0x292] sm:$0xff]
    %v5038 = vld [vmem:[%s4857 + $0x2a2] sm:$0xff]
    %v5039 = vld [vmem:[%s4857 + $0x2aa] sm:$0xff]
    %v5040 = vld [vmem:[%s4857 + $0x2ba] sm:$0xff]
    %v5041 = vld [vmem:[%s4857 + $0x2c2] sm:$0xff]
    %v5042 = vld [vmem:[%s4857 + $0x2d2] sm:$0xff]
    %v5043 = vld [vmem:[%s4857 + $0x2da] sm:$0xff]
    %v5044 = vld [vmem:[%s4857 + $0x2ea] sm:$0xff]
    %v5045 = vld [vmem:[%s4857 + $0x2f2] sm:$0xff]
    %v5046 = vld [vmem:[%s4857 + $0x302] sm:$0xff]
    %v5047 = vld [vmem:[%s4857 + $0x30a] sm:$0xff]
    %v5048 = vld [vmem:[%s4857 + $0x31a] sm:$0xff]
    %v5049 = vld [vmem:[%s4857 + $0x322] sm:$0xff]
    %5114 = vrot.lane.b32.xlu0 %v4537, 8
    %v5115 = vpop.permute.xlu0 %5114
    %5116 = vrot.lane.b32.xlu0 %v4538, 8
    %v5117 = vpop.permute.xlu0 %5116
    %5118 = vrot.lane.b32.xlu0 %v4539, 8
    %v5119 = vpop.permute.xlu0 %5118
    %5120 = vrot.lane.b32.xlu0 %v4540, 8
    %v5121 = vpop.permute.xlu0 %5120
    %5122 = vrot.lane.b32.xlu0 %v4541, 8
    %v5123 = vpop.permute.xlu0 %5122
    %5124 = vrot.lane.b32.xlu0 %v4542, 8
    %v5125 = vpop.permute.xlu0 %5124
    %5126 = vrot.lane.b32.xlu0 %v4543, 8
    %v5127 = vpop.permute.xlu0 %5126
    %5128 = vrot.lane.b32.xlu0 %v4544, 8
    %v5129 = vpop.permute.xlu0 %5128
    %5130 = vrot.lane.b32.xlu0 %v4545, 8
    %v5131 = vpop.permute.xlu0 %5130
    %5132 = vrot.lane.b32.xlu0 %v4546, 8
    %v5133 = vpop.permute.xlu0 %5132
    %5134 = vrot.lane.b32.xlu0 %v4547, 8
    %v5135 = vpop.permute.xlu0 %5134
    %5136 = vrot.lane.b32.xlu0 %v4548, 8
    %v5137 = vpop.permute.xlu0 %5136
    %5138 = vrot.lane.b32.xlu0 %v4549, 8
    %v5139 = vpop.permute.xlu0 %5138
    %5140 = vrot.lane.b32.xlu0 %v4550, 8
    %v5141 = vpop.permute.xlu0 %5140
    %5142 = vrot.lane.b32.xlu0 %v4551, 8
    %v5143 = vpop.permute.xlu0 %5142
    %5144 = vrot.lane.b32.xlu0 %v4552, 8
    %v5145 = vpop.permute.xlu0 %5144
    %5146 = vrot.lane.b32.xlu0 %v4553, 8
    %v5147 = vpop.permute.xlu0 %5146
    %5148 = vrot.lane.b32.xlu0 %v4554, 8
    %v5149 = vpop.permute.xlu0 %5148
    %5150 = vrot.lane.b32.xlu0 %v4555, 8
    %v5151 = vpop.permute.xlu0 %5150
    %5152 = vrot.lane.b32.xlu0 %v4556, 8
    %v5153 = vpop.permute.xlu0 %5152
    %5154 = vrot.lane.b32.xlu0 %v4557, 8
    %v5155 = vpop.permute.xlu0 %5154
    %5156 = vrot.lane.b32.xlu0 %v4558, 8
    %v5157 = vpop.permute.xlu0 %5156
    %5158 = vrot.lane.b32.xlu0 %v4559, 8
    %v5159 = vpop.permute.xlu0 %5158
    %5160 = vrot.lane.b32.xlu0 %v4560, 8
    %v5161 = vpop.permute.xlu0 %5160
    %5162 = vrot.lane.b32.xlu0 %v4561, 8
    %v5163 = vpop.permute.xlu0 %5162
    %5164 = vrot.lane.b32.xlu0 %v4562, 8
    %v5165 = vpop.permute.xlu0 %5164
    %5166 = vrot.lane.b32.xlu0 %v4563, 8
    %v5167 = vpop.permute.xlu0 %5166
    %5168 = vrot.lane.b32.xlu0 %v4564, 8
    %v5169 = vpop.permute.xlu0 %5168
    %5170 = vrot.lane.b32.xlu0 %v4565, 8
    %v5171 = vpop.permute.xlu0 %5170
    %5172 = vrot.lane.b32.xlu0 %v4566, 8
    %v5173 = vpop.permute.xlu0 %5172
    %5174 = vrot.lane.b32.xlu0 %v4567, 8
    %v5175 = vpop.permute.xlu0 %5174
    %5176 = vrot.lane.b32.xlu0 %v4568, 8
    %v5177 = vpop.permute.xlu0 %5176
    %5178 = vrot.lane.b32.xlu0 %v4569, 8
    %v5179 = vpop.permute.xlu0 %5178
    %5180 = vrot.lane.b32.xlu0 %v4570, 8
    %v5181 = vpop.permute.xlu0 %5180
    %5182 = vrot.lane.b32.xlu0 %v4571, 8
    %v5183 = vpop.permute.xlu0 %5182
    %5184 = vrot.lane.b32.xlu0 %v4572, 8
    %v5185 = vpop.permute.xlu0 %5184
    %5186 = vrot.lane.b32.xlu0 %v4573, 8
    %v5187 = vpop.permute.xlu0 %5186
    %5188 = vrot.lane.b32.xlu0 %v4574, 8
    %v5189 = vpop.permute.xlu0 %5188
    %5190 = vrot.lane.b32.xlu0 %v4575, 8
    %v5191 = vpop.permute.xlu0 %5190
    %5192 = vrot.lane.b32.xlu0 %v4576, 8
    %v5193 = vpop.permute.xlu0 %5192
    %5194 = vrot.lane.b32.xlu0 %v4577, 8
    %v5195 = vpop.permute.xlu0 %5194
    %5196 = vrot.lane.b32.xlu0 %v4578, 8
    %v5197 = vpop.permute.xlu0 %5196
    %5198 = vrot.lane.b32.xlu0 %v4579, 8
    %v5199 = vpop.permute.xlu0 %5198
    %5200 = vrot.lane.b32.xlu0 %v4580, 8
    %v5201 = vpop.permute.xlu0 %5200
    %5202 = vrot.lane.b32.xlu0 %v4581, 8
    %v5203 = vpop.permute.xlu0 %5202
    %5204 = vrot.lane.b32.xlu0 %v4582, 8
    %v5205 = vpop.permute.xlu0 %5204
    %5206 = vrot.lane.b32.xlu0 %v4583, 8
    %v5207 = vpop.permute.xlu0 %5206
    %5208 = vrot.lane.b32.xlu0 %v4584, 8
    %v5209 = vpop.permute.xlu0 %5208
    %5210 = vrot.lane.b32.xlu0 %v4585, 8
    %v5211 = vpop.permute.xlu0 %5210
    %5212 = vrot.lane.b32.xlu0 %v4586, 8
    %v5213 = vpop.permute.xlu0 %5212
    %5214 = vrot.lane.b32.xlu0 %v4587, 8
    %v5215 = vpop.permute.xlu0 %5214
    %5216 = vrot.lane.b32.xlu0 %v4588, 8
    %v5217 = vpop.permute.xlu0 %5216
    %5218 = vrot.lane.b32.xlu0 %v4589, 8
    %v5219 = vpop.permute.xlu0 %5218
    %5220 = vrot.lane.b32.xlu0 %v4590, 8
    %v5221 = vpop.permute.xlu0 %5220
    %5222 = vrot.lane.b32.xlu0 %v4591, 8
    %v5223 = vpop.permute.xlu0 %5222
    %5224 = vrot.lane.b32.xlu0 %v4592, 8
    %v5225 = vpop.permute.xlu0 %5224
    %5226 = vrot.lane.b32.xlu0 %v4593, 8
    %v5227 = vpop.permute.xlu0 %5226
    %5228 = vrot.lane.b32.xlu0 %v4594, 8
    %v5229 = vpop.permute.xlu0 %5228
    %5230 = vrot.lane.b32.xlu0 %v4595, 8
    %v5231 = vpop.permute.xlu0 %5230
    %5232 = vrot.lane.b32.xlu0 %v4596, 8
    %v5233 = vpop.permute.xlu0 %5232
    %5234 = vrot.lane.b32.xlu0 %v4597, 8
    %v5235 = vpop.permute.xlu0 %5234
    %5236 = vrot.lane.b32.xlu0 %v4598, 8
    %v5237 = vpop.permute.xlu0 %5236
    %5238 = vrot.lane.b32.xlu0 %v4599, 8
    %v5239 = vpop.permute.xlu0 %5238
    %5240 = vrot.lane.b32.xlu0 %v4600, 8
    %v5241 = vpop.permute.xlu0 %5240
    %5370 = vrot.lane.b32.xlu0 %v4601, 16
    %v5371 = vpop.permute.xlu0 %5370
    %5372 = vrot.lane.b32.xlu0 %v4602, 16
    %v5373 = vpop.permute.xlu0 %5372
    %5374 = vrot.lane.b32.xlu0 %v4603, 16
    %v5375 = vpop.permute.xlu0 %5374
    %5376 = vrot.lane.b32.xlu0 %v4604, 16
    %v5377 = vpop.permute.xlu0 %5376
    %5378 = vrot.lane.b32.xlu0 %v4605, 16
    %v5379 = vpop.permute.xlu0 %5378
    %5380 = vrot.lane.b32.xlu0 %v4606, 16
    %v5381 = vpop.permute.xlu0 %5380
    %5382 = vrot.lane.b32.xlu0 %v4607, 16
    %v5383 = vpop.permute.xlu0 %5382
    %5384 = vrot.lane.b32.xlu0 %v4608, 16
    %v5385 = vpop.permute.xlu0 %5384
    %5386 = vrot.lane.b32.xlu0 %v4609, 16
    %v5387 = vpop.permute.xlu0 %5386
    %5388 = vrot.lane.b32.xlu0 %v4610, 16
    %v5389 = vpop.permute.xlu0 %5388
    %5390 = vrot.lane.b32.xlu0 %v4611, 16
    %v5391 = vpop.permute.xlu0 %5390
    %5392 = vrot.lane.b32.xlu0 %v4612, 16
    %v5393 = vpop.permute.xlu0 %5392
    %5394 = vrot.lane.b32.xlu0 %v4613, 16
    %v5395 = vpop.permute.xlu0 %5394
    %5396 = vrot.lane.b32.xlu0 %v4614, 16
    %v5397 = vpop.permute.xlu0 %5396
    %5398 = vrot.lane.b32.xlu0 %v4615, 16
    %v5399 = vpop.permute.xlu0 %5398
    %5400 = vrot.lane.b32.xlu0 %v4616, 16
    %v5401 = vpop.permute.xlu0 %5400
    %5402 = vrot.lane.b32.xlu0 %v4617, 16
    %v5403 = vpop.permute.xlu0 %5402
    %5404 = vrot.lane.b32.xlu0 %v4618, 16
    %v5405 = vpop.permute.xlu0 %5404
    %5406 = vrot.lane.b32.xlu0 %v4619, 16
    %v5407 = vpop.permute.xlu0 %5406
    %5408 = vrot.lane.b32.xlu0 %v4620, 16
    %v5409 = vpop.permute.xlu0 %5408
    %5410 = vrot.lane.b32.xlu0 %v4621, 16
    %v5411 = vpop.permute.xlu0 %5410
    %5412 = vrot.lane.b32.xlu0 %v4622, 16
    %v5413 = vpop.permute.xlu0 %5412
    %5414 = vrot.lane.b32.xlu0 %v4623, 16
    %v5415 = vpop.permute.xlu0 %5414
    %5416 = vrot.lane.b32.xlu0 %v4624, 16
    %v5417 = vpop.permute.xlu0 %5416
    %5418 = vrot.lane.b32.xlu0 %v4625, 16
    %v5419 = vpop.permute.xlu0 %5418
    %5420 = vrot.lane.b32.xlu0 %v4626, 16
    %v5421 = vpop.permute.xlu0 %5420
    %5422 = vrot.lane.b32.xlu0 %v4627, 16
    %v5423 = vpop.permute.xlu0 %5422
    %5424 = vrot.lane.b32.xlu0 %v4628, 16
    %v5425 = vpop.permute.xlu0 %5424
    %5426 = vrot.lane.b32.xlu0 %v4629, 16
    %v5427 = vpop.permute.xlu0 %5426
    %5428 = vrot.lane.b32.xlu0 %v4630, 16
    %v5429 = vpop.permute.xlu0 %5428
    %5430 = vrot.lane.b32.xlu0 %v4631, 16
    %v5431 = vpop.permute.xlu0 %5430
    %5432 = vrot.lane.b32.xlu0 %v4632, 16
    %v5433 = vpop.permute.xlu0 %5432
    %5434 = vrot.lane.b32.xlu0 %v4633, 16
    %v5435 = vpop.permute.xlu0 %5434
    %5436 = vrot.lane.b32.xlu0 %v4634, 16
    %v5437 = vpop.permute.xlu0 %5436
    %5438 = vrot.lane.b32.xlu0 %v4635, 16
    %v5439 = vpop.permute.xlu0 %5438
    %5440 = vrot.lane.b32.xlu0 %v4636, 16
    %v5441 = vpop.permute.xlu0 %5440
    %5442 = vrot.lane.b32.xlu0 %v4637, 16
    %v5443 = vpop.permute.xlu0 %5442
    %5444 = vrot.lane.b32.xlu0 %v4638, 16
    %v5445 = vpop.permute.xlu0 %5444
    %5446 = vrot.lane.b32.xlu0 %v4639, 16
    %v5447 = vpop.permute.xlu0 %5446
    %5448 = vrot.lane.b32.xlu0 %v4640, 16
    %v5449 = vpop.permute.xlu0 %5448
    %5450 = vrot.lane.b32.xlu0 %v4641, 16
    %v5451 = vpop.permute.xlu0 %5450
    %5452 = vrot.lane.b32.xlu0 %v4642, 16
    %v5453 = vpop.permute.xlu0 %5452
    %5454 = vrot.lane.b32.xlu0 %v4643, 16
    %v5455 = vpop.permute.xlu0 %5454
    %5456 = vrot.lane.b32.xlu0 %v4644, 16
    %v5457 = vpop.permute.xlu0 %5456
    %5458 = vrot.lane.b32.xlu0 %v4645, 16
    %v5459 = vpop.permute.xlu0 %5458
    %5460 = vrot.lane.b32.xlu0 %v4646, 16
    %v5461 = vpop.permute.xlu0 %5460
    %5462 = vrot.lane.b32.xlu0 %v4647, 16
    %v5463 = vpop.permute.xlu0 %5462
    %5464 = vrot.lane.b32.xlu0 %v4648, 16
    %v5465 = vpop.permute.xlu0 %5464
    %5466 = vrot.lane.b32.xlu0 %v4649, 16
    %v5467 = vpop.permute.xlu0 %5466
    %5468 = vrot.lane.b32.xlu0 %v4650, 16
    %v5469 = vpop.permute.xlu0 %5468
    %5470 = vrot.lane.b32.xlu0 %v4651, 16
    %v5471 = vpop.permute.xlu0 %5470
    %5472 = vrot.lane.b32.xlu0 %v4652, 16
    %v5473 = vpop.permute.xlu0 %5472
    %5474 = vrot.lane.b32.xlu0 %v4653, 16
    %v5475 = vpop.permute.xlu0 %5474
    %5476 = vrot.lane.b32.xlu0 %v4654, 16
    %v5477 = vpop.permute.xlu0 %5476
    %5478 = vrot.lane.b32.xlu0 %v4655, 16
    %v5479 = vpop.permute.xlu0 %5478
    %5480 = vrot.lane.b32.xlu0 %v4656, 16
    %v5481 = vpop.permute.xlu0 %5480
    %5482 = vrot.lane.b32.xlu0 %v4657, 16
    %v5483 = vpop.permute.xlu0 %5482
    %5484 = vrot.lane.b32.xlu0 %v4658, 16
    %v5485 = vpop.permute.xlu0 %5484
    %5486 = vrot.lane.b32.xlu0 %v4659, 16
    %v5487 = vpop.permute.xlu0 %5486
    %5488 = vrot.lane.b32.xlu0 %v4660, 16
    %v5489 = vpop.permute.xlu0 %5488
    %5490 = vrot.lane.b32.xlu0 %v4661, 16
    %v5491 = vpop.permute.xlu0 %5490
    %5492 = vrot.lane.b32.xlu0 %v4662, 16
    %v5493 = vpop.permute.xlu0 %5492
    %5494 = vrot.lane.b32.xlu0 %v4663, 16
    %v5495 = vpop.permute.xlu0 %5494
    %5496 = vrot.lane.b32.xlu0 %v4664, 16
    %v5497 = vpop.permute.xlu0 %5496
    %5626 = vrot.lane.b32.xlu0 %v4665, 24
    %v5627 = vpop.permute.xlu0 %5626
    %5628 = vrot.lane.b32.xlu0 %v4666, 24
    %v5629 = vpop.permute.xlu0 %5628
    %5630 = vrot.lane.b32.xlu0 %v4667, 24
    %v5631 = vpop.permute.xlu0 %5630
    %5632 = vrot.lane.b32.xlu0 %v4668, 24
    %v5633 = vpop.permute.xlu0 %5632
    %5634 = vrot.lane.b32.xlu0 %v4669, 24
    %v5635 = vpop.permute.xlu0 %5634
    %5636 = vrot.lane.b32.xlu0 %v4670, 24
    %v5637 = vpop.permute.xlu0 %5636
    %5638 = vrot.lane.b32.xlu0 %v4671, 24
    %v5639 = vpop.permute.xlu0 %5638
    %5640 = vrot.lane.b32.xlu0 %v4672, 24
    %v5641 = vpop.permute.xlu0 %5640
    %5642 = vrot.lane.b32.xlu0 %v4673, 24
    %v5643 = vpop.permute.xlu0 %5642
    %5644 = vrot.lane.b32.xlu0 %v4674, 24
    %v5645 = vpop.permute.xlu0 %5644
    %5646 = vrot.lane.b32.xlu0 %v4675, 24
    %v5647 = vpop.permute.xlu0 %5646
    %5648 = vrot.lane.b32.xlu0 %v4676, 24
    %v5649 = vpop.permute.xlu0 %5648
    %5650 = vrot.lane.b32.xlu0 %v4677, 24
    %v5651 = vpop.permute.xlu0 %5650
    %5652 = vrot.lane.b32.xlu0 %v4678, 24
    %v5653 = vpop.permute.xlu0 %5652
    %5654 = vrot.lane.b32.xlu0 %v4679, 24
    %v5655 = vpop.permute.xlu0 %5654
    %5656 = vrot.lane.b32.xlu0 %v4680, 24
    %v5657 = vpop.permute.xlu0 %5656
    %5658 = vrot.lane.b32.xlu0 %v4681, 24
    %v5659 = vpop.permute.xlu0 %5658
    %5660 = vrot.lane.b32.xlu0 %v4682, 24
    %v5661 = vpop.permute.xlu0 %5660
    %5662 = vrot.lane.b32.xlu0 %v4683, 24
    %v5663 = vpop.permute.xlu0 %5662
    %5664 = vrot.lane.b32.xlu0 %v4684, 24
    %v5665 = vpop.permute.xlu0 %5664
    %5666 = vrot.lane.b32.xlu0 %v4685, 24
    %v5667 = vpop.permute.xlu0 %5666
    %5668 = vrot.lane.b32.xlu0 %v4686, 24
    %v5669 = vpop.permute.xlu0 %5668
    %5670 = vrot.lane.b32.xlu0 %v4687, 24
    %v5671 = vpop.permute.xlu0 %5670
    %5672 = vrot.lane.b32.xlu0 %v4688, 24
    %v5673 = vpop.permute.xlu0 %5672
    %5674 = vrot.lane.b32.xlu0 %v4689, 24
    %v5675 = vpop.permute.xlu0 %5674
    %5676 = vrot.lane.b32.xlu0 %v4690, 24
    %v5677 = vpop.permute.xlu0 %5676
    %5678 = vrot.lane.b32.xlu0 %v4691, 24
    %v5679 = vpop.permute.xlu0 %5678
    %5680 = vrot.lane.b32.xlu0 %v4692, 24
    %v5681 = vpop.permute.xlu0 %5680
    %5682 = vrot.lane.b32.xlu0 %v4693, 24
    %v5683 = vpop.permute.xlu0 %5682
    %5684 = vrot.lane.b32.xlu0 %v4694, 24
    %v5685 = vpop.permute.xlu0 %5684
    %5686 = vrot.lane.b32.xlu0 %v4695, 24
    %v5687 = vpop.permute.xlu0 %5686
    %5688 = vrot.lane.b32.xlu0 %v4696, 24
    %v5689 = vpop.permute.xlu0 %5688
    %5690 = vrot.lane.b32.xlu0 %v4697, 24
    %v5691 = vpop.permute.xlu0 %5690
    %5692 = vrot.lane.b32.xlu0 %v4698, 24
    %v5693 = vpop.permute.xlu0 %5692
    %5694 = vrot.lane.b32.xlu0 %v4699, 24
    %v5695 = vpop.permute.xlu0 %5694
    %5696 = vrot.lane.b32.xlu0 %v4700, 24
    %v5697 = vpop.permute.xlu0 %5696
    %5698 = vrot.lane.b32.xlu0 %v4701, 24
    %v5699 = vpop.permute.xlu0 %5698
    %5700 = vrot.lane.b32.xlu0 %v4702, 24
    %v5701 = vpop.permute.xlu0 %5700
    %5702 = vrot.lane.b32.xlu0 %v4703, 24
    %v5703 = vpop.permute.xlu0 %5702
    %5704 = vrot.lane.b32.xlu0 %v4704, 24
    %v5705 = vpop.permute.xlu0 %5704
    %5706 = vrot.lane.b32.xlu0 %v4705, 24
    %v5707 = vpop.permute.xlu0 %5706
    %5708 = vrot.lane.b32.xlu0 %v4706, 24
    %v5709 = vpop.permute.xlu0 %5708
    %5710 = vrot.lane.b32.xlu0 %v4707, 24
    %v5711 = vpop.permute.xlu0 %5710
    %5712 = vrot.lane.b32.xlu0 %v4708, 24
    %v5713 = vpop.permute.xlu0 %5712
    %5714 = vrot.lane.b32.xlu0 %v4709, 24
    %v5715 = vpop.permute.xlu0 %5714
    %5716 = vrot.lane.b32.xlu0 %v4710, 24
    %v5717 = vpop.permute.xlu0 %5716
    %5718 = vrot.lane.b32.xlu0 %v4711, 24
    %v5719 = vpop.permute.xlu0 %5718
    %5720 = vrot.lane.b32.xlu0 %v4712, 24
    %v5721 = vpop.permute.xlu0 %5720
    %5722 = vrot.lane.b32.xlu0 %v4713, 24
    %v5723 = vpop.permute.xlu0 %5722
    %5724 = vrot.lane.b32.xlu0 %v4714, 24
    %v5725 = vpop.permute.xlu0 %5724
    %5726 = vrot.lane.b32.xlu0 %v4715, 24
    %v5727 = vpop.permute.xlu0 %5726
    %5728 = vrot.lane.b32.xlu0 %v4716, 24
    %v5729 = vpop.permute.xlu0 %5728
    %5730 = vrot.lane.b32.xlu0 %v4717, 24
    %v5731 = vpop.permute.xlu0 %5730
    %5732 = vrot.lane.b32.xlu0 %v4718, 24
    %v5733 = vpop.permute.xlu0 %5732
    %5734 = vrot.lane.b32.xlu0 %v4719, 24
    %v5735 = vpop.permute.xlu0 %5734
    %5736 = vrot.lane.b32.xlu0 %v4720, 24
    %v5737 = vpop.permute.xlu0 %5736
    %5738 = vrot.lane.b32.xlu0 %v4721, 24
    %v5739 = vpop.permute.xlu0 %5738
    %5740 = vrot.lane.b32.xlu0 %v4722, 24
    %v5741 = vpop.permute.xlu0 %5740
    %5742 = vrot.lane.b32.xlu0 %v4723, 24
    %v5743 = vpop.permute.xlu0 %5742
    %5744 = vrot.lane.b32.xlu0 %v4724, 24
    %v5745 = vpop.permute.xlu0 %5744
    %5746 = vrot.lane.b32.xlu0 %v4725, 24
    %v5747 = vpop.permute.xlu0 %5746
    %5748 = vrot.lane.b32.xlu0 %v4726, 24
    %v5749 = vpop.permute.xlu0 %5748
    %5750 = vrot.lane.b32.xlu0 %v4727, 24
    %v5751 = vpop.permute.xlu0 %5750
    %5752 = vrot.lane.b32.xlu0 %v4728, 24
    %v5753 = vpop.permute.xlu0 %5752
    %5882 = vrot.lane.b32.xlu0 %v4729, 32
    %v5883 = vpop.permute.xlu0 %5882
    %5884 = vrot.lane.b32.xlu0 %v4730, 32
    %v5885 = vpop.permute.xlu0 %5884
    %5886 = vrot.lane.b32.xlu0 %v4731, 32
    %v5887 = vpop.permute.xlu0 %5886
    %5888 = vrot.lane.b32.xlu0 %v4732, 32
    %v5889 = vpop.permute.xlu0 %5888
    %5890 = vrot.lane.b32.xlu0 %v4733, 32
    %v5891 = vpop.permute.xlu0 %5890
    %5892 = vrot.lane.b32.xlu0 %v4734, 32
    %v5893 = vpop.permute.xlu0 %5892
    %5894 = vrot.lane.b32.xlu0 %v4735, 32
    %v5895 = vpop.permute.xlu0 %5894
    %5896 = vrot.lane.b32.xlu0 %v4736, 32
    %v5897 = vpop.permute.xlu0 %5896
    %5898 = vrot.lane.b32.xlu0 %v4737, 32
    %v5899 = vpop.permute.xlu0 %5898
    %5900 = vrot.lane.b32.xlu0 %v4738, 32
    %v5901 = vpop.permute.xlu0 %5900
    %5902 = vrot.lane.b32.xlu0 %v4739, 32
    %v5903 = vpop.permute.xlu0 %5902
    %5904 = vrot.lane.b32.xlu0 %v4740, 32
    %v5905 = vpop.permute.xlu0 %5904
    %5906 = vrot.lane.b32.xlu0 %v4741, 32
    %v5907 = vpop.permute.xlu0 %5906
    %5908 = vrot.lane.b32.xlu0 %v4742, 32
    %v5909 = vpop.permute.xlu0 %5908
    %5910 = vrot.lane.b32.xlu0 %v4743, 32
    %v5911 = vpop.permute.xlu0 %5910
    %5912 = vrot.lane.b32.xlu0 %v4744, 32
    %v5913 = vpop.permute.xlu0 %5912
    %5914 = vrot.lane.b32.xlu0 %v4745, 32
    %v5915 = vpop.permute.xlu0 %5914
    %5916 = vrot.lane.b32.xlu0 %v4746, 32
    %v5917 = vpop.permute.xlu0 %5916
    %5918 = vrot.lane.b32.xlu0 %v4747, 32
    %v5919 = vpop.permute.xlu0 %5918
    %5920 = vrot.lane.b32.xlu0 %v4748, 32
    %v5921 = vpop.permute.xlu0 %5920
    %5922 = vrot.lane.b32.xlu0 %v4749, 32
    %v5923 = vpop.permute.xlu0 %5922
    %5924 = vrot.lane.b32.xlu0 %v4750, 32
    %v5925 = vpop.permute.xlu0 %5924
    %5926 = vrot.lane.b32.xlu0 %v4751, 32
    %v5927 = vpop.permute.xlu0 %5926
    %5928 = vrot.lane.b32.xlu0 %v4752, 32
    %v5929 = vpop.permute.xlu0 %5928
    %5930 = vrot.lane.b32.xlu0 %v4753, 32
    %v5931 = vpop.permute.xlu0 %5930
    %5932 = vrot.lane.b32.xlu0 %v4754, 32
    %v5933 = vpop.permute.xlu0 %5932
    %5934 = vrot.lane.b32.xlu0 %v4755, 32
    %v5935 = vpop.permute.xlu0 %5934
    %5936 = vrot.lane.b32.xlu0 %v4756, 32
    %v5937 = vpop.permute.xlu0 %5936
    %5938 = vrot.lane.b32.xlu0 %v4757, 32
    %v5939 = vpop.permute.xlu0 %5938
    %5940 = vrot.lane.b32.xlu0 %v4758, 32
    %v5941 = vpop.permute.xlu0 %5940
    %5942 = vrot.lane.b32.xlu0 %v4759, 32
    %v5943 = vpop.permute.xlu0 %5942
    %5944 = vrot.lane.b32.xlu0 %v4760, 32
    %v5945 = vpop.permute.xlu0 %5944
    %5946 = vrot.lane.b32.xlu0 %v4761, 32
    %v5947 = vpop.permute.xlu0 %5946
    %5948 = vrot.lane.b32.xlu0 %v4762, 32
    %v5949 = vpop.permute.xlu0 %5948
    %5950 = vrot.lane.b32.xlu0 %v4763, 32
    %v5951 = vpop.permute.xlu0 %5950
    %5952 = vrot.lane.b32.xlu0 %v4764, 32
    %v5953 = vpop.permute.xlu0 %5952
    %5954 = vrot.lane.b32.xlu0 %v4765, 32
    %v5955 = vpop.permute.xlu0 %5954
    %5956 = vrot.lane.b32.xlu0 %v4766, 32
    %v5957 = vpop.permute.xlu0 %5956
    %5958 = vrot.lane.b32.xlu0 %v4767, 32
    %v5959 = vpop.permute.xlu0 %5958
    %5960 = vrot.lane.b32.xlu0 %v4768, 32
    %v5961 = vpop.permute.xlu0 %5960
    %5962 = vrot.lane.b32.xlu0 %v4769, 32
    %v5963 = vpop.permute.xlu0 %5962
    %5964 = vrot.lane.b32.xlu0 %v4770, 32
    %v5965 = vpop.permute.xlu0 %5964
    %5966 = vrot.lane.b32.xlu0 %v4771, 32
    %v5967 = vpop.permute.xlu0 %5966
    %5968 = vrot.lane.b32.xlu0 %v4772, 32
    %v5969 = vpop.permute.xlu0 %5968
    %5970 = vrot.lane.b32.xlu0 %v4773, 32
    %v5971 = vpop.permute.xlu0 %5970
    %5972 = vrot.lane.b32.xlu0 %v4774, 32
    %v5973 = vpop.permute.xlu0 %5972
    %5974 = vrot.lane.b32.xlu0 %v4775, 32
    %v5975 = vpop.permute.xlu0 %5974
    %5976 = vrot.lane.b32.xlu0 %v4776, 32
    %v5977 = vpop.permute.xlu0 %5976
    %5978 = vrot.lane.b32.xlu0 %v4777, 32
    %v5979 = vpop.permute.xlu0 %5978
    %5980 = vrot.lane.b32.xlu0 %v4778, 32
    %v5981 = vpop.permute.xlu0 %5980
    %5982 = vrot.lane.b32.xlu0 %v4779, 32
    %v5983 = vpop.permute.xlu0 %5982
    %5984 = vrot.lane.b32.xlu0 %v4780, 32
    %v5985 = vpop.permute.xlu0 %5984
    %5986 = vrot.lane.b32.xlu0 %v4781, 32
    %v5987 = vpop.permute.xlu0 %5986
    %5988 = vrot.lane.b32.xlu0 %v4782, 32
    %v5989 = vpop.permute.xlu0 %5988
    %5990 = vrot.lane.b32.xlu0 %v4783, 32
    %v5991 = vpop.permute.xlu0 %5990
    %5992 = vrot.lane.b32.xlu0 %v4784, 32
    %v5993 = vpop.permute.xlu0 %5992
    %5994 = vrot.lane.b32.xlu0 %v4785, 32
    %v5995 = vpop.permute.xlu0 %5994
    %5996 = vrot.lane.b32.xlu0 %v4786, 32
    %v5997 = vpop.permute.xlu0 %5996
    %5998 = vrot.lane.b32.xlu0 %v4787, 32
    %v5999 = vpop.permute.xlu0 %5998
    %6000 = vrot.lane.b32.xlu0 %v4788, 32
    %v6001 = vpop.permute.xlu0 %6000
    %6002 = vrot.lane.b32.xlu0 %v4789, 32
    %v6003 = vpop.permute.xlu0 %6002
    %6004 = vrot.lane.b32.xlu0 %v4790, 32
    %v6005 = vpop.permute.xlu0 %6004
    %6006 = vrot.lane.b32.xlu0 %v4791, 32
    %v6007 = vpop.permute.xlu0 %6006
    %6008 = vrot.lane.b32.xlu0 %v4792, 32
    %v6009 = vpop.permute.xlu0 %6008
    %6138 = vrot.lane.b32.xlu0 %v4793, 40
    %v6139 = vpop.permute.xlu0 %6138
    %6140 = vrot.lane.b32.xlu0 %v4794, 40
    %v6141 = vpop.permute.xlu0 %6140
    %6142 = vrot.lane.b32.xlu0 %v4795, 40
    %v6143 = vpop.permute.xlu0 %6142
    %6144 = vrot.lane.b32.xlu0 %v4796, 40
    %v6145 = vpop.permute.xlu0 %6144
    %6146 = vrot.lane.b32.xlu0 %v4797, 40
    %v6147 = vpop.permute.xlu0 %6146
    %6148 = vrot.lane.b32.xlu0 %v4798, 40
    %v6149 = vpop.permute.xlu0 %6148
    %6150 = vrot.lane.b32.xlu0 %v4799, 40
    %v6151 = vpop.permute.xlu0 %6150
    %6152 = vrot.lane.b32.xlu0 %v4800, 40
    %v6153 = vpop.permute.xlu0 %6152
    %6154 = vrot.lane.b32.xlu0 %v4801, 40
    %v6155 = vpop.permute.xlu0 %6154
    %6156 = vrot.lane.b32.xlu0 %v4802, 40
    %v6157 = vpop.permute.xlu0 %6156
    %6158 = vrot.lane.b32.xlu0 %v4803, 40
    %v6159 = vpop.permute.xlu0 %6158
    %6160 = vrot.lane.b32.xlu0 %v4804, 40
    %v6161 = vpop.permute.xlu0 %6160
    %6162 = vrot.lane.b32.xlu0 %v4805, 40
    %v6163 = vpop.permute.xlu0 %6162
    %6164 = vrot.lane.b32.xlu0 %v4806, 40
    %v6165 = vpop.permute.xlu0 %6164
    %6166 = vrot.lane.b32.xlu0 %v4807, 40
    %v6167 = vpop.permute.xlu0 %6166
    %6168 = vrot.lane.b32.xlu0 %v4808, 40
    %v6169 = vpop.permute.xlu0 %6168
    %6170 = vrot.lane.b32.xlu0 %v4809, 40
    %v6171 = vpop.permute.xlu0 %6170
    %6172 = vrot.lane.b32.xlu0 %v4810, 40
    %v6173 = vpop.permute.xlu0 %6172
    %6174 = vrot.lane.b32.xlu0 %v4811, 40
    %v6175 = vpop.permute.xlu0 %6174
    %6176 = vrot.lane.b32.xlu0 %v4812, 40
    %v6177 = vpop.permute.xlu0 %6176
    %6178 = vrot.lane.b32.xlu0 %v4813, 40
    %v6179 = vpop.permute.xlu0 %6178
    %6180 = vrot.lane.b32.xlu0 %v4814, 40
    %v6181 = vpop.permute.xlu0 %6180
    %6182 = vrot.lane.b32.xlu0 %v4815, 40
    %v6183 = vpop.permute.xlu0 %6182
    %6184 = vrot.lane.b32.xlu0 %v4816, 40
    %v6185 = vpop.permute.xlu0 %6184
    %6186 = vrot.lane.b32.xlu0 %v4817, 40
    %v6187 = vpop.permute.xlu0 %6186
    %6188 = vrot.lane.b32.xlu0 %v4818, 40
    %v6189 = vpop.permute.xlu0 %6188
    %6190 = vrot.lane.b32.xlu0 %v4819, 40
    %v6191 = vpop.permute.xlu0 %6190
    %6192 = vrot.lane.b32.xlu0 %v4820, 40
    %v6193 = vpop.permute.xlu0 %6192
    %6194 = vrot.lane.b32.xlu0 %v4821, 40
    %v6195 = vpop.permute.xlu0 %6194
    %6196 = vrot.lane.b32.xlu0 %v4822, 40
    %v6197 = vpop.permute.xlu0 %6196
    %6198 = vrot.lane.b32.xlu0 %v4823, 40
    %v6199 = vpop.permute.xlu0 %6198
    %6200 = vrot.lane.b32.xlu0 %v4824, 40
    %v6201 = vpop.permute.xlu0 %6200
    %6202 = vrot.lane.b32.xlu0 %v4825, 40
    %v6203 = vpop.permute.xlu0 %6202
    %6204 = vrot.lane.b32.xlu0 %v4826, 40
    %v6205 = vpop.permute.xlu0 %6204
    %6206 = vrot.lane.b32.xlu0 %v4827, 40
    %v6207 = vpop.permute.xlu0 %6206
    %6208 = vrot.lane.b32.xlu0 %v4828, 40
    %v6209 = vpop.permute.xlu0 %6208
    %6210 = vrot.lane.b32.xlu0 %v4829, 40
    %v6211 = vpop.permute.xlu0 %6210
    %6212 = vrot.lane.b32.xlu0 %v4830, 40
    %v6213 = vpop.permute.xlu0 %6212
    %6214 = vrot.lane.b32.xlu0 %v4831, 40
    %v6215 = vpop.permute.xlu0 %6214
    %6216 = vrot.lane.b32.xlu0 %v4832, 40
    %v6217 = vpop.permute.xlu0 %6216
    %6218 = vrot.lane.b32.xlu0 %v4833, 40
    %v6219 = vpop.permute.xlu0 %6218
    %6220 = vrot.lane.b32.xlu0 %v4834, 40
    %v6221 = vpop.permute.xlu0 %6220
    %6222 = vrot.lane.b32.xlu0 %v4835, 40
    %v6223 = vpop.permute.xlu0 %6222
    %6224 = vrot.lane.b32.xlu0 %v4836, 40
    %v6225 = vpop.permute.xlu0 %6224
    %6226 = vrot.lane.b32.xlu0 %v4837, 40
    %v6227 = vpop.permute.xlu0 %6226
    %6228 = vrot.lane.b32.xlu0 %v4838, 40
    %v6229 = vpop.permute.xlu0 %6228
    %6230 = vrot.lane.b32.xlu0 %v4839, 40
    %v6231 = vpop.permute.xlu0 %6230
    %6232 = vrot.lane.b32.xlu0 %v4840, 40
    %v6233 = vpop.permute.xlu0 %6232
    %6234 = vrot.lane.b32.xlu0 %v4841, 40
    %v6235 = vpop.permute.xlu0 %6234
    %6236 = vrot.lane.b32.xlu0 %v4842, 40
    %v6237 = vpop.permute.xlu0 %6236
    %6238 = vrot.lane.b32.xlu0 %v4843, 40
    %v6239 = vpop.permute.xlu0 %6238
    %6240 = vrot.lane.b32.xlu0 %v4844, 40
    %v6241 = vpop.permute.xlu0 %6240
    %6242 = vrot.lane.b32.xlu0 %v4845, 40
    %v6243 = vpop.permute.xlu0 %6242
    %6244 = vrot.lane.b32.xlu0 %v4846, 40
    %v6245 = vpop.permute.xlu0 %6244
    %6246 = vrot.lane.b32.xlu0 %v4847, 40
    %v6247 = vpop.permute.xlu0 %6246
    %6248 = vrot.lane.b32.xlu0 %v4848, 40
    %v6249 = vpop.permute.xlu0 %6248
    %6250 = vrot.lane.b32.xlu0 %v4849, 40
    %v6251 = vpop.permute.xlu0 %6250
    %6252 = vrot.lane.b32.xlu0 %v4850, 40
    %v6253 = vpop.permute.xlu0 %6252
    %6254 = vrot.lane.b32.xlu0 %v4851, 40
    %v6255 = vpop.permute.xlu0 %6254
    %6256 = vrot.lane.b32.xlu0 %v4852, 40
    %v6257 = vpop.permute.xlu0 %6256
    %6258 = vrot.lane.b32.xlu0 %v4853, 40
    %v6259 = vpop.permute.xlu0 %6258
    %6260 = vrot.lane.b32.xlu0 %v4854, 40
    %v6261 = vpop.permute.xlu0 %6260
    %6262 = vrot.lane.b32.xlu0 %v4855, 40
    %v6263 = vpop.permute.xlu0 %6262
    %6264 = vrot.lane.b32.xlu0 %v4856, 40
    %v6265 = vpop.permute.xlu0 %6264
    %6394 = vrot.lane.b32.xlu0 %v4858, 48
    %v6395 = vpop.permute.xlu0 %6394
    %6396 = vrot.lane.b32.xlu0 %v4859, 48
    %v6397 = vpop.permute.xlu0 %6396
    %6398 = vrot.lane.b32.xlu0 %v4860, 48
    %v6399 = vpop.permute.xlu0 %6398
    %6400 = vrot.lane.b32.xlu0 %v4861, 48
    %v6401 = vpop.permute.xlu0 %6400
    %6402 = vrot.lane.b32.xlu0 %v4862, 48
    %v6403 = vpop.permute.xlu0 %6402
    %6404 = vrot.lane.b32.xlu0 %v4863, 48
    %v6405 = vpop.permute.xlu0 %6404
    %6406 = vrot.lane.b32.xlu0 %v4864, 48
    %v6407 = vpop.permute.xlu0 %6406
    %6408 = vrot.lane.b32.xlu0 %v4865, 48
    %v6409 = vpop.permute.xlu0 %6408
    %6410 = vrot.lane.b32.xlu0 %v4866, 48
    %v6411 = vpop.permute.xlu0 %6410
    %6412 = vrot.lane.b32.xlu0 %v4867, 48
    %v6413 = vpop.permute.xlu0 %6412
    %6414 = vrot.lane.b32.xlu0 %v4868, 48
    %v6415 = vpop.permute.xlu0 %6414
    %6416 = vrot.lane.b32.xlu0 %v4869, 48
    %v6417 = vpop.permute.xlu0 %6416
    %6418 = vrot.lane.b32.xlu0 %v4870, 48
    %v6419 = vpop.permute.xlu0 %6418
    %6420 = vrot.lane.b32.xlu0 %v4871, 48
    %v6421 = vpop.permute.xlu0 %6420
    %6422 = vrot.lane.b32.xlu0 %v4872, 48
    %v6423 = vpop.permute.xlu0 %6422
    %6424 = vrot.lane.b32.xlu0 %v4873, 48
    %v6425 = vpop.permute.xlu0 %6424
    %6426 = vrot.lane.b32.xlu0 %v4874, 48
    %v6427 = vpop.permute.xlu0 %6426
    %6428 = vrot.lane.b32.xlu0 %v4875, 48
    %v6429 = vpop.permute.xlu0 %6428
    %6430 = vrot.lane.b32.xlu0 %v4876, 48
    %v6431 = vpop.permute.xlu0 %6430
    %6432 = vrot.lane.b32.xlu0 %v4877, 48
    %v6433 = vpop.permute.xlu0 %6432
    %6434 = vrot.lane.b32.xlu0 %v4878, 48
    %v6435 = vpop.permute.xlu0 %6434
    %6436 = vrot.lane.b32.xlu0 %v4879, 48
    %v6437 = vpop.permute.xlu0 %6436
    %6438 = vrot.lane.b32.xlu0 %v4880, 48
    %v6439 = vpop.permute.xlu0 %6438
    %6440 = vrot.lane.b32.xlu0 %v4881, 48
    %v6441 = vpop.permute.xlu0 %6440
    %6442 = vrot.lane.b32.xlu0 %v4882, 48
    %v6443 = vpop.permute.xlu0 %6442
    %6444 = vrot.lane.b32.xlu0 %v4883, 48
    %v6445 = vpop.permute.xlu0 %6444
    %6446 = vrot.lane.b32.xlu0 %v4884, 48
    %v6447 = vpop.permute.xlu0 %6446
    %6448 = vrot.lane.b32.xlu0 %v4885, 48
    %v6449 = vpop.permute.xlu0 %6448
    %6450 = vrot.lane.b32.xlu0 %v4886, 48
    %v6451 = vpop.permute.xlu0 %6450
    %6452 = vrot.lane.b32.xlu0 %v4887, 48
    %v6453 = vpop.permute.xlu0 %6452
    %6454 = vrot.lane.b32.xlu0 %v4888, 48
    %v6455 = vpop.permute.xlu0 %6454
    %6456 = vrot.lane.b32.xlu0 %v4889, 48
    %v6457 = vpop.permute.xlu0 %6456
    %6458 = vrot.lane.b32.xlu0 %v4890, 48
    %v6459 = vpop.permute.xlu0 %6458
    %6460 = vrot.lane.b32.xlu0 %v4891, 48
    %v6461 = vpop.permute.xlu0 %6460
    %6462 = vrot.lane.b32.xlu0 %v4892, 48
    %v6463 = vpop.permute.xlu0 %6462
    %6464 = vrot.lane.b32.xlu0 %v4893, 48
    %v6465 = vpop.permute.xlu0 %6464
    %6466 = vrot.lane.b32.xlu0 %v4894, 48
    %v6467 = vpop.permute.xlu0 %6466
    %6468 = vrot.lane.b32.xlu0 %v4895, 48
    %v6469 = vpop.permute.xlu0 %6468
    %6470 = vrot.lane.b32.xlu0 %v4896, 48
    %v6471 = vpop.permute.xlu0 %6470
    %6472 = vrot.lane.b32.xlu0 %v4897, 48
    %v6473 = vpop.permute.xlu0 %6472
    %6474 = vrot.lane.b32.xlu0 %v4898, 48
    %v6475 = vpop.permute.xlu0 %6474
    %6476 = vrot.lane.b32.xlu0 %v4899, 48
    %v6477 = vpop.permute.xlu0 %6476
    %6478 = vrot.lane.b32.xlu0 %v4900, 48
    %v6479 = vpop.permute.xlu0 %6478
    %6480 = vrot.lane.b32.xlu0 %v4901, 48
    %v6481 = vpop.permute.xlu0 %6480
    %6482 = vrot.lane.b32.xlu0 %v4902, 48
    %v6483 = vpop.permute.xlu0 %6482
    %6484 = vrot.lane.b32.xlu0 %v4903, 48
    %v6485 = vpop.permute.xlu0 %6484
    %6486 = vrot.lane.b32.xlu0 %v4904, 48
    %v6487 = vpop.permute.xlu0 %6486
    %6488 = vrot.lane.b32.xlu0 %v4905, 48
    %v6489 = vpop.permute.xlu0 %6488
    %6490 = vrot.lane.b32.xlu0 %v4906, 48
    %v6491 = vpop.permute.xlu0 %6490
    %6492 = vrot.lane.b32.xlu0 %v4907, 48
    %v6493 = vpop.permute.xlu0 %6492
    %6494 = vrot.lane.b32.xlu0 %v4908, 48
    %v6495 = vpop.permute.xlu0 %6494
    %6496 = vrot.lane.b32.xlu0 %v4909, 48
    %v6497 = vpop.permute.xlu0 %6496
    %6498 = vrot.lane.b32.xlu0 %v4910, 48
    %v6499 = vpop.permute.xlu0 %6498
    %6500 = vrot.lane.b32.xlu0 %v4911, 48
    %v6501 = vpop.permute.xlu0 %6500
    %6502 = vrot.lane.b32.xlu0 %v4912, 48
    %v6503 = vpop.permute.xlu0 %6502
    %6504 = vrot.lane.b32.xlu0 %v4913, 48
    %v6505 = vpop.permute.xlu0 %6504
    %6506 = vrot.lane.b32.xlu0 %v4914, 48
    %v6507 = vpop.permute.xlu0 %6506
    %6508 = vrot.lane.b32.xlu0 %v4915, 48
    %v6509 = vpop.permute.xlu0 %6508
    %6510 = vrot.lane.b32.xlu0 %v4916, 48
    %v6511 = vpop.permute.xlu0 %6510
    %6512 = vrot.lane.b32.xlu0 %v4917, 48
    %v6513 = vpop.permute.xlu0 %6512
    %6514 = vrot.lane.b32.xlu0 %v4918, 48
    %v6515 = vpop.permute.xlu0 %6514
    %6516 = vrot.lane.b32.xlu0 %v4919, 48
    %v6517 = vpop.permute.xlu0 %6516
    %6518 = vrot.lane.b32.xlu0 %v4920, 48
    %v6519 = vpop.permute.xlu0 %6518
    %6520 = vrot.lane.b32.xlu0 %v4921, 48
    %v6521 = vpop.permute.xlu0 %6520
    %6650 = vrot.lane.b32.xlu0 %v4922, 56
    %v6651 = vpop.permute.xlu0 %6650
    %6652 = vrot.lane.b32.xlu0 %v4923, 56
    %v6653 = vpop.permute.xlu0 %6652
    %6654 = vrot.lane.b32.xlu0 %v4924, 56
    %v6655 = vpop.permute.xlu0 %6654
    %6656 = vrot.lane.b32.xlu0 %v4925, 56
    %v6657 = vpop.permute.xlu0 %6656
    %6658 = vrot.lane.b32.xlu0 %v4926, 56
    %v6659 = vpop.permute.xlu0 %6658
    %6660 = vrot.lane.b32.xlu0 %v4927, 56
    %v6661 = vpop.permute.xlu0 %6660
    %6662 = vrot.lane.b32.xlu0 %v4928, 56
    %v6663 = vpop.permute.xlu0 %6662
    %6664 = vrot.lane.b32.xlu0 %v4929, 56
    %v6665 = vpop.permute.xlu0 %6664
    %6666 = vrot.lane.b32.xlu0 %v4930, 56
    %v6667 = vpop.permute.xlu0 %6666
    %6668 = vrot.lane.b32.xlu0 %v4931, 56
    %v6669 = vpop.permute.xlu0 %6668
    %6670 = vrot.lane.b32.xlu0 %v4932, 56
    %v6671 = vpop.permute.xlu0 %6670
    %6672 = vrot.lane.b32.xlu0 %v4933, 56
    %v6673 = vpop.permute.xlu0 %6672
    %6674 = vrot.lane.b32.xlu0 %v4934, 56
    %v6675 = vpop.permute.xlu0 %6674
    %6676 = vrot.lane.b32.xlu0 %v4935, 56
    %v6677 = vpop.permute.xlu0 %6676
    %6678 = vrot.lane.b32.xlu0 %v4936, 56
    %v6679 = vpop.permute.xlu0 %6678
    %6680 = vrot.lane.b32.xlu0 %v4937, 56
    %v6681 = vpop.permute.xlu0 %6680
    %6682 = vrot.lane.b32.xlu0 %v4938, 56
    %v6683 = vpop.permute.xlu0 %6682
    %6684 = vrot.lane.b32.xlu0 %v4939, 56
    %v6685 = vpop.permute.xlu0 %6684
    %6686 = vrot.lane.b32.xlu0 %v4940, 56
    %v6687 = vpop.permute.xlu0 %6686
    %6688 = vrot.lane.b32.xlu0 %v4941, 56
    %v6689 = vpop.permute.xlu0 %6688
    %6690 = vrot.lane.b32.xlu0 %v4942, 56
    %v6691 = vpop.permute.xlu0 %6690
    %6692 = vrot.lane.b32.xlu0 %v4943, 56
    %v6693 = vpop.permute.xlu0 %6692
    %6694 = vrot.lane.b32.xlu0 %v4944, 56
    %v6695 = vpop.permute.xlu0 %6694
    %6696 = vrot.lane.b32.xlu0 %v4945, 56
    %v6697 = vpop.permute.xlu0 %6696
    %6698 = vrot.lane.b32.xlu0 %v4946, 56
    %v6699 = vpop.permute.xlu0 %6698
    %6700 = vrot.lane.b32.xlu0 %v4947, 56
    %v6701 = vpop.permute.xlu0 %6700
    %6702 = vrot.lane.b32.xlu0 %v4948, 56
    %v6703 = vpop.permute.xlu0 %6702
    %6704 = vrot.lane.b32.xlu0 %v4949, 56
    %v6705 = vpop.permute.xlu0 %6704
    %6706 = vrot.lane.b32.xlu0 %v4950, 56
    %v6707 = vpop.permute.xlu0 %6706
    %6708 = vrot.lane.b32.xlu0 %v4951, 56
    %v6709 = vpop.permute.xlu0 %6708
    %6710 = vrot.lane.b32.xlu0 %v4952, 56
    %v6711 = vpop.permute.xlu0 %6710
    %6712 = vrot.lane.b32.xlu0 %v4953, 56
    %v6713 = vpop.permute.xlu0 %6712
    %6714 = vrot.lane.b32.xlu0 %v4954, 56
    %v6715 = vpop.permute.xlu0 %6714
    %6716 = vrot.lane.b32.xlu0 %v4955, 56
    %v6717 = vpop.permute.xlu0 %6716
    %6718 = vrot.lane.b32.xlu0 %v4956, 56
    %v6719 = vpop.permute.xlu0 %6718
    %6720 = vrot.lane.b32.xlu0 %v4957, 56
    %v6721 = vpop.permute.xlu0 %6720
    %6722 = vrot.lane.b32.xlu0 %v4958, 56
    %v6723 = vpop.permute.xlu0 %6722
    %6724 = vrot.lane.b32.xlu0 %v4959, 56
    %v6725 = vpop.permute.xlu0 %6724
    %6726 = vrot.lane.b32.xlu0 %v4960, 56
    %v6727 = vpop.permute.xlu0 %6726
    %6728 = vrot.lane.b32.xlu0 %v4961, 56
    %v6729 = vpop.permute.xlu0 %6728
    %6730 = vrot.lane.b32.xlu0 %v4962, 56
    %v6731 = vpop.permute.xlu0 %6730
    %6732 = vrot.lane.b32.xlu0 %v4963, 56
    %v6733 = vpop.permute.xlu0 %6732
    %6734 = vrot.lane.b32.xlu0 %v4964, 56
    %v6735 = vpop.permute.xlu0 %6734
    %6736 = vrot.lane.b32.xlu0 %v4965, 56
    %v6737 = vpop.permute.xlu0 %6736
    %6738 = vrot.lane.b32.xlu0 %v4966, 56
    %v6739 = vpop.permute.xlu0 %6738
    %6740 = vrot.lane.b32.xlu0 %v4967, 56
    %v6741 = vpop.permute.xlu0 %6740
    %6742 = vrot.lane.b32.xlu0 %v4968, 56
    %v6743 = vpop.permute.xlu0 %6742
    %6744 = vrot.lane.b32.xlu0 %v4969, 56
    %v6745 = vpop.permute.xlu0 %6744
    %6746 = vrot.lane.b32.xlu0 %v4970, 56
    %v6747 = vpop.permute.xlu0 %6746
    %6748 = vrot.lane.b32.xlu0 %v4971, 56
    %v6749 = vpop.permute.xlu0 %6748
    %6750 = vrot.lane.b32.xlu0 %v4972, 56
    %v6751 = vpop.permute.xlu0 %6750
    %6752 = vrot.lane.b32.xlu0 %v4973, 56
    %v6753 = vpop.permute.xlu0 %6752
    %6754 = vrot.lane.b32.xlu0 %v4974, 56
    %v6755 = vpop.permute.xlu0 %6754
    %6756 = vrot.lane.b32.xlu0 %v4975, 56
    %v6757 = vpop.permute.xlu0 %6756
    %6758 = vrot.lane.b32.xlu0 %v4976, 56
    %v6759 = vpop.permute.xlu0 %6758
    %6760 = vrot.lane.b32.xlu0 %v4977, 56
    %v6761 = vpop.permute.xlu0 %6760
    %6762 = vrot.lane.b32.xlu0 %v4978, 56
    %v6763 = vpop.permute.xlu0 %6762
    %6764 = vrot.lane.b32.xlu0 %v4979, 56
    %v6765 = vpop.permute.xlu0 %6764
    %6766 = vrot.lane.b32.xlu0 %v4980, 56
    %v6767 = vpop.permute.xlu0 %6766
    %6768 = vrot.lane.b32.xlu0 %v4981, 56
    %v6769 = vpop.permute.xlu0 %6768
    %6770 = vrot.lane.b32.xlu0 %v4982, 56
    %v6771 = vpop.permute.xlu0 %6770
    %6772 = vrot.lane.b32.xlu0 %v4983, 56
    %v6773 = vpop.permute.xlu0 %6772
    %6774 = vrot.lane.b32.xlu0 %v4984, 56
    %v6775 = vpop.permute.xlu0 %6774
    %6776 = vrot.lane.b32.xlu0 %v4985, 56
    %v6777 = vpop.permute.xlu0 %6776
    %6906 = vrot.lane.b32.xlu0 %v4986, 64
    %v6907 = vpop.permute.xlu0 %6906
    %6908 = vrot.lane.b32.xlu0 %v4987, 64
    %v6909 = vpop.permute.xlu0 %6908
    %6910 = vrot.lane.b32.xlu0 %v4988, 64
    %v6911 = vpop.permute.xlu0 %6910
    %6912 = vrot.lane.b32.xlu0 %v4989, 64
    %v6913 = vpop.permute.xlu0 %6912
    %6914 = vrot.lane.b32.xlu0 %v4990, 64
    %v6915 = vpop.permute.xlu0 %6914
    %6916 = vrot.lane.b32.xlu0 %v4991, 64
    %v6917 = vpop.permute.xlu0 %6916
    %6918 = vrot.lane.b32.xlu0 %v4992, 64
    %v6919 = vpop.permute.xlu0 %6918
    %6920 = vrot.lane.b32.xlu0 %v4993, 64
    %v6921 = vpop.permute.xlu0 %6920
    %6922 = vrot.lane.b32.xlu0 %v4994, 64
    %v6923 = vpop.permute.xlu0 %6922
    %6924 = vrot.lane.b32.xlu0 %v4995, 64
    %v6925 = vpop.permute.xlu0 %6924
    %6926 = vrot.lane.b32.xlu0 %v4996, 64
    %v6927 = vpop.permute.xlu0 %6926
    %6928 = vrot.lane.b32.xlu0 %v4997, 64
    %v6929 = vpop.permute.xlu0 %6928
    %6930 = vrot.lane.b32.xlu0 %v4998, 64
    %v6931 = vpop.permute.xlu0 %6930
    %6932 = vrot.lane.b32.xlu0 %v4999, 64
    %v6933 = vpop.permute.xlu0 %6932
    %6934 = vrot.lane.b32.xlu0 %v5000, 64
    %v6935 = vpop.permute.xlu0 %6934
    %6936 = vrot.lane.b32.xlu0 %v5001, 64
    %v6937 = vpop.permute.xlu0 %6936
    %6938 = vrot.lane.b32.xlu0 %v5002, 64
    %v6939 = vpop.permute.xlu0 %6938
    %6940 = vrot.lane.b32.xlu0 %v5003, 64
    %v6941 = vpop.permute.xlu0 %6940
    %6942 = vrot.lane.b32.xlu0 %v5004, 64
    %v6943 = vpop.permute.xlu0 %6942
    %6944 = vrot.lane.b32.xlu0 %v5005, 64
    %v6945 = vpop.permute.xlu0 %6944
    %6946 = vrot.lane.b32.xlu0 %v5006, 64
    %v6947 = vpop.permute.xlu0 %6946
    %6948 = vrot.lane.b32.xlu0 %v5007, 64
    %v6949 = vpop.permute.xlu0 %6948
    %6950 = vrot.lane.b32.xlu0 %v5008, 64
    %v6951 = vpop.permute.xlu0 %6950
    %6952 = vrot.lane.b32.xlu0 %v5009, 64
    %v6953 = vpop.permute.xlu0 %6952
    %6954 = vrot.lane.b32.xlu0 %v5010, 64
    %v6955 = vpop.permute.xlu0 %6954
    %6956 = vrot.lane.b32.xlu0 %v5011, 64
    %v6957 = vpop.permute.xlu0 %6956
    %6958 = vrot.lane.b32.xlu0 %v5012, 64
    %v6959 = vpop.permute.xlu0 %6958
    %6960 = vrot.lane.b32.xlu0 %v5013, 64
    %v6961 = vpop.permute.xlu0 %6960
    %6962 = vrot.lane.b32.xlu0 %v5014, 64
    %v6963 = vpop.permute.xlu0 %6962
    %6964 = vrot.lane.b32.xlu0 %v5015, 64
    %v6965 = vpop.permute.xlu0 %6964
    %6966 = vrot.lane.b32.xlu0 %v5016, 64
    %v6967 = vpop.permute.xlu0 %6966
    %6968 = vrot.lane.b32.xlu0 %v5017, 64
    %v6969 = vpop.permute.xlu0 %6968
    %6970 = vrot.lane.b32.xlu0 %v5018, 64
    %v6971 = vpop.permute.xlu0 %6970
    %6972 = vrot.lane.b32.xlu0 %v5019, 64
    %v6973 = vpop.permute.xlu0 %6972
    %6974 = vrot.lane.b32.xlu0 %v5020, 64
    %v6975 = vpop.permute.xlu0 %6974
    %6976 = vrot.lane.b32.xlu0 %v5021, 64
    %v6977 = vpop.permute.xlu0 %6976
    %6978 = vrot.lane.b32.xlu0 %v5022, 64
    %v6979 = vpop.permute.xlu0 %6978
    %6980 = vrot.lane.b32.xlu0 %v5023, 64
    %v6981 = vpop.permute.xlu0 %6980
    %6982 = vrot.lane.b32.xlu0 %v5024, 64
    %v6983 = vpop.permute.xlu0 %6982
    %6984 = vrot.lane.b32.xlu0 %v5025, 64
    %v6985 = vpop.permute.xlu0 %6984
    %6986 = vrot.lane.b32.xlu0 %v5026, 64
    %v6987 = vpop.permute.xlu0 %6986
    %6988 = vrot.lane.b32.xlu0 %v5027, 64
    %v6989 = vpop.permute.xlu0 %6988
    %6990 = vrot.lane.b32.xlu0 %v5028, 64
    %v6991 = vpop.permute.xlu0 %6990
    %6992 = vrot.lane.b32.xlu0 %v5029, 64
    %v6993 = vpop.permute.xlu0 %6992
    %6994 = vrot.lane.b32.xlu0 %v5030, 64
    %v6995 = vpop.permute.xlu0 %6994
    %6996 = vrot.lane.b32.xlu0 %v5031, 64
    %v6997 = vpop.permute.xlu0 %6996
    %6998 = vrot.lane.b32.xlu0 %v5032, 64
    %v6999 = vpop.permute.xlu0 %6998
    %7000 = vrot.lane.b32.xlu0 %v5033, 64
    %v7001 = vpop.permute.xlu0 %7000
    %7002 = vrot.lane.b32.xlu0 %v5034, 64
    %v7003 = vpop.permute.xlu0 %7002
    %7004 = vrot.lane.b32.xlu0 %v5035, 64
    %v7005 = vpop.permute.xlu0 %7004
    %7006 = vrot.lane.b32.xlu0 %v5036, 64
    %v7007 = vpop.permute.xlu0 %7006
    %7008 = vrot.lane.b32.xlu0 %v5037, 64
    %v7009 = vpop.permute.xlu0 %7008
    %7010 = vrot.lane.b32.xlu0 %v5038, 64
    %v7011 = vpop.permute.xlu0 %7010
    %7012 = vrot.lane.b32.xlu0 %v5039, 64
    %v7013 = vpop.permute.xlu0 %7012
    %7014 = vrot.lane.b32.xlu0 %v5040, 64
    %v7015 = vpop.permute.xlu0 %7014
    %7016 = vrot.lane.b32.xlu0 %v5041, 64
    %v7017 = vpop.permute.xlu0 %7016
    %7018 = vrot.lane.b32.xlu0 %v5042, 64
    %v7019 = vpop.permute.xlu0 %7018
    %7020 = vrot.lane.b32.xlu0 %v5043, 64
    %v7021 = vpop.permute.xlu0 %7020
    %7022 = vrot.lane.b32.xlu0 %v5044, 64
    %v7023 = vpop.permute.xlu0 %7022
    %7024 = vrot.lane.b32.xlu0 %v5045, 64
    %v7025 = vpop.permute.xlu0 %7024
    %7026 = vrot.lane.b32.xlu0 %v5046, 64
    %v7027 = vpop.permute.xlu0 %7026
    %7028 = vrot.lane.b32.xlu0 %v5047, 64
    %v7029 = vpop.permute.xlu0 %7028
    %7030 = vrot.lane.b32.xlu0 %v5048, 64
    %v7031 = vpop.permute.xlu0 %7030
    %7032 = vrot.lane.b32.xlu0 %v5049, 64
    %v7033 = vpop.permute.xlu0 %7032
    %v7098 = vsel %vm2662, %v4473, %v5115
    %v7099 = vsel %vm2662, %v4474, %v5117
    %v7100 = vsel %vm2662, %v4475, %v5119
    %v7101 = vsel %vm2662, %v4476, %v5121
    %v7102 = vsel %vm2662, %v4477, %v5123
    %v7103 = vsel %vm2662, %v4478, %v5125
    %v7104 = vsel %vm2662, %v4479, %v5127
    %v7105 = vsel %vm2662, %v4480, %v5129
    %v7106 = vsel %vm2662, %v4481, %v5131
    %v7107 = vsel %vm2662, %v4482, %v5133
    %v7108 = vsel %vm2662, %v4483, %v5135
    %v7109 = vsel %vm2662, %v4484, %v5137
    %v7110 = vsel %vm2662, %v4485, %v5139
    %v7111 = vsel %vm2662, %v4486, %v5141
    %v7112 = vsel %vm2662, %v4487, %v5143
    %v7113 = vsel %vm2662, %v4488, %v5145
    %v7114 = vsel %vm2662, %v4489, %v5147
    %v7115 = vsel %vm2662, %v4490, %v5149
    %v7116 = vsel %vm2662, %v4491, %v5151
    %v7117 = vsel %vm2662, %v4492, %v5153
    %v7118 = vsel %vm2662, %v4493, %v5155
    %v7119 = vsel %vm2662, %v4494, %v5157
    %v7120 = vsel %vm2662, %v4495, %v5159
    %v7121 = vsel %vm2662, %v4496, %v5161
    %v7122 = vsel %vm2662, %v4497, %v5163
    %v7123 = vsel %vm2662, %v4498, %v5165
    %v7124 = vsel %vm2662, %v4499, %v5167
    %v7125 = vsel %vm2662, %v4500, %v5169
    %v7126 = vsel %vm2662, %v4501, %v5171
    %v7127 = vsel %vm2662, %v4502, %v5173
    %v7128 = vsel %vm2662, %v4503, %v5175
    %v7129 = vsel %vm2662, %v4504, %v5177
    %v7130 = vsel %vm2662, %v4505, %v5179
    %v7131 = vsel %vm2662, %v4506, %v5181
    %v7132 = vsel %vm2662, %v4507, %v5183
    %v7133 = vsel %vm2662, %v4508, %v5185
    %v7134 = vsel %vm2662, %v4509, %v5187
    %v7135 = vsel %vm2662, %v4510, %v5189
    %v7136 = vsel %vm2662, %v4511, %v5191
    %v7137 = vsel %vm2662, %v4512, %v5193
    %v7138 = vsel %vm2662, %v4513, %v5195
    %v7139 = vsel %vm2662, %v4514, %v5197
    %v7140 = vsel %vm2662, %v4515, %v5199
    %v7141 = vsel %vm2662, %v4516, %v5201
    %v7142 = vsel %vm2662, %v4517, %v5203
    %v7143 = vsel %vm2662, %v4518, %v5205
    %v7144 = vsel %vm2662, %v4519, %v5207
    %v7145 = vsel %vm2662, %v4520, %v5209
    %v7146 = vsel %vm2662, %v4521, %v5211
    %v7147 = vsel %vm2662, %v4522, %v5213
    %v7148 = vsel %vm2662, %v4523, %v5215
    %v7149 = vsel %vm2662, %v4524, %v5217
    %v7150 = vsel %vm2662, %v4525, %v5219
    %v7151 = vsel %vm2662, %v4526, %v5221
    %v7152 = vsel %vm2662, %v4527, %v5223
    %v7153 = vsel %vm2662, %v4528, %v5225
    %v7154 = vsel %vm2662, %v4529, %v5227
    %v7155 = vsel %vm2662, %v4530, %v5229
    %v7156 = vsel %vm2662, %v4531, %v5231
    %v7157 = vsel %vm2662, %v4532, %v5233
    %v7158 = vsel %vm2662, %v4533, %v5235
    %v7159 = vsel %vm2662, %v4534, %v5237
    %v7160 = vsel %vm2662, %v4535, %v5239
    %v7161 = vsel %vm2662, %v4536, %v5241
    %v7162 = vsel %vm2727, %v7098, %v5371
    %v7163 = vsel %vm2727, %v7099, %v5373
    %v7164 = vsel %vm2727, %v7100, %v5375
    %v7165 = vsel %vm2727, %v7101, %v5377
    %v7166 = vsel %vm2727, %v7102, %v5379
    %v7167 = vsel %vm2727, %v7103, %v5381
    %v7168 = vsel %vm2727, %v7104, %v5383
    %v7169 = vsel %vm2727, %v7105, %v5385
    %v7170 = vsel %vm2727, %v7106, %v5387
    %v7171 = vsel %vm2727, %v7107, %v5389
    %v7172 = vsel %vm2727, %v7108, %v5391
    %v7173 = vsel %vm2727, %v7109, %v5393
    %v7174 = vsel %vm2727, %v7110, %v5395
    %v7175 = vsel %vm2727, %v7111, %v5397
    %v7176 = vsel %vm2727, %v7112, %v5399
    %v7177 = vsel %vm2727, %v7113, %v5401
    %v7178 = vsel %vm2727, %v7114, %v5403
    %v7179 = vsel %vm2727, %v7115, %v5405
    %v7180 = vsel %vm2727, %v7116, %v5407
    %v7181 = vsel %vm2727, %v7117, %v5409
    %v7182 = vsel %vm2727, %v7118, %v5411
    %v7183 = vsel %vm2727, %v7119, %v5413
    %v7184 = vsel %vm2727, %v7120, %v5415
    %v7185 = vsel %vm2727, %v7121, %v5417
    %v7186 = vsel %vm2727, %v7122, %v5419
    %v7187 = vsel %vm2727, %v7123, %v5421
    %v7188 = vsel %vm2727, %v7124, %v5423
    %v7189 = vsel %vm2727, %v7125, %v5425
    %v7190 = vsel %vm2727, %v7126, %v5427
    %v7191 = vsel %vm2727, %v7127, %v5429
    %v7192 = vsel %vm2727, %v7128, %v5431
    %v7193 = vsel %vm2727, %v7129, %v5433
    %v7194 = vsel %vm2727, %v7130, %v5435
    %v7195 = vsel %vm2727, %v7131, %v5437
    %v7196 = vsel %vm2727, %v7132, %v5439
    %v7197 = vsel %vm2727, %v7133, %v5441
    %v7198 = vsel %vm2727, %v7134, %v5443
    %v7199 = vsel %vm2727, %v7135, %v5445
    %v7200 = vsel %vm2727, %v7136, %v5447
    %v7201 = vsel %vm2727, %v7137, %v5449
    %v7202 = vsel %vm2727, %v7138, %v5451
    %v7203 = vsel %vm2727, %v7139, %v5453
    %v7204 = vsel %vm2727, %v7140, %v5455
    %v7205 = vsel %vm2727, %v7141, %v5457
    %v7206 = vsel %vm2727, %v7142, %v5459
    %v7207 = vsel %vm2727, %v7143, %v5461
    %v7208 = vsel %vm2727, %v7144, %v5463
    %v7209 = vsel %vm2727, %v7145, %v5465
    %v7210 = vsel %vm2727, %v7146, %v5467
    %v7211 = vsel %vm2727, %v7147, %v5469
    %v7212 = vsel %vm2727, %v7148, %v5471
    %v7213 = vsel %vm2727, %v7149, %v5473
    %v7214 = vsel %vm2727, %v7150, %v5475
    %v7215 = vsel %vm2727, %v7151, %v5477
    %v7216 = vsel %vm2727, %v7152, %v5479
    %v7217 = vsel %vm2727, %v7153, %v5481
    %v7218 = vsel %vm2727, %v7154, %v5483
    %v7219 = vsel %vm2727, %v7155, %v5485
    %v7220 = vsel %vm2727, %v7156, %v5487
    %v7221 = vsel %vm2727, %v7157, %v5489
    %v7222 = vsel %vm2727, %v7158, %v5491
    %v7223 = vsel %vm2727, %v7159, %v5493
    %v7224 = vsel %vm2727, %v7160, %v5495
    %v7225 = vsel %vm2727, %v7161, %v5497
    %v7226 = vsel %vm2792, %v7162, %v5627
    %v7227 = vsel %vm2792, %v7163, %v5629
    %v7228 = vsel %vm2792, %v7164, %v5631
    %v7229 = vsel %vm2792, %v7165, %v5633
    %v7230 = vsel %vm2792, %v7166, %v5635
    %v7231 = vsel %vm2792, %v7167, %v5637
    %v7232 = vsel %vm2792, %v7168, %v5639
    %v7233 = vsel %vm2792, %v7169, %v5641
    %v7234 = vsel %vm2792, %v7170, %v5643
    %v7235 = vsel %vm2792, %v7171, %v5645
    %v7236 = vsel %vm2792, %v7172, %v5647
    %v7237 = vsel %vm2792, %v7173, %v5649
    %v7238 = vsel %vm2792, %v7174, %v5651
    %v7239 = vsel %vm2792, %v7175, %v5653
    %v7240 = vsel %vm2792, %v7176, %v5655
    %v7241 = vsel %vm2792, %v7177, %v5657
    %v7242 = vsel %vm2792, %v7178, %v5659
    %v7243 = vsel %vm2792, %v7179, %v5661
    %v7244 = vsel %vm2792, %v7180, %v5663
    %v7245 = vsel %vm2792, %v7181, %v5665
    %v7246 = vsel %vm2792, %v7182, %v5667
    %v7247 = vsel %vm2792, %v7183, %v5669
    %v7248 = vsel %vm2792, %v7184, %v5671
    %v7249 = vsel %vm2792, %v7185, %v5673
    %v7250 = vsel %vm2792, %v7186, %v5675
    %v7251 = vsel %vm2792, %v7187, %v5677
    %v7252 = vsel %vm2792, %v7188, %v5679
    %v7253 = vsel %vm2792, %v7189, %v5681
    %v7254 = vsel %vm2792, %v7190, %v5683
    %v7255 = vsel %vm2792, %v7191, %v5685
    %v7256 = vsel %vm2792, %v7192, %v5687
    %v7257 = vsel %vm2792, %v7193, %v5689
    %v7258 = vsel %vm2792, %v7194, %v5691
    %v7259 = vsel %vm2792, %v7195, %v5693
    %v7260 = vsel %vm2792, %v7196, %v5695
    %v7261 = vsel %vm2792, %v7197, %v5697
    %v7262 = vsel %vm2792, %v7198, %v5699
    %v7263 = vsel %vm2792, %v7199, %v5701
    %v7264 = vsel %vm2792, %v7200, %v5703
    %v7265 = vsel %vm2792, %v7201, %v5705
    %v7266 = vsel %vm2792, %v7202, %v5707
    %v7267 = vsel %vm2792, %v7203, %v5709
    %v7268 = vsel %vm2792, %v7204, %v5711
    %v7269 = vsel %vm2792, %v7205, %v5713
    %v7270 = vsel %vm2792, %v7206, %v5715
    %v7271 = vsel %vm2792, %v7207, %v5717
    %v7272 = vsel %vm2792, %v7208, %v5719
    %v7273 = vsel %vm2792, %v7209, %v5721
    %v7274 = vsel %vm2792, %v7210, %v5723
    %v7275 = vsel %vm2792, %v7211, %v5725
    %v7276 = vsel %vm2792, %v7212, %v5727
    %v7277 = vsel %vm2792, %v7213, %v5729
    %v7278 = vsel %vm2792, %v7214, %v5731
    %v7279 = vsel %vm2792, %v7215, %v5733
    %v7280 = vsel %vm2792, %v7216, %v5735
    %v7281 = vsel %vm2792, %v7217, %v5737
    %v7282 = vsel %vm2792, %v7218, %v5739
    %v7283 = vsel %vm2792, %v7219, %v5741
    %v7284 = vsel %vm2792, %v7220, %v5743
    %v7285 = vsel %vm2792, %v7221, %v5745
    %v7286 = vsel %vm2792, %v7222, %v5747
    %v7287 = vsel %vm2792, %v7223, %v5749
    %v7288 = vsel %vm2792, %v7224, %v5751
    %v7289 = vsel %vm2792, %v7225, %v5753
    %v7290 = vsel %vm2857, %v7226, %v5883
    %v7291 = vsel %vm2857, %v7227, %v5885
    %v7292 = vsel %vm2857, %v7228, %v5887
    %v7293 = vsel %vm2857, %v7229, %v5889
    %v7294 = vsel %vm2857, %v7230, %v5891
    %v7295 = vsel %vm2857, %v7231, %v5893
    %v7296 = vsel %vm2857, %v7232, %v5895
    %v7297 = vsel %vm2857, %v7233, %v5897
    %v7298 = vsel %vm2857, %v7234, %v5899
    %v7299 = vsel %vm2857, %v7235, %v5901
    %v7300 = vsel %vm2857, %v7236, %v5903
    %v7301 = vsel %vm2857, %v7237, %v5905
    %v7302 = vsel %vm2857, %v7238, %v5907
    %v7303 = vsel %vm2857, %v7239, %v5909
    %v7304 = vsel %vm2857, %v7240, %v5911
    %v7305 = vsel %vm2857, %v7241, %v5913
    %v7306 = vsel %vm2857, %v7242, %v5915
    %v7307 = vsel %vm2857, %v7243, %v5917
    %v7308 = vsel %vm2857, %v7244, %v5919
    %v7309 = vsel %vm2857, %v7245, %v5921
    %v7310 = vsel %vm2857, %v7246, %v5923
    %v7311 = vsel %vm2857, %v7247, %v5925
    %v7312 = vsel %vm2857, %v7248, %v5927
    %v7313 = vsel %vm2857, %v7249, %v5929
    %v7314 = vsel %vm2857, %v7250, %v5931
    %v7315 = vsel %vm2857, %v7251, %v5933
    %v7316 = vsel %vm2857, %v7252, %v5935
    %v7317 = vsel %vm2857, %v7253, %v5937
    %v7318 = vsel %vm2857, %v7254, %v5939
    %v7319 = vsel %vm2857, %v7255, %v5941
    %v7320 = vsel %vm2857, %v7256, %v5943
    %v7321 = vsel %vm2857, %v7257, %v5945
    %v7322 = vsel %vm2857, %v7258, %v5947
    %v7323 = vsel %vm2857, %v7259, %v5949
    %v7324 = vsel %vm2857, %v7260, %v5951
    %v7325 = vsel %vm2857, %v7261, %v5953
    %v7326 = vsel %vm2857, %v7262, %v5955
    %v7327 = vsel %vm2857, %v7263, %v5957
    %v7328 = vsel %vm2857, %v7264, %v5959
    %v7329 = vsel %vm2857, %v7265, %v5961
    %v7330 = vsel %vm2857, %v7266, %v5963
    %v7331 = vsel %vm2857, %v7267, %v5965
    %v7332 = vsel %vm2857, %v7268, %v5967
    %v7333 = vsel %vm2857, %v7269, %v5969
    %v7334 = vsel %vm2857, %v7270, %v5971
    %v7335 = vsel %vm2857, %v7271, %v5973
    %v7336 = vsel %vm2857, %v7272, %v5975
    %v7337 = vsel %vm2857, %v7273, %v5977
    %v7338 = vsel %vm2857, %v7274, %v5979
    %v7339 = vsel %vm2857, %v7275, %v5981
    %v7340 = vsel %vm2857, %v7276, %v5983
    %v7341 = vsel %vm2857, %v7277, %v5985
    %v7342 = vsel %vm2857, %v7278, %v5987
    %v7343 = vsel %vm2857, %v7279, %v5989
    %v7344 = vsel %vm2857, %v7280, %v5991
    %v7345 = vsel %vm2857, %v7281, %v5993
    %v7346 = vsel %vm2857, %v7282, %v5995
    %v7347 = vsel %vm2857, %v7283, %v5997
    %v7348 = vsel %vm2857, %v7284, %v5999
    %v7349 = vsel %vm2857, %v7285, %v6001
    %v7350 = vsel %vm2857, %v7286, %v6003
    %v7351 = vsel %vm2857, %v7287, %v6005
    %v7352 = vsel %vm2857, %v7288, %v6007
    %v7353 = vsel %vm2857, %v7289, %v6009
    %v7354 = vsel %vm2922, %v7290, %v6139
    %v7355 = vsel %vm2922, %v7291, %v6141
    %v7356 = vsel %vm2922, %v7292, %v6143
    %v7357 = vsel %vm2922, %v7293, %v6145
    %v7358 = vsel %vm2922, %v7294, %v6147
    %v7359 = vsel %vm2922, %v7295, %v6149
    %v7360 = vsel %vm2922, %v7296, %v6151
    %v7361 = vsel %vm2922, %v7297, %v6153
    %v7362 = vsel %vm2922, %v7298, %v6155
    %v7363 = vsel %vm2922, %v7299, %v6157
    %v7364 = vsel %vm2922, %v7300, %v6159
    %v7365 = vsel %vm2922, %v7301, %v6161
    %v7366 = vsel %vm2922, %v7302, %v6163
    %v7367 = vsel %vm2922, %v7303, %v6165
    %v7368 = vsel %vm2922, %v7304, %v6167
    %v7369 = vsel %vm2922, %v7305, %v6169
    %v7370 = vsel %vm2922, %v7306, %v6171
    %v7371 = vsel %vm2922, %v7307, %v6173
    %v7372 = vsel %vm2922, %v7308, %v6175
    %v7373 = vsel %vm2922, %v7309, %v6177
    %v7374 = vsel %vm2922, %v7310, %v6179
    %v7375 = vsel %vm2922, %v7311, %v6181
    %v7376 = vsel %vm2922, %v7312, %v6183
    %v7377 = vsel %vm2922, %v7313, %v6185
    %v7378 = vsel %vm2922, %v7314, %v6187
    %v7379 = vsel %vm2922, %v7315, %v6189
    %v7380 = vsel %vm2922, %v7316, %v6191
    %v7381 = vsel %vm2922, %v7317, %v6193
    %v7382 = vsel %vm2922, %v7318, %v6195
    %v7383 = vsel %vm2922, %v7319, %v6197
    %v7384 = vsel %vm2922, %v7320, %v6199
    %v7385 = vsel %vm2922, %v7321, %v6201
    %v7386 = vsel %vm2922, %v7322, %v6203
    %v7387 = vsel %vm2922, %v7323, %v6205
    %v7388 = vsel %vm2922, %v7324, %v6207
    %v7389 = vsel %vm2922, %v7325, %v6209
    %v7390 = vsel %vm2922, %v7326, %v6211
    %v7391 = vsel %vm2922, %v7327, %v6213
    %v7392 = vsel %vm2922, %v7328, %v6215
    %v7393 = vsel %vm2922, %v7329, %v6217
    %v7394 = vsel %vm2922, %v7330, %v6219
    %v7395 = vsel %vm2922, %v7331, %v6221
    %v7396 = vsel %vm2922, %v7332, %v6223
    %v7397 = vsel %vm2922, %v7333, %v6225
    %v7398 = vsel %vm2922, %v7334, %v6227
    %v7399 = vsel %vm2922, %v7335, %v6229
    %v7400 = vsel %vm2922, %v7336, %v6231
    %v7401 = vsel %vm2922, %v7337, %v6233
    %v7402 = vsel %vm2922, %v7338, %v6235
    %v7403 = vsel %vm2922, %v7339, %v6237
    %v7404 = vsel %vm2922, %v7340, %v6239
    %v7405 = vsel %vm2922, %v7341, %v6241
    %v7406 = vsel %vm2922, %v7342, %v6243
    %v7407 = vsel %vm2922, %v7343, %v6245
    %v7408 = vsel %vm2922, %v7344, %v6247
    %v7409 = vsel %vm2922, %v7345, %v6249
    %v7410 = vsel %vm2922, %v7346, %v6251
    %v7411 = vsel %vm2922, %v7347, %v6253
    %v7412 = vsel %vm2922, %v7348, %v6255
    %v7413 = vsel %vm2922, %v7349, %v6257
    %v7414 = vsel %vm2922, %v7350, %v6259
    %v7415 = vsel %vm2922, %v7351, %v6261
    %v7416 = vsel %vm2922, %v7352, %v6263
    %v7417 = vsel %vm2922, %v7353, %v6265
    %v7418 = vsel %vm2987, %v7354, %v6395
    %v7419 = vsel %vm2987, %v7355, %v6397
    %v7420 = vsel %vm2987, %v7356, %v6399
    %v7421 = vsel %vm2987, %v7357, %v6401
    %v7422 = vsel %vm2987, %v7358, %v6403
    %v7423 = vsel %vm2987, %v7359, %v6405
    %v7424 = vsel %vm2987, %v7360, %v6407
    %v7425 = vsel %vm2987, %v7361, %v6409
    %v7426 = vsel %vm2987, %v7362, %v6411
    %v7427 = vsel %vm2987, %v7363, %v6413
    %v7428 = vsel %vm2987, %v7364, %v6415
    %v7429 = vsel %vm2987, %v7365, %v6417
    %v7430 = vsel %vm2987, %v7366, %v6419
    %v7431 = vsel %vm2987, %v7367, %v6421
    %v7432 = vsel %vm2987, %v7368, %v6423
    %v7433 = vsel %vm2987, %v7369, %v6425
    %v7434 = vsel %vm2987, %v7370, %v6427
    %v7435 = vsel %vm2987, %v7371, %v6429
    %v7436 = vsel %vm2987, %v7372, %v6431
    %v7437 = vsel %vm2987, %v7373, %v6433
    %v7438 = vsel %vm2987, %v7374, %v6435
    %v7439 = vsel %vm2987, %v7375, %v6437
    %v7440 = vsel %vm2987, %v7376, %v6439
    %v7441 = vsel %vm2987, %v7377, %v6441
    %v7442 = vsel %vm2987, %v7378, %v6443
    %v7443 = vsel %vm2987, %v7379, %v6445
    %v7444 = vsel %vm2987, %v7380, %v6447
    %v7445 = vsel %vm2987, %v7381, %v6449
    %v7446 = vsel %vm2987, %v7382, %v6451
    %v7447 = vsel %vm2987, %v7383, %v6453
    %v7448 = vsel %vm2987, %v7384, %v6455
    %v7449 = vsel %vm2987, %v7385, %v6457
    %v7450 = vsel %vm2987, %v7386, %v6459
    %v7451 = vsel %vm2987, %v7387, %v6461
    %v7452 = vsel %vm2987, %v7388, %v6463
    %v7453 = vsel %vm2987, %v7389, %v6465
    %v7454 = vsel %vm2987, %v7390, %v6467
    %v7455 = vsel %vm2987, %v7391, %v6469
    %v7456 = vsel %vm2987, %v7392, %v6471
    %v7457 = vsel %vm2987, %v7393, %v6473
    %v7458 = vsel %vm2987, %v7394, %v6475
    %v7459 = vsel %vm2987, %v7395, %v6477
    %v7460 = vsel %vm2987, %v7396, %v6479
    %v7461 = vsel %vm2987, %v7397, %v6481
    %v7462 = vsel %vm2987, %v7398, %v6483
    %v7463 = vsel %vm2987, %v7399, %v6485
    %v7464 = vsel %vm2987, %v7400, %v6487
    %v7465 = vsel %vm2987, %v7401, %v6489
    %v7466 = vsel %vm2987, %v7402, %v6491
    %v7467 = vsel %vm2987, %v7403, %v6493
    %v7468 = vsel %vm2987, %v7404, %v6495
    %v7469 = vsel %vm2987, %v7405, %v6497
    %v7470 = vsel %vm2987, %v7406, %v6499
    %v7471 = vsel %vm2987, %v7407, %v6501
    %v7472 = vsel %vm2987, %v7408, %v6503
    %v7473 = vsel %vm2987, %v7409, %v6505
    %v7474 = vsel %vm2987, %v7410, %v6507
    %v7475 = vsel %vm2987, %v7411, %v6509
    %v7476 = vsel %vm2987, %v7412, %v6511
    %v7477 = vsel %vm2987, %v7413, %v6513
    %v7478 = vsel %vm2987, %v7414, %v6515
    %v7479 = vsel %vm2987, %v7415, %v6517
    %v7480 = vsel %vm2987, %v7416, %v6519
    %v7481 = vsel %vm2987, %v7417, %v6521
    %v7482 = vsel %vm3052, %v7418, %v6651
    %v7483 = vsel %vm3052, %v7419, %v6653
    %v7484 = vsel %vm3052, %v7420, %v6655
    %v7485 = vsel %vm3052, %v7421, %v6657
    %v7486 = vsel %vm3052, %v7422, %v6659
    %v7487 = vsel %vm3052, %v7423, %v6661
    %v7488 = vsel %vm3052, %v7424, %v6663
    %v7489 = vsel %vm3052, %v7425, %v6665
    %v7490 = vsel %vm3052, %v7426, %v6667
    %v7491 = vsel %vm3052, %v7427, %v6669
    %v7492 = vsel %vm3052, %v7428, %v6671
    %v7493 = vsel %vm3052, %v7429, %v6673
    %v7494 = vsel %vm3052, %v7430, %v6675
    %v7495 = vsel %vm3052, %v7431, %v6677
    %v7496 = vsel %vm3052, %v7432, %v6679
    %v7497 = vsel %vm3052, %v7433, %v6681
    %v7498 = vsel %vm3052, %v7434, %v6683
    %v7499 = vsel %vm3052, %v7435, %v6685
    %v7500 = vsel %vm3052, %v7436, %v6687
    %v7501 = vsel %vm3052, %v7437, %v6689
    %v7502 = vsel %vm3052, %v7438, %v6691
    %v7503 = vsel %vm3052, %v7439, %v6693
    %v7504 = vsel %vm3052, %v7440, %v6695
    %v7505 = vsel %vm3052, %v7441, %v6697
    %v7506 = vsel %vm3052, %v7442, %v6699
    %v7507 = vsel %vm3052, %v7443, %v6701
    %v7508 = vsel %vm3052, %v7444, %v6703
    %v7509 = vsel %vm3052, %v7445, %v6705
    %v7510 = vsel %vm3052, %v7446, %v6707
    %v7511 = vsel %vm3052, %v7447, %v6709
    %v7512 = vsel %vm3052, %v7448, %v6711
    %v7513 = vsel %vm3052, %v7449, %v6713
    %v7514 = vsel %vm3052, %v7450, %v6715
    %v7515 = vsel %vm3052, %v7451, %v6717
    %v7516 = vsel %vm3052, %v7452, %v6719
    %v7517 = vsel %vm3052, %v7453, %v6721
    %v7518 = vsel %vm3052, %v7454, %v6723
    %v7519 = vsel %vm3052, %v7455, %v6725
    %v7520 = vsel %vm3052, %v7456, %v6727
    %v7521 = vsel %vm3052, %v7457, %v6729
    %v7522 = vsel %vm3052, %v7458, %v6731
    %v7523 = vsel %vm3052, %v7459, %v6733
    %v7524 = vsel %vm3052, %v7460, %v6735
    %v7525 = vsel %vm3052, %v7461, %v6737
    %v7526 = vsel %vm3052, %v7462, %v6739
    %v7527 = vsel %vm3052, %v7463, %v6741
    %v7528 = vsel %vm3052, %v7464, %v6743
    %v7529 = vsel %vm3052, %v7465, %v6745
    %v7530 = vsel %vm3052, %v7466, %v6747
    %v7531 = vsel %vm3052, %v7467, %v6749
    %v7532 = vsel %vm3052, %v7468, %v6751
    %v7533 = vsel %vm3052, %v7469, %v6753
    %v7534 = vsel %vm3052, %v7470, %v6755
    %v7535 = vsel %vm3052, %v7471, %v6757
    %v7536 = vsel %vm3052, %v7472, %v6759
    %v7537 = vsel %vm3052, %v7473, %v6761
    %v7538 = vsel %vm3052, %v7474, %v6763
    %v7539 = vsel %vm3052, %v7475, %v6765
    %v7540 = vsel %vm3052, %v7476, %v6767
    %v7541 = vsel %vm3052, %v7477, %v6769
    %v7542 = vsel %vm3052, %v7478, %v6771
    %v7543 = vsel %vm3052, %v7479, %v6773
    %v7544 = vsel %vm3052, %v7480, %v6775
    %v7545 = vsel %vm3052, %v7481, %v6777
    %v7546 = vsel %vm3117, %v7482, %v6907
    %v7547 = vsel %vm3117, %v7483, %v6909
    %v7548 = vsel %vm3117, %v7484, %v6911
    %v7549 = vsel %vm3117, %v7485, %v6913
    %v7550 = vsel %vm3117, %v7486, %v6915
    %v7551 = vsel %vm3117, %v7487, %v6917
    %v7552 = vsel %vm3117, %v7488, %v6919
    %v7553 = vsel %vm3117, %v7489, %v6921
    %v7554 = vsel %vm3117, %v7490, %v6923
    %v7555 = vsel %vm3117, %v7491, %v6925
    %v7556 = vsel %vm3117, %v7492, %v6927
    %v7557 = vsel %vm3117, %v7493, %v6929
    %v7558 = vsel %vm3117, %v7494, %v6931
    %v7559 = vsel %vm3117, %v7495, %v6933
    %v7560 = vsel %vm3117, %v7496, %v6935
    %v7561 = vsel %vm3117, %v7497, %v6937
    %v7562 = vsel %vm3117, %v7498, %v6939
    %v7563 = vsel %vm3117, %v7499, %v6941
    %v7564 = vsel %vm3117, %v7500, %v6943
    %v7565 = vsel %vm3117, %v7501, %v6945
    %v7566 = vsel %vm3117, %v7502, %v6947
    %v7567 = vsel %vm3117, %v7503, %v6949
    %v7568 = vsel %vm3117, %v7504, %v6951
    %v7569 = vsel %vm3117, %v7505, %v6953
    %v7570 = vsel %vm3117, %v7506, %v6955
    %v7571 = vsel %vm3117, %v7507, %v6957
    %v7572 = vsel %vm3117, %v7508, %v6959
    %v7573 = vsel %vm3117, %v7509, %v6961
    %v7574 = vsel %vm3117, %v7510, %v6963
    %v7575 = vsel %vm3117, %v7511, %v6965
    %v7576 = vsel %vm3117, %v7512, %v6967
    %v7577 = vsel %vm3117, %v7513, %v6969
    %v7578 = vsel %vm3117, %v7514, %v6971
    %v7579 = vsel %vm3117, %v7515, %v6973
    %v7580 = vsel %vm3117, %v7516, %v6975
    %v7581 = vsel %vm3117, %v7517, %v6977
    %v7582 = vsel %vm3117, %v7518, %v6979
    %v7583 = vsel %vm3117, %v7519, %v6981
    %v7584 = vsel %vm3117, %v7520, %v6983
    %v7585 = vsel %vm3117, %v7521, %v6985
    %v7586 = vsel %vm3117, %v7522, %v6987
    %v7587 = vsel %vm3117, %v7523, %v6989
    %v7588 = vsel %vm3117, %v7524, %v6991
    %v7589 = vsel %vm3117, %v7525, %v6993
    %v7590 = vsel %vm3117, %v7526, %v6995
    %v7591 = vsel %vm3117, %v7527, %v6997
    %v7592 = vsel %vm3117, %v7528, %v6999
    %v7593 = vsel %vm3117, %v7529, %v7001
    %v7594 = vsel %vm3117, %v7530, %v7003
    %v7595 = vsel %vm3117, %v7531, %v7005
    %v7596 = vsel %vm3117, %v7532, %v7007
    %v7597 = vsel %vm3117, %v7533, %v7009
    %v7598 = vsel %vm3117, %v7534, %v7011
    %v7599 = vsel %vm3117, %v7535, %v7013
    %v7600 = vsel %vm3117, %v7536, %v7015
    %v7601 = vsel %vm3117, %v7537, %v7017
    %v7602 = vsel %vm3117, %v7538, %v7019
    %v7603 = vsel %vm3117, %v7539, %v7021
    %v7604 = vsel %vm3117, %v7540, %v7023
    %v7605 = vsel %vm3117, %v7541, %v7025
    %v7606 = vsel %vm3117, %v7542, %v7027
    %v7607 = vsel %vm3117, %v7543, %v7029
    %v7608 = vsel %vm3117, %v7544, %v7031
    %v7609 = vsel %vm3117, %v7545, %v7033
    %v7610 = vld [vmem:[%s6] sm:$0xff]
    %v7611 = vld [vmem:[%s6 + $0x8] sm:$0xff]
    %v7612 = vld [vmem:[%s6 + $0x10] sm:$0xff]
    %v7613 = vld [vmem:[%s6 + $0x18] sm:$0xff]
    %v7614 = vld [vmem:[%s6 + $0x20] sm:$0xff]
    %v7615 = vld [vmem:[%s6 + $0x28] sm:$0xff]
    %v7616 = vld [vmem:[%s6 + $0x30] sm:$0xff]
    %v7617 = vld [vmem:[%s6 + $0x38] sm:$0xff]
    %v7618 = vld [vmem:[%s6 + $0x40] sm:$0xff]
    %v7619 = vld [vmem:[%s7] sm:$0x1]
    %v7621 = vlaneseq
    %v7622 = vshrl.u32 %v7621, 7
    %v7623 = vsub.s32 0, %v7622
    %v7624 = vrot.slane %v7619, %v7623
    %v7627 = vsel %vm3198, %v7546, 0
    %v7630 = vsel %vm3198, %v7547, 0
    %v7633 = vsel %vm3198, %v7548, 0
    %v7636 = vsel %vm3198, %v7549, 0
    %v7639 = vsel %vm3198, %v7550, 0
    %v7642 = vsel %vm3198, %v7551, 0
    %v7645 = vsel %vm3198, %v7552, 0
    %v7648 = vsel %vm3198, %v7553, 0
    %v7651 = vsel %vm3198, %v7554, 0
    %v7654 = vsel %vm3198, %v7555, 0
    %v7657 = vsel %vm3198, %v7556, 0
    %v7660 = vsel %vm3198, %v7557, 0
    %v7663 = vsel %vm3198, %v7558, 0
    %v7666 = vsel %vm3198, %v7559, 0
    %v7669 = vsel %vm3198, %v7560, 0
    %v7672 = vsel %vm3198, %v7561, 0
    %v7675 = vsel %vm3198, %v7562, 0
    %v7678 = vsel %vm3198, %v7563, 0
    %v7681 = vsel %vm3198, %v7564, 0
    %v7684 = vsel %vm3198, %v7565, 0
    %v7687 = vsel %vm3198, %v7566, 0
    %v7690 = vsel %vm3198, %v7567, 0
    %v7693 = vsel %vm3198, %v7568, 0
    %v7696 = vsel %vm3198, %v7569, 0
    %v7699 = vsel %vm3198, %v7570, 0
    %v7702 = vsel %vm3198, %v7571, 0
    %v7705 = vsel %vm3198, %v7572, 0
    %v7708 = vsel %vm3198, %v7573, 0
    %v7711 = vsel %vm3198, %v7574, 0
    %v7714 = vsel %vm3198, %v7575, 0
    %v7717 = vsel %vm3198, %v7576, 0
    %v7720 = vsel %vm3198, %v7577, 0
    %v7723 = vsel %vm3198, %v7578, 0
    %v7726 = vsel %vm3198, %v7579, 0
    %v7729 = vsel %vm3198, %v7580, 0
    %v7732 = vsel %vm3198, %v7581, 0
    %v7735 = vsel %vm3198, %v7582, 0
    %v7738 = vsel %vm3198, %v7583, 0
    %v7741 = vsel %vm3198, %v7584, 0
    %v7744 = vsel %vm3198, %v7585, 0
    %v7747 = vsel %vm3198, %v7586, 0
    %v7750 = vsel %vm3198, %v7587, 0
    %v7753 = vsel %vm3198, %v7588, 0
    %v7756 = vsel %vm3198, %v7589, 0
    %v7759 = vsel %vm3198, %v7590, 0
    %v7762 = vsel %vm3198, %v7591, 0
    %v7765 = vsel %vm3198, %v7592, 0
    %v7768 = vsel %vm3198, %v7593, 0
    %v7771 = vsel %vm3198, %v7594, 0
    %v7774 = vsel %vm3198, %v7595, 0
    %v7777 = vsel %vm3198, %v7596, 0
    %v7780 = vsel %vm3198, %v7597, 0
    %v7783 = vsel %vm3198, %v7598, 0
    %v7786 = vsel %vm3198, %v7599, 0
    %v7789 = vsel %vm3198, %v7600, 0
    %v7792 = vsel %vm3198, %v7601, 0
    %v7795 = vsel %vm3198, %v7602, 0
    %v7798 = vsel %vm3198, %v7603, 0
    %v7801 = vsel %vm3198, %v7604, 0
    %v7804 = vsel %vm3198, %v7605, 0
    %v7807 = vsel %vm3198, %v7606, 0
    %v7810 = vsel %vm3198, %v7607, 0
    %v7813 = vsel %vm3198, %v7608, 0
    %v7816 = vsel %vm3198, %v7609, 0
    %7818 = vmatprep.subr.mxu0 0.0
    %7819 = vmatpush1.msra.mxu0 %v7610
    %7820 = vmatprep.subr.mxu0 0.0
    %7821 = vmatpush1.msra.mxu0 %v7611
    %7822 = vmatprep.subr.mxu0 0.0
    %7823 = vmatpush1.msra.mxu0 %v7612
    %7824 = vmatprep.subr.mxu0 0.0
    %7825 = vmatpush1.msra.mxu0 %v7613
    %7826 = vmatprep.subr.mxu0 0.0
    %7827 = vmatpush1.msra.mxu0 %v7614
    %7828 = vmatprep.subr.mxu0 0.0
    %7829 = vmatpush1.msra.mxu0 %v7615
    %7830 = vmatprep.subr.mxu0 0.0
    %7831 = vmatpush1.msra.mxu0 %v7616
    %7832 = vmatprep.subr.mxu0 0.0
    %7833 = vmatpush1.msra.mxu0 %v7617
    %7834 = vmatprep.subr.mxu0 0.0
    %7835 = vmatpush1.msra.mxu0 %v7618
    %7836 = vmatprep.subr.mxu0 0.0
    %7837 = vmatpush1.msra.mxu0 0.0
    %7838 = vmatprep.subr.mxu0 0.0
    %7839 = vmatpush1.msra.mxu0 0.0
    %7840 = vmatprep.subr.mxu0 0.0
    %7841 = vmatpush1.msra.mxu0 0.0
    %7842 = vmatprep.subr.mxu0 0.0
    %7843 = vmatpush1.msra.mxu0 0.0
    %7844 = vmatprep.subr.mxu0 0.0
    %7845 = vmatpush1.msra.mxu0 0.0
    %7846 = vmatprep.subr.mxu0 0.0
    %7847 = vmatpush1.msra.mxu0 0.0
    %7848 = vmatprep.subr.mxu0 0.0
    %7849 = vmatpush1.msra.mxu0 0.0
    %7850 = vmatprep.subr.mxu0 0.0
    %7851 = vmatpush1.msra.mxu0 0.0
    %7852 = vmatprep.subr.mxu0 0.0
    %7853 = vmatpush1.msra.mxu0 0.0
    %7854 = vmatprep.subr.mxu0 0.0
    %7855 = vmatpush1.msra.mxu0 0.0
    %7856 = vmatprep.subr.mxu0 0.0
    %7857 = vmatpush1.msra.mxu0 0.0
    %7858 = vmatprep.subr.mxu0 0.0
    %7859 = vmatpush1.msra.mxu0 0.0
    %7860 = vmatprep.subr.mxu0 0.0
    %7861 = vmatpush1.msra.mxu0 0.0
    %7862 = vmatprep.subr.mxu0 0.0
    %7863 = vmatpush1.msra.mxu0 0.0
    %7864 = vmatprep.subr.mxu0 0.0
    %7865 = vmatpush1.msra.mxu0 0.0
    %7866 = vmatprep.subr.mxu0 0.0
    %7867 = vmatpush1.msra.mxu0 0.0
    %7868 = vmatprep.subr.mxu0 0.0
    %7869 = vmatpush1.msra.mxu0 0.0
    %7870 = vmatprep.subr.mxu0 0.0
    %7871 = vmatpush1.msra.mxu0 0.0
    %7872 = vmatprep.subr.mxu0 0.0
    %7873 = vmatpush1.msra.mxu0 0.0
    %7874 = vmatprep.subr.mxu0 0.0
    %7875 = vmatpush1.msra.mxu0 0.0
    %7876 = vmatprep.subr.mxu0 0.0
    %7877 = vmatpush1.msra.mxu0 0.0
    %7878 = vmatprep.subr.mxu0 0.0
    %7879 = vmatpush1.msra.mxu0 0.0
    %7880 = vmatprep.subr.mxu0 0.0
    %7881 = vmatpush1.msra.mxu0 0.0
    %7882 = vmatprep.mubr.f32.mxu0 0.0
    %7883 = vmatmul.mubr.f32.gmra.mrb[0].mxu0 %v7627
    %v7884 = vpop.f32.mrb[0].mxu0
    %v7885 = vadd.f32 %v7624, %v7884
    %v7886 = vpop.f32.mrb[0].mxu0
    %7887 = vmatprep.mubr.f32.mxu0 0.0
    %7888 = vmatmul.mubr.f32.gmra.mrb[0].mxu0 %v7630
    %v7889 = vpop.f32.mrb[0].mxu0
    %v7890 = vadd.f32 %v7624, %v7889
    %v7891 = vpop.f32.mrb[0].mxu0
    %7892 = vmatprep.mubr.f32.mxu0 0.0
    %7893 = vmatmul.mubr.f32.gmra.mrb[0].mxu0 %v7633
    %v7894 = vpop.f32.mrb[0].mxu0
    %v7895 = vadd.f32 %v7624, %v7894
    %v7896 = vpop.f32.mrb[0].mxu0
    %7897 = vmatprep.mubr.f32.mxu0 0.0
    %7898 = vmatmul.mubr.f32.gmra.mrb[0].mxu0 %v7636
    %v7899 = vpop.f32.mrb[0].mxu0
    %v7900 = vadd.f32 %v7624, %v7899
    %v7901 = vpop.f32.mrb[0].mxu0
    %7902 = vmatprep.mubr.f32.mxu0 0.0
    %7903 = vmatmul.mubr.f32.gmra.mrb[0].mxu0 %v7639
    %v7904 = vpop.f32.mrb[0].mxu0
    %v7905 = vadd.f32 %v7624, %v7904
    %v7906 = vpop.f32.mrb[0].mxu0
    %7907 = vmatprep.mubr.f32.mxu0 0.0
    %7908 = vmatmul.mubr.f32.gmra.mrb[0].mxu0 %v7642
    %v7909 = vpop.f32.mrb[0].mxu0
    %v7910 = vadd.f32 %v7624, %v7909
    %v7911 = vpop.f32.mrb[0].mxu0
    %7912 = vmatprep.mubr.f32.mxu0 0.0
    %7913 = vmatmul.mubr.f32.gmra.mrb[0].mxu0 %v7645
    %v7914 = vpop.f32.mrb[0].mxu0
    %v7915 = vadd.f32 %v7624, %v7914
    %v7916 = vpop.f32.mrb[0].mxu0
    %7917 = vmatprep.mubr.f32.mxu0 0.0
    %7918 = vmatmul.mubr.f32.gmra.mrb[0].mxu0 %v7648
    %v7919 = vpop.f32.mrb[0].mxu0
    %v7920 = vadd.f32 %v7624, %v7919
    %v7921 = vpop.f32.mrb[0].mxu0
    %7922 = vmatprep.mubr.f32.mxu0 0.0
    %7923 = vmatmul.mubr.f32.gmra.mrb[0].mxu0 %v7651
    %v7924 = vpop.f32.mrb[0].mxu0
    %v7925 = vadd.f32 %v7624, %v7924
    %v7926 = vpop.f32.mrb[0].mxu0
    %7927 = vmatprep.mubr.f32.mxu0 0.0
    %7928 = vmatmul.mubr.f32.gmra.mrb[0].mxu0 %v7654
    %v7929 = vpop.f32.mrb[0].mxu0
    %v7930 = vadd.f32 %v7624, %v7929
    %v7931 = vpop.f32.mrb[0].mxu0
    %7932 = vmatprep.mubr.f32.mxu0 0.0
    %7933 = vmatmul.mubr.f32.gmra.mrb[0].mxu0 %v7657
    %v7934 = vpop.f32.mrb[0].mxu0
    %v7935 = vadd.f32 %v7624, %v7934
    %v7936 = vpop.f32.mrb[0].mxu0
    %7937 = vmatprep.mubr.f32.mxu0 0.0
    %7938 = vmatmul.mubr.f32.gmra.mrb[0].mxu0 %v7660
    %v7939 = vpop.f32.mrb[0].mxu0
    %v7940 = vadd.f32 %v7624, %v7939
    %v7941 = vpop.f32.mrb[0].mxu0
    %7942 = vmatprep.mubr.f32.mxu0 0.0
    %7943 = vmatmul.mubr.f32.gmra.mrb[0].mxu0 %v7663
    %v7944 = vpop.f32.mrb[0].mxu0
    %v7945 = vadd.f32 %v7624, %v7944
    %v7946 = vpop.f32.mrb[0].mxu0
    %7947 = vmatprep.mubr.f32.mxu0 0.0
    %7948 = vmatmul.mubr.f32.gmra.mrb[0].mxu0 %v7666
    %v7949 = vpop.f32.mrb[0].mxu0
    %v7950 = vadd.f32 %v7624, %v7949
    %v7951 = vpop.f32.mrb[0].mxu0
    %7952 = vmatprep.mubr.f32.mxu0 0.0
    %7953 = vmatmul.mubr.f32.gmra.mrb[0].mxu0 %v7669
    %v7954 = vpop.f32.mrb[0].mxu0
    %v7955 = vadd.f32 %v7624, %v7954
    %v7956 = vpop.f32.mrb[0].mxu0
    %7957 = vmatprep.mubr.f32.mxu0 0.0
    %7958 = vmatmul.mubr.f32.gmra.mrb[0].mxu0 %v7672
    %v7959 = vpop.f32.mrb[0].mxu0
    %v7960 = vadd.f32 %v7624, %v7959
    %v7961 = vpop.f32.mrb[0].mxu0
    %7962 = vmatprep.mubr.f32.mxu0 0.0
    %7963 = vmatmul.mubr.f32.gmra.mrb[0].mxu0 %v7675
    %v7964 = vpop.f32.mrb[0].mxu0
    %v7965 = vadd.f32 %v7624, %v7964
    %v7966 = vpop.f32.mrb[0].mxu0
    %7967 = vmatprep.mubr.f32.mxu0 0.0
    %7968 = vmatmul.mubr.f32.gmra.mrb[0].mxu0 %v7678
    %v7969 = vpop.f32.mrb[0].mxu0
    %v7970 = vadd.f32 %v7624, %v7969
    %v7971 = vpop.f32.mrb[0].mxu0
    %7972 = vmatprep.mubr.f32.mxu0 0.0
    %7973 = vmatmul.mubr.f32.gmra.mrb[0].mxu0 %v7681
    %v7974 = vpop.f32.mrb[0].mxu0
    %v7975 = vadd.f32 %v7624, %v7974
    %v7976 = vpop.f32.mrb[0].mxu0
    %7977 = vmatprep.mubr.f32.mxu0 0.0
    %7978 = vmatmul.mubr.f32.gmra.mrb[0].mxu0 %v7684
    %v7979 = vpop.f32.mrb[0].mxu0
    %v7980 = vadd.f32 %v7624, %v7979
    %v7981 = vpop.f32.mrb[0].mxu0
    %7982 = vmatprep.mubr.f32.mxu0 0.0
    %7983 = vmatmul.mubr.f32.gmra.mrb[0].mxu0 %v7687
    %v7984 = vpop.f32.mrb[0].mxu0
    %v7985 = vadd.f32 %v7624, %v7984
    %v7986 = vpop.f32.mrb[0].mxu0
    %7987 = vmatprep.mubr.f32.mxu0 0.0
    %7988 = vmatmul.mubr.f32.gmra.mrb[0].mxu0 %v7690
    %v7989 = vpop.f32.mrb[0].mxu0
    %v7990 = vadd.f32 %v7624, %v7989
    %v7991 = vpop.f32.mrb[0].mxu0
    %7992 = vmatprep.mubr.f32.mxu0 0.0
    %7993 = vmatmul.mubr.f32.gmra.mrb[0].mxu0 %v7693
    %v7994 = vpop.f32.mrb[0].mxu0
    %v7995 = vadd.f32 %v7624, %v7994
    %v7996 = vpop.f32.mrb[0].mxu0
    %7997 = vmatprep.mubr.f32.mxu0 0.0
    %7998 = vmatmul.mubr.f32.gmra.mrb[0].mxu0 %v7696
    %v7999 = vpop.f32.mrb[0].mxu0
    %v8000 = vadd.f32 %v7624, %v7999
    %v8001 = vpop.f32.mrb[0].mxu0
    %8002 = vmatprep.mubr.f32.mxu0 0.0
    %8003 = vmatmul.mubr.f32.gmra.mrb[0].mxu0 %v7699
    %v8004 = vpop.f32.mrb[0].mxu0
    %v8005 = vadd.f32 %v7624, %v8004
    %v8006 = vpop.f32.mrb[0].mxu0
    %8007 = vmatprep.mubr.f32.mxu0 0.0
    %8008 = vmatmul.mubr.f32.gmra.mrb[0].mxu0 %v7702
    %v8009 = vpop.f32.mrb[0].mxu0
    %v8010 = vadd.f32 %v7624, %v8009
    %v8011 = vpop.f32.mrb[0].mxu0
    %8012 = vmatprep.mubr.f32.mxu0 0.0
    %8013 = vmatmul.mubr.f32.gmra.mrb[0].mxu0 %v7705
    %v8014 = vpop.f32.mrb[0].mxu0
    %v8015 = vadd.f32 %v7624, %v8014
    %v8016 = vpop.f32.mrb[0].mxu0
    %8017 = vmatprep.mubr.f32.mxu0 0.0
    %8018 = vmatmul.mubr.f32.gmra.mrb[0].mxu0 %v7708
    %v8019 = vpop.f32.mrb[0].mxu0
    %v8020 = vadd.f32 %v7624, %v8019
    %v8021 = vpop.f32.mrb[0].mxu0
    %8022 = vmatprep.mubr.f32.mxu0 0.0
    %8023 = vmatmul.mubr.f32.gmra.mrb[0].mxu0 %v7711
    %v8024 = vpop.f32.mrb[0].mxu0
    %v8025 = vadd.f32 %v7624, %v8024
    %v8026 = vpop.f32.mrb[0].mxu0
    %8027 = vmatprep.mubr.f32.mxu0 0.0
    %8028 = vmatmul.mubr.f32.gmra.mrb[0].mxu0 %v7714
    %v8029 = vpop.f32.mrb[0].mxu0
    %v8030 = vadd.f32 %v7624, %v8029
    %v8031 = vpop.f32.mrb[0].mxu0
    %8032 = vmatprep.mubr.f32.mxu0 0.0
    %8033 = vmatmul.mubr.f32.gmra.mrb[0].mxu0 %v7717
    %v8034 = vpop.f32.mrb[0].mxu0
    %v8035 = vadd.f32 %v7624, %v8034
    %v8036 = vpop.f32.mrb[0].mxu0
    %8037 = vmatprep.mubr.f32.mxu0 0.0
    %8038 = vmatmul.mubr.f32.gmra.mrb[0].mxu0 %v7720
    %v8039 = vpop.f32.mrb[0].mxu0
    %v8040 = vadd.f32 %v7624, %v8039
    %v8041 = vpop.f32.mrb[0].mxu0
    %8042 = vmatprep.mubr.f32.mxu0 0.0
    %8043 = vmatmul.mubr.f32.gmra.mrb[0].mxu0 %v7723
    %v8044 = vpop.f32.mrb[0].mxu0
    %v8045 = vadd.f32 %v7624, %v8044
    %v8046 = vpop.f32.mrb[0].mxu0
    %8047 = vmatprep.mubr.f32.mxu0 0.0
    %8048 = vmatmul.mubr.f32.gmra.mrb[0].mxu0 %v7726
    %v8049 = vpop.f32.mrb[0].mxu0
    %v8050 = vadd.f32 %v7624, %v8049
    %v8051 = vpop.f32.mrb[0].mxu0
    %8052 = vmatprep.mubr.f32.mxu0 0.0
    %8053 = vmatmul.mubr.f32.gmra.mrb[0].mxu0 %v7729
    %v8054 = vpop.f32.mrb[0].mxu0
    %v8055 = vadd.f32 %v7624, %v8054
    %v8056 = vpop.f32.mrb[0].mxu0
    %8057 = vmatprep.mubr.f32.mxu0 0.0
    %8058 = vmatmul.mubr.f32.gmra.mrb[0].mxu0 %v7732
    %v8059 = vpop.f32.mrb[0].mxu0
    %v8060 = vadd.f32 %v7624, %v8059
    %v8061 = vpop.f32.mrb[0].mxu0
    %8062 = vmatprep.mubr.f32.mxu0 0.0
    %8063 = vmatmul.mubr.f32.gmra.mrb[0].mxu0 %v7735
    %v8064 = vpop.f32.mrb[0].mxu0
    %v8065 = vadd.f32 %v7624, %v8064
    %v8066 = vpop.f32.mrb[0].mxu0
    %8067 = vmatprep.mubr.f32.mxu0 0.0
    %8068 = vmatmul.mubr.f32.gmra.mrb[0].mxu0 %v7738
    %v8069 = vpop.f32.mrb[0].mxu0
    %v8070 = vadd.f32 %v7624, %v8069
    %v8071 = vpop.f32.mrb[0].mxu0
    %8072 = vmatprep.mubr.f32.mxu0 0.0
    %8073 = vmatmul.mubr.f32.gmra.mrb[0].mxu0 %v7741
    %v8074 = vpop.f32.mrb[0].mxu0
    %v8075 = vadd.f32 %v7624, %v8074
    %v8076 = vpop.f32.mrb[0].mxu0
    %8077 = vmatprep.mubr.f32.mxu0 0.0
    %8078 = vmatmul.mubr.f32.gmra.mrb[0].mxu0 %v7744
    %v8079 = vpop.f32.mrb[0].mxu0
    %v8080 = vadd.f32 %v7624, %v8079
    %v8081 = vpop.f32.mrb[0].mxu0
    %8082 = vmatprep.mubr.f32.mxu0 0.0
    %8083 = vmatmul.mubr.f32.gmra.mrb[0].mxu0 %v7747
    %v8084 = vpop.f32.mrb[0].mxu0
    %v8085 = vadd.f32 %v7624, %v8084
    %v8086 = vpop.f32.mrb[0].mxu0
    %8087 = vmatprep.mubr.f32.mxu0 0.0
    %8088 = vmatmul.mubr.f32.gmra.mrb[0].mxu0 %v7750
    %v8089 = vpop.f32.mrb[0].mxu0
    %v8090 = vadd.f32 %v7624, %v8089
    %v8091 = vpop.f32.mrb[0].mxu0
    %8092 = vmatprep.mubr.f32.mxu0 0.0
    %8093 = vmatmul.mubr.f32.gmra.mrb[0].mxu0 %v7753
    %v8094 = vpop.f32.mrb[0].mxu0
    %v8095 = vadd.f32 %v7624, %v8094
    %v8096 = vpop.f32.mrb[0].mxu0
    %8097 = vmatprep.mubr.f32.mxu0 0.0
    %8098 = vmatmul.mubr.f32.gmra.mrb[0].mxu0 %v7756
    %v8099 = vpop.f32.mrb[0].mxu0
    %v8100 = vadd.f32 %v7624, %v8099
    %v8101 = vpop.f32.mrb[0].mxu0
    %8102 = vmatprep.mubr.f32.mxu0 0.0
    %8103 = vmatmul.mubr.f32.gmra.mrb[0].mxu0 %v7759
    %v8104 = vpop.f32.mrb[0].mxu0
    %v8105 = vadd.f32 %v7624, %v8104
    %v8106 = vpop.f32.mrb[0].mxu0
    %8107 = vmatprep.mubr.f32.mxu0 0.0
    %8108 = vmatmul.mubr.f32.gmra.mrb[0].mxu0 %v7762
    %v8109 = vpop.f32.mrb[0].mxu0
    %v8110 = vadd.f32 %v7624, %v8109
    %v8111 = vpop.f32.mrb[0].mxu0
    %8112 = vmatprep.mubr.f32.mxu0 0.0
    %8113 = vmatmul.mubr.f32.gmra.mrb[0].mxu0 %v7765
    %v8114 = vpop.f32.mrb[0].mxu0
    %v8115 = vadd.f32 %v7624, %v8114
    %v8116 = vpop.f32.mrb[0].mxu0
    %8117 = vmatprep.mubr.f32.mxu0 0.0
    %8118 = vmatmul.mubr.f32.gmra.mrb[0].mxu0 %v7768
    %v8119 = vpop.f32.mrb[0].mxu0
    %v8120 = vadd.f32 %v7624, %v8119
    %v8121 = vpop.f32.mrb[0].mxu0
    %8122 = vmatprep.mubr.f32.mxu0 0.0
    %8123 = vmatmul.mubr.f32.gmra.mrb[0].mxu0 %v7771
    %v8124 = vpop.f32.mrb[0].mxu0
    %v8125 = vadd.f32 %v7624, %v8124
    %v8126 = vpop.f32.mrb[0].mxu0
    %8127 = vmatprep.mubr.f32.mxu0 0.0
    %8128 = vmatmul.mubr.f32.gmra.mrb[0].mxu0 %v7774
    %v8129 = vpop.f32.mrb[0].mxu0
    %v8130 = vadd.f32 %v7624, %v8129
    %v8131 = vpop.f32.mrb[0].mxu0
    %8132 = vmatprep.mubr.f32.mxu0 0.0
    %8133 = vmatmul.mubr.f32.gmra.mrb[0].mxu0 %v7777
    %v8134 = vpop.f32.mrb[0].mxu0
    %v8135 = vadd.f32 %v7624, %v8134
    %v8136 = vpop.f32.mrb[0].mxu0
    %8137 = vmatprep.mubr.f32.mxu0 0.0
    %8138 = vmatmul.mubr.f32.gmra.mrb[0].mxu0 %v7780
    %v8139 = vpop.f32.mrb[0].mxu0
    %v8140 = vadd.f32 %v7624, %v8139
    %v8141 = vpop.f32.mrb[0].mxu0
    %8142 = vmatprep.mubr.f32.mxu0 0.0
    %8143 = vmatmul.mubr.f32.gmra.mrb[0].mxu0 %v7783
    %v8144 = vpop.f32.mrb[0].mxu0
    %v8145 = vadd.f32 %v7624, %v8144
    %v8146 = vpop.f32.mrb[0].mxu0
    %8147 = vmatprep.mubr.f32.mxu0 0.0
    %8148 = vmatmul.mubr.f32.gmra.mrb[0].mxu0 %v7786
    %v8149 = vpop.f32.mrb[0].mxu0
    %v8150 = vadd.f32 %v7624, %v8149
    %v8151 = vpop.f32.mrb[0].mxu0
    %8152 = vmatprep.mubr.f32.mxu0 0.0
    %8153 = vmatmul.mubr.f32.gmra.mrb[0].mxu0 %v7789
    %v8154 = vpop.f32.mrb[0].mxu0
    %v8155 = vadd.f32 %v7624, %v8154
    %v8156 = vpop.f32.mrb[0].mxu0
    %8157 = vmatprep.mubr.f32.mxu0 0.0
    %8158 = vmatmul.mubr.f32.gmra.mrb[0].mxu0 %v7792
    %v8159 = vpop.f32.mrb[0].mxu0
    %v8160 = vadd.f32 %v7624, %v8159
    %v8161 = vpop.f32.mrb[0].mxu0
    %8162 = vmatprep.mubr.f32.mxu0 0.0
    %8163 = vmatmul.mubr.f32.gmra.mrb[0].mxu0 %v7795
    %v8164 = vpop.f32.mrb[0].mxu0
    %v8165 = vadd.f32 %v7624, %v8164
    %v8166 = vpop.f32.mrb[0].mxu0
    %8167 = vmatprep.mubr.f32.mxu0 0.0
    %8168 = vmatmul.mubr.f32.gmra.mrb[0].mxu0 %v7798
    %v8169 = vpop.f32.mrb[0].mxu0
    %v8170 = vadd.f32 %v7624, %v8169
    %v8171 = vpop.f32.mrb[0].mxu0
    %8172 = vmatprep.mubr.f32.mxu0 0.0
    %8173 = vmatmul.mubr.f32.gmra.mrb[0].mxu0 %v7801
    %v8174 = vpop.f32.mrb[0].mxu0
    %v8175 = vadd.f32 %v7624, %v8174
    %v8176 = vpop.f32.mrb[0].mxu0
    %8177 = vmatprep.mubr.f32.mxu0 0.0
    %8178 = vmatmul.mubr.f32.gmra.mrb[0].mxu0 %v7804
    %v8179 = vpop.f32.mrb[0].mxu0
    %v8180 = vadd.f32 %v7624, %v8179
    %v8181 = vpop.f32.mrb[0].mxu0
    %8182 = vmatprep.mubr.f32.mxu0 0.0
    %8183 = vmatmul.mubr.f32.gmra.mrb[0].mxu0 %v7807
    %v8184 = vpop.f32.mrb[0].mxu0
    %v8185 = vadd.f32 %v7624, %v8184
    %v8186 = vpop.f32.mrb[0].mxu0
    %8187 = vmatprep.mubr.f32.mxu0 0.0
    %8188 = vmatmul.mubr.f32.gmra.mrb[0].mxu0 %v7810
    %v8189 = vpop.f32.mrb[0].mxu0
    %v8190 = vadd.f32 %v7624, %v8189
    %v8191 = vpop.f32.mrb[0].mxu0
    %8192 = vmatprep.mubr.f32.mxu0 0.0
    %8193 = vmatmul.mubr.f32.gmra.mrb[0].mxu0 %v7813
    %v8194 = vpop.f32.mrb[0].mxu0
    %v8195 = vadd.f32 %v7624, %v8194
    %v8196 = vpop.f32.mrb[0].mxu0
    %8197 = vmatprep.mubr.f32.mxu0 0.0
    %8198 = vmatmul.mubr.f32.gmra.mrb[0].mxu0 %v7816
    %v8199 = vpop.f32.mrb[0].mxu0
    %v8200 = vadd.f32 %v7624, %v8199
    %v8201 = vpop.f32.mrb[0].mxu0
    %8202 = vdwg.mxu0
    %v8203 = vld [vmem:[%s8] sm:$0x1]
    %v8204 = vld [vmem:[%s9] sm:$0x1]
    %v8205 = vsel %vm2662, %v7885, 0.0
    %v8206 = vsel %vm2662, %v7890, 0.0
    %v8207 = vadd.f32 %v8205, %v8206
    %v8208 = vsel %vm2662, %v7895, 0.0
    %v8209 = vadd.f32 %v8207, %v8208
    %v8210 = vsel %vm2662, %v7900, 0.0
    %v8211 = vadd.f32 %v8209, %v8210
    %v8212 = vsel %vm2662, %v7905, 0.0
    %v8213 = vadd.f32 %v8211, %v8212
    %v8214 = vsel %vm2662, %v7910, 0.0
    %v8215 = vadd.f32 %v8213, %v8214
    %v8216 = vsel %vm2662, %v7915, 0.0
    %v8217 = vadd.f32 %v8215, %v8216
    %v8218 = vsel %vm2662, %v7920, 0.0
    %v8219 = vadd.f32 %v8217, %v8218
    %v8220 = vsel %vm2662, %v7925, 0.0
    %v8221 = vadd.f32 %v8219, %v8220
    %v8222 = vsel %vm2662, %v7930, 0.0
    %v8223 = vadd.f32 %v8221, %v8222
    %v8224 = vsel %vm2662, %v7935, 0.0
    %v8225 = vadd.f32 %v8223, %v8224
    %v8226 = vsel %vm2662, %v7940, 0.0
    %v8227 = vadd.f32 %v8225, %v8226
    %v8228 = vsel %vm2662, %v7945, 0.0
    %v8229 = vadd.f32 %v8227, %v8228
    %v8230 = vsel %vm2662, %v7950, 0.0
    %v8231 = vadd.f32 %v8229, %v8230
    %v8232 = vsel %vm2662, %v7955, 0.0
    %v8233 = vadd.f32 %v8231, %v8232
    %v8234 = vsel %vm2662, %v7960, 0.0
    %v8235 = vadd.f32 %v8233, %v8234
    %v8236 = vsel %vm2662, %v7965, 0.0
    %v8237 = vadd.f32 %v8235, %v8236
    %v8238 = vsel %vm2662, %v7970, 0.0
    %v8239 = vadd.f32 %v8237, %v8238
    %v8240 = vsel %vm2662, %v7975, 0.0
    %v8241 = vadd.f32 %v8239, %v8240
    %v8242 = vsel %vm2662, %v7980, 0.0
    %v8243 = vadd.f32 %v8241, %v8242
    %v8244 = vsel %vm2662, %v7985, 0.0
    %v8245 = vadd.f32 %v8243, %v8244
    %v8246 = vsel %vm2662, %v7990, 0.0
    %v8247 = vadd.f32 %v8245, %v8246
    %v8248 = vsel %vm2662, %v7995, 0.0
    %v8249 = vadd.f32 %v8247, %v8248
    %v8250 = vsel %vm2662, %v8000, 0.0
    %v8251 = vadd.f32 %v8249, %v8250
    %v8252 = vsel %vm2662, %v8005, 0.0
    %v8253 = vadd.f32 %v8251, %v8252
    %v8254 = vsel %vm2662, %v8010, 0.0
    %v8255 = vadd.f32 %v8253, %v8254
    %v8256 = vsel %vm2662, %v8015, 0.0
    %v8257 = vadd.f32 %v8255, %v8256
    %v8258 = vsel %vm2662, %v8020, 0.0
    %v8259 = vadd.f32 %v8257, %v8258
    %v8260 = vsel %vm2662, %v8025, 0.0
    %v8261 = vadd.f32 %v8259, %v8260
    %v8262 = vsel %vm2662, %v8030, 0.0
    %v8263 = vadd.f32 %v8261, %v8262
    %v8264 = vsel %vm2662, %v8035, 0.0
    %v8265 = vadd.f32 %v8263, %v8264
    %v8266 = vsel %vm2662, %v8040, 0.0
    %v8267 = vadd.f32 %v8265, %v8266
    %v8268 = vsel %vm2662, %v8045, 0.0
    %v8269 = vadd.f32 %v8267, %v8268
    %v8270 = vsel %vm2662, %v8050, 0.0
    %v8271 = vadd.f32 %v8269, %v8270
    %v8272 = vsel %vm2662, %v8055, 0.0
    %v8273 = vadd.f32 %v8271, %v8272
    %v8274 = vsel %vm2662, %v8060, 0.0
    %v8275 = vadd.f32 %v8273, %v8274
    %v8276 = vsel %vm2662, %v8065, 0.0
    %v8277 = vadd.f32 %v8275, %v8276
    %v8278 = vsel %vm2662, %v8070, 0.0
    %v8279 = vadd.f32 %v8277, %v8278
    %v8280 = vsel %vm2662, %v8075, 0.0
    %v8281 = vadd.f32 %v8279, %v8280
    %v8282 = vsel %vm2662, %v8080, 0.0
    %v8283 = vadd.f32 %v8281, %v8282
    %v8284 = vsel %vm2662, %v8085, 0.0
    %v8285 = vadd.f32 %v8283, %v8284
    %v8286 = vsel %vm2662, %v8090, 0.0
    %v8287 = vadd.f32 %v8285, %v8286
    %v8288 = vsel %vm2662, %v8095, 0.0
    %v8289 = vadd.f32 %v8287, %v8288
    %v8290 = vsel %vm2662, %v8100, 0.0
    %v8291 = vadd.f32 %v8289, %v8290
    %v8292 = vsel %vm2662, %v8105, 0.0
    %v8293 = vadd.f32 %v8291, %v8292
    %v8294 = vsel %vm2662, %v8110, 0.0
    %v8295 = vadd.f32 %v8293, %v8294
    %v8296 = vsel %vm2662, %v8115, 0.0
    %v8297 = vadd.f32 %v8295, %v8296
    %v8298 = vsel %vm2662, %v8120, 0.0
    %v8299 = vadd.f32 %v8297, %v8298
    %v8300 = vsel %vm2662, %v8125, 0.0
    %v8301 = vadd.f32 %v8299, %v8300
    %v8302 = vsel %vm2662, %v8130, 0.0
    %v8303 = vadd.f32 %v8301, %v8302
    %v8304 = vsel %vm2662, %v8135, 0.0
    %v8305 = vadd.f32 %v8303, %v8304
    %v8306 = vsel %vm2662, %v8140, 0.0
    %v8307 = vadd.f32 %v8305, %v8306
    %v8308 = vsel %vm2662, %v8145, 0.0
    %v8309 = vadd.f32 %v8307, %v8308
    %v8310 = vsel %vm2662, %v8150, 0.0
    %v8311 = vadd.f32 %v8309, %v8310
    %v8312 = vsel %vm2662, %v8155, 0.0
    %v8313 = vadd.f32 %v8311, %v8312
    %v8314 = vsel %vm2662, %v8160, 0.0
    %v8315 = vadd.f32 %v8313, %v8314
    %v8316 = vsel %vm2662, %v8165, 0.0
    %v8317 = vadd.f32 %v8315, %v8316
    %v8318 = vsel %vm2662, %v8170, 0.0
    %v8319 = vadd.f32 %v8317, %v8318
    %v8320 = vsel %vm2662, %v8175, 0.0
    %v8321 = vadd.f32 %v8319, %v8320
    %v8322 = vsel %vm2662, %v8180, 0.0
    %v8323 = vadd.f32 %v8321, %v8322
    %v8324 = vsel %vm2662, %v8185, 0.0
    %v8325 = vadd.f32 %v8323, %v8324
    %v8326 = vsel %vm2662, %v8190, 0.0
    %v8327 = vadd.f32 %v8325, %v8326
    %v8328 = vsel %vm2662, %v8195, 0.0
    %v8329 = vadd.f32 %v8327, %v8328
    %v8330 = vsel %vm2662, %v8200, 0.0
    %v8331 = vadd.f32 %v8329, %v8330
    %v8332 = vrot.slane %v8331, 4
    %v8333 = vadd.f32 %v8331, %v8332
    %v8334 = vrot.slane %v8333, 2
    %v8335 = vadd.f32 %v8333, %v8334
    %v8336 = vrot.slane %v8335, 1
    %v8337 = vadd.f32 %v8335, %v8336
    %v8338 = vmul.f32 %v8337, 0.001953125
    %v8339 = vmul.f32 %v7885, %v7885
    %v8340 = vmul.f32 %v7890, %v7890
    %v8341 = vmul.f32 %v7895, %v7895
    %v8342 = vmul.f32 %v7900, %v7900
    %v8343 = vmul.f32 %v7905, %v7905
    %v8344 = vmul.f32 %v7910, %v7910
    %v8345 = vmul.f32 %v7915, %v7915
    %v8346 = vmul.f32 %v7920, %v7920
    %v8347 = vmul.f32 %v7925, %v7925
    %v8348 = vmul.f32 %v7930, %v7930
    %v8349 = vmul.f32 %v7935, %v7935
    %v8350 = vmul.f32 %v7940, %v7940
    %v8351 = vmul.f32 %v7945, %v7945
    %v8352 = vmul.f32 %v7950, %v7950
    %v8353 = vmul.f32 %v7955, %v7955
    %v8354 = vmul.f32 %v7960, %v7960
    %v8355 = vmul.f32 %v7965, %v7965
    %v8356 = vmul.f32 %v7970, %v7970
    %v8357 = vmul.f32 %v7975, %v7975
    %v8358 = vmul.f32 %v7980, %v7980
    %v8359 = vmul.f32 %v7985, %v7985
    %v8360 = vmul.f32 %v7990, %v7990
    %v8361 = vmul.f32 %v7995, %v7995
    %v8362 = vmul.f32 %v8000, %v8000
    %v8363 = vmul.f32 %v8005, %v8005
    %v8364 = vmul.f32 %v8010, %v8010
    %v8365 = vmul.f32 %v8015, %v8015
    %v8366 = vmul.f32 %v8020, %v8020
    %v8367 = vmul.f32 %v8025, %v8025
    %v8368 = vmul.f32 %v8030, %v8030
    %v8369 = vmul.f32 %v8035, %v8035
    %v8370 = vmul.f32 %v8040, %v8040
    %v8371 = vmul.f32 %v8045, %v8045
    %v8372 = vmul.f32 %v8050, %v8050
    %v8373 = vmul.f32 %v8055, %v8055
    %v8374 = vmul.f32 %v8060, %v8060
    %v8375 = vmul.f32 %v8065, %v8065
    %v8376 = vmul.f32 %v8070, %v8070
    %v8377 = vmul.f32 %v8075, %v8075
    %v8378 = vmul.f32 %v8080, %v8080
    %v8379 = vmul.f32 %v8085, %v8085
    %v8380 = vmul.f32 %v8090, %v8090
    %v8381 = vmul.f32 %v8095, %v8095
    %v8382 = vmul.f32 %v8100, %v8100
    %v8383 = vmul.f32 %v8105, %v8105
    %v8384 = vmul.f32 %v8110, %v8110
    %v8385 = vmul.f32 %v8115, %v8115
    %v8386 = vmul.f32 %v8120, %v8120
    %v8387 = vmul.f32 %v8125, %v8125
    %v8388 = vmul.f32 %v8130, %v8130
    %v8389 = vmul.f32 %v8135, %v8135
    %v8390 = vmul.f32 %v8140, %v8140
    %v8391 = vmul.f32 %v8145, %v8145
    %v8392 = vmul.f32 %v8150, %v8150
    %v8393 = vmul.f32 %v8155, %v8155
    %v8394 = vmul.f32 %v8160, %v8160
    %v8395 = vmul.f32 %v8165, %v8165
    %v8396 = vmul.f32 %v8170, %v8170
    %v8397 = vmul.f32 %v8175, %v8175
    %v8398 = vmul.f32 %v8180, %v8180
    %v8399 = vmul.f32 %v8185, %v8185
    %v8400 = vmul.f32 %v8190, %v8190
    %v8401 = vmul.f32 %v8195, %v8195
    %v8402 = vmul.f32 %v8200, %v8200
    %v8403 = vsel %vm2662, %v8339, 0.0
    %v8404 = vsel %vm2662, %v8340, 0.0
    %v8405 = vadd.f32 %v8403, %v8404
    %v8406 = vsel %vm2662, %v8341, 0.0
    %v8407 = vadd.f32 %v8405, %v8406
    %v8408 = vsel %vm2662, %v8342, 0.0
    %v8409 = vadd.f32 %v8407, %v8408
    %v8410 = vsel %vm2662, %v8343, 0.0
    %v8411 = vadd.f32 %v8409, %v8410
    %v8412 = vsel %vm2662, %v8344, 0.0
    %v8413 = vadd.f32 %v8411, %v8412
    %v8414 = vsel %vm2662, %v8345, 0.0
    %v8415 = vadd.f32 %v8413, %v8414
    %v8416 = vsel %vm2662, %v8346, 0.0
    %v8417 = vadd.f32 %v8415, %v8416
    %v8418 = vsel %vm2662, %v8347, 0.0
    %v8419 = vadd.f32 %v8417, %v8418
    %v8420 = vsel %vm2662, %v8348, 0.0
    %v8421 = vadd.f32 %v8419, %v8420
    %v8422 = vsel %vm2662, %v8349, 0.0
    %v8423 = vadd.f32 %v8421, %v8422
    %v8424 = vsel %vm2662, %v8350, 0.0
    %v8425 = vadd.f32 %v8423, %v8424
    %v8426 = vsel %vm2662, %v8351, 0.0
    %v8427 = vadd.f32 %v8425, %v8426
    %v8428 = vsel %vm2662, %v8352, 0.0
    %v8429 = vadd.f32 %v8427, %v8428
    %v8430 = vsel %vm2662, %v8353, 0.0
    %v8431 = vadd.f32 %v8429, %v8430
    %v8432 = vsel %vm2662, %v8354, 0.0
    %v8433 = vadd.f32 %v8431, %v8432
    %v8434 = vsel %vm2662, %v8355, 0.0
    %v8435 = vadd.f32 %v8433, %v8434
    %v8436 = vsel %vm2662, %v8356, 0.0
    %v8437 = vadd.f32 %v8435, %v8436
    %v8438 = vsel %vm2662, %v8357, 0.0
    %v8439 = vadd.f32 %v8437, %v8438
    %v8440 = vsel %vm2662, %v8358, 0.0
    %v8441 = vadd.f32 %v8439, %v8440
    %v8442 = vsel %vm2662, %v8359, 0.0
    %v8443 = vadd.f32 %v8441, %v8442
    %v8444 = vsel %vm2662, %v8360, 0.0
    %v8445 = vadd.f32 %v8443, %v8444
    %v8446 = vsel %vm2662, %v8361, 0.0
    %v8447 = vadd.f32 %v8445, %v8446
    %v8448 = vsel %vm2662, %v8362, 0.0
    %v8449 = vadd.f32 %v8447, %v8448
    %v8450 = vsel %vm2662, %v8363, 0.0
    %v8451 = vadd.f32 %v8449, %v8450
    %v8452 = vsel %vm2662, %v8364, 0.0
    %v8453 = vadd.f32 %v8451, %v8452
    %v8454 = vsel %vm2662, %v8365, 0.0
    %v8455 = vadd.f32 %v8453, %v8454
    %v8456 = vsel %vm2662, %v8366, 0.0
    %v8457 = vadd.f32 %v8455, %v8456
    %v8458 = vsel %vm2662, %v8367, 0.0
    %v8459 = vadd.f32 %v8457, %v8458
    %v8460 = vsel %vm2662, %v8368, 0.0
    %v8461 = vadd.f32 %v8459, %v8460
    %v8462 = vsel %vm2662, %v8369, 0.0
    %v8463 = vadd.f32 %v8461, %v8462
    %v8464 = vsel %vm2662, %v8370, 0.0
    %v8465 = vadd.f32 %v8463, %v8464
    %v8466 = vsel %vm2662, %v8371, 0.0
    %v8467 = vadd.f32 %v8465, %v8466
    %v8468 = vsel %vm2662, %v8372, 0.0
    %v8469 = vadd.f32 %v8467, %v8468
    %v8470 = vsel %vm2662, %v8373, 0.0
    %v8471 = vadd.f32 %v8469, %v8470
    %v8472 = vsel %vm2662, %v8374, 0.0
    %v8473 = vadd.f32 %v8471, %v8472
    %v8474 = vsel %vm2662, %v8375, 0.0
    %v8475 = vadd.f32 %v8473, %v8474
    %v8476 = vsel %vm2662, %v8376, 0.0
    %v8477 = vadd.f32 %v8475, %v8476
    %v8478 = vsel %vm2662, %v8377, 0.0
    %v8479 = vadd.f32 %v8477, %v8478
    %v8480 = vsel %vm2662, %v8378, 0.0
    %v8481 = vadd.f32 %v8479, %v8480
    %v8482 = vsel %vm2662, %v8379, 0.0
    %v8483 = vadd.f32 %v8481, %v8482
    %v8484 = vsel %vm2662, %v8380, 0.0
    %v8485 = vadd.f32 %v8483, %v8484
    %v8486 = vsel %vm2662, %v8381, 0.0
    %v8487 = vadd.f32 %v8485, %v8486
    %v8488 = vsel %vm2662, %v8382, 0.0
    %v8489 = vadd.f32 %v8487, %v8488
    %v8490 = vsel %vm2662, %v8383, 0.0
    %v8491 = vadd.f32 %v8489, %v8490
    %v8492 = vsel %vm2662, %v8384, 0.0
    %v8493 = vadd.f32 %v8491, %v8492
    %v8494 = vsel %vm2662, %v8385, 0.0
    %v8495 = vadd.f32 %v8493, %v8494
    %v8496 = vsel %vm2662, %v8386, 0.0
    %v8497 = vadd.f32 %v8495, %v8496
    %v8498 = vsel %vm2662, %v8387, 0.0
    %v8499 = vadd.f32 %v8497, %v8498
    %v8500 = vsel %vm2662, %v8388, 0.0
    %v8501 = vadd.f32 %v8499, %v8500
    %v8502 = vsel %vm2662, %v8389, 0.0
    %v8503 = vadd.f32 %v8501, %v8502
    %v8504 = vsel %vm2662, %v8390, 0.0
    %v8505 = vadd.f32 %v8503, %v8504
    %v8506 = vsel %vm2662, %v8391, 0.0
    %v8507 = vadd.f32 %v8505, %v8506
    %v8508 = vsel %vm2662, %v8392, 0.0
    %v8509 = vadd.f32 %v8507, %v8508
    %v8510 = vsel %vm2662, %v8393, 0.0
    %v8511 = vadd.f32 %v8509, %v8510
    %v8512 = vsel %vm2662, %v8394, 0.0
    %v8513 = vadd.f32 %v8511, %v8512
    %v8514 = vsel %vm2662, %v8395, 0.0
    %v8515 = vadd.f32 %v8513, %v8514
    %v8516 = vsel %vm2662, %v8396, 0.0
    %v8517 = vadd.f32 %v8515, %v8516
    %v8518 = vsel %vm2662, %v8397, 0.0
    %v8519 = vadd.f32 %v8517, %v8518
    %v8520 = vsel %vm2662, %v8398, 0.0
    %v8521 = vadd.f32 %v8519, %v8520
    %v8522 = vsel %vm2662, %v8399, 0.0
    %v8523 = vadd.f32 %v8521, %v8522
    %v8524 = vsel %vm2662, %v8400, 0.0
    %v8525 = vadd.f32 %v8523, %v8524
    %v8526 = vsel %vm2662, %v8401, 0.0
    %v8527 = vadd.f32 %v8525, %v8526
    %v8528 = vsel %vm2662, %v8402, 0.0
    %v8529 = vadd.f32 %v8527, %v8528
    %v8530 = vrot.slane %v8529, 4
    %v8531 = vadd.f32 %v8529, %v8530
    %v8532 = vrot.slane %v8531, 2
    %v8533 = vadd.f32 %v8531, %v8532
    %v8534 = vrot.slane %v8533, 1
    %v8535 = vadd.f32 %v8533, %v8534
    %v8536 = vmul.f32 %v8535, 0.001953125
    %v8537 = vmul.f32 %v8338, %v8338
    %v8538 = vsub.f32 %v8536, %v8537
    %v8539 = vadd.f32 %v8538, 1e-05
    %v8540 = vrsqrt.pop %v8539
    %v8541 = vmul.f32 %v8203, %v8540
    %v8542 = vmul.f32 %v8338, %v8541
    %v8543 = vsub.f32 %v8204, %v8542
    %v8545 = vlaneseq
    %v8546 = vshrl.u32 %v8545, 7
    %v8547 = vsub.s32 0, %v8546
    %v8548 = vrot.slane %v8541, %v8547
    %v8550 = vmul.f32 %v7885, %v8548
    %v8551 = vmul.f32 %v7890, %v8548
    %v8552 = vmul.f32 %v7895, %v8548
    %v8553 = vmul.f32 %v7900, %v8548
    %v8554 = vmul.f32 %v7905, %v8548
    %v8555 = vmul.f32 %v7910, %v8548
    %v8556 = vmul.f32 %v7915, %v8548
    %v8557 = vmul.f32 %v7920, %v8548
    %v8558 = vmul.f32 %v7925, %v8548
    %v8559 = vmul.f32 %v7930, %v8548
    %v8560 = vmul.f32 %v7935, %v8548
    %v8561 = vmul.f32 %v7940, %v8548
    %v8562 = vmul.f32 %v7945, %v8548
    %v8563 = vmul.f32 %v7950, %v8548
    %v8564 = vmul.f32 %v7955, %v8548
    %v8565 = vmul.f32 %v7960, %v8548
    %v8566 = vmul.f32 %v7965, %v8548
    %v8567 = vmul.f32 %v7970, %v8548
    %v8568 = vmul.f32 %v7975, %v8548
    %v8569 = vmul.f32 %v7980, %v8548
    %v8570 = vmul.f32 %v7985, %v8548
    %v8571 = vmul.f32 %v7990, %v8548
    %v8572 = vmul.f32 %v7995, %v8548
    %v8573 = vmul.f32 %v8000, %v8548
    %v8574 = vmul.f32 %v8005, %v8548
    %v8575 = vmul.f32 %v8010, %v8548
    %v8576 = vmul.f32 %v8015, %v8548
    %v8577 = vmul.f32 %v8020, %v8548
    %v8578 = vmul.f32 %v8025, %v8548
    %v8579 = vmul.f32 %v8030, %v8548
    %v8580 = vmul.f32 %v8035, %v8548
    %v8581 = vmul.f32 %v8040, %v8548
    %v8582 = vmul.f32 %v8045, %v8548
    %v8583 = vmul.f32 %v8050, %v8548
    %v8584 = vmul.f32 %v8055, %v8548
    %v8585 = vmul.f32 %v8060, %v8548
    %v8586 = vmul.f32 %v8065, %v8548
    %v8587 = vmul.f32 %v8070, %v8548
    %v8588 = vmul.f32 %v8075, %v8548
    %v8589 = vmul.f32 %v8080, %v8548
    %v8590 = vmul.f32 %v8085, %v8548
    %v8591 = vmul.f32 %v8090, %v8548
    %v8592 = vmul.f32 %v8095, %v8548
    %v8593 = vmul.f32 %v8100, %v8548
    %v8594 = vmul.f32 %v8105, %v8548
    %v8595 = vmul.f32 %v8110, %v8548
    %v8596 = vmul.f32 %v8115, %v8548
    %v8597 = vmul.f32 %v8120, %v8548
    %v8598 = vmul.f32 %v8125, %v8548
    %v8599 = vmul.f32 %v8130, %v8548
    %v8600 = vmul.f32 %v8135, %v8548
    %v8601 = vmul.f32 %v8140, %v8548
    %v8602 = vmul.f32 %v8145, %v8548
    %v8603 = vmul.f32 %v8150, %v8548
    %v8604 = vmul.f32 %v8155, %v8548
    %v8605 = vmul.f32 %v8160, %v8548
    %v8606 = vmul.f32 %v8165, %v8548
    %v8607 = vmul.f32 %v8170, %v8548
    %v8608 = vmul.f32 %v8175, %v8548
    %v8609 = vmul.f32 %v8180, %v8548
    %v8610 = vmul.f32 %v8185, %v8548
    %v8611 = vmul.f32 %v8190, %v8548
    %v8612 = vmul.f32 %v8195, %v8548
    %v8613 = vmul.f32 %v8200, %v8548
    %v8615 = vlaneseq
    %v8616 = vshrl.u32 %v8615, 7
    %v8617 = vsub.s32 0, %v8616
    %v8618 = vrot.slane %v8543, %v8617
    %v8620 = vadd.f32 %v8550, %v8618
    %v8621 = vadd.f32 %v8551, %v8618
    %v8622 = vadd.f32 %v8552, %v8618
    %v8623 = vadd.f32 %v8553, %v8618
    %v8624 = vadd.f32 %v8554, %v8618
    %v8625 = vadd.f32 %v8555, %v8618
    %v8626 = vadd.f32 %v8556, %v8618
    %v8627 = vadd.f32 %v8557, %v8618
    %v8628 = vadd.f32 %v8558, %v8618
    %v8629 = vadd.f32 %v8559, %v8618
    %v8630 = vadd.f32 %v8560, %v8618
    %v8631 = vadd.f32 %v8561, %v8618
    %v8632 = vadd.f32 %v8562, %v8618
    %v8633 = vadd.f32 %v8563, %v8618
    %v8634 = vadd.f32 %v8564, %v8618
    %v8635 = vadd.f32 %v8565, %v8618
    %v8636 = vadd.f32 %v8566, %v8618
    %v8637 = vadd.f32 %v8567, %v8618
    %v8638 = vadd.f32 %v8568, %v8618
    %v8639 = vadd.f32 %v8569, %v8618
    %v8640 = vadd.f32 %v8570, %v8618
    %v8641 = vadd.f32 %v8571, %v8618
    %v8642 = vadd.f32 %v8572, %v8618
    %v8643 = vadd.f32 %v8573, %v8618
    %v8644 = vadd.f32 %v8574, %v8618
    %v8645 = vadd.f32 %v8575, %v8618
    %v8646 = vadd.f32 %v8576, %v8618
    %v8647 = vadd.f32 %v8577, %v8618
    %v8648 = vadd.f32 %v8578, %v8618
    %v8649 = vadd.f32 %v8579, %v8618
    %v8650 = vadd.f32 %v8580, %v8618
    %v8651 = vadd.f32 %v8581, %v8618
    %v8652 = vadd.f32 %v8582, %v8618
    %v8653 = vadd.f32 %v8583, %v8618
    %v8654 = vadd.f32 %v8584, %v8618
    %v8655 = vadd.f32 %v8585, %v8618
    %v8656 = vadd.f32 %v8586, %v8618
    %v8657 = vadd.f32 %v8587, %v8618
    %v8658 = vadd.f32 %v8588, %v8618
    %v8659 = vadd.f32 %v8589, %v8618
    %v8660 = vadd.f32 %v8590, %v8618
    %v8661 = vadd.f32 %v8591, %v8618
    %v8662 = vadd.f32 %v8592, %v8618
    %v8663 = vadd.f32 %v8593, %v8618
    %v8664 = vadd.f32 %v8594, %v8618
    %v8665 = vadd.f32 %v8595, %v8618
    %v8666 = vadd.f32 %v8596, %v8618
    %v8667 = vadd.f32 %v8597, %v8618
    %v8668 = vadd.f32 %v8598, %v8618
    %v8669 = vadd.f32 %v8599, %v8618
    %v8670 = vadd.f32 %v8600, %v8618
    %v8671 = vadd.f32 %v8601, %v8618
    %v8672 = vadd.f32 %v8602, %v8618
    %v8673 = vadd.f32 %v8603, %v8618
    %v8674 = vadd.f32 %v8604, %v8618
    %v8675 = vadd.f32 %v8605, %v8618
    %v8676 = vadd.f32 %v8606, %v8618
    %v8677 = vadd.f32 %v8607, %v8618
    %v8678 = vadd.f32 %v8608, %v8618
    %v8679 = vadd.f32 %v8609, %v8618
    %v8680 = vadd.f32 %v8610, %v8618
    %v8681 = vadd.f32 %v8611, %v8618
    %v8682 = vadd.f32 %v8612, %v8618
    %v8683 = vadd.f32 %v8613, %v8618
    %v8684 = vld [vmem:[%s1] sm:$0xff]
    %v8685 = vld [vmem:[%s1 + $0x8] sm:$0xff]
    %v8686 = vld [vmem:[%s1 + $0x10] sm:$0xff]
    %v8687 = vld [vmem:[%s1 + $0x18] sm:$0xff]
    %v8688 = vld [vmem:[%s1 + $0x20] sm:$0xff]
    %v8689 = vld [vmem:[%s1 + $0x28] sm:$0xff]
    %v8690 = vld [vmem:[%s1 + $0x30] sm:$0xff]
    %v8691 = vld [vmem:[%s1 + $0x38] sm:$0xff]
    %v8692 = vld [vmem:[%s1 + $0x40] sm:$0xff]
    %v8693 = vld [vmem:[%s1 + $0x48] sm:$0xff]
    %v8694 = vld [vmem:[%s1 + $0x50] sm:$0xff]
    %v8695 = vld [vmem:[%s1 + $0x58] sm:$0xff]
    %v8696 = vld [vmem:[%s1 + $0x60] sm:$0xff]
    %v8697 = vld [vmem:[%s1 + $0x68] sm:$0xff]
    %v8698 = vld [vmem:[%s1 + $0x70] sm:$0xff]
    %v8699 = vld [vmem:[%s1 + $0x78] sm:$0xff]
    %v8700 = vld [vmem:[%s1 + $0x80] sm:$0xff]
    %v8701 = vld [vmem:[%s1 + $0x88] sm:$0xff]
    %v8702 = vld [vmem:[%s1 + $0x90] sm:$0xff]
    %v8703 = vld [vmem:[%s1 + $0x98] sm:$0xff]
    %v8704 = vld [vmem:[%s1 + $0xa0] sm:$0xff]
    %v8705 = vld [vmem:[%s1 + $0xa8] sm:$0xff]
    %v8706 = vld [vmem:[%s1 + $0xb0] sm:$0xff]
    %v8707 = vld [vmem:[%s1 + $0xb8] sm:$0xff]
    %v8708 = vld [vmem:[%s1 + $0xc0] sm:$0xff]
    %v8709 = vld [vmem:[%s1 + $0xc8] sm:$0xff]
    %v8710 = vld [vmem:[%s1 + $0xd0] sm:$0xff]
    %v8711 = vld [vmem:[%s1 + $0xd8] sm:$0xff]
    %v8712 = vld [vmem:[%s1 + $0xe0] sm:$0xff]
    %v8713 = vld [vmem:[%s1 + $0xe8] sm:$0xff]
    %v8714 = vld [vmem:[%s1 + $0xf0] sm:$0xff]
    %v8715 = vld [vmem:[%s1 + $0xf8] sm:$0xff]
    %v8716 = vld [vmem:[%s1 + $0x100] sm:$0xff]
    %v8717 = vld [vmem:[%s1 + $0x108] sm:$0xff]
    %v8718 = vld [vmem:[%s1 + $0x110] sm:$0xff]
    %v8719 = vld [vmem:[%s1 + $0x118] sm:$0xff]
    %v8720 = vld [vmem:[%s1 + $0x120] sm:$0xff]
    %v8721 = vld [vmem:[%s1 + $0x128] sm:$0xff]
    %v8722 = vld [vmem:[%s1 + $0x130] sm:$0xff]
    %v8723 = vld [vmem:[%s1 + $0x138] sm:$0xff]
    %v8724 = vld [vmem:[%s1 + $0x140] sm:$0xff]
    %v8725 = vld [vmem:[%s1 + $0x148] sm:$0xff]
    %v8726 = vld [vmem:[%s1 + $0x150] sm:$0xff]
    %v8727 = vld [vmem:[%s1 + $0x158] sm:$0xff]
    %v8728 = vld [vmem:[%s1 + $0x160] sm:$0xff]
    %v8729 = vld [vmem:[%s1 + $0x168] sm:$0xff]
    %v8730 = vld [vmem:[%s1 + $0x170] sm:$0xff]
    %v8731 = vld [vmem:[%s1 + $0x178] sm:$0xff]
    %v8732 = vld [vmem:[%s1 + $0x180] sm:$0xff]
    %v8733 = vld [vmem:[%s1 + $0x188] sm:$0xff]
    %v8734 = vld [vmem:[%s1 + $0x190] sm:$0xff]
    %v8735 = vld [vmem:[%s1 + $0x198] sm:$0xff]
    %v8736 = vld [vmem:[%s1 + $0x1a0] sm:$0xff]
    %v8737 = vld [vmem:[%s1 + $0x1a8] sm:$0xff]
    %v8738 = vld [vmem:[%s1 + $0x1b0] sm:$0xff]
    %v8739 = vld [vmem:[%s1 + $0x1b8] sm:$0xff]
    %v8740 = vld [vmem:[%s1 + $0x1c0] sm:$0xff]
    %v8741 = vld [vmem:[%s1 + $0x1c8] sm:$0xff]
    %v8742 = vld [vmem:[%s1 + $0x1d0] sm:$0xff]
    %v8743 = vld [vmem:[%s1 + $0x1d8] sm:$0xff]
    %v8744 = vld [vmem:[%s1 + $0x1e0] sm:$0xff]
    %v8745 = vld [vmem:[%s1 + $0x1e8] sm:$0xff]
    %v8746 = vld [vmem:[%s1 + $0x1f0] sm:$0xff]
    %v8747 = vld [vmem:[%s1 + $0x1f8] sm:$0xff]
    %v8748 = vadd.f32 %v8620, %v8684
    %v8749 = vadd.f32 %v8621, %v8685
    %v8750 = vadd.f32 %v8622, %v8686
    %v8751 = vadd.f32 %v8623, %v8687
    %v8752 = vadd.f32 %v8624, %v8688
    %v8753 = vadd.f32 %v8625, %v8689
    %v8754 = vadd.f32 %v8626, %v8690
    %v8755 = vadd.f32 %v8627, %v8691
    %v8756 = vadd.f32 %v8628, %v8692
    %v8757 = vadd.f32 %v8629, %v8693
    %v8758 = vadd.f32 %v8630, %v8694
    %v8759 = vadd.f32 %v8631, %v8695
    %v8760 = vadd.f32 %v8632, %v8696
    %v8761 = vadd.f32 %v8633, %v8697
    %v8762 = vadd.f32 %v8634, %v8698
    %v8763 = vadd.f32 %v8635, %v8699
    %v8764 = vadd.f32 %v8636, %v8700
    %v8765 = vadd.f32 %v8637, %v8701
    %v8766 = vadd.f32 %v8638, %v8702
    %v8767 = vadd.f32 %v8639, %v8703
    %v8768 = vadd.f32 %v8640, %v8704
    %v8769 = vadd.f32 %v8641, %v8705
    %v8770 = vadd.f32 %v8642, %v8706
    %v8771 = vadd.f32 %v8643, %v8707
    %v8772 = vadd.f32 %v8644, %v8708
    %v8773 = vadd.f32 %v8645, %v8709
    %v8774 = vadd.f32 %v8646, %v8710
    %v8775 = vadd.f32 %v8647, %v8711
    %v8776 = vadd.f32 %v8648, %v8712
    %v8777 = vadd.f32 %v8649, %v8713
    %v8778 = vadd.f32 %v8650, %v8714
    %v8779 = vadd.f32 %v8651, %v8715
    %v8780 = vadd.f32 %v8652, %v8716
    %v8781 = vadd.f32 %v8653, %v8717
    %v8782 = vadd.f32 %v8654, %v8718
    %v8783 = vadd.f32 %v8655, %v8719
    %v8784 = vadd.f32 %v8656, %v8720
    %v8785 = vadd.f32 %v8657, %v8721
    %v8786 = vadd.f32 %v8658, %v8722
    %v8787 = vadd.f32 %v8659, %v8723
    %v8788 = vadd.f32 %v8660, %v8724
    %v8789 = vadd.f32 %v8661, %v8725
    %v8790 = vadd.f32 %v8662, %v8726
    %v8791 = vadd.f32 %v8663, %v8727
    %v8792 = vadd.f32 %v8664, %v8728
    %v8793 = vadd.f32 %v8665, %v8729
    %v8794 = vadd.f32 %v8666, %v8730
    %v8795 = vadd.f32 %v8667, %v8731
    %v8796 = vadd.f32 %v8668, %v8732
    %v8797 = vadd.f32 %v8669, %v8733
    %v8798 = vadd.f32 %v8670, %v8734
    %v8799 = vadd.f32 %v8671, %v8735
    %v8800 = vadd.f32 %v8672, %v8736
    %v8801 = vadd.f32 %v8673, %v8737
    %v8802 = vadd.f32 %v8674, %v8738
    %v8803 = vadd.f32 %v8675, %v8739
    %v8804 = vadd.f32 %v8676, %v8740
    %v8805 = vadd.f32 %v8677, %v8741
    %v8806 = vadd.f32 %v8678, %v8742
    %v8807 = vadd.f32 %v8679, %v8743
    %v8808 = vadd.f32 %v8680, %v8744
    %v8809 = vadd.f32 %v8681, %v8745
    %v8810 = vadd.f32 %v8682, %v8746
    %v8811 = vadd.f32 %v8683, %v8747
    %v8812 = vmax.f32 %v8748, 0.0
    %v8813 = vmax.f32 %v8749, 0.0
    %v8814 = vmax.f32 %v8750, 0.0
    %v8815 = vmax.f32 %v8751, 0.0
    %v8816 = vmax.f32 %v8752, 0.0
    %v8817 = vmax.f32 %v8753, 0.0
    %v8818 = vmax.f32 %v8754, 0.0
    %v8819 = vmax.f32 %v8755, 0.0
    %v8820 = vmax.f32 %v8756, 0.0
    %v8821 = vmax.f32 %v8757, 0.0
    %v8822 = vmax.f32 %v8758, 0.0
    %v8823 = vmax.f32 %v8759, 0.0
    %v8824 = vmax.f32 %v8760, 0.0
    %v8825 = vmax.f32 %v8761, 0.0
    %v8826 = vmax.f32 %v8762, 0.0
    %v8827 = vmax.f32 %v8763, 0.0
    %v8828 = vmax.f32 %v8764, 0.0
    %v8829 = vmax.f32 %v8765, 0.0
    %v8830 = vmax.f32 %v8766, 0.0
    %v8831 = vmax.f32 %v8767, 0.0
    %v8832 = vmax.f32 %v8768, 0.0
    %v8833 = vmax.f32 %v8769, 0.0
    %v8834 = vmax.f32 %v8770, 0.0
    %v8835 = vmax.f32 %v8771, 0.0
    %v8836 = vmax.f32 %v8772, 0.0
    %v8837 = vmax.f32 %v8773, 0.0
    %v8838 = vmax.f32 %v8774, 0.0
    %v8839 = vmax.f32 %v8775, 0.0
    %v8840 = vmax.f32 %v8776, 0.0
    %v8841 = vmax.f32 %v8777, 0.0
    %v8842 = vmax.f32 %v8778, 0.0
    %v8843 = vmax.f32 %v8779, 0.0
    %v8844 = vmax.f32 %v8780, 0.0
    %v8845 = vmax.f32 %v8781, 0.0
    %v8846 = vmax.f32 %v8782, 0.0
    %v8847 = vmax.f32 %v8783, 0.0
    %v8848 = vmax.f32 %v8784, 0.0
    %v8849 = vmax.f32 %v8785, 0.0
    %v8850 = vmax.f32 %v8786, 0.0
    %v8851 = vmax.f32 %v8787, 0.0
    %v8852 = vmax.f32 %v8788, 0.0
    %v8853 = vmax.f32 %v8789, 0.0
    %v8854 = vmax.f32 %v8790, 0.0
    %v8855 = vmax.f32 %v8791, 0.0
    %v8856 = vmax.f32 %v8792, 0.0
    %v8857 = vmax.f32 %v8793, 0.0
    %v8858 = vmax.f32 %v8794, 0.0
    %v8859 = vmax.f32 %v8795, 0.0
    %v8860 = vmax.f32 %v8796, 0.0
    %v8861 = vmax.f32 %v8797, 0.0
    %v8862 = vmax.f32 %v8798, 0.0
    %v8863 = vmax.f32 %v8799, 0.0
    %v8864 = vmax.f32 %v8800, 0.0
    %v8865 = vmax.f32 %v8801, 0.0
    %v8866 = vmax.f32 %v8802, 0.0
    %v8867 = vmax.f32 %v8803, 0.0
    %v8868 = vmax.f32 %v8804, 0.0
    %v8869 = vmax.f32 %v8805, 0.0
    %v8870 = vmax.f32 %v8806, 0.0
    %v8871 = vmax.f32 %v8807, 0.0
    %v8872 = vmax.f32 %v8808, 0.0
    %v8873 = vmax.f32 %v8809, 0.0
    %v8874 = vmax.f32 %v8810, 0.0
    %v8875 = vmax.f32 %v8811, 0.0
    %v8908 = vrot.slane %v8814, 7
    %vm8909 = vcmask 1041409
    %v8910 = vsel %vm8909, %v8908, %v8812
    %v8911 = vrot.slane %v8816, 6
    %vm8912 = vcmask 1042434
    %v8913 = vsel %vm8912, %v8911, %v8910
    %v8914 = vrot.slane %v8818, 5
    %vm8915 = vcmask 1043459
    %v8916 = vsel %vm8915, %v8914, %v8913
    %v8917 = vrot.slane %v8820, 4
    %vm8918 = vcmask 1044484
    %v8919 = vsel %vm8918, %v8917, %v8916
    %v8920 = vrot.slane %v8822, 3
    %vm8921 = vcmask 1045509
    %v8922 = vsel %vm8921, %v8920, %v8919
    %v8923 = vrot.slane %v8824, 2
    %vm8924 = vcmask 1046534
    %v8925 = vsel %vm8924, %v8923, %v8922
    %v8926 = vrot.slane %v8826, 1
    %vm8927 = vcmask 1047559
    %v8928 = vsel %vm8927, %v8926, %v8925
    %v8929 = vrot.slane %v8830, 7
    %v8930 = vsel %vm8909, %v8929, %v8828
    %v8931 = vrot.slane %v8832, 6
    %v8932 = vsel %vm8912, %v8931, %v8930
    %v8933 = vrot.slane %v8834, 5
    %v8934 = vsel %vm8915, %v8933, %v8932
    %v8935 = vrot.slane %v8836, 4
    %v8936 = vsel %vm8918, %v8935, %v8934
    %v8937 = vrot.slane %v8838, 3
    %v8938 = vsel %vm8921, %v8937, %v8936
    %v8939 = vrot.slane %v8840, 2
    %v8940 = vsel %vm8924, %v8939, %v8938
    %v8941 = vrot.slane %v8842, 1
    %v8942 = vsel %vm8927, %v8941, %v8940
    %v8943 = vrot.slane %v8846, 7
    %v8944 = vsel %vm8909, %v8943, %v8844
    %v8945 = vrot.slane %v8848, 6
    %v8946 = vsel %vm8912, %v8945, %v8944
    %v8947 = vrot.slane %v8850, 5
    %v8948 = vsel %vm8915, %v8947, %v8946
    %v8949 = vrot.slane %v8852, 4
    %v8950 = vsel %vm8918, %v8949, %v8948
    %v8951 = vrot.slane %v8854, 3
    %v8952 = vsel %vm8921, %v8951, %v8950
    %v8953 = vrot.slane %v8856, 2
    %v8954 = vsel %vm8924, %v8953, %v8952
    %v8955 = vrot.slane %v8858, 1
    %v8956 = vsel %vm8927, %v8955, %v8954
    %v8957 = vrot.slane %v8862, 7
    %v8958 = vsel %vm8909, %v8957, %v8860
    %v8959 = vrot.slane %v8864, 6
    %v8960 = vsel %vm8912, %v8959, %v8958
    %v8961 = vrot.slane %v8866, 5
    %v8962 = vsel %vm8915, %v8961, %v8960
    %v8963 = vrot.slane %v8868, 4
    %v8964 = vsel %vm8918, %v8963, %v8962
    %v8965 = vrot.slane %v8870, 3
    %v8966 = vsel %vm8921, %v8965, %v8964
    %v8967 = vrot.slane %v8872, 2
    %v8968 = vsel %vm8924, %v8967, %v8966
    %v8969 = vrot.slane %v8874, 1
    %v8970 = vsel %vm8927, %v8969, %v8968
    %v8975 = vrot.slane %v8812, 1
    %v8976 = vsel %vm8909, %v8814, %v8975
    %v8977 = vrot.slane %v8816, 7
    %v8978 = vsel %vm8912, %v8977, %v8976
    %v8979 = vrot.slane %v8818, 6
    %v8980 = vsel %vm8915, %v8979, %v8978
    %v8981 = vrot.slane %v8820, 5
    %v8982 = vsel %vm8918, %v8981, %v8980
    %v8983 = vrot.slane %v8822, 4
    %v8984 = vsel %vm8921, %v8983, %v8982
    %v8985 = vrot.slane %v8824, 3
    %v8986 = vsel %vm8924, %v8985, %v8984
    %v8987 = vrot.slane %v8826, 2
    %v8988 = vsel %vm8927, %v8987, %v8986
    %v8989 = vrot.slane %v8828, 1
    %v8990 = vsel %vm8909, %v8830, %v8989
    %v8991 = vrot.slane %v8832, 7
    %v8992 = vsel %vm8912, %v8991, %v8990
    %v8993 = vrot.slane %v8834, 6
    %v8994 = vsel %vm8915, %v8993, %v8992
    %v8995 = vrot.slane %v8836, 5
    %v8996 = vsel %vm8918, %v8995, %v8994
    %v8997 = vrot.slane %v8838, 4
    %v8998 = vsel %vm8921, %v8997, %v8996
    %v8999 = vrot.slane %v8840, 3
    %v9000 = vsel %vm8924, %v8999, %v8998
    %v9001 = vrot.slane %v8842, 2
    %v9002 = vsel %vm8927, %v9001, %v9000
    %v9003 = vrot.slane %v8844, 1
    %v9004 = vsel %vm8909, %v8846, %v9003
    %v9005 = vrot.slane %v8848, 7
    %v9006 = vsel %vm8912, %v9005, %v9004
    %v9007 = vrot.slane %v8850, 6
    %v9008 = vsel %vm8915, %v9007, %v9006
    %v9009 = vrot.slane %v8852, 5
    %v9010 = vsel %vm8918, %v9009, %v9008
    %v9011 = vrot.slane %v8854, 4
    %v9012 = vsel %vm8921, %v9011, %v9010
    %v9013 = vrot.slane %v8856, 3
    %v9014 = vsel %vm8924, %v9013, %v9012
    %v9015 = vrot.slane %v8858, 2
    %v9016 = vsel %vm8927, %v9015, %v9014
    %v9017 = vrot.slane %v8860, 1
    %v9018 = vsel %vm8909, %v8862, %v9017
    %v9019 = vrot.slane %v8864, 7
    %v9020 = vsel %vm8912, %v9019, %v9018
    %v9021 = vrot.slane %v8866, 6
    %v9022 = vsel %vm8915, %v9021, %v9020
    %v9023 = vrot.slane %v8868, 5
    %v9024 = vsel %vm8918, %v9023, %v9022
    %v9025 = vrot.slane %v8870, 4
    %v9026 = vsel %vm8921, %v9025, %v9024
    %v9027 = vrot.slane %v8872, 3
    %v9028 = vsel %vm8924, %v9027, %v9026
    %v9029 = vrot.slane %v8874, 2
    %v9030 = vsel %vm8927, %v9029, %v9028
    %9031 = vrot.lane.b32.xlu0 %v8988, 8
    %v9032 = vpop.permute.xlu0 %9031
    %9033 = vrot.lane.b32.xlu0 %v9002, 8
    %v9034 = vpop.permute.xlu0 %9033
    %9035 = vrot.lane.b32.xlu0 %v9016, 8
    %v9036 = vpop.permute.xlu0 %9035
    %9037 = vrot.lane.b32.xlu0 %v9030, 8
    %v9038 = vpop.permute.xlu0 %9037
    %v9043 = vrot.slane %v8812, 2
    %v9044 = vrot.slane %v8814, 1
    %v9045 = vsel %vm8909, %v9044, %v9043
    %v9046 = vsel %vm8912, %v8816, %v9045
    %v9047 = vrot.slane %v8818, 7
    %v9048 = vsel %vm8915, %v9047, %v9046
    %v9049 = vrot.slane %v8820, 6
    %v9050 = vsel %vm8918, %v9049, %v9048
    %v9051 = vrot.slane %v8822, 5
    %v9052 = vsel %vm8921, %v9051, %v9050
    %v9053 = vrot.slane %v8824, 4
    %v9054 = vsel %vm8924, %v9053, %v9052
    %v9055 = vrot.slane %v8826, 3
    %v9056 = vsel %vm8927, %v9055, %v9054
    %v9057 = vrot.slane %v8828, 2
    %v9058 = vrot.slane %v8830, 1
    %v9059 = vsel %vm8909, %v9058, %v9057
    %v9060 = vsel %vm8912, %v8832, %v9059
    %v9061 = vrot.slane %v8834, 7
    %v9062 = vsel %vm8915, %v9061, %v9060
    %v9063 = vrot.slane %v8836, 6
    %v9064 = vsel %vm8918, %v9063, %v9062
    %v9065 = vrot.slane %v8838, 5
    %v9066 = vsel %vm8921, %v9065, %v9064
    %v9067 = vrot.slane %v8840, 4
    %v9068 = vsel %vm8924, %v9067, %v9066
    %v9069 = vrot.slane %v8842, 3
    %v9070 = vsel %vm8927, %v9069, %v9068
    %v9071 = vrot.slane %v8844, 2
    %v9072 = vrot.slane %v8846, 1
    %v9073 = vsel %vm8909, %v9072, %v9071
    %v9074 = vsel %vm8912, %v8848, %v9073
    %v9075 = vrot.slane %v8850, 7
    %v9076 = vsel %vm8915, %v9075, %v9074
    %v9077 = vrot.slane %v8852, 6
    %v9078 = vsel %vm8918, %v9077, %v9076
    %v9079 = vrot.slane %v8854, 5
    %v9080 = vsel %vm8921, %v9079, %v9078
    %v9081 = vrot.slane %v8856, 4
    %v9082 = vsel %vm8924, %v9081, %v9080
    %v9083 = vrot.slane %v8858, 3
    %v9084 = vsel %vm8927, %v9083, %v9082
    %v9085 = vrot.slane %v8860, 2
    %v9086 = vrot.slane %v8862, 1
    %v9087 = vsel %vm8909, %v9086, %v9085
    %v9088 = vsel %vm8912, %v8864, %v9087
    %v9089 = vrot.slane %v8866, 7
    %v9090 = vsel %vm8915, %v9089, %v9088
    %v9091 = vrot.slane %v8868, 6
    %v9092 = vsel %vm8918, %v9091, %v9090
    %v9093 = vrot.slane %v8870, 5
    %v9094 = vsel %vm8921, %v9093, %v9092
    %v9095 = vrot.slane %v8872, 4
    %v9096 = vsel %vm8924, %v9095, %v9094
    %v9097 = vrot.slane %v8874, 3
    %v9098 = vsel %vm8927, %v9097, %v9096
    %9099 = vrot.lane.b32.xlu0 %v9056, 16
    %v9100 = vpop.permute.xlu0 %9099
    %9101 = vrot.lane.b32.xlu0 %v9070, 16
    %v9102 = vpop.permute.xlu0 %9101
    %9103 = vrot.lane.b32.xlu0 %v9084, 16
    %v9104 = vpop.permute.xlu0 %9103
    %9105 = vrot.lane.b32.xlu0 %v9098, 16
    %v9106 = vpop.permute.xlu0 %9105
    %v9111 = vrot.slane %v8812, 3
    %v9112 = vrot.slane %v8814, 2
    %v9113 = vsel %vm8909, %v9112, %v9111
    %v9114 = vrot.slane %v8816, 1
    %v9115 = vsel %vm8912, %v9114, %v9113
    %v9116 = vsel %vm8915, %v8818, %v9115
    %v9117 = vrot.slane %v8820, 7
    %v9118 = vsel %vm8918, %v9117, %v9116
    %v9119 = vrot.slane %v8822, 6
    %v9120 = vsel %vm8921, %v9119, %v9118
    %v9121 = vrot.slane %v8824, 5
    %v9122 = vsel %vm8924, %v9121, %v9120
    %v9123 = vrot.slane %v8826, 4
    %v9124 = vsel %vm8927, %v9123, %v9122
    %v9125 = vrot.slane %v8828, 3
    %v9126 = vrot.slane %v8830, 2
    %v9127 = vsel %vm8909, %v9126, %v9125
    %v9128 = vrot.slane %v8832, 1
    %v9129 = vsel %vm8912, %v9128, %v9127
    %v9130 = vsel %vm8915, %v8834, %v9129
    %v9131 = vrot.slane %v8836, 7
    %v9132 = vsel %vm8918, %v9131, %v9130
    %v9133 = vrot.slane %v8838, 6
    %v9134 = vsel %vm8921, %v9133, %v9132
    %v9135 = vrot.slane %v8840, 5
    %v9136 = vsel %vm8924, %v9135, %v9134
    %v9137 = vrot.slane %v8842, 4
    %v9138 = vsel %vm8927, %v9137, %v9136
    %v9139 = vrot.slane %v8844, 3
    %v9140 = vrot.slane %v8846, 2
    %v9141 = vsel %vm8909, %v9140, %v9139
    %v9142 = vrot.slane %v8848, 1
    %v9143 = vsel %vm8912, %v9142, %v9141
    %v9144 = vsel %vm8915, %v8850, %v9143
    %v9145 = vrot.slane %v8852, 7
    %v9146 = vsel %vm8918, %v9145, %v9144
    %v9147 = vrot.slane %v8854, 6
    %v9148 = vsel %vm8921, %v9147, %v9146
    %v9149 = vrot.slane %v8856, 5
    %v9150 = vsel %vm8924, %v9149, %v9148
    %v9151 = vrot.slane %v8858, 4
    %v9152 = vsel %vm8927, %v9151, %v9150
    %v9153 = vrot.slane %v8860, 3
    %v9154 = vrot.slane %v8862, 2
    %v9155 = vsel %vm8909, %v9154, %v9153
    %v9156 = vrot.slane %v8864, 1
    %v9157 = vsel %vm8912, %v9156, %v9155
    %v9158 = vsel %vm8915, %v8866, %v9157
    %v9159 = vrot.slane %v8868, 7
    %v9160 = vsel %vm8918, %v9159, %v9158
    %v9161 = vrot.slane %v8870, 6
    %v9162 = vsel %vm8921, %v9161, %v9160
    %v9163 = vrot.slane %v8872, 5
    %v9164 = vsel %vm8924, %v9163, %v9162
    %v9165 = vrot.slane %v8874, 4
    %v9166 = vsel %vm8927, %v9165, %v9164
    %9167 = vrot.lane.b32.xlu0 %v9124, 24
    %v9168 = vpop.permute.xlu0 %9167
    %9169 = vrot.lane.b32.xlu0 %v9138, 24
    %v9170 = vpop.permute.xlu0 %9169
    %9171 = vrot.lane.b32.xlu0 %v9152, 24
    %v9172 = vpop.permute.xlu0 %9171
    %9173 = vrot.lane.b32.xlu0 %v9166, 24
    %v9174 = vpop.permute.xlu0 %9173
    %v9179 = vrot.slane %v8812, 4
    %v9180 = vrot.slane %v8814, 3
    %v9181 = vsel %vm8909, %v9180, %v9179
    %v9182 = vrot.slane %v8816, 2
    %v9183 = vsel %vm8912, %v9182, %v9181
    %v9184 = vrot.slane %v8818, 1
    %v9185 = vsel %vm8915, %v9184, %v9183
    %v9186 = vsel %vm8918, %v8820, %v9185
    %v9187 = vrot.slane %v8822, 7
    %v9188 = vsel %vm8921, %v9187, %v9186
    %v9189 = vrot.slane %v8824, 6
    %v9190 = vsel %vm8924, %v9189, %v9188
    %v9191 = vrot.slane %v8826, 5
    %v9192 = vsel %vm8927, %v9191, %v9190
    %v9193 = vrot.slane %v8828, 4
    %v9194 = vrot.slane %v8830, 3
    %v9195 = vsel %vm8909, %v9194, %v9193
    %v9196 = vrot.slane %v8832, 2
    %v9197 = vsel %vm8912, %v9196, %v9195
    %v9198 = vrot.slane %v8834, 1
    %v9199 = vsel %vm8915, %v9198, %v9197
    %v9200 = vsel %vm8918, %v8836, %v9199
    %v9201 = vrot.slane %v8838, 7
    %v9202 = vsel %vm8921, %v9201, %v9200
    %v9203 = vrot.slane %v8840, 6
    %v9204 = vsel %vm8924, %v9203, %v9202
    %v9205 = vrot.slane %v8842, 5
    %v9206 = vsel %vm8927, %v9205, %v9204
    %v9207 = vrot.slane %v8844, 4
    %v9208 = vrot.slane %v8846, 3
    %v9209 = vsel %vm8909, %v9208, %v9207
    %v9210 = vrot.slane %v8848, 2
    %v9211 = vsel %vm8912, %v9210, %v9209
    %v9212 = vrot.slane %v8850, 1
    %v9213 = vsel %vm8915, %v9212, %v9211
    %v9214 = vsel %vm8918, %v8852, %v9213
    %v9215 = vrot.slane %v8854, 7
    %v9216 = vsel %vm8921, %v9215, %v9214
    %v9217 = vrot.slane %v8856, 6
    %v9218 = vsel %vm8924, %v9217, %v9216
    %v9219 = vrot.slane %v8858, 5
    %v9220 = vsel %vm8927, %v9219, %v9218
    %v9221 = vrot.slane %v8860, 4
    %v9222 = vrot.slane %v8862, 3
    %v9223 = vsel %vm8909, %v9222, %v9221
    %v9224 = vrot.slane %v8864, 2
    %v9225 = vsel %vm8912, %v9224, %v9223
    %v9226 = vrot.slane %v8866, 1
    %v9227 = vsel %vm8915, %v9226, %v9225
    %v9228 = vsel %vm8918, %v8868, %v9227
    %v9229 = vrot.slane %v8870, 7
    %v9230 = vsel %vm8921, %v9229, %v9228
    %v9231 = vrot.slane %v8872, 6
    %v9232 = vsel %vm8924, %v9231, %v9230
    %v9233 = vrot.slane %v8874, 5
    %v9234 = vsel %vm8927, %v9233, %v9232
    %9235 = vrot.lane.b32.xlu0 %v9192, 32
    %v9236 = vpop.permute.xlu0 %9235
    %9237 = vrot.lane.b32.xlu0 %v9206, 32
    %v9238 = vpop.permute.xlu0 %9237
    %9239 = vrot.lane.b32.xlu0 %v9220, 32
    %v9240 = vpop.permute.xlu0 %9239
    %9241 = vrot.lane.b32.xlu0 %v9234, 32
    %v9242 = vpop.permute.xlu0 %9241
    %v9247 = vrot.slane %v8812, 5
    %v9248 = vrot.slane %v8814, 4
    %v9249 = vsel %vm8909, %v9248, %v9247
    %v9250 = vrot.slane %v8816, 3
    %v9251 = vsel %vm8912, %v9250, %v9249
    %v9252 = vrot.slane %v8818, 2
    %v9253 = vsel %vm8915, %v9252, %v9251
    %v9254 = vrot.slane %v8820, 1
    %v9255 = vsel %vm8918, %v9254, %v9253
    %v9256 = vsel %vm8921, %v8822, %v9255
    %v9257 = vrot.slane %v8824, 7
    %v9258 = vsel %vm8924, %v9257, %v9256
    %v9259 = vrot.slane %v8826, 6
    %v9260 = vsel %vm8927, %v9259, %v9258
    %v9261 = vrot.slane %v8828, 5
    %v9262 = vrot.slane %v8830, 4
    %v9263 = vsel %vm8909, %v9262, %v9261
    %v9264 = vrot.slane %v8832, 3
    %v9265 = vsel %vm8912, %v9264, %v9263
    %v9266 = vrot.slane %v8834, 2
    %v9267 = vsel %vm8915, %v9266, %v9265
    %v9268 = vrot.slane %v8836, 1
    %v9269 = vsel %vm8918, %v9268, %v9267
    %v9270 = vsel %vm8921, %v8838, %v9269
    %v9271 = vrot.slane %v8840, 7
    %v9272 = vsel %vm8924, %v9271, %v9270
    %v9273 = vrot.slane %v8842, 6
    %v9274 = vsel %vm8927, %v9273, %v9272
    %v9275 = vrot.slane %v8844, 5
    %v9276 = vrot.slane %v8846, 4
    %v9277 = vsel %vm8909, %v9276, %v9275
    %v9278 = vrot.slane %v8848, 3
    %v9279 = vsel %vm8912, %v9278, %v9277
    %v9280 = vrot.slane %v8850, 2
    %v9281 = vsel %vm8915, %v9280, %v9279
    %v9282 = vrot.slane %v8852, 1
    %v9283 = vsel %vm8918, %v9282, %v9281
    %v9284 = vsel %vm8921, %v8854, %v9283
    %v9285 = vrot.slane %v8856, 7
    %v9286 = vsel %vm8924, %v9285, %v9284
    %v9287 = vrot.slane %v8858, 6
    %v9288 = vsel %vm8927, %v9287, %v9286
    %v9289 = vrot.slane %v8860, 5
    %v9290 = vrot.slane %v8862, 4
    %v9291 = vsel %vm8909, %v9290, %v9289
    %v9292 = vrot.slane %v8864, 3
    %v9293 = vsel %vm8912, %v9292, %v9291
    %v9294 = vrot.slane %v8866, 2
    %v9295 = vsel %vm8915, %v9294, %v9293
    %v9296 = vrot.slane %v8868, 1
    %v9297 = vsel %vm8918, %v9296, %v9295
    %v9298 = vsel %vm8921, %v8870, %v9297
    %v9299 = vrot.slane %v8872, 7
    %v9300 = vsel %vm8924, %v9299, %v9298
    %v9301 = vrot.slane %v8874, 6
    %v9302 = vsel %vm8927, %v9301, %v9300
    %9303 = vrot.lane.b32.xlu0 %v9260, 40
    %v9304 = vpop.permute.xlu0 %9303
    %9305 = vrot.lane.b32.xlu0 %v9274, 40
    %v9306 = vpop.permute.xlu0 %9305
    %9307 = vrot.lane.b32.xlu0 %v9288, 40
    %v9308 = vpop.permute.xlu0 %9307
    %9309 = vrot.lane.b32.xlu0 %v9302, 40
    %v9310 = vpop.permute.xlu0 %9309
    %v9315 = vrot.slane %v8812, 6
    %v9316 = vrot.slane %v8814, 5
    %v9317 = vsel %vm8909, %v9316, %v9315
    %v9318 = vrot.slane %v8816, 4
    %v9319 = vsel %vm8912, %v9318, %v9317
    %v9320 = vrot.slane %v8818, 3
    %v9321 = vsel %vm8915, %v9320, %v9319
    %v9322 = vrot.slane %v8820, 2
    %v9323 = vsel %vm8918, %v9322, %v9321
    %v9324 = vrot.slane %v8822, 1
    %v9325 = vsel %vm8921, %v9324, %v9323
    %v9326 = vsel %vm8924, %v8824, %v9325
    %v9327 = vrot.slane %v8826, 7
    %v9328 = vsel %vm8927, %v9327, %v9326
    %v9329 = vrot.slane %v8828, 6
    %v9330 = vrot.slane %v8830, 5
    %v9331 = vsel %vm8909, %v9330, %v9329
    %v9332 = vrot.slane %v8832, 4
    %v9333 = vsel %vm8912, %v9332, %v9331
    %v9334 = vrot.slane %v8834, 3
    %v9335 = vsel %vm8915, %v9334, %v9333
    %v9336 = vrot.slane %v8836, 2
    %v9337 = vsel %vm8918, %v9336, %v9335
    %v9338 = vrot.slane %v8838, 1
    %v9339 = vsel %vm8921, %v9338, %v9337
    %v9340 = vsel %vm8924, %v8840, %v9339
    %v9341 = vrot.slane %v8842, 7
    %v9342 = vsel %vm8927, %v9341, %v9340
    %v9343 = vrot.slane %v8844, 6
    %v9344 = vrot.slane %v8846, 5
    %v9345 = vsel %vm8909, %v9344, %v9343
    %v9346 = vrot.slane %v8848, 4
    %v9347 = vsel %vm8912, %v9346, %v9345
    %v9348 = vrot.slane %v8850, 3
    %v9349 = vsel %vm8915, %v9348, %v9347
    %v9350 = vrot.slane %v8852, 2
    %v9351 = vsel %vm8918, %v9350, %v9349
    %v9352 = vrot.slane %v8854, 1
    %v9353 = vsel %vm8921, %v9352, %v9351
    %v9354 = vsel %vm8924, %v8856, %v9353
    %v9355 = vrot.slane %v8858, 7
    %v9356 = vsel %vm8927, %v9355, %v9354
    %v9357 = vrot.slane %v8860, 6
    %v9358 = vrot.slane %v8862, 5
    %v9359 = vsel %vm8909, %v9358, %v9357
    %v9360 = vrot.slane %v8864, 4
    %v9361 = vsel %vm8912, %v9360, %v9359
    %v9362 = vrot.slane %v8866, 3
    %v9363 = vsel %vm8915, %v9362, %v9361
    %v9364 = vrot.slane %v8868, 2
    %v9365 = vsel %vm8918, %v9364, %v9363
    %v9366 = vrot.slane %v8870, 1
    %v9367 = vsel %vm8921, %v9366, %v9365
    %v9368 = vsel %vm8924, %v8872, %v9367
    %v9369 = vrot.slane %v8874, 7
    %v9370 = vsel %vm8927, %v9369, %v9368
    %9371 = vrot.lane.b32.xlu0 %v9328, 48
    %v9372 = vpop.permute.xlu0 %9371
    %9373 = vrot.lane.b32.xlu0 %v9342, 48
    %v9374 = vpop.permute.xlu0 %9373
    %9375 = vrot.lane.b32.xlu0 %v9356, 48
    %v9376 = vpop.permute.xlu0 %9375
    %9377 = vrot.lane.b32.xlu0 %v9370, 48
    %v9378 = vpop.permute.xlu0 %9377
    %v9383 = vrot.slane %v8812, 7
    %v9384 = vrot.slane %v8814, 6
    %v9385 = vsel %vm8909, %v9384, %v9383
    %v9386 = vrot.slane %v8816, 5
    %v9387 = vsel %vm8912, %v9386, %v9385
    %v9388 = vrot.slane %v8818, 4
    %v9389 = vsel %vm8915, %v9388, %v9387
    %v9390 = vrot.slane %v8820, 3
    %v9391 = vsel %vm8918, %v9390, %v9389
    %v9392 = vrot.slane %v8822, 2
    %v9393 = vsel %vm8921, %v9392, %v9391
    %v9394 = vrot.slane %v8824, 1
    %v9395 = vsel %vm8924, %v9394, %v9393
    %v9396 = vsel %vm8927, %v8826, %v9395
    %v9397 = vrot.slane %v8828, 7
    %v9398 = vrot.slane %v8830, 6
    %v9399 = vsel %vm8909, %v9398, %v9397
    %v9400 = vrot.slane %v8832, 5
    %v9401 = vsel %vm8912, %v9400, %v9399
    %v9402 = vrot.slane %v8834, 4
    %v9403 = vsel %vm8915, %v9402, %v9401
    %v9404 = vrot.slane %v8836, 3
    %v9405 = vsel %vm8918, %v9404, %v9403
    %v9406 = vrot.slane %v8838, 2
    %v9407 = vsel %vm8921, %v9406, %v9405
    %v9408 = vrot.slane %v8840, 1
    %v9409 = vsel %vm8924, %v9408, %v9407
    %v9410 = vsel %vm8927, %v8842, %v9409
    %v9411 = vrot.slane %v8844, 7
    %v9412 = vrot.slane %v8846, 6
    %v9413 = vsel %vm8909, %v9412, %v9411
    %v9414 = vrot.slane %v8848, 5
    %v9415 = vsel %vm8912, %v9414, %v9413
    %v9416 = vrot.slane %v8850, 4
    %v9417 = vsel %vm8915, %v9416, %v9415
    %v9418 = vrot.slane %v8852, 3
    %v9419 = vsel %vm8918, %v9418, %v9417
    %v9420 = vrot.slane %v8854, 2
    %v9421 = vsel %vm8921, %v9420, %v9419
    %v9422 = vrot.slane %v8856, 1
    %v9423 = vsel %vm8924, %v9422, %v9421
    %v9424 = vsel %vm8927, %v8858, %v9423
    %v9425 = vrot.slane %v8860, 7
    %v9426 = vrot.slane %v8862, 6
    %v9427 = vsel %vm8909, %v9426, %v9425
    %v9428 = vrot.slane %v8864, 5
    %v9429 = vsel %vm8912, %v9428, %v9427
    %v9430 = vrot.slane %v8866, 4
    %v9431 = vsel %vm8915, %v9430, %v9429
    %v9432 = vrot.slane %v8868, 3
    %v9433 = vsel %vm8918, %v9432, %v9431
    %v9434 = vrot.slane %v8870, 2
    %v9435 = vsel %vm8921, %v9434, %v9433
    %v9436 = vrot.slane %v8872, 1
    %v9437 = vsel %vm8924, %v9436, %v9435
    %v9438 = vsel %vm8927, %v8874, %v9437
    %9439 = vrot.lane.b32.xlu0 %v9396, 56
    %v9440 = vpop.permute.xlu0 %9439
    %9441 = vrot.lane.b32.xlu0 %v9410, 56
    %v9442 = vpop.permute.xlu0 %9441
    %9443 = vrot.lane.b32.xlu0 %v9424, 56
    %v9444 = vpop.permute.xlu0 %9443
    %9445 = vrot.lane.b32.xlu0 %v9438, 56
    %v9446 = vpop.permute.xlu0 %9445
    %v9483 = vrot.slane %v8815, 7
    %v9484 = vsel %vm8909, %v9483, %v8813
    %v9485 = vrot.slane %v8817, 6
    %v9486 = vsel %vm8912, %v9485, %v9484
    %v9487 = vrot.slane %v8819, 5
    %v9488 = vsel %vm8915, %v9487, %v9486
    %v9489 = vrot.slane %v8821, 4
    %v9490 = vsel %vm8918, %v9489, %v9488
    %v9491 = vrot.slane %v8823, 3
    %v9492 = vsel %vm8921, %v9491, %v9490
    %v9493 = vrot.slane %v8825, 2
    %v9494 = vsel %vm8924, %v9493, %v9492
    %v9495 = vrot.slane %v8827, 1
    %v9496 = vsel %vm8927, %v9495, %v9494
    %v9497 = vrot.slane %v8831, 7
    %v9498 = vsel %vm8909, %v9497, %v8829
    %v9499 = vrot.slane %v8833, 6
    %v9500 = vsel %vm8912, %v9499, %v9498
    %v9501 = vrot.slane %v8835, 5
    %v9502 = vsel %vm8915, %v9501, %v9500
    %v9503 = vrot.slane %v8837, 4
    %v9504 = vsel %vm8918, %v9503, %v9502
    %v9505 = vrot.slane %v8839, 3
    %v9506 = vsel %vm8921, %v9505, %v9504
    %v9507 = vrot.slane %v8841, 2
    %v9508 = vsel %vm8924, %v9507, %v9506
    %v9509 = vrot.slane %v8843, 1
    %v9510 = vsel %vm8927, %v9509, %v9508
    %v9511 = vrot.slane %v8847, 7
    %v9512 = vsel %vm8909, %v9511, %v8845
    %v9513 = vrot.slane %v8849, 6
    %v9514 = vsel %vm8912, %v9513, %v9512
    %v9515 = vrot.slane %v8851, 5
    %v9516 = vsel %vm8915, %v9515, %v9514
    %v9517 = vrot.slane %v8853, 4
    %v9518 = vsel %vm8918, %v9517, %v9516
    %v9519 = vrot.slane %v8855, 3
    %v9520 = vsel %vm8921, %v9519, %v9518
    %v9521 = vrot.slane %v8857, 2
    %v9522 = vsel %vm8924, %v9521, %v9520
    %v9523 = vrot.slane %v8859, 1
    %v9524 = vsel %vm8927, %v9523, %v9522
    %v9525 = vrot.slane %v8863, 7
    %v9526 = vsel %vm8909, %v9525, %v8861
    %v9527 = vrot.slane %v8865, 6
    %v9528 = vsel %vm8912, %v9527, %v9526
    %v9529 = vrot.slane %v8867, 5
    %v9530 = vsel %vm8915, %v9529, %v9528
    %v9531 = vrot.slane %v8869, 4
    %v9532 = vsel %vm8918, %v9531, %v9530
    %v9533 = vrot.slane %v8871, 3
    %v9534 = vsel %vm8921, %v9533, %v9532
    %v9535 = vrot.slane %v8873, 2
    %v9536 = vsel %vm8924, %v9535, %v9534
    %v9537 = vrot.slane %v8875, 1
    %v9538 = vsel %vm8927, %v9537, %v9536
    %9539 = vrot.lane.b32.xlu0 %v9496, 64
    %v9540 = vpop.permute.xlu0 %9539
    %9541 = vrot.lane.b32.xlu0 %v9510, 64
    %v9542 = vpop.permute.xlu0 %9541
    %9543 = vrot.lane.b32.xlu0 %v9524, 64
    %v9544 = vpop.permute.xlu0 %9543
    %9545 = vrot.lane.b32.xlu0 %v9538, 64
    %v9546 = vpop.permute.xlu0 %9545
    %v9551 = vrot.slane %v8813, 1
    %v9552 = vsel %vm8909, %v8815, %v9551
    %v9553 = vrot.slane %v8817, 7
    %v9554 = vsel %vm8912, %v9553, %v9552
    %v9555 = vrot.slane %v8819, 6
    %v9556 = vsel %vm8915, %v9555, %v9554
    %v9557 = vrot.slane %v8821, 5
    %v9558 = vsel %vm8918, %v9557, %v9556
    %v9559 = vrot.slane %v8823, 4
    %v9560 = vsel %vm8921, %v9559, %v9558
    %v9561 = vrot.slane %v8825, 3
    %v9562 = vsel %vm8924, %v9561, %v9560
    %v9563 = vrot.slane %v8827, 2
    %v9564 = vsel %vm8927, %v9563, %v9562
    %v9565 = vrot.slane %v8829, 1
    %v9566 = vsel %vm8909, %v8831, %v9565
    %v9567 = vrot.slane %v8833, 7
    %v9568 = vsel %vm8912, %v9567, %v9566
    %v9569 = vrot.slane %v8835, 6
    %v9570 = vsel %vm8915, %v9569, %v9568
    %v9571 = vrot.slane %v8837, 5
    %v9572 = vsel %vm8918, %v9571, %v9570
    %v9573 = vrot.slane %v8839, 4
    %v9574 = vsel %vm8921, %v9573, %v9572
    %v9575 = vrot.slane %v8841, 3
    %v9576 = vsel %vm8924, %v9575, %v9574
    %v9577 = vrot.slane %v8843, 2
    %v9578 = vsel %vm8927, %v9577, %v9576
    %v9579 = vrot.slane %v8845, 1
    %v9580 = vsel %vm8909, %v8847, %v9579
    %v9581 = vrot.slane %v8849, 7
    %v9582 = vsel %vm8912, %v9581, %v9580
    %v9583 = vrot.slane %v8851, 6
    %v9584 = vsel %vm8915, %v9583, %v9582
    %v9585 = vrot.slane %v8853, 5
    %v9586 = vsel %vm8918, %v9585, %v9584
    %v9587 = vrot.slane %v8855, 4
    %v9588 = vsel %vm8921, %v9587, %v9586
    %v9589 = vrot.slane %v8857, 3
    %v9590 = vsel %vm8924, %v9589, %v9588
    %v9591 = vrot.slane %v8859, 2
    %v9592 = vsel %vm8927, %v9591, %v9590
    %v9593 = vrot.slane %v8861, 1
    %v9594 = vsel %vm8909, %v8863, %v9593
    %v9595 = vrot.slane %v8865, 7
    %v9596 = vsel %vm8912, %v9595, %v9594
    %v9597 = vrot.slane %v8867, 6
    %v9598 = vsel %vm8915, %v9597, %v9596
    %v9599 = vrot.slane %v8869, 5
    %v9600 = vsel %vm8918, %v9599, %v9598
    %v9601 = vrot.slane %v8871, 4
    %v9602 = vsel %vm8921, %v9601, %v9600
    %v9603 = vrot.slane %v8873, 3
    %v9604 = vsel %vm8924, %v9603, %v9602
    %v9605 = vrot.slane %v8875, 2
    %v9606 = vsel %vm8927, %v9605, %v9604
    %9607 = vrot.lane.b32.xlu0 %v9564, 72
    %v9608 = vpop.permute.xlu0 %9607
    %9609 = vrot.lane.b32.xlu0 %v9578, 72
    %v9610 = vpop.permute.xlu0 %9609
    %9611 = vrot.lane.b32.xlu0 %v9592, 72
    %v9612 = vpop.permute.xlu0 %9611
    %9613 = vrot.lane.b32.xlu0 %v9606, 72
    %v9614 = vpop.permute.xlu0 %9613
    %v9619 = vrot.slane %v8813, 2
    %v9620 = vrot.slane %v8815, 1
    %v9621 = vsel %vm8909, %v9620, %v9619
    %v9622 = vsel %vm8912, %v8817, %v9621
    %v9623 = vrot.slane %v8819, 7
    %v9624 = vsel %vm8915, %v9623, %v9622
    %v9625 = vrot.slane %v8821, 6
    %v9626 = vsel %vm8918, %v9625, %v9624
    %v9627 = vrot.slane %v8823, 5
    %v9628 = vsel %vm8921, %v9627, %v9626
    %v9629 = vrot.slane %v8825, 4
    %v9630 = vsel %vm8924, %v9629, %v9628
    %v9631 = vrot.slane %v8827, 3
    %v9632 = vsel %vm8927, %v9631, %v9630
    %v9633 = vrot.slane %v8829, 2
    %v9634 = vrot.slane %v8831, 1
    %v9635 = vsel %vm8909, %v9634, %v9633
    %v9636 = vsel %vm8912, %v8833, %v9635
    %v9637 = vrot.slane %v8835, 7
    %v9638 = vsel %vm8915, %v9637, %v9636
    %v9639 = vrot.slane %v8837, 6
    %v9640 = vsel %vm8918, %v9639, %v9638
    %v9641 = vrot.slane %v8839, 5
    %v9642 = vsel %vm8921, %v9641, %v9640
    %v9643 = vrot.slane %v8841, 4
    %v9644 = vsel %vm8924, %v9643, %v9642
    %v9645 = vrot.slane %v8843, 3
    %v9646 = vsel %vm8927, %v9645, %v9644
    %v9647 = vrot.slane %v8845, 2
    %v9648 = vrot.slane %v8847, 1
    %v9649 = vsel %vm8909, %v9648, %v9647
    %v9650 = vsel %vm8912, %v8849, %v9649
    %v9651 = vrot.slane %v8851, 7
    %v9652 = vsel %vm8915, %v9651, %v9650
    %v9653 = vrot.slane %v8853, 6
    %v9654 = vsel %vm8918, %v9653, %v9652
    %v9655 = vrot.slane %v8855, 5
    %v9656 = vsel %vm8921, %v9655, %v9654
    %v9657 = vrot.slane %v8857, 4
    %v9658 = vsel %vm8924, %v9657, %v9656
    %v9659 = vrot.slane %v8859, 3
    %v9660 = vsel %vm8927, %v9659, %v9658
    %v9661 = vrot.slane %v8861, 2
    %v9662 = vrot.slane %v8863, 1
    %v9663 = vsel %vm8909, %v9662, %v9661
    %v9664 = vsel %vm8912, %v8865, %v9663
    %v9665 = vrot.slane %v8867, 7
    %v9666 = vsel %vm8915, %v9665, %v9664
    %v9667 = vrot.slane %v8869, 6
    %v9668 = vsel %vm8918, %v9667, %v9666
    %v9669 = vrot.slane %v8871, 5
    %v9670 = vsel %vm8921, %v9669, %v9668
    %v9671 = vrot.slane %v8873, 4
    %v9672 = vsel %vm8924, %v9671, %v9670
    %v9673 = vrot.slane %v8875, 3
    %v9674 = vsel %vm8927, %v9673, %v9672
    %9675 = vrot.lane.b32.xlu0 %v9632, 80
    %v9676 = vpop.permute.xlu0 %9675
    %9677 = vrot.lane.b32.xlu0 %v9646, 80
    %v9678 = vpop.permute.xlu0 %9677
    %9679 = vrot.lane.b32.xlu0 %v9660, 80
    %v9680 = vpop.permute.xlu0 %9679
    %9681 = vrot.lane.b32.xlu0 %v9674, 80
    %v9682 = vpop.permute.xlu0 %9681
    %v9687 = vrot.slane %v8813, 3
    %v9688 = vrot.slane %v8815, 2
    %v9689 = vsel %vm8909, %v9688, %v9687
    %v9690 = vrot.slane %v8817, 1
    %v9691 = vsel %vm8912, %v9690, %v9689
    %v9692 = vsel %vm8915, %v8819, %v9691
    %v9693 = vrot.slane %v8821, 7
    %v9694 = vsel %vm8918, %v9693, %v9692
    %v9695 = vrot.slane %v8823, 6
    %v9696 = vsel %vm8921, %v9695, %v9694
    %v9697 = vrot.slane %v8825, 5
    %v9698 = vsel %vm8924, %v9697, %v9696
    %v9699 = vrot.slane %v8827, 4
    %v9700 = vsel %vm8927, %v9699, %v9698
    %v9701 = vrot.slane %v8829, 3
    %v9702 = vrot.slane %v8831, 2
    %v9703 = vsel %vm8909, %v9702, %v9701
    %v9704 = vrot.slane %v8833, 1
    %v9705 = vsel %vm8912, %v9704, %v9703
    %v9706 = vsel %vm8915, %v8835, %v9705
    %v9707 = vrot.slane %v8837, 7
    %v9708 = vsel %vm8918, %v9707, %v9706
    %v9709 = vrot.slane %v8839, 6
    %v9710 = vsel %vm8921, %v9709, %v9708
    %v9711 = vrot.slane %v8841, 5
    %v9712 = vsel %vm8924, %v9711, %v9710
    %v9713 = vrot.slane %v8843, 4
    %v9714 = vsel %vm8927, %v9713, %v9712
    %v9715 = vrot.slane %v8845, 3
    %v9716 = vrot.slane %v8847, 2
    %v9717 = vsel %vm8909, %v9716, %v9715
    %v9718 = vrot.slane %v8849, 1
    %v9719 = vsel %vm8912, %v9718, %v9717
    %v9720 = vsel %vm8915, %v8851, %v9719
    %v9721 = vrot.slane %v8853, 7
    %v9722 = vsel %vm8918, %v9721, %v9720
    %v9723 = vrot.slane %v8855, 6
    %v9724 = vsel %vm8921, %v9723, %v9722
    %v9725 = vrot.slane %v8857, 5
    %v9726 = vsel %vm8924, %v9725, %v9724
    %v9727 = vrot.slane %v8859, 4
    %v9728 = vsel %vm8927, %v9727, %v9726
    %v9729 = vrot.slane %v8861, 3
    %v9730 = vrot.slane %v8863, 2
    %v9731 = vsel %vm8909, %v9730, %v9729
    %v9732 = vrot.slane %v8865, 1
    %v9733 = vsel %vm8912, %v9732, %v9731
    %v9734 = vsel %vm8915, %v8867, %v9733
    %v9735 = vrot.slane %v8869, 7
    %v9736 = vsel %vm8918, %v9735, %v9734
    %v9737 = vrot.slane %v8871, 6
    %v9738 = vsel %vm8921, %v9737, %v9736
    %v9739 = vrot.slane %v8873, 5
    %v9740 = vsel %vm8924, %v9739, %v9738
    %v9741 = vrot.slane %v8875, 4
    %v9742 = vsel %vm8927, %v9741, %v9740
    %9743 = vrot.lane.b32.xlu0 %v9700, 88
    %v9744 = vpop.permute.xlu0 %9743
    %9745 = vrot.lane.b32.xlu0 %v9714, 88
    %v9746 = vpop.permute.xlu0 %9745
    %9747 = vrot.lane.b32.xlu0 %v9728, 88
    %v9748 = vpop.permute.xlu0 %9747
    %9749 = vrot.lane.b32.xlu0 %v9742, 88
    %v9750 = vpop.permute.xlu0 %9749
    %v9755 = vrot.slane %v8813, 4
    %v9756 = vrot.slane %v8815, 3
    %v9757 = vsel %vm8909, %v9756, %v9755
    %v9758 = vrot.slane %v8817, 2
    %v9759 = vsel %vm8912, %v9758, %v9757
    %v9760 = vrot.slane %v8819, 1
    %v9761 = vsel %vm8915, %v9760, %v9759
    %v9762 = vsel %vm8918, %v8821, %v9761
    %v9763 = vrot.slane %v8823, 7
    %v9764 = vsel %vm8921, %v9763, %v9762
    %v9765 = vrot.slane %v8825, 6
    %v9766 = vsel %vm8924, %v9765, %v9764
    %v9767 = vrot.slane %v8827, 5
    %v9768 = vsel %vm8927, %v9767, %v9766
    %v9769 = vrot.slane %v8829, 4
    %v9770 = vrot.slane %v8831, 3
    %v9771 = vsel %vm8909, %v9770, %v9769
    %v9772 = vrot.slane %v8833, 2
    %v9773 = vsel %vm8912, %v9772, %v9771
    %v9774 = vrot.slane %v8835, 1
    %v9775 = vsel %vm8915, %v9774, %v9773
    %v9776 = vsel %vm8918, %v8837, %v9775
    %v9777 = vrot.slane %v8839, 7
    %v9778 = vsel %vm8921, %v9777, %v9776
    %v9779 = vrot.slane %v8841, 6
    %v9780 = vsel %vm8924, %v9779, %v9778
    %v9781 = vrot.slane %v8843, 5
    %v9782 = vsel %vm8927, %v9781, %v9780
    %v9783 = vrot.slane %v8845, 4
    %v9784 = vrot.slane %v8847, 3
    %v9785 = vsel %vm8909, %v9784, %v9783
    %v9786 = vrot.slane %v8849, 2
    %v9787 = vsel %vm8912, %v9786, %v9785
    %v9788 = vrot.slane %v8851, 1
    %v9789 = vsel %vm8915, %v9788, %v9787
    %v9790 = vsel %vm8918, %v8853, %v9789
    %v9791 = vrot.slane %v8855, 7
    %v9792 = vsel %vm8921, %v9791, %v9790
    %v9793 = vrot.slane %v8857, 6
    %v9794 = vsel %vm8924, %v9793, %v9792
    %v9795 = vrot.slane %v8859, 5
    %v9796 = vsel %vm8927, %v9795, %v9794
    %v9797 = vrot.slane %v8861, 4
    %v9798 = vrot.slane %v8863, 3
    %v9799 = vsel %vm8909, %v9798, %v9797
    %v9800 = vrot.slane %v8865, 2
    %v9801 = vsel %vm8912, %v9800, %v9799
    %v9802 = vrot.slane %v8867, 1
    %v9803 = vsel %vm8915, %v9802, %v9801
    %v9804 = vsel %vm8918, %v8869, %v9803
    %v9805 = vrot.slane %v8871, 7
    %v9806 = vsel %vm8921, %v9805, %v9804
    %v9807 = vrot.slane %v8873, 6
    %v9808 = vsel %vm8924, %v9807, %v9806
    %v9809 = vrot.slane %v8875, 5
    %v9810 = vsel %vm8927, %v9809, %v9808
    %9811 = vrot.lane.b32.xlu0 %v9768, 96
    %v9812 = vpop.permute.xlu0 %9811
    %9813 = vrot.lane.b32.xlu0 %v9782, 96
    %v9814 = vpop.permute.xlu0 %9813
    %9815 = vrot.lane.b32.xlu0 %v9796, 96
    %v9816 = vpop.permute.xlu0 %9815
    %9817 = vrot.lane.b32.xlu0 %v9810, 96
    %v9818 = vpop.permute.xlu0 %9817
    %v9823 = vrot.slane %v8813, 5
    %v9824 = vrot.slane %v8815, 4
    %v9825 = vsel %vm8909, %v9824, %v9823
    %v9826 = vrot.slane %v8817, 3
    %v9827 = vsel %vm8912, %v9826, %v9825
    %v9828 = vrot.slane %v8819, 2
    %v9829 = vsel %vm8915, %v9828, %v9827
    %v9830 = vrot.slane %v8821, 1
    %v9831 = vsel %vm8918, %v9830, %v9829
    %v9832 = vsel %vm8921, %v8823, %v9831
    %v9833 = vrot.slane %v8825, 7
    %v9834 = vsel %vm8924, %v9833, %v9832
    %v9835 = vrot.slane %v8827, 6
    %v9836 = vsel %vm8927, %v9835, %v9834
    %v9837 = vrot.slane %v8829, 5
    %v9838 = vrot.slane %v8831, 4
    %v9839 = vsel %vm8909, %v9838, %v9837
    %v9840 = vrot.slane %v8833, 3
    %v9841 = vsel %vm8912, %v9840, %v9839
    %v9842 = vrot.slane %v8835, 2
    %v9843 = vsel %vm8915, %v9842, %v9841
    %v9844 = vrot.slane %v8837, 1
    %v9845 = vsel %vm8918, %v9844, %v9843
    %v9846 = vsel %vm8921, %v8839, %v9845
    %v9847 = vrot.slane %v8841, 7
    %v9848 = vsel %vm8924, %v9847, %v9846
    %v9849 = vrot.slane %v8843, 6
    %v9850 = vsel %vm8927, %v9849, %v9848
    %v9851 = vrot.slane %v8845, 5
    %v9852 = vrot.slane %v8847, 4
    %v9853 = vsel %vm8909, %v9852, %v9851
    %v9854 = vrot.slane %v8849, 3
    %v9855 = vsel %vm8912, %v9854, %v9853
    %v9856 = vrot.slane %v8851, 2
    %v9857 = vsel %vm8915, %v9856, %v9855
    %v9858 = vrot.slane %v8853, 1
    %v9859 = vsel %vm8918, %v9858, %v9857
    %v9860 = vsel %vm8921, %v8855, %v9859
    %v9861 = vrot.slane %v8857, 7
    %v9862 = vsel %vm8924, %v9861, %v9860
    %v9863 = vrot.slane %v8859, 6
    %v9864 = vsel %vm8927, %v9863, %v9862
    %v9865 = vrot.slane %v8861, 5
    %v9866 = vrot.slane %v8863, 4
    %v9867 = vsel %vm8909, %v9866, %v9865
    %v9868 = vrot.slane %v8865, 3
    %v9869 = vsel %vm8912, %v9868, %v9867
    %v9870 = vrot.slane %v8867, 2
    %v9871 = vsel %vm8915, %v9870, %v9869
    %v9872 = vrot.slane %v8869, 1
    %v9873 = vsel %vm8918, %v9872, %v9871
    %v9874 = vsel %vm8921, %v8871, %v9873
    %v9875 = vrot.slane %v8873, 7
    %v9876 = vsel %vm8924, %v9875, %v9874
    %v9877 = vrot.slane %v8875, 6
    %v9878 = vsel %vm8927, %v9877, %v9876
    %9879 = vrot.lane.b32.xlu0 %v9836, 104
    %v9880 = vpop.permute.xlu0 %9879
    %9881 = vrot.lane.b32.xlu0 %v9850, 104
    %v9882 = vpop.permute.xlu0 %9881
    %9883 = vrot.lane.b32.xlu0 %v9864, 104
    %v9884 = vpop.permute.xlu0 %9883
    %9885 = vrot.lane.b32.xlu0 %v9878, 104
    %v9886 = vpop.permute.xlu0 %9885
    %v9891 = vrot.slane %v8813, 6
    %v9892 = vrot.slane %v8815, 5
    %v9893 = vsel %vm8909, %v9892, %v9891
    %v9894 = vrot.slane %v8817, 4
    %v9895 = vsel %vm8912, %v9894, %v9893
    %v9896 = vrot.slane %v8819, 3
    %v9897 = vsel %vm8915, %v9896, %v9895
    %v9898 = vrot.slane %v8821, 2
    %v9899 = vsel %vm8918, %v9898, %v9897
    %v9900 = vrot.slane %v8823, 1
    %v9901 = vsel %vm8921, %v9900, %v9899
    %v9902 = vsel %vm8924, %v8825, %v9901
    %v9903 = vrot.slane %v8827, 7
    %v9904 = vsel %vm8927, %v9903, %v9902
    %v9905 = vrot.slane %v8829, 6
    %v9906 = vrot.slane %v8831, 5
    %v9907 = vsel %vm8909, %v9906, %v9905
    %v9908 = vrot.slane %v8833, 4
    %v9909 = vsel %vm8912, %v9908, %v9907
    %v9910 = vrot.slane %v8835, 3
    %v9911 = vsel %vm8915, %v9910, %v9909
    %v9912 = vrot.slane %v8837, 2
    %v9913 = vsel %vm8918, %v9912, %v9911
    %v9914 = vrot.slane %v8839, 1
    %v9915 = vsel %vm8921, %v9914, %v9913
    %v9916 = vsel %vm8924, %v8841, %v9915
    %v9917 = vrot.slane %v8843, 7
    %v9918 = vsel %vm8927, %v9917, %v9916
    %v9919 = vrot.slane %v8845, 6
    %v9920 = vrot.slane %v8847, 5
    %v9921 = vsel %vm8909, %v9920, %v9919
    %v9922 = vrot.slane %v8849, 4
    %v9923 = vsel %vm8912, %v9922, %v9921
    %v9924 = vrot.slane %v8851, 3
    %v9925 = vsel %vm8915, %v9924, %v9923
    %v9926 = vrot.slane %v8853, 2
    %v9927 = vsel %vm8918, %v9926, %v9925
    %v9928 = vrot.slane %v8855, 1
    %v9929 = vsel %vm8921, %v9928, %v9927
    %v9930 = vsel %vm8924, %v8857, %v9929
    %v9931 = vrot.slane %v8859, 7
    %v9932 = vsel %vm8927, %v9931, %v9930
    %v9933 = vrot.slane %v8861, 6
    %v9934 = vrot.slane %v8863, 5
    %v9935 = vsel %vm8909, %v9934, %v9933
    %v9936 = vrot.slane %v8865, 4
    %v9937 = vsel %vm8912, %v9936, %v9935
    %v9938 = vrot.slane %v8867, 3
    %v9939 = vsel %vm8915, %v9938, %v9937
    %v9940 = vrot.slane %v8869, 2
    %v9941 = vsel %vm8918, %v9940, %v9939
    %v9942 = vrot.slane %v8871, 1
    %v9943 = vsel %vm8921, %v9942, %v9941
    %v9944 = vsel %vm8924, %v8873, %v9943
    %v9945 = vrot.slane %v8875, 7
    %v9946 = vsel %vm8927, %v9945, %v9944
    %9947 = vrot.lane.b32.xlu0 %v9904, 112
    %v9948 = vpop.permute.xlu0 %9947
    %9949 = vrot.lane.b32.xlu0 %v9918, 112
    %v9950 = vpop.permute.xlu0 %9949
    %9951 = vrot.lane.b32.xlu0 %v9932, 112
    %v9952 = vpop.permute.xlu0 %9951
    %9953 = vrot.lane.b32.xlu0 %v9946, 112
    %v9954 = vpop.permute.xlu0 %9953
    %v9959 = vrot.slane %v8813, 7
    %v9960 = vrot.slane %v8815, 6
    %v9961 = vsel %vm8909, %v9960, %v9959
    %v9962 = vrot.slane %v8817, 5
    %v9963 = vsel %vm8912, %v9962, %v9961
    %v9964 = vrot.slane %v8819, 4
    %v9965 = vsel %vm8915, %v9964, %v9963
    %v9966 = vrot.slane %v8821, 3
    %v9967 = vsel %vm8918, %v9966, %v9965
    %v9968 = vrot.slane %v8823, 2
    %v9969 = vsel %vm8921, %v9968, %v9967
    %v9970 = vrot.slane %v8825, 1
    %v9971 = vsel %vm8924, %v9970, %v9969
    %v9972 = vsel %vm8927, %v8827, %v9971
    %v9973 = vrot.slane %v8829, 7
    %v9974 = vrot.slane %v8831, 6
    %v9975 = vsel %vm8909, %v9974, %v9973
    %v9976 = vrot.slane %v8833, 5
    %v9977 = vsel %vm8912, %v9976, %v9975
    %v9978 = vrot.slane %v8835, 4
    %v9979 = vsel %vm8915, %v9978, %v9977
    %v9980 = vrot.slane %v8837, 3
    %v9981 = vsel %vm8918, %v9980, %v9979
    %v9982 = vrot.slane %v8839, 2
    %v9983 = vsel %vm8921, %v9982, %v9981
    %v9984 = vrot.slane %v8841, 1
    %v9985 = vsel %vm8924, %v9984, %v9983
    %v9986 = vsel %vm8927, %v8843, %v9985
    %v9987 = vrot.slane %v8845, 7
    %v9988 = vrot.slane %v8847, 6
    %v9989 = vsel %vm8909, %v9988, %v9987
    %v9990 = vrot.slane %v8849, 5
    %v9991 = vsel %vm8912, %v9990, %v9989
    %v9992 = vrot.slane %v8851, 4
    %v9993 = vsel %vm8915, %v9992, %v9991
    %v9994 = vrot.slane %v8853, 3
    %v9995 = vsel %vm8918, %v9994, %v9993
    %v9996 = vrot.slane %v8855, 2
    %v9997 = vsel %vm8921, %v9996, %v9995
    %v9998 = vrot.slane %v8857, 1
    %v9999 = vsel %vm8924, %v9998, %v9997
    %v10000 = vsel %vm8927, %v8859, %v9999
    %v10001 = vrot.slane %v8861, 7
    %v10002 = vrot.slane %v8863, 6
    %v10003 = vsel %vm8909, %v10002, %v10001
    %v10004 = vrot.slane %v8865, 5
    %v10005 = vsel %vm8912, %v10004, %v10003
    %v10006 = vrot.slane %v8867, 4
    %v10007 = vsel %vm8915, %v10006, %v10005
    %v10008 = vrot.slane %v8869, 3
    %v10009 = vsel %vm8918, %v10008, %v10007
    %v10010 = vrot.slane %v8871, 2
    %v10011 = vsel %vm8921, %v10010, %v10009
    %v10012 = vrot.slane %v8873, 1
    %v10013 = vsel %vm8924, %v10012, %v10011
    %v10014 = vsel %vm8927, %v8875, %v10013
    %10015 = vrot.lane.b32.xlu0 %v9972, 120
    %v10016 = vpop.permute.xlu0 %10015
    %10017 = vrot.lane.b32.xlu0 %v9986, 120
    %v10018 = vpop.permute.xlu0 %10017
    %10019 = vrot.lane.b32.xlu0 %v10000, 120
    %v10020 = vpop.permute.xlu0 %10019
    %10021 = vrot.lane.b32.xlu0 %v10014, 120
    %v10022 = vpop.permute.xlu0 %10021
    %v10027 = vsel %vm2662, %v8928, %v9032
    %v10028 = vsel %vm2662, %v8942, %v9034
    %v10029 = vsel %vm2662, %v8956, %v9036
    %v10030 = vsel %vm2662, %v8970, %v9038
    %v10031 = vsel %vm2727, %v10027, %v9100
    %v10032 = vsel %vm2727, %v10028, %v9102
    %v10033 = vsel %vm2727, %v10029, %v9104
    %v10034 = vsel %vm2727, %v10030, %v9106
    %v10035 = vsel %vm2792, %v10031, %v9168
    %v10036 = vsel %vm2792, %v10032, %v9170
    %v10037 = vsel %vm2792, %v10033, %v9172
    %v10038 = vsel %vm2792, %v10034, %v9174
    %v10039 = vsel %vm2857, %v10035, %v9236
    %v10040 = vsel %vm2857, %v10036, %v9238
    %v10041 = vsel %vm2857, %v10037, %v9240
    %v10042 = vsel %vm2857, %v10038, %v9242
    %v10043 = vsel %vm2922, %v10039, %v9304
    %v10044 = vsel %vm2922, %v10040, %v9306
    %v10045 = vsel %vm2922, %v10041, %v9308
    %v10046 = vsel %vm2922, %v10042, %v9310
    %v10047 = vsel %vm2987, %v10043, %v9372
    %v10048 = vsel %vm2987, %v10044, %v9374
    %v10049 = vsel %vm2987, %v10045, %v9376
    %v10050 = vsel %vm2987, %v10046, %v9378
    %v10051 = vsel %vm3052, %v10047, %v9440
    %v10052 = vsel %vm3052, %v10048, %v9442
    %v10053 = vsel %vm3052, %v10049, %v9444
    %v10054 = vsel %vm3052, %v10050, %v9446
    %v10055 = vsel %vm3117, %v10051, %v9540
    %v10056 = vsel %vm3117, %v10052, %v9542
    %v10057 = vsel %vm3117, %v10053, %v9544
    %v10058 = vsel %vm3117, %v10054, %v9546
    %v10059 = vsel %vm3198, %v10055, %v9608
    %v10060 = vsel %vm3198, %v10056, %v9610
    %v10061 = vsel %vm3198, %v10057, %v9612
    %v10062 = vsel %vm3198, %v10058, %v9614
    %vm10063 = vcmask 654336
    %v10064 = vsel %vm10063, %v10059, %v9676
    %v10065 = vsel %vm10063, %v10060, %v9678
    %v10066 = vsel %vm10063, %v10061, %v9680
    %v10067 = vsel %vm10063, %v10062, %v9682
    %vm10068 = vcmask 719872
    %v10069 = vsel %vm10068, %v10064, %v9744
    %v10070 = vsel %vm10068, %v10065, %v9746
    %v10071 = vsel %vm10068, %v10066, %v9748
    %v10072 = vsel %vm10068, %v10067, %v9750
    %vm10073 = vcmask 785408
    %v10074 = vsel %vm10073, %v10069, %v9812
    %v10075 = vsel %vm10073, %v10070, %v9814
    %v10076 = vsel %vm10073, %v10071, %v9816
    %v10077 = vsel %vm10073, %v10072, %v9818
    %vm10078 = vcmask 850944
    %v10079 = vsel %vm10078, %v10074, %v9880
    %v10080 = vsel %vm10078, %v10075, %v9882
    %v10081 = vsel %vm10078, %v10076, %v9884
    %v10082 = vsel %vm10078, %v10077, %v9886
    %vm10083 = vcmask 916480
    %v10084 = vsel %vm10083, %v10079, %v9948
    %v10085 = vsel %vm10083, %v10080, %v9950
    %v10086 = vsel %vm10083, %v10081, %v9952
    %v10087 = vsel %vm10083, %v10082, %v9954
    %vm10088 = vcmask 982016
    %v10089 = vsel %vm10088, %v10084, %v10016
    %v10090 = vsel %vm10088, %v10085, %v10018
    %v10091 = vsel %vm10088, %v10086, %v10020
    %v10092 = vsel %vm10088, %v10087, %v10022
    %10093 = vst [vmem:[#allocation3] sm:$0xff] %v10089
    %10094 = vst [vmem:[#allocation3 + $0x8] sm:$0xff] %v10090
    %10095 = vst [vmem:[#allocation3 + $0x10] sm:$0xff] %v10091
    %10096 = vst [vmem:[#allocation3 + $0x18] sm:$0xff] %v10092
    // Predicated region
    $region42: #{tpu_custom_call.1} parent=1 // pred_check
      _
    $region43: #{tpu_custom_call.1} parent=1 // pred_check_branch
      %10098 = sbr.rel (0) target = $region45
    $region44: #{tpu_custom_call.1} parent=1 // pred_region
      %s10100 = ssub.s32 512, 512
      %10101 = vsyncadd [#allocation4], %s10100
      %s10102 = sshll.u32 [#allocation3], 4
      %s10103 = int_to_ptr.vmem [resolvable:$true] %s10102
      %10108 = dma.vmem_to_hbm [thread:$0]  %s10103, 512, %s10, [#allocation4], 128, 128, 8
    $region45: #{tpu_custom_call.1} parent=1 // pred_fallthru
      _
    // Predicated region
    $region46: #{tpu_custom_call.1} parent=1 // pred_check
      _
    $region47: #{tpu_custom_call.1} parent=1 // pred_check_branch
      %10110 = sbr.rel (0) target = $region49
    $region48: #{tpu_custom_call.1} parent=1 // pred_region
      %10111 = dma.done [#allocation4], 512
    $region49: #{tpu_custom_call.1} parent=1 // pred_fallthru
      _
    %10112 = vsyncpa [#allocation4], 1

</llo_original>
